<compile_context>
chip_gen: v7x
topology: tpu7x:2x2x1
jax: 0.10.0
libtpu: 0.0.40
codegen_flags: <defaults>
</compile_context>

<pallas_src>
import math

import jax
import jax.numpy as jnp
from jax.experimental import pallas as pl
from jax.experimental.pallas import tpu as pltpu

# ----------------------------- model config (module defaults) ----------------
D_CONTINUOUS = 2
N_CATEGORICAL = 1
N_BINS = 10
D_MODEL = 64
N_HEADS = 4
N_LAYERS = 3
D_FF = 256
N_OUTPUTS = 2
HEAD_DIM = D_MODEL // N_HEADS

# HybridInputEmbedding dimension split (matches PyTorch __init__ logic)
MAX_CAT_SPACE = D_MODEL // 4                       # 16
CAT_EMBED_DIM = max(4, min(D_MODEL // 4, MAX_CAT_SPACE // N_CATEGORICAL))  # 16
D_CAT_PROJ = N_CATEGORICAL * CAT_EMBED_DIM         # 16
D_CONT_PROJ = D_MODEL - D_CAT_PROJ                 # 48
D_INPUT = D_CONTINUOUS + N_BINS                    # 12 (continuous ++ one-hot)

LN_EPS = 1e-5


def create_layer_mapping(n_layers):
    n_unique = (n_layers + 3) // 2
    if n_layers <= 2:
        return list(range(n_layers))
    mapping = [0]
    for i in range(1, n_layers - 1):
        mapping.append(1 + (i - 1) % (n_unique - 2))
    mapping.append(n_unique - 1)
    return mapping


N_UNIQUE_BLOCKS = (N_LAYERS + 3) // 2              # 3
LAYER_MAPPING = tuple(create_layer_mapping(N_LAYERS))   # (0, 1, 2)


# ----------------------------- shared math helpers ----------------------------
def _ln(x, gamma, beta):
    # PyTorch LayerNorm: biased variance, eps inside rsqrt
    mu = jnp.mean(x, axis=-1, keepdims=True)
    var = jnp.mean((x - mu) ** 2, axis=-1, keepdims=True)
    return (x - mu) * jax.lax.rsqrt(var + LN_EPS) * gamma + beta


def _gelu(x):
    # TODO(synk): PyTorch nn.GELU default is exact erf-GELU; tanh approximation
    # used because erf lowering is backend-sensitive in Mosaic.
    c = math.sqrt(2.0 / math.pi)
    return 0.5 * x * (1.0 + jnp.tanh(c * (x + 0.044715 * x * x * x)))


# ----------------------------- fused forward kernel ---------------------------
def fused_forward_kernel(xin_ref, w_in_ref, b_in_ref, lne_g_ref, lne_b_ref,
                         ln1g_ref, ln1b_ref, wq_ref, bq_ref, wk_ref, bk_ref,
                         wv_ref, bv_ref, wo_ref, bo_ref, ln2g_ref, ln2b_ref,
                         w1_ref, b1_ref, w2_ref, b2_ref,
                         lnfg_ref, lnfb_ref, wout_ref, bout_ref, out_ref):
    BB, T, DIN = xin_ref.shape
    N = BB * T

    # ---- embedding: one fused matmul on [continuous ++ onehot], then LayerNorm
    xin = xin_ref[...].reshape(N, DIN)                     # [BB*T, 12]
    x = jnp.dot(xin, w_in_ref[...], preferred_element_type=jnp.float32) + b_in_ref[...]
    x = _ln(x, lne_g_ref[...], lne_b_ref[...])             # [BB*T, D]

    # causal additive mask (diagonal always unmasked; finite value is NaN-safe)
    rows = jax.lax.broadcasted_iota(jnp.int32, (T, T), 0)
    cols = jax.lax.broadcasted_iota(jnp.int32, (T, T), 1)
    neg_mask = jnp.where(cols > rows, -1e30, 0.0).astype(jnp.float32)
    scale = 1.0 / math.sqrt(HEAD_DIM)

    # ---- decoder blocks: static unroll over the layer mapping, weights are
    # stacked per unique block and indexed with static indices.
    for idx in LAYER_MAPPING:
        # --- attention branch (MultiScaleAttention with scales=[1]) ---
        h = _ln(x, ln1g_ref[idx], ln1b_ref[idx])           # [N, D]
        attn = jnp.zeros((N, D_MODEL), jnp.float32)
        for hh in range(N_HEADS):                          # static unroll; weights pre-split per head
            q = (jnp.dot(h, wq_ref[idx, hh], preferred_element_type=jnp.float32)
                 + bq_ref[idx, hh]).reshape(BB, T, HEAD_DIM)
            k = (jnp.dot(h, wk_ref[idx, hh], preferred_element_type=jnp.float32)
                 + bk_ref[idx, hh]).reshape(BB, T, HEAD_DIM)
            v = (jnp.dot(h, wv_ref[idx, hh], preferred_element_type=jnp.float32)
                 + bv_ref[idx, hh]).reshape(BB, T, HEAD_DIM)
            att = jnp.einsum("bqd,bkd->bqk", q, k,
                             preferred_element_type=jnp.float32) * scale + neg_mask
            att = att - jnp.max(att, axis=-1, keepdims=True)
            p = jnp.exp(att)
            p = p / jnp.sum(p, axis=-1, keepdims=True)
            o = jnp.einsum("bqk,bkd->bqd", p, v, preferred_element_type=jnp.float32)
            # per-head row-block of the folded (proj @ scale_combine) projection:
            # no lane concat of heads, just an accumulate.
            attn = attn + jnp.dot(o.reshape(N, HEAD_DIM), wo_ref[idx, hh],
                                  preferred_element_type=jnp.float32)
        x = x + attn + bo_ref[idx]                         # dropout = identity (eval)

        # --- MLP branch ---
        h2 = _ln(x, ln2g_ref[idx], ln2b_ref[idx])
        m = _gelu(jnp.dot(h2, w1_ref[idx], preferred_element_type=jnp.float32)
                  + b1_ref[idx])
        m = jnp.dot(m, w2_ref[idx], preferred_element_type=jnp.float32) + b2_ref[idx]
        x = x + m

    # ---- head: final LayerNorm + output projection, last timestep only
    x_last = x.reshape(BB, T, D_MODEL)[:, T - 1, :]        # [BB, D]
    hl = _ln(x_last, lnfg_ref[...], lnfb_ref[...])
    out_ref[...] = (jnp.dot(hl, wout_ref[...], preferred_element_type=jnp.float32)
                    + bout_ref[...])


PARAM_ORDER = ("w_in", "b_in", "lne_g", "lne_b",
               "ln1_g", "ln1_b", "wq", "bq", "wk", "bk", "wv", "bv", "wo", "bo",
               "ln2_g", "ln2_b", "w1", "b1", "w2", "b2",
               "lnf_g", "lnf_b", "wout", "bout")


def _const_index_map(nd):
    def im(g):
        return (0,) * nd
    return im


def fused_decoder_forward(xin, fused):
    B, T, DIN = xin.shape
    assert B <= 8 or B % 8 == 0, "batch must be <=8 or a multiple of 8"
    BB = B if B <= 8 else 8
    params = [fused[k] for k in PARAM_ORDER]
    weight_specs = [pl.BlockSpec(p.shape, _const_index_map(p.ndim)) for p in params]
    return pl.pallas_call(
        fused_forward_kernel,
        out_shape=jax.ShapeDtypeStruct((B, N_OUTPUTS), jnp.float32),
        grid=(B // BB,),
        in_specs=[pl.BlockSpec((BB, T, DIN), lambda g: (g, 0, 0))] + weight_specs,
        out_specs=pl.BlockSpec((BB, N_OUTPUTS), lambda g: (g, 0)),
        compiler_params=pltpu.CompilerParams(dimension_semantics=("parallel",)),
    )(xin, *params)


# ----------------------------- parameter construction -------------------------
def init_params(key):
    """Raw parameters in the PyTorch module layout (weights stored [in, out])."""
    keys = iter(jax.random.split(key, 128))
    nrm = lambda shape, s=0.02: (s * jax.random.normal(next(keys), shape)).astype(jnp.float32)

    embed = dict(
        wc=nrm((D_CONTINUOUS, D_CONT_PROJ)), bc=jnp.zeros((1, D_CONT_PROJ), jnp.float32),
        emb=nrm((N_BINS, CAT_EMBED_DIM), 1.0),
        ln_g=jnp.ones((1, D_MODEL), jnp.float32), ln_b=jnp.zeros((1, D_MODEL), jnp.float32),
    )

    blocks = []
    for _ in range(N_UNIQUE_BLOCKS):
        blocks.append(dict(
            ln1_g=jnp.ones((1, D_MODEL), jnp.float32), ln1_b=jnp.zeros((1, D_MODEL), jnp.float32),
            qkv_w=nrm((D_MODEL, 3 * D_MODEL)), qkv_b=jnp.zeros((1, 3 * D_MODEL), jnp.float32),
            proj_w=nrm((D_MODEL, D_MODEL)), proj_b=jnp.zeros((1, D_MODEL), jnp.float32),
            comb_w=nrm((D_MODEL, D_MODEL)), comb_b=jnp.zeros((1, D_MODEL), jnp.float32),
            ln2_g=jnp.ones((1, D_MODEL), jnp.float32), ln2_b=jnp.zeros((1, D_MODEL), jnp.float32),
            fc1_w=nrm((D_MODEL, D_FF)), fc1_b=jnp.zeros((1, D_FF), jnp.float32),
            fc2_w=nrm((D_FF, D_MODEL)), fc2_b=jnp.zeros((1, D_MODEL), jnp.float32),
        ))

    head = dict(
        lnf_g=jnp.ones((1, D_MODEL), jnp.float32), lnf_b=jnp.zeros((1, D_MODEL), jnp.float32),
        wout=nrm((D_MODEL, N_OUTPUTS)), bout=jnp.zeros((1, N_OUTPUTS), jnp.float32),
    )
    return embed, blocks, head


def fuse_params(embed, blocks, head):
    """Host-side folding / stacking of raw params into the fused-kernel layout."""
    # Embedding: block-diagonal fused input weight on [continuous ++ onehot]
    w_in = jnp.zeros((D_INPUT, D_MODEL), jnp.float32)
    w_in = w_in.at[:D_CONTINUOUS, :D_CONT_PROJ].set(embed["wc"])
    w_in = w_in.at[D_CONTINUOUS:, D_CONT_PROJ:].set(embed["emb"])
    b_in = jnp.concatenate([embed["bc"], jnp.zeros((1, D_CAT_PROJ), jnp.float32)], axis=-1)

    def split_out_cols_per_head(w):            # [D, D] -> [H, D, hd]
        return w.reshape(D_MODEL, N_HEADS, HEAD_DIM).transpose(1, 0, 2)

    wq = jnp.stack([split_out_cols_per_head(b["qkv_w"][:, :D_MODEL]) for b in blocks])
    wk = jnp.stack([split_out_cols_per_head(b["qkv_w"][:, D_MODEL:2 * D_MODEL]) for b in blocks])
    wv = jnp.stack([split_out_cols_per_head(b["qkv_w"][:, 2 * D_MODEL:]) for b in blocks])
    bq = jnp.stack([b["qkv_b"][0, :D_MODEL].reshape(N_HEADS, 1, HEAD_DIM) for b in blocks])
    bk = jnp.stack([b["qkv_b"][0, D_MODEL:2 * D_MODEL].reshape(N_HEADS, 1, HEAD_DIM) for b in blocks])
    bv = jnp.stack([b["qkv_b"][0, 2 * D_MODEL:].reshape(N_HEADS, 1, HEAD_DIM) for b in blocks])

    # Fold attention output proj + scale_combine (scales=[1] => both affine => exact),
    # then split the rows per head so head outputs can be accumulated (no concat).
    wo_list, bo_list = [], []
    for b in blocks:
        wo_full = b["proj_w"] @ b["comb_w"]                       # [D, D]
        bo_full = b["proj_b"] @ b["comb_w"] + b["comb_b"]         # [1, D]
        wo_list.append(wo_full.reshape(N_HEADS, HEAD_DIM, D_MODEL))
        bo_list.append(bo_full)
    wo = jnp.stack(wo_list)                                       # [n, H, hd, D]
    bo = jnp.stack(bo_list)                                       # [n, 1, D]

    stack1 = lambda name: jnp.stack([b[name] for b in blocks])
    return dict(
        w_in=w_in, b_in=b_in, lne_g=embed["ln_g"], lne_b=embed["ln_b"],
        ln1_g=stack1("ln1_g"), ln1_b=stack1("ln1_b"),
        wq=wq, bq=bq, wk=wk, bk=bk, wv=wv, bv=bv, wo=wo, bo=bo,
        ln2_g=stack1("ln2_g"), ln2_b=stack1("ln2_b"),
        w1=stack1("fc1_w"), b1=stack1("fc1_b"), w2=stack1("fc2_w"), b2=stack1("fc2_b"),
        lnf_g=head["lnf_g"], lnf_b=head["lnf_b"], wout=head["wout"], bout=head["bout"],
    )


# ----------------------------- full forward -----------------------------------
@jax.jit
def timeseries_decoder_forward(continuous, categorical, fused_params):
    # glue in XLA: one-hot the categorical indices and concat with continuous so
    # the kernel embedding is a single lane-dense matmul.
    onehot = jax.nn.one_hot(categorical[..., 0], N_BINS, dtype=jnp.float32)
    xin = jnp.concatenate([continuous.astype(jnp.float32), onehot], axis=-1)
    return fused_decoder_forward(xin, fused_params)               # [B, n_outputs]


# ----------------------------- pure-JAX reference (unfused params) ------------
def reference_forward(continuous, categorical, embed_p, block_ps, head_p):
    B, T, _ = continuous.shape
    cont = continuous @ embed_p["wc"] + embed_p["bc"]             # [B,T,48]
    cat = embed_p["emb"][categorical[..., 0]]                     # [B,T,16]
    x = jnp.concatenate([cont, cat], axis=-1)
    x = _ln(x, embed_p["ln_g"], embed_p["ln_b"])
    mask = jnp.triu(jnp.ones((T, T), jnp.float32), k=1).astype(bool)
    for idx in LAYER_MAPPING:
        p = block_ps[idx]
        h = _ln(x, p["ln1_g"], p["ln1_b"])
        qkv = (h @ p["qkv_w"] + p["qkv_b"]).reshape(B, T, 3, N_HEADS, HEAD_DIM)
        qkv = qkv.transpose(2, 0, 3, 1, 4)
        q, k, v = qkv[0], qkv[1], qkv[2]                          # [B,H,T,hd]
        att = jnp.einsum("bhqd,bhkd->bhqk", q, k) / math.sqrt(HEAD_DIM)
        att = jnp.where(mask, -jnp.inf, att)
        att = jax.nn.softmax(att, axis=-1)
        o = jnp.einsum("bhqk,bhkd->bhqd", att, v)
        o = o.transpose(0, 2, 1, 3).reshape(B, T, D_MODEL)
        o = o @ p["proj_w"] + p["proj_b"]
        o = o @ p["comb_w"] + p["comb_b"]
        x = x + o
        h2 = _ln(x, p["ln2_g"], p["ln2_b"])
        m = _gelu(h2 @ p["fc1_w"] + p["fc1_b"])
        x = x + (m @ p["fc2_w"] + p["fc2_b"])
    x = _ln(x, head_p["lnf_g"], head_p["lnf_b"])
    y = x @ head_p["wout"] + head_p["bout"]
    return y[:, -1, :]


# ----------------------------- demo --------------------------------------------
if __name__ == "__main__":
    B, T = 2, 8
    key = jax.random.PRNGKey(0)
    k_cont, k_cat, k_param = jax.random.split(key, 3)

    continuous = jax.random.normal(k_cont, (B, T, D_CONTINUOUS), dtype=jnp.float32)
    categorical = jax.random.randint(k_cat, (B, T, N_CATEGORICAL), 0, N_BINS, dtype=jnp.int32)

    embed_p, block_ps, head_p = init_params(k_param)
    fused = fuse_params(embed_p, block_ps, head_p)

    out = timeseries_decoder_forward(continuous, categorical, fused)
    out = jax.block_until_ready(out)
    assert out.shape == (B, N_OUTPUTS), out.shape

    ref = reference_forward(continuous, categorical, embed_p, tuple(block_ps), head_p)
    assert jnp.allclose(out, ref, atol=1e-3, rtol=1e-3), (out, ref)

    print("KERNEL_OK")
</pallas_src>

<mosaic_0001>
module attributes {stable_mosaic.version = 11 : i64} {
  func.func @fused_forward_kernel(%arg0: i32, %arg1: memref<2x8x12xf32, #tpu.memory_space<vmem>>, %arg2: memref<12x64xf32, #tpu.memory_space<vmem>>, %arg3: memref<1x64xf32, #tpu.memory_space<vmem>>, %arg4: memref<1x64xf32, #tpu.memory_space<vmem>>, %arg5: memref<1x64xf32, #tpu.memory_space<vmem>>, %arg6: memref<3x1x64xf32, #tpu.memory_space<vmem>>, %arg7: memref<3x1x64xf32, #tpu.memory_space<vmem>>, %arg8: memref<3x4x64x16xf32, #tpu.memory_space<vmem>>, %arg9: memref<3x4x1x16xf32, #tpu.memory_space<vmem>>, %arg10: memref<3x4x64x16xf32, #tpu.memory_space<vmem>>, %arg11: memref<3x4x1x16xf32, #tpu.memory_space<vmem>>, %arg12: memref<3x4x64x16xf32, #tpu.memory_space<vmem>>, %arg13: memref<3x4x1x16xf32, #tpu.memory_space<vmem>>, %arg14: memref<3x4x16x64xf32, #tpu.memory_space<vmem>>, %arg15: memref<3x1x64xf32, #tpu.memory_space<vmem>>, %arg16: memref<3x1x64xf32, #tpu.memory_space<vmem>>, %arg17: memref<3x1x64xf32, #tpu.memory_space<vmem>>, %arg18: memref<3x64x256xf32, #tpu.memory_space<vmem>>, %arg19: memref<3x1x256xf32, #tpu.memory_space<vmem>>, %arg20: memref<3x256x64xf32, #tpu.memory_space<vmem>>, %arg21: memref<3x1x64xf32, #tpu.memory_space<vmem>>, %arg22: memref<1x64xf32, #tpu.memory_space<vmem>>, %arg23: memref<1x64xf32, #tpu.memory_space<vmem>>, %arg24: memref<64x2xf32, #tpu.memory_space<vmem>>, %arg25: memref<1x2xf32, #tpu.memory_space<vmem>>, %arg26: memref<2x2xf32, #tpu.memory_space<vmem>>) attributes {dimension_semantics = [#tpu.dimension_semantics<parallel>], iteration_bounds = array<i64: 1>, scalar_prefetch = 0 : i64, scratch_operands = 0 : i64, tpu.core_type = #tpu.core_type<tc>, window_params = [{transform_indices = @transform_0, window_bounds = array<i64: 2, 8, 12>}, {pipeline_mode = #tpu.pipeline_mode<synchronous>, transform_indices = @transform_1, window_bounds = array<i64: 12, 64>}, {pipeline_mode = #tpu.pipeline_mode<synchronous>, transform_indices = @transform_2, window_bounds = array<i64: 1, 64>}, {pipeline_mode = #tpu.pipeline_mode<synchronous>, transform_indices = @transform_3, window_bounds = array<i64: 1, 64>}, {pipeline_mode = #tpu.pipeline_mode<synchronous>, transform_indices = @transform_4, window_bounds = array<i64: 1, 64>}, {pipeline_mode = #tpu.pipeline_mode<synchronous>, transform_indices = @transform_5, window_bounds = array<i64: 3, 1, 64>}, {pipeline_mode = #tpu.pipeline_mode<synchronous>, transform_indices = @transform_6, window_bounds = array<i64: 3, 1, 64>}, {pipeline_mode = #tpu.pipeline_mode<synchronous>, transform_indices = @transform_7, window_bounds = array<i64: 3, 4, 64, 16>}, {pipeline_mode = #tpu.pipeline_mode<synchronous>, transform_indices = @transform_8, window_bounds = array<i64: 3, 4, 1, 16>}, {pipeline_mode = #tpu.pipeline_mode<synchronous>, transform_indices = @transform_9, window_bounds = array<i64: 3, 4, 64, 16>}, {pipeline_mode = #tpu.pipeline_mode<synchronous>, transform_indices = @transform_10, window_bounds = array<i64: 3, 4, 1, 16>}, {pipeline_mode = #tpu.pipeline_mode<synchronous>, transform_indices = @transform_11, window_bounds = array<i64: 3, 4, 64, 16>}, {pipeline_mode = #tpu.pipeline_mode<synchronous>, transform_indices = @transform_12, window_bounds = array<i64: 3, 4, 1, 16>}, {pipeline_mode = #tpu.pipeline_mode<synchronous>, transform_indices = @transform_13, window_bounds = array<i64: 3, 4, 16, 64>}, {pipeline_mode = #tpu.pipeline_mode<synchronous>, transform_indices = @transform_14, window_bounds = array<i64: 3, 1, 64>}, {pipeline_mode = #tpu.pipeline_mode<synchronous>, transform_indices = @transform_15, window_bounds = array<i64: 3, 1, 64>}, {pipeline_mode = #tpu.pipeline_mode<synchronous>, transform_indices = @transform_16, window_bounds = array<i64: 3, 1, 64>}, {pipeline_mode = #tpu.pipeline_mode<synchronous>, transform_indices = @transform_17, window_bounds = array<i64: 3, 64, 256>}, {pipeline_mode = #tpu.pipeline_mode<synchronous>, transform_indices = @transform_18, window_bounds = array<i64: 3, 1, 256>}, {pipeline_mode = #tpu.pipeline_mode<synchronous>, transform_indices = @transform_19, window_bounds = array<i64: 3, 256, 64>}, {pipeline_mode = #tpu.pipeline_mode<synchronous>, transform_indices = @transform_20, window_bounds = array<i64: 3, 1, 64>}, {pipeline_mode = #tpu.pipeline_mode<synchronous>, transform_indices = @transform_21, window_bounds = array<i64: 1, 64>}, {pipeline_mode = #tpu.pipeline_mode<synchronous>, transform_indices = @transform_22, window_bounds = array<i64: 1, 64>}, {pipeline_mode = #tpu.pipeline_mode<synchronous>, transform_indices = @transform_23, window_bounds = array<i64: 64, 2>}, {pipeline_mode = #tpu.pipeline_mode<synchronous>, transform_indices = @transform_24, window_bounds = array<i64: 1, 2>}, {transform_indices = @transform_25, window_bounds = array<i64: 2, 2>}]} {
    %c0 = arith.constant 0 : index
    %c0_0 = arith.constant 0 : index
    %c0_1 = arith.constant 0 : index
    %0 = vector.load %arg1[%c0, %c0_0, %c0_1] : memref<2x8x12xf32, #tpu.memory_space<vmem>>, vector<2x8x12xf32>
    %1 = vector.shape_cast %0 : vector<2x8x12xf32> to vector<16x12xf32>
    %c0_2 = arith.constant 0 : index
    %c0_3 = arith.constant 0 : index
    %2 = vector.load %arg2[%c0_2, %c0_3] : memref<12x64xf32, #tpu.memory_space<vmem>>, vector<12x64xf32>
    %cst = arith.constant dense<0.000000e+00> : vector<16x64xf32>
    %3 = tpu.matmul %1, %2, %cst {dimension_numbers = #tpu.dot_dimension_numbers<[1], [0], [0], [1], [0, 0, 1, 1], [], []>} : vector<16x12xf32>, vector<12x64xf32>, vector<16x64xf32> -> vector<16x64xf32>
    %c0_4 = arith.constant 0 : index
    %c0_5 = arith.constant 0 : index
    %4 = vector.load %arg3[%c0_4, %c0_5] : memref<1x64xf32, #tpu.memory_space<vmem>>, vector<1x64xf32>
    %5 = vector.broadcast %4 : vector<1x64xf32> to vector<16x64xf32>
    %6 = arith.addf %3, %5 : vector<16x64xf32>
    %c0_6 = arith.constant 0 : index
    %c0_7 = arith.constant 0 : index
    %7 = vector.load %arg4[%c0_6, %c0_7] : memref<1x64xf32, #tpu.memory_space<vmem>>, vector<1x64xf32>
    %c0_8 = arith.constant 0 : index
    %c0_9 = arith.constant 0 : index
    %8 = vector.load %arg5[%c0_8, %c0_9] : memref<1x64xf32, #tpu.memory_space<vmem>>, vector<1x64xf32>
    %cst_10 = arith.constant dense<0.000000e+00> : vector<16xf32>
    %9 = vector.multi_reduction <add>, %6, %cst_10 [1] : vector<16x64xf32> to vector<16xf32>
    %10 = vector.shape_cast %9 : vector<16xf32> to vector<16x1xf32>
    %cst_11 = arith.constant 6.400000e+01 : f32
    %11 = vector.broadcast %cst_11 : f32 to vector<16x1xf32>
    %12 = arith.divf %10, %11 : vector<16x1xf32>
    %13 = vector.broadcast %12 : vector<16x1xf32> to vector<16x64xf32>
    %14 = arith.subf %6, %13 : vector<16x64xf32>
    %15 = arith.mulf %14, %14 : vector<16x64xf32>
    %cst_12 = arith.constant dense<0.000000e+00> : vector<16xf32>
    %16 = vector.multi_reduction <add>, %15, %cst_12 [1] : vector<16x64xf32> to vector<16xf32>
    %17 = vector.shape_cast %16 : vector<16xf32> to vector<16x1xf32>
    %cst_13 = arith.constant 6.400000e+01 : f32
    %18 = vector.broadcast %cst_13 : f32 to vector<16x1xf32>
    %19 = arith.divf %17, %18 : vector<16x1xf32>
    %20 = vector.broadcast %12 : vector<16x1xf32> to vector<16x64xf32>
    %21 = arith.subf %6, %20 : vector<16x64xf32>
    %cst_14 = arith.constant 9.99999974E-6 : f32
    %22 = vector.broadcast %cst_14 : f32 to vector<16x1xf32>
    %23 = arith.addf %19, %22 : vector<16x1xf32>
    %24 = math.rsqrt %23 : vector<16x1xf32>
    %25 = vector.broadcast %24 : vector<16x1xf32> to vector<16x64xf32>
    %26 = arith.mulf %21, %25 : vector<16x64xf32>
    %27 = vector.broadcast %7 : vector<1x64xf32> to vector<16x64xf32>
    %28 = arith.mulf %26, %27 : vector<16x64xf32>
    %29 = vector.broadcast %8 : vector<1x64xf32> to vector<16x64xf32>
    %30 = arith.addf %28, %29 : vector<16x64xf32>
    %31 = tpu.iota {dimensions = array<i32: 0>} : vector<8x8xi32>
    %32 = tpu.iota {dimensions = array<i32: 1>} : vector<8x8xi32>
    %33 = arith.cmpi sgt, %32, %31 : vector<8x8xi32>
    %cst_15 = arith.constant -1.000000e+30 : f32
    %cst_16 = arith.constant 0.000000e+00 : f32
    %34 = vector.broadcast %cst_15 : f32 to vector<8x8xf32>
    %35 = vector.broadcast %cst_16 : f32 to vector<8x8xf32>
    %36 = arith.select %33, %34, %35 : vector<8x8xi1>, vector<8x8xf32>
    %c0_17 = arith.constant 0 : index
    %c0_18 = arith.constant 0 : index
    %c0_19 = arith.constant 0 : index
    %37 = vector.load %arg6[%c0_17, %c0_18, %c0_19] : memref<3x1x64xf32, #tpu.memory_space<vmem>>, vector<1x1x64xf32>
    %38 = vector.shape_cast %37 : vector<1x1x64xf32> to vector<1x64xf32>
    %c0_20 = arith.constant 0 : index
    %c0_21 = arith.constant 0 : index
    %c0_22 = arith.constant 0 : index
    %39 = vector.load %arg7[%c0_20, %c0_21, %c0_22] : memref<3x1x64xf32, #tpu.memory_space<vmem>>, vector<1x1x64xf32>
    %40 = vector.shape_cast %39 : vector<1x1x64xf32> to vector<1x64xf32>
    %cst_23 = arith.constant dense<0.000000e+00> : vector<16xf32>
    %41 = vector.multi_reduction <add>, %30, %cst_23 [1] : vector<16x64xf32> to vector<16xf32>
    %42 = vector.shape_cast %41 : vector<16xf32> to vector<16x1xf32>
    %cst_24 = arith.constant 6.400000e+01 : f32
    %43 = vector.broadcast %cst_24 : f32 to vector<16x1xf32>
    %44 = arith.divf %42, %43 : vector<16x1xf32>
    %45 = vector.broadcast %44 : vector<16x1xf32> to vector<16x64xf32>
    %46 = arith.subf %30, %45 : vector<16x64xf32>
    %47 = arith.mulf %46, %46 : vector<16x64xf32>
    %cst_25 = arith.constant dense<0.000000e+00> : vector<16xf32>
    %48 = vector.multi_reduction <add>, %47, %cst_25 [1] : vector<16x64xf32> to vector<16xf32>
    %49 = vector.shape_cast %48 : vector<16xf32> to vector<16x1xf32>
    %cst_26 = arith.constant 6.400000e+01 : f32
    %50 = vector.broadcast %cst_26 : f32 to vector<16x1xf32>
    %51 = arith.divf %49, %50 : vector<16x1xf32>
    %52 = vector.broadcast %44 : vector<16x1xf32> to vector<16x64xf32>
    %53 = arith.subf %30, %52 : vector<16x64xf32>
    %cst_27 = arith.constant 9.99999974E-6 : f32
    %54 = vector.broadcast %cst_27 : f32 to vector<16x1xf32>
    %55 = arith.addf %51, %54 : vector<16x1xf32>
    %56 = math.rsqrt %55 : vector<16x1xf32>
    %57 = vector.broadcast %56 : vector<16x1xf32> to vector<16x64xf32>
    %58 = arith.mulf %53, %57 : vector<16x64xf32>
    %59 = vector.broadcast %38 : vector<1x64xf32> to vector<16x64xf32>
    %60 = arith.mulf %58, %59 : vector<16x64xf32>
    %61 = vector.broadcast %40 : vector<1x64xf32> to vector<16x64xf32>
    %62 = arith.addf %60, %61 : vector<16x64xf32>
    %cst_28 = arith.constant 0.000000e+00 : f32
    %63 = vector.broadcast %cst_28 : f32 to vector<16x64xf32>
    %c0_29 = arith.constant 0 : index
    %c0_30 = arith.constant 0 : index
    %c0_31 = arith.constant 0 : index
    %c0_32 = arith.constant 0 : index
    %64 = vector.load %arg8[%c0_29, %c0_30, %c0_31, %c0_32] : memref<3x4x64x16xf32, #tpu.memory_space<vmem>>, vector<1x1x64x16xf32>
    %65 = vector.shape_cast %64 : vector<1x1x64x16xf32> to vector<64x16xf32>
    %cst_33 = arith.constant dense<0.000000e+00> : vector<16x16xf32>
    %66 = tpu.matmul %62, %65, %cst_33 {dimension_numbers = #tpu.dot_dimension_numbers<[1], [0], [0], [1], [0, 0, 1, 1], [], []>} : vector<16x64xf32>, vector<64x16xf32>, vector<16x16xf32> -> vector<16x16xf32>
    %c0_34 = arith.constant 0 : index
    %c0_35 = arith.constant 0 : index
    %c0_36 = arith.constant 0 : index
    %c0_37 = arith.constant 0 : index
    %67 = vector.load %arg9[%c0_34, %c0_35, %c0_36, %c0_37] : memref<3x4x1x16xf32, #tpu.memory_space<vmem>>, vector<1x1x1x16xf32>
    %68 = vector.shape_cast %67 : vector<1x1x1x16xf32> to vector<1x16xf32>
    %69 = vector.broadcast %68 : vector<1x16xf32> to vector<16x16xf32>
    %70 = arith.addf %66, %69 : vector<16x16xf32>
    %71 = vector.shape_cast %70 : vector<16x16xf32> to vector<2x8x16xf32>
    %c0_38 = arith.constant 0 : index
    %c0_39 = arith.constant 0 : index
    %c0_40 = arith.constant 0 : index
    %c0_41 = arith.constant 0 : index
    %72 = vector.load %arg10[%c0_38, %c0_39, %c0_40, %c0_41] : memref<3x4x64x16xf32, #tpu.memory_space<vmem>>, vector<1x1x64x16xf32>
    %73 = vector.shape_cast %72 : vector<1x1x64x16xf32> to vector<64x16xf32>
    %cst_42 = arith.constant dense<0.000000e+00> : vector<16x16xf32>
    %74 = tpu.matmul %62, %73, %cst_42 {dimension_numbers = #tpu.dot_dimension_numbers<[1], [0], [0], [1], [0, 0, 1, 1], [], []>} : vector<16x64xf32>, vector<64x16xf32>, vector<16x16xf32> -> vector<16x16xf32>
    %c0_43 = arith.constant 0 : index
    %c0_44 = arith.constant 0 : index
    %c0_45 = arith.constant 0 : index
    %c0_46 = arith.constant 0 : index
    %75 = vector.load %arg11[%c0_43, %c0_44, %c0_45, %c0_46] : memref<3x4x1x16xf32, #tpu.memory_space<vmem>>, vector<1x1x1x16xf32>
    %76 = vector.shape_cast %75 : vector<1x1x1x16xf32> to vector<1x16xf32>
    %77 = vector.broadcast %76 : vector<1x16xf32> to vector<16x16xf32>
    %78 = arith.addf %74, %77 : vector<16x16xf32>
    %79 = vector.shape_cast %78 : vector<16x16xf32> to vector<2x8x16xf32>
    %c0_47 = arith.constant 0 : index
    %c0_48 = arith.constant 0 : index
    %c0_49 = arith.constant 0 : index
    %c0_50 = arith.constant 0 : index
    %80 = vector.load %arg12[%c0_47, %c0_48, %c0_49, %c0_50] : memref<3x4x64x16xf32, #tpu.memory_space<vmem>>, vector<1x1x64x16xf32>
    %81 = vector.shape_cast %80 : vector<1x1x64x16xf32> to vector<64x16xf32>
    %cst_51 = arith.constant dense<0.000000e+00> : vector<16x16xf32>
    %82 = tpu.matmul %62, %81, %cst_51 {dimension_numbers = #tpu.dot_dimension_numbers<[1], [0], [0], [1], [0, 0, 1, 1], [], []>} : vector<16x64xf32>, vector<64x16xf32>, vector<16x16xf32> -> vector<16x16xf32>
    %c0_52 = arith.constant 0 : index
    %c0_53 = arith.constant 0 : index
    %c0_54 = arith.constant 0 : index
    %c0_55 = arith.constant 0 : index
    %83 = vector.load %arg13[%c0_52, %c0_53, %c0_54, %c0_55] : memref<3x4x1x16xf32, #tpu.memory_space<vmem>>, vector<1x1x1x16xf32>
    %84 = vector.shape_cast %83 : vector<1x1x1x16xf32> to vector<1x16xf32>
    %85 = vector.broadcast %84 : vector<1x16xf32> to vector<16x16xf32>
    %86 = arith.addf %82, %85 : vector<16x16xf32>
    %87 = vector.shape_cast %86 : vector<16x16xf32> to vector<2x8x16xf32>
    "tpu.trace_start"() <{level = 10 : i32, message = "bqd,bkd->bqk"}> : () -> ()
    %cst_56 = arith.constant dense<0.000000e+00> : vector<2x8x8xf32>
    %88 = tpu.matmul %71, %79, %cst_56 {dimension_numbers = #tpu.dot_dimension_numbers<[2], [2], [1], [1], [0, 0, 0, 1, 1, 1], [0], [0]>} : vector<2x8x16xf32>, vector<2x8x16xf32>, vector<2x8x8xf32> -> vector<2x8x8xf32>
    "tpu.trace_stop"() : () -> ()
    %cst_57 = arith.constant 2.500000e-01 : f32
    %89 = vector.broadcast %cst_57 : f32 to vector<2x8x8xf32>
    %90 = arith.mulf %88, %89 : vector<2x8x8xf32>
    %91 = vector.shape_cast %36 : vector<8x8xf32> to vector<1x8x8xf32>
    %92 = vector.broadcast %91 : vector<1x8x8xf32> to vector<2x8x8xf32>
    %93 = arith.addf %90, %92 : vector<2x8x8xf32>
    %cst_58 = arith.constant dense<0xFF800000> : vector<2x8xf32>
    %94 = vector.multi_reduction <maximumf>, %93, %cst_58 [2] : vector<2x8x8xf32> to vector<2x8xf32>
    %95 = vector.shape_cast %94 : vector<2x8xf32> to vector<2x8x1xf32>
    %96 = vector.broadcast %95 : vector<2x8x1xf32> to vector<2x8x8xf32>
    %97 = arith.subf %93, %96 : vector<2x8x8xf32>
    %98 = math.exp %97 : vector<2x8x8xf32>
    %cst_59 = arith.constant dense<0.000000e+00> : vector<2x8xf32>
    %99 = vector.multi_reduction <add>, %98, %cst_59 [2] : vector<2x8x8xf32> to vector<2x8xf32>
    %100 = vector.shape_cast %99 : vector<2x8xf32> to vector<2x8x1xf32>
    %101 = vector.broadcast %100 : vector<2x8x1xf32> to vector<2x8x8xf32>
    %102 = arith.divf %98, %101 : vector<2x8x8xf32>
    "tpu.trace_start"() <{level = 10 : i32, message = "bqk,bkd->bqd"}> : () -> ()
    %cst_60 = arith.constant dense<0.000000e+00> : vector<2x8x16xf32>
    %103 = tpu.matmul %102, %87, %cst_60 {dimension_numbers = #tpu.dot_dimension_numbers<[2], [1], [1], [2], [0, 0, 0, 1, 1, 2], [0], [0]>} : vector<2x8x8xf32>, vector<2x8x16xf32>, vector<2x8x16xf32> -> vector<2x8x16xf32>
    "tpu.trace_stop"() : () -> ()
    %104 = vector.shape_cast %103 : vector<2x8x16xf32> to vector<16x16xf32>
    %c0_61 = arith.constant 0 : index
    %c0_62 = arith.constant 0 : index
    %c0_63 = arith.constant 0 : index
    %c0_64 = arith.constant 0 : index
    %105 = vector.load %arg14[%c0_61, %c0_62, %c0_63, %c0_64] : memref<3x4x16x64xf32, #tpu.memory_space<vmem>>, vector<1x1x16x64xf32>
    %106 = vector.shape_cast %105 : vector<1x1x16x64xf32> to vector<16x64xf32>
    %cst_65 = arith.constant dense<0.000000e+00> : vector<16x64xf32>
    %107 = tpu.matmul %104, %106, %cst_65 {dimension_numbers = #tpu.dot_dimension_numbers<[1], [0], [0], [1], [0, 0, 1, 1], [], []>} : vector<16x16xf32>, vector<16x64xf32>, vector<16x64xf32> -> vector<16x64xf32>
    %108 = arith.addf %63, %107 : vector<16x64xf32>
    %c0_66 = arith.constant 0 : index
    %c1 = arith.constant 1 : index
    %c0_67 = arith.constant 0 : index
    %c0_68 = arith.constant 0 : index
    %109 = vector.load %arg8[%c0_66, %c1, %c0_67, %c0_68] : memref<3x4x64x16xf32, #tpu.memory_space<vmem>>, vector<1x1x64x16xf32>
    %110 = vector.shape_cast %109 : vector<1x1x64x16xf32> to vector<64x16xf32>
    %cst_69 = arith.constant dense<0.000000e+00> : vector<16x16xf32>
    %111 = tpu.matmul %62, %110, %cst_69 {dimension_numbers = #tpu.dot_dimension_numbers<[1], [0], [0], [1], [0, 0, 1, 1], [], []>} : vector<16x64xf32>, vector<64x16xf32>, vector<16x16xf32> -> vector<16x16xf32>
    %c0_70 = arith.constant 0 : index
    %c1_71 = arith.constant 1 : index
    %c0_72 = arith.constant 0 : index
    %c0_73 = arith.constant 0 : index
    %112 = vector.load %arg9[%c0_70, %c1_71, %c0_72, %c0_73] : memref<3x4x1x16xf32, #tpu.memory_space<vmem>>, vector<1x1x1x16xf32>
    %113 = vector.shape_cast %112 : vector<1x1x1x16xf32> to vector<1x16xf32>
    %114 = vector.broadcast %113 : vector<1x16xf32> to vector<16x16xf32>
    %115 = arith.addf %111, %114 : vector<16x16xf32>
    %116 = vector.shape_cast %115 : vector<16x16xf32> to vector<2x8x16xf32>
    %c0_74 = arith.constant 0 : index
    %c1_75 = arith.constant 1 : index
    %c0_76 = arith.constant 0 : index
    %c0_77 = arith.constant 0 : index
    %117 = vector.load %arg10[%c0_74, %c1_75, %c0_76, %c0_77] : memref<3x4x64x16xf32, #tpu.memory_space<vmem>>, vector<1x1x64x16xf32>
    %118 = vector.shape_cast %117 : vector<1x1x64x16xf32> to vector<64x16xf32>
    %cst_78 = arith.constant dense<0.000000e+00> : vector<16x16xf32>
    %119 = tpu.matmul %62, %118, %cst_78 {dimension_numbers = #tpu.dot_dimension_numbers<[1], [0], [0], [1], [0, 0, 1, 1], [], []>} : vector<16x64xf32>, vector<64x16xf32>, vector<16x16xf32> -> vector<16x16xf32>
    %c0_79 = arith.constant 0 : index
    %c1_80 = arith.constant 1 : index
    %c0_81 = arith.constant 0 : index
    %c0_82 = arith.constant 0 : index
    %120 = vector.load %arg11[%c0_79, %c1_80, %c0_81, %c0_82] : memref<3x4x1x16xf32, #tpu.memory_space<vmem>>, vector<1x1x1x16xf32>
    %121 = vector.shape_cast %120 : vector<1x1x1x16xf32> to vector<1x16xf32>
    %122 = vector.broadcast %121 : vector<1x16xf32> to vector<16x16xf32>
    %123 = arith.addf %119, %122 : vector<16x16xf32>
    %124 = vector.shape_cast %123 : vector<16x16xf32> to vector<2x8x16xf32>
    %c0_83 = arith.constant 0 : index
    %c1_84 = arith.constant 1 : index
    %c0_85 = arith.constant 0 : index
    %c0_86 = arith.constant 0 : index
    %125 = vector.load %arg12[%c0_83, %c1_84, %c0_85, %c0_86] : memref<3x4x64x16xf32, #tpu.memory_space<vmem>>, vector<1x1x64x16xf32>
    %126 = vector.shape_cast %125 : vector<1x1x64x16xf32> to vector<64x16xf32>
    %cst_87 = arith.constant dense<0.000000e+00> : vector<16x16xf32>
    %127 = tpu.matmul %62, %126, %cst_87 {dimension_numbers = #tpu.dot_dimension_numbers<[1], [0], [0], [1], [0, 0, 1, 1], [], []>} : vector<16x64xf32>, vector<64x16xf32>, vector<16x16xf32> -> vector<16x16xf32>
    %c0_88 = arith.constant 0 : index
    %c1_89 = arith.constant 1 : index
    %c0_90 = arith.constant 0 : index
    %c0_91 = arith.constant 0 : index
    %128 = vector.load %arg13[%c0_88, %c1_89, %c0_90, %c0_91] : memref<3x4x1x16xf32, #tpu.memory_space<vmem>>, vector<1x1x1x16xf32>
    %129 = vector.shape_cast %128 : vector<1x1x1x16xf32> to vector<1x16xf32>
    %130 = vector.broadcast %129 : vector<1x16xf32> to vector<16x16xf32>
    %131 = arith.addf %127, %130 : vector<16x16xf32>
    %132 = vector.shape_cast %131 : vector<16x16xf32> to vector<2x8x16xf32>
    "tpu.trace_start"() <{level = 10 : i32, message = "bqd,bkd->bqk"}> : () -> ()
    %cst_92 = arith.constant dense<0.000000e+00> : vector<2x8x8xf32>
    %133 = tpu.matmul %116, %124, %cst_92 {dimension_numbers = #tpu.dot_dimension_numbers<[2], [2], [1], [1], [0, 0, 0, 1, 1, 1], [0], [0]>} : vector<2x8x16xf32>, vector<2x8x16xf32>, vector<2x8x8xf32> -> vector<2x8x8xf32>
    "tpu.trace_stop"() : () -> ()
    %cst_93 = arith.constant 2.500000e-01 : f32
    %134 = vector.broadcast %cst_93 : f32 to vector<2x8x8xf32>
    %135 = arith.mulf %133, %134 : vector<2x8x8xf32>
    %136 = vector.shape_cast %36 : vector<8x8xf32> to vector<1x8x8xf32>
    %137 = vector.broadcast %136 : vector<1x8x8xf32> to vector<2x8x8xf32>
    %138 = arith.addf %135, %137 : vector<2x8x8xf32>
    %cst_94 = arith.constant dense<0xFF800000> : vector<2x8xf32>
    %139 = vector.multi_reduction <maximumf>, %138, %cst_94 [2] : vector<2x8x8xf32> to vector<2x8xf32>
    %140 = vector.shape_cast %139 : vector<2x8xf32> to vector<2x8x1xf32>
    %141 = vector.broadcast %140 : vector<2x8x1xf32> to vector<2x8x8xf32>
    %142 = arith.subf %138, %141 : vector<2x8x8xf32>
    %143 = math.exp %142 : vector<2x8x8xf32>
    %cst_95 = arith.constant dense<0.000000e+00> : vector<2x8xf32>
    %144 = vector.multi_reduction <add>, %143, %cst_95 [2] : vector<2x8x8xf32> to vector<2x8xf32>
    %145 = vector.shape_cast %144 : vector<2x8xf32> to vector<2x8x1xf32>
    %146 = vector.broadcast %145 : vector<2x8x1xf32> to vector<2x8x8xf32>
    %147 = arith.divf %143, %146 : vector<2x8x8xf32>
    "tpu.trace_start"() <{level = 10 : i32, message = "bqk,bkd->bqd"}> : () -> ()
    %cst_96 = arith.constant dense<0.000000e+00> : vector<2x8x16xf32>
    %148 = tpu.matmul %147, %132, %cst_96 {dimension_numbers = #tpu.dot_dimension_numbers<[2], [1], [1], [2], [0, 0, 0, 1, 1, 2], [0], [0]>} : vector<2x8x8xf32>, vector<2x8x16xf32>, vector<2x8x16xf32> -> vector<2x8x16xf32>
    "tpu.trace_stop"() : () -> ()
    %149 = vector.shape_cast %148 : vector<2x8x16xf32> to vector<16x16xf32>
    %c0_97 = arith.constant 0 : index
    %c1_98 = arith.constant 1 : index
    %c0_99 = arith.constant 0 : index
    %c0_100 = arith.constant 0 : index
    %150 = vector.load %arg14[%c0_97, %c1_98, %c0_99, %c0_100] : memref<3x4x16x64xf32, #tpu.memory_space<vmem>>, vector<1x1x16x64xf32>
    %151 = vector.shape_cast %150 : vector<1x1x16x64xf32> to vector<16x64xf32>
    %cst_101 = arith.constant dense<0.000000e+00> : vector<16x64xf32>
    %152 = tpu.matmul %149, %151, %cst_101 {dimension_numbers = #tpu.dot_dimension_numbers<[1], [0], [0], [1], [0, 0, 1, 1], [], []>} : vector<16x16xf32>, vector<16x64xf32>, vector<16x64xf32> -> vector<16x64xf32>
    %153 = arith.addf %108, %152 : vector<16x64xf32>
    %c0_102 = arith.constant 0 : index
    %c2 = arith.constant 2 : index
    %c0_103 = arith.constant 0 : index
    %c0_104 = arith.constant 0 : index
    %154 = vector.load %arg8[%c0_102, %c2, %c0_103, %c0_104] : memref<3x4x64x16xf32, #tpu.memory_space<vmem>>, vector<1x1x64x16xf32>
    %155 = vector.shape_cast %154 : vector<1x1x64x16xf32> to vector<64x16xf32>
    %cst_105 = arith.constant dense<0.000000e+00> : vector<16x16xf32>
    %156 = tpu.matmul %62, %155, %cst_105 {dimension_numbers = #tpu.dot_dimension_numbers<[1], [0], [0], [1], [0, 0, 1, 1], [], []>} : vector<16x64xf32>, vector<64x16xf32>, vector<16x16xf32> -> vector<16x16xf32>
    %c0_106 = arith.constant 0 : index
    %c2_107 = arith.constant 2 : index
    %c0_108 = arith.constant 0 : index
    %c0_109 = arith.constant 0 : index
    %157 = vector.load %arg9[%c0_106, %c2_107, %c0_108, %c0_109] : memref<3x4x1x16xf32, #tpu.memory_space<vmem>>, vector<1x1x1x16xf32>
    %158 = vector.shape_cast %157 : vector<1x1x1x16xf32> to vector<1x16xf32>
    %159 = vector.broadcast %158 : vector<1x16xf32> to vector<16x16xf32>
    %160 = arith.addf %156, %159 : vector<16x16xf32>
    %161 = vector.shape_cast %160 : vector<16x16xf32> to vector<2x8x16xf32>
    %c0_110 = arith.constant 0 : index
    %c2_111 = arith.constant 2 : index
    %c0_112 = arith.constant 0 : index
    %c0_113 = arith.constant 0 : index
    %162 = vector.load %arg10[%c0_110, %c2_111, %c0_112, %c0_113] : memref<3x4x64x16xf32, #tpu.memory_space<vmem>>, vector<1x1x64x16xf32>
    %163 = vector.shape_cast %162 : vector<1x1x64x16xf32> to vector<64x16xf32>
    %cst_114 = arith.constant dense<0.000000e+00> : vector<16x16xf32>
    %164 = tpu.matmul %62, %163, %cst_114 {dimension_numbers = #tpu.dot_dimension_numbers<[1], [0], [0], [1], [0, 0, 1, 1], [], []>} : vector<16x64xf32>, vector<64x16xf32>, vector<16x16xf32> -> vector<16x16xf32>
    %c0_115 = arith.constant 0 : index
    %c2_116 = arith.constant 2 : index
    %c0_117 = arith.constant 0 : index
    %c0_118 = arith.constant 0 : index
    %165 = vector.load %arg11[%c0_115, %c2_116, %c0_117, %c0_118] : memref<3x4x1x16xf32, #tpu.memory_space<vmem>>, vector<1x1x1x16xf32>
    %166 = vector.shape_cast %165 : vector<1x1x1x16xf32> to vector<1x16xf32>
    %167 = vector.broadcast %166 : vector<1x16xf32> to vector<16x16xf32>
    %168 = arith.addf %164, %167 : vector<16x16xf32>
    %169 = vector.shape_cast %168 : vector<16x16xf32> to vector<2x8x16xf32>
    %c0_119 = arith.constant 0 : index
    %c2_120 = arith.constant 2 : index
    %c0_121 = arith.constant 0 : index
    %c0_122 = arith.constant 0 : index
    %170 = vector.load %arg12[%c0_119, %c2_120, %c0_121, %c0_122] : memref<3x4x64x16xf32, #tpu.memory_space<vmem>>, vector<1x1x64x16xf32>
    %171 = vector.shape_cast %170 : vector<1x1x64x16xf32> to vector<64x16xf32>
    %cst_123 = arith.constant dense<0.000000e+00> : vector<16x16xf32>
    %172 = tpu.matmul %62, %171, %cst_123 {dimension_numbers = #tpu.dot_dimension_numbers<[1], [0], [0], [1], [0, 0, 1, 1], [], []>} : vector<16x64xf32>, vector<64x16xf32>, vector<16x16xf32> -> vector<16x16xf32>
    %c0_124 = arith.constant 0 : index
    %c2_125 = arith.constant 2 : index
    %c0_126 = arith.constant 0 : index
    %c0_127 = arith.constant 0 : index
    %173 = vector.load %arg13[%c0_124, %c2_125, %c0_126, %c0_127] : memref<3x4x1x16xf32, #tpu.memory_space<vmem>>, vector<1x1x1x16xf32>
    %174 = vector.shape_cast %173 : vector<1x1x1x16xf32> to vector<1x16xf32>
    %175 = vector.broadcast %174 : vector<1x16xf32> to vector<16x16xf32>
    %176 = arith.addf %172, %175 : vector<16x16xf32>
    %177 = vector.shape_cast %176 : vector<16x16xf32> to vector<2x8x16xf32>
    "tpu.trace_start"() <{level = 10 : i32, message = "bqd,bkd->bqk"}> : () -> ()
    %cst_128 = arith.constant dense<0.000000e+00> : vector<2x8x8xf32>
    %178 = tpu.matmul %161, %169, %cst_128 {dimension_numbers = #tpu.dot_dimension_numbers<[2], [2], [1], [1], [0, 0, 0, 1, 1, 1], [0], [0]>} : vector<2x8x16xf32>, vector<2x8x16xf32>, vector<2x8x8xf32> -> vector<2x8x8xf32>
    "tpu.trace_stop"() : () -> ()
    %cst_129 = arith.constant 2.500000e-01 : f32
    %179 = vector.broadcast %cst_129 : f32 to vector<2x8x8xf32>
    %180 = arith.mulf %178, %179 : vector<2x8x8xf32>
    %181 = vector.shape_cast %36 : vector<8x8xf32> to vector<1x8x8xf32>
    %182 = vector.broadcast %181 : vector<1x8x8xf32> to vector<2x8x8xf32>
    %183 = arith.addf %180, %182 : vector<2x8x8xf32>
    %cst_130 = arith.constant dense<0xFF800000> : vector<2x8xf32>
    %184 = vector.multi_reduction <maximumf>, %183, %cst_130 [2] : vector<2x8x8xf32> to vector<2x8xf32>
    %185 = vector.shape_cast %184 : vector<2x8xf32> to vector<2x8x1xf32>
    %186 = vector.broadcast %185 : vector<2x8x1xf32> to vector<2x8x8xf32>
    %187 = arith.subf %183, %186 : vector<2x8x8xf32>
    %188 = math.exp %187 : vector<2x8x8xf32>
    %cst_131 = arith.constant dense<0.000000e+00> : vector<2x8xf32>
    %189 = vector.multi_reduction <add>, %188, %cst_131 [2] : vector<2x8x8xf32> to vector<2x8xf32>
    %190 = vector.shape_cast %189 : vector<2x8xf32> to vector<2x8x1xf32>
    %191 = vector.broadcast %190 : vector<2x8x1xf32> to vector<2x8x8xf32>
    %192 = arith.divf %188, %191 : vector<2x8x8xf32>
    "tpu.trace_start"() <{level = 10 : i32, message = "bqk,bkd->bqd"}> : () -> ()
    %cst_132 = arith.constant dense<0.000000e+00> : vector<2x8x16xf32>
    %193 = tpu.matmul %192, %177, %cst_132 {dimension_numbers = #tpu.dot_dimension_numbers<[2], [1], [1], [2], [0, 0, 0, 1, 1, 2], [0], [0]>} : vector<2x8x8xf32>, vector<2x8x16xf32>, vector<2x8x16xf32> -> vector<2x8x16xf32>
    "tpu.trace_stop"() : () -> ()
    %194 = vector.shape_cast %193 : vector<2x8x16xf32> to vector<16x16xf32>
    %c0_133 = arith.constant 0 : index
    %c2_134 = arith.constant 2 : index
    %c0_135 = arith.constant 0 : index
    %c0_136 = arith.constant 0 : index
    %195 = vector.load %arg14[%c0_133, %c2_134, %c0_135, %c0_136] : memref<3x4x16x64xf32, #tpu.memory_space<vmem>>, vector<1x1x16x64xf32>
    %196 = vector.shape_cast %195 : vector<1x1x16x64xf32> to vector<16x64xf32>
    %cst_137 = arith.constant dense<0.000000e+00> : vector<16x64xf32>
    %197 = tpu.matmul %194, %196, %cst_137 {dimension_numbers = #tpu.dot_dimension_numbers<[1], [0], [0], [1], [0, 0, 1, 1], [], []>} : vector<16x16xf32>, vector<16x64xf32>, vector<16x64xf32> -> vector<16x64xf32>
    %198 = arith.addf %153, %197 : vector<16x64xf32>
    %c0_138 = arith.constant 0 : index
    %c3 = arith.constant 3 : index
    %c0_139 = arith.constant 0 : index
    %c0_140 = arith.constant 0 : index
    %199 = vector.load %arg8[%c0_138, %c3, %c0_139, %c0_140] : memref<3x4x64x16xf32, #tpu.memory_space<vmem>>, vector<1x1x64x16xf32>
    %200 = vector.shape_cast %199 : vector<1x1x64x16xf32> to vector<64x16xf32>
    %cst_141 = arith.constant dense<0.000000e+00> : vector<16x16xf32>
    %201 = tpu.matmul %62, %200, %cst_141 {dimension_numbers = #tpu.dot_dimension_numbers<[1], [0], [0], [1], [0, 0, 1, 1], [], []>} : vector<16x64xf32>, vector<64x16xf32>, vector<16x16xf32> -> vector<16x16xf32>
    %c0_142 = arith.constant 0 : index
    %c3_143 = arith.constant 3 : index
    %c0_144 = arith.constant 0 : index
    %c0_145 = arith.constant 0 : index
    %202 = vector.load %arg9[%c0_142, %c3_143, %c0_144, %c0_145] : memref<3x4x1x16xf32, #tpu.memory_space<vmem>>, vector<1x1x1x16xf32>
    %203 = vector.shape_cast %202 : vector<1x1x1x16xf32> to vector<1x16xf32>
    %204 = vector.broadcast %203 : vector<1x16xf32> to vector<16x16xf32>
    %205 = arith.addf %201, %204 : vector<16x16xf32>
    %206 = vector.shape_cast %205 : vector<16x16xf32> to vector<2x8x16xf32>
    %c0_146 = arith.constant 0 : index
    %c3_147 = arith.constant 3 : index
    %c0_148 = arith.constant 0 : index
    %c0_149 = arith.constant 0 : index
    %207 = vector.load %arg10[%c0_146, %c3_147, %c0_148, %c0_149] : memref<3x4x64x16xf32, #tpu.memory_space<vmem>>, vector<1x1x64x16xf32>
    %208 = vector.shape_cast %207 : vector<1x1x64x16xf32> to vector<64x16xf32>
    %cst_150 = arith.constant dense<0.000000e+00> : vector<16x16xf32>
    %209 = tpu.matmul %62, %208, %cst_150 {dimension_numbers = #tpu.dot_dimension_numbers<[1], [0], [0], [1], [0, 0, 1, 1], [], []>} : vector<16x64xf32>, vector<64x16xf32>, vector<16x16xf32> -> vector<16x16xf32>
    %c0_151 = arith.constant 0 : index
    %c3_152 = arith.constant 3 : index
    %c0_153 = arith.constant 0 : index
    %c0_154 = arith.constant 0 : index
    %210 = vector.load %arg11[%c0_151, %c3_152, %c0_153, %c0_154] : memref<3x4x1x16xf32, #tpu.memory_space<vmem>>, vector<1x1x1x16xf32>
    %211 = vector.shape_cast %210 : vector<1x1x1x16xf32> to vector<1x16xf32>
    %212 = vector.broadcast %211 : vector<1x16xf32> to vector<16x16xf32>
    %213 = arith.addf %209, %212 : vector<16x16xf32>
    %214 = vector.shape_cast %213 : vector<16x16xf32> to vector<2x8x16xf32>
    %c0_155 = arith.constant 0 : index
    %c3_156 = arith.constant 3 : index
    %c0_157 = arith.constant 0 : index
    %c0_158 = arith.constant 0 : index
    %215 = vector.load %arg12[%c0_155, %c3_156, %c0_157, %c0_158] : memref<3x4x64x16xf32, #tpu.memory_space<vmem>>, vector<1x1x64x16xf32>
    %216 = vector.shape_cast %215 : vector<1x1x64x16xf32> to vector<64x16xf32>
    %cst_159 = arith.constant dense<0.000000e+00> : vector<16x16xf32>
    %217 = tpu.matmul %62, %216, %cst_159 {dimension_numbers = #tpu.dot_dimension_numbers<[1], [0], [0], [1], [0, 0, 1, 1], [], []>} : vector<16x64xf32>, vector<64x16xf32>, vector<16x16xf32> -> vector<16x16xf32>
    %c0_160 = arith.constant 0 : index
    %c3_161 = arith.constant 3 : index
    %c0_162 = arith.constant 0 : index
    %c0_163 = arith.constant 0 : index
    %218 = vector.load %arg13[%c0_160, %c3_161, %c0_162, %c0_163] : memref<3x4x1x16xf32, #tpu.memory_space<vmem>>, vector<1x1x1x16xf32>
    %219 = vector.shape_cast %218 : vector<1x1x1x16xf32> to vector<1x16xf32>
    %220 = vector.broadcast %219 : vector<1x16xf32> to vector<16x16xf32>
    %221 = arith.addf %217, %220 : vector<16x16xf32>
    %222 = vector.shape_cast %221 : vector<16x16xf32> to vector<2x8x16xf32>
    "tpu.trace_start"() <{level = 10 : i32, message = "bqd,bkd->bqk"}> : () -> ()
    %cst_164 = arith.constant dense<0.000000e+00> : vector<2x8x8xf32>
    %223 = tpu.matmul %206, %214, %cst_164 {dimension_numbers = #tpu.dot_dimension_numbers<[2], [2], [1], [1], [0, 0, 0, 1, 1, 1], [0], [0]>} : vector<2x8x16xf32>, vector<2x8x16xf32>, vector<2x8x8xf32> -> vector<2x8x8xf32>
    "tpu.trace_stop"() : () -> ()
    %cst_165 = arith.constant 2.500000e-01 : f32
    %224 = vector.broadcast %cst_165 : f32 to vector<2x8x8xf32>
    %225 = arith.mulf %223, %224 : vector<2x8x8xf32>
    %226 = vector.shape_cast %36 : vector<8x8xf32> to vector<1x8x8xf32>
    %227 = vector.broadcast %226 : vector<1x8x8xf32> to vector<2x8x8xf32>
    %228 = arith.addf %225, %227 : vector<2x8x8xf32>
    %cst_166 = arith.constant dense<0xFF800000> : vector<2x8xf32>
    %229 = vector.multi_reduction <maximumf>, %228, %cst_166 [2] : vector<2x8x8xf32> to vector<2x8xf32>
    %230 = vector.shape_cast %229 : vector<2x8xf32> to vector<2x8x1xf32>
    %231 = vector.broadcast %230 : vector<2x8x1xf32> to vector<2x8x8xf32>
    %232 = arith.subf %228, %231 : vector<2x8x8xf32>
    %233 = math.exp %232 : vector<2x8x8xf32>
    %cst_167 = arith.constant dense<0.000000e+00> : vector<2x8xf32>
    %234 = vector.multi_reduction <add>, %233, %cst_167 [2] : vector<2x8x8xf32> to vector<2x8xf32>
    %235 = vector.shape_cast %234 : vector<2x8xf32> to vector<2x8x1xf32>
    %236 = vector.broadcast %235 : vector<2x8x1xf32> to vector<2x8x8xf32>
    %237 = arith.divf %233, %236 : vector<2x8x8xf32>
    "tpu.trace_start"() <{level = 10 : i32, message = "bqk,bkd->bqd"}> : () -> ()
    %cst_168 = arith.constant dense<0.000000e+00> : vector<2x8x16xf32>
    %238 = tpu.matmul %237, %222, %cst_168 {dimension_numbers = #tpu.dot_dimension_numbers<[2], [1], [1], [2], [0, 0, 0, 1, 1, 2], [0], [0]>} : vector<2x8x8xf32>, vector<2x8x16xf32>, vector<2x8x16xf32> -> vector<2x8x16xf32>
    "tpu.trace_stop"() : () -> ()
    %239 = vector.shape_cast %238 : vector<2x8x16xf32> to vector<16x16xf32>
    %c0_169 = arith.constant 0 : index
    %c3_170 = arith.constant 3 : index
    %c0_171 = arith.constant 0 : index
    %c0_172 = arith.constant 0 : index
    %240 = vector.load %arg14[%c0_169, %c3_170, %c0_171, %c0_172] : memref<3x4x16x64xf32, #tpu.memory_space<vmem>>, vector<1x1x16x64xf32>
    %241 = vector.shape_cast %240 : vector<1x1x16x64xf32> to vector<16x64xf32>
    %cst_173 = arith.constant dense<0.000000e+00> : vector<16x64xf32>
    %242 = tpu.matmul %239, %241, %cst_173 {dimension_numbers = #tpu.dot_dimension_numbers<[1], [0], [0], [1], [0, 0, 1, 1], [], []>} : vector<16x16xf32>, vector<16x64xf32>, vector<16x64xf32> -> vector<16x64xf32>
    %243 = arith.addf %198, %242 : vector<16x64xf32>
    %244 = arith.addf %30, %243 : vector<16x64xf32>
    %c0_174 = arith.constant 0 : index
    %c0_175 = arith.constant 0 : index
    %c0_176 = arith.constant 0 : index
    %245 = vector.load %arg15[%c0_174, %c0_175, %c0_176] : memref<3x1x64xf32, #tpu.memory_space<vmem>>, vector<1x1x64xf32>
    %246 = vector.shape_cast %245 : vector<1x1x64xf32> to vector<1x64xf32>
    %247 = vector.broadcast %246 : vector<1x64xf32> to vector<16x64xf32>
    %248 = arith.addf %244, %247 : vector<16x64xf32>
    %c0_177 = arith.constant 0 : index
    %c0_178 = arith.constant 0 : index
    %c0_179 = arith.constant 0 : index
    %249 = vector.load %arg16[%c0_177, %c0_178, %c0_179] : memref<3x1x64xf32, #tpu.memory_space<vmem>>, vector<1x1x64xf32>
    %250 = vector.shape_cast %249 : vector<1x1x64xf32> to vector<1x64xf32>
    %c0_180 = arith.constant 0 : index
    %c0_181 = arith.constant 0 : index
    %c0_182 = arith.constant 0 : index
    %251 = vector.load %arg17[%c0_180, %c0_181, %c0_182] : memref<3x1x64xf32, #tpu.memory_space<vmem>>, vector<1x1x64xf32>
    %252 = vector.shape_cast %251 : vector<1x1x64xf32> to vector<1x64xf32>
    %cst_183 = arith.constant dense<0.000000e+00> : vector<16xf32>
    %253 = vector.multi_reduction <add>, %248, %cst_183 [1] : vector<16x64xf32> to vector<16xf32>
    %254 = vector.shape_cast %253 : vector<16xf32> to vector<16x1xf32>
    %cst_184 = arith.constant 6.400000e+01 : f32
    %255 = vector.broadcast %cst_184 : f32 to vector<16x1xf32>
    %256 = arith.divf %254, %255 : vector<16x1xf32>
    %257 = vector.broadcast %256 : vector<16x1xf32> to vector<16x64xf32>
    %258 = arith.subf %248, %257 : vector<16x64xf32>
    %259 = arith.mulf %258, %258 : vector<16x64xf32>
    %cst_185 = arith.constant dense<0.000000e+00> : vector<16xf32>
    %260 = vector.multi_reduction <add>, %259, %cst_185 [1] : vector<16x64xf32> to vector<16xf32>
    %261 = vector.shape_cast %260 : vector<16xf32> to vector<16x1xf32>
    %cst_186 = arith.constant 6.400000e+01 : f32
    %262 = vector.broadcast %cst_186 : f32 to vector<16x1xf32>
    %263 = arith.divf %261, %262 : vector<16x1xf32>
    %264 = vector.broadcast %256 : vector<16x1xf32> to vector<16x64xf32>
    %265 = arith.subf %248, %264 : vector<16x64xf32>
    %cst_187 = arith.constant 9.99999974E-6 : f32
    %266 = vector.broadcast %cst_187 : f32 to vector<16x1xf32>
    %267 = arith.addf %263, %266 : vector<16x1xf32>
    %268 = math.rsqrt %267 : vector<16x1xf32>
    %269 = vector.broadcast %268 : vector<16x1xf32> to vector<16x64xf32>
    %270 = arith.mulf %265, %269 : vector<16x64xf32>
    %271 = vector.broadcast %250 : vector<1x64xf32> to vector<16x64xf32>
    %272 = arith.mulf %270, %271 : vector<16x64xf32>
    %273 = vector.broadcast %252 : vector<1x64xf32> to vector<16x64xf32>
    %274 = arith.addf %272, %273 : vector<16x64xf32>
    %c0_188 = arith.constant 0 : index
    %c0_189 = arith.constant 0 : index
    %c0_190 = arith.constant 0 : index
    %275 = vector.load %arg18[%c0_188, %c0_189, %c0_190] : memref<3x64x256xf32, #tpu.memory_space<vmem>>, vector<1x64x256xf32>
    %276 = vector.shape_cast %275 : vector<1x64x256xf32> to vector<64x256xf32>
    %cst_191 = arith.constant dense<0.000000e+00> : vector<16x256xf32>
    %277 = tpu.matmul %274, %276, %cst_191 {dimension_numbers = #tpu.dot_dimension_numbers<[1], [0], [0], [1], [0, 0, 1, 1], [], []>} : vector<16x64xf32>, vector<64x256xf32>, vector<16x256xf32> -> vector<16x256xf32>
    %c0_192 = arith.constant 0 : index
    %c0_193 = arith.constant 0 : index
    %c0_194 = arith.constant 0 : index
    %278 = vector.load %arg19[%c0_192, %c0_193, %c0_194] : memref<3x1x256xf32, #tpu.memory_space<vmem>>, vector<1x1x256xf32>
    %279 = vector.shape_cast %278 : vector<1x1x256xf32> to vector<1x256xf32>
    %280 = vector.broadcast %279 : vector<1x256xf32> to vector<16x256xf32>
    %281 = arith.addf %277, %280 : vector<16x256xf32>
    %cst_195 = arith.constant 5.000000e-01 : f32
    %282 = vector.broadcast %cst_195 : f32 to vector<16x256xf32>
    %283 = arith.mulf %282, %281 : vector<16x256xf32>
    %cst_196 = arith.constant 4.471500e-02 : f32
    %284 = vector.broadcast %cst_196 : f32 to vector<16x256xf32>
    %285 = arith.mulf %284, %281 : vector<16x256xf32>
    %286 = arith.mulf %285, %281 : vector<16x256xf32>
    %287 = arith.mulf %286, %281 : vector<16x256xf32>
    %288 = arith.addf %281, %287 : vector<16x256xf32>
    %cst_197 = arith.constant 0.797884583 : f32
    %289 = vector.broadcast %cst_197 : f32 to vector<16x256xf32>
    %290 = arith.mulf %289, %288 : vector<16x256xf32>
    %291 = math.tanh %290 : vector<16x256xf32>
    %cst_198 = arith.constant 1.000000e+00 : f32
    %292 = vector.broadcast %cst_198 : f32 to vector<16x256xf32>
    %293 = arith.addf %292, %291 : vector<16x256xf32>
    %294 = arith.mulf %283, %293 : vector<16x256xf32>
    %c0_199 = arith.constant 0 : index
    %c0_200 = arith.constant 0 : index
    %c0_201 = arith.constant 0 : index
    %295 = vector.load %arg20[%c0_199, %c0_200, %c0_201] : memref<3x256x64xf32, #tpu.memory_space<vmem>>, vector<1x256x64xf32>
    %296 = vector.shape_cast %295 : vector<1x256x64xf32> to vector<256x64xf32>
    %cst_202 = arith.constant dense<0.000000e+00> : vector<16x64xf32>
    %297 = tpu.matmul %294, %296, %cst_202 {dimension_numbers = #tpu.dot_dimension_numbers<[1], [0], [0], [1], [0, 0, 1, 1], [], []>} : vector<16x256xf32>, vector<256x64xf32>, vector<16x64xf32> -> vector<16x64xf32>
    %c0_203 = arith.constant 0 : index
    %c0_204 = arith.constant 0 : index
    %c0_205 = arith.constant 0 : index
    %298 = vector.load %arg21[%c0_203, %c0_204, %c0_205] : memref<3x1x64xf32, #tpu.memory_space<vmem>>, vector<1x1x64xf32>
    %299 = vector.shape_cast %298 : vector<1x1x64xf32> to vector<1x64xf32>
    %300 = vector.broadcast %299 : vector<1x64xf32> to vector<16x64xf32>
    %301 = arith.addf %297, %300 : vector<16x64xf32>
    %302 = arith.addf %248, %301 : vector<16x64xf32>
    %c1_206 = arith.constant 1 : index
    %c0_207 = arith.constant 0 : index
    %c0_208 = arith.constant 0 : index
    %303 = vector.load %arg6[%c1_206, %c0_207, %c0_208] : memref<3x1x64xf32, #tpu.memory_space<vmem>>, vector<1x1x64xf32>
    %304 = vector.shape_cast %303 : vector<1x1x64xf32> to vector<1x64xf32>
    %c1_209 = arith.constant 1 : index
    %c0_210 = arith.constant 0 : index
    %c0_211 = arith.constant 0 : index
    %305 = vector.load %arg7[%c1_209, %c0_210, %c0_211] : memref<3x1x64xf32, #tpu.memory_space<vmem>>, vector<1x1x64xf32>
    %306 = vector.shape_cast %305 : vector<1x1x64xf32> to vector<1x64xf32>
    %cst_212 = arith.constant dense<0.000000e+00> : vector<16xf32>
    %307 = vector.multi_reduction <add>, %302, %cst_212 [1] : vector<16x64xf32> to vector<16xf32>
    %308 = vector.shape_cast %307 : vector<16xf32> to vector<16x1xf32>
    %cst_213 = arith.constant 6.400000e+01 : f32
    %309 = vector.broadcast %cst_213 : f32 to vector<16x1xf32>
    %310 = arith.divf %308, %309 : vector<16x1xf32>
    %311 = vector.broadcast %310 : vector<16x1xf32> to vector<16x64xf32>
    %312 = arith.subf %302, %311 : vector<16x64xf32>
    %313 = arith.mulf %312, %312 : vector<16x64xf32>
    %cst_214 = arith.constant dense<0.000000e+00> : vector<16xf32>
    %314 = vector.multi_reduction <add>, %313, %cst_214 [1] : vector<16x64xf32> to vector<16xf32>
    %315 = vector.shape_cast %314 : vector<16xf32> to vector<16x1xf32>
    %cst_215 = arith.constant 6.400000e+01 : f32
    %316 = vector.broadcast %cst_215 : f32 to vector<16x1xf32>
    %317 = arith.divf %315, %316 : vector<16x1xf32>
    %318 = vector.broadcast %310 : vector<16x1xf32> to vector<16x64xf32>
    %319 = arith.subf %302, %318 : vector<16x64xf32>
    %cst_216 = arith.constant 9.99999974E-6 : f32
    %320 = vector.broadcast %cst_216 : f32 to vector<16x1xf32>
    %321 = arith.addf %317, %320 : vector<16x1xf32>
    %322 = math.rsqrt %321 : vector<16x1xf32>
    %323 = vector.broadcast %322 : vector<16x1xf32> to vector<16x64xf32>
    %324 = arith.mulf %319, %323 : vector<16x64xf32>
    %325 = vector.broadcast %304 : vector<1x64xf32> to vector<16x64xf32>
    %326 = arith.mulf %324, %325 : vector<16x64xf32>
    %327 = vector.broadcast %306 : vector<1x64xf32> to vector<16x64xf32>
    %328 = arith.addf %326, %327 : vector<16x64xf32>
    %cst_217 = arith.constant 0.000000e+00 : f32
    %329 = vector.broadcast %cst_217 : f32 to vector<16x64xf32>
    %c1_218 = arith.constant 1 : index
    %c0_219 = arith.constant 0 : index
    %c0_220 = arith.constant 0 : index
    %c0_221 = arith.constant 0 : index
    %330 = vector.load %arg8[%c1_218, %c0_219, %c0_220, %c0_221] : memref<3x4x64x16xf32, #tpu.memory_space<vmem>>, vector<1x1x64x16xf32>
    %331 = vector.shape_cast %330 : vector<1x1x64x16xf32> to vector<64x16xf32>
    %cst_222 = arith.constant dense<0.000000e+00> : vector<16x16xf32>
    %332 = tpu.matmul %328, %331, %cst_222 {dimension_numbers = #tpu.dot_dimension_numbers<[1], [0], [0], [1], [0, 0, 1, 1], [], []>} : vector<16x64xf32>, vector<64x16xf32>, vector<16x16xf32> -> vector<16x16xf32>
    %c1_223 = arith.constant 1 : index
    %c0_224 = arith.constant 0 : index
    %c0_225 = arith.constant 0 : index
    %c0_226 = arith.constant 0 : index
    %333 = vector.load %arg9[%c1_223, %c0_224, %c0_225, %c0_226] : memref<3x4x1x16xf32, #tpu.memory_space<vmem>>, vector<1x1x1x16xf32>
    %334 = vector.shape_cast %333 : vector<1x1x1x16xf32> to vector<1x16xf32>
    %335 = vector.broadcast %334 : vector<1x16xf32> to vector<16x16xf32>
    %336 = arith.addf %332, %335 : vector<16x16xf32>
    %337 = vector.shape_cast %336 : vector<16x16xf32> to vector<2x8x16xf32>
    %c1_227 = arith.constant 1 : index
    %c0_228 = arith.constant 0 : index
    %c0_229 = arith.constant 0 : index
    %c0_230 = arith.constant 0 : index
    %338 = vector.load %arg10[%c1_227, %c0_228, %c0_229, %c0_230] : memref<3x4x64x16xf32, #tpu.memory_space<vmem>>, vector<1x1x64x16xf32>
    %339 = vector.shape_cast %338 : vector<1x1x64x16xf32> to vector<64x16xf32>
    %cst_231 = arith.constant dense<0.000000e+00> : vector<16x16xf32>
    %340 = tpu.matmul %328, %339, %cst_231 {dimension_numbers = #tpu.dot_dimension_numbers<[1], [0], [0], [1], [0, 0, 1, 1], [], []>} : vector<16x64xf32>, vector<64x16xf32>, vector<16x16xf32> -> vector<16x16xf32>
    %c1_232 = arith.constant 1 : index
    %c0_233 = arith.constant 0 : index
    %c0_234 = arith.constant 0 : index
    %c0_235 = arith.constant 0 : index
    %341 = vector.load %arg11[%c1_232, %c0_233, %c0_234, %c0_235] : memref<3x4x1x16xf32, #tpu.memory_space<vmem>>, vector<1x1x1x16xf32>
    %342 = vector.shape_cast %341 : vector<1x1x1x16xf32> to vector<1x16xf32>
    %343 = vector.broadcast %342 : vector<1x16xf32> to vector<16x16xf32>
    %344 = arith.addf %340, %343 : vector<16x16xf32>
    %345 = vector.shape_cast %344 : vector<16x16xf32> to vector<2x8x16xf32>
    %c1_236 = arith.constant 1 : index
    %c0_237 = arith.constant 0 : index
    %c0_238 = arith.constant 0 : index
    %c0_239 = arith.constant 0 : index
    %346 = vector.load %arg12[%c1_236, %c0_237, %c0_238, %c0_239] : memref<3x4x64x16xf32, #tpu.memory_space<vmem>>, vector<1x1x64x16xf32>
    %347 = vector.shape_cast %346 : vector<1x1x64x16xf32> to vector<64x16xf32>
    %cst_240 = arith.constant dense<0.000000e+00> : vector<16x16xf32>
    %348 = tpu.matmul %328, %347, %cst_240 {dimension_numbers = #tpu.dot_dimension_numbers<[1], [0], [0], [1], [0, 0, 1, 1], [], []>} : vector<16x64xf32>, vector<64x16xf32>, vector<16x16xf32> -> vector<16x16xf32>
    %c1_241 = arith.constant 1 : index
    %c0_242 = arith.constant 0 : index
    %c0_243 = arith.constant 0 : index
    %c0_244 = arith.constant 0 : index
    %349 = vector.load %arg13[%c1_241, %c0_242, %c0_243, %c0_244] : memref<3x4x1x16xf32, #tpu.memory_space<vmem>>, vector<1x1x1x16xf32>
    %350 = vector.shape_cast %349 : vector<1x1x1x16xf32> to vector<1x16xf32>
    %351 = vector.broadcast %350 : vector<1x16xf32> to vector<16x16xf32>
    %352 = arith.addf %348, %351 : vector<16x16xf32>
    %353 = vector.shape_cast %352 : vector<16x16xf32> to vector<2x8x16xf32>
    "tpu.trace_start"() <{level = 10 : i32, message = "bqd,bkd->bqk"}> : () -> ()
    %cst_245 = arith.constant dense<0.000000e+00> : vector<2x8x8xf32>
    %354 = tpu.matmul %337, %345, %cst_245 {dimension_numbers = #tpu.dot_dimension_numbers<[2], [2], [1], [1], [0, 0, 0, 1, 1, 1], [0], [0]>} : vector<2x8x16xf32>, vector<2x8x16xf32>, vector<2x8x8xf32> -> vector<2x8x8xf32>
    "tpu.trace_stop"() : () -> ()
    %cst_246 = arith.constant 2.500000e-01 : f32
    %355 = vector.broadcast %cst_246 : f32 to vector<2x8x8xf32>
    %356 = arith.mulf %354, %355 : vector<2x8x8xf32>
    %357 = vector.shape_cast %36 : vector<8x8xf32> to vector<1x8x8xf32>
    %358 = vector.broadcast %357 : vector<1x8x8xf32> to vector<2x8x8xf32>
    %359 = arith.addf %356, %358 : vector<2x8x8xf32>
    %cst_247 = arith.constant dense<0xFF800000> : vector<2x8xf32>
    %360 = vector.multi_reduction <maximumf>, %359, %cst_247 [2] : vector<2x8x8xf32> to vector<2x8xf32>
    %361 = vector.shape_cast %360 : vector<2x8xf32> to vector<2x8x1xf32>
    %362 = vector.broadcast %361 : vector<2x8x1xf32> to vector<2x8x8xf32>
    %363 = arith.subf %359, %362 : vector<2x8x8xf32>
    %364 = math.exp %363 : vector<2x8x8xf32>
    %cst_248 = arith.constant dense<0.000000e+00> : vector<2x8xf32>
    %365 = vector.multi_reduction <add>, %364, %cst_248 [2] : vector<2x8x8xf32> to vector<2x8xf32>
    %366 = vector.shape_cast %365 : vector<2x8xf32> to vector<2x8x1xf32>
    %367 = vector.broadcast %366 : vector<2x8x1xf32> to vector<2x8x8xf32>
    %368 = arith.divf %364, %367 : vector<2x8x8xf32>
    "tpu.trace_start"() <{level = 10 : i32, message = "bqk,bkd->bqd"}> : () -> ()
    %cst_249 = arith.constant dense<0.000000e+00> : vector<2x8x16xf32>
    %369 = tpu.matmul %368, %353, %cst_249 {dimension_numbers = #tpu.dot_dimension_numbers<[2], [1], [1], [2], [0, 0, 0, 1, 1, 2], [0], [0]>} : vector<2x8x8xf32>, vector<2x8x16xf32>, vector<2x8x16xf32> -> vector<2x8x16xf32>
    "tpu.trace_stop"() : () -> ()
    %370 = vector.shape_cast %369 : vector<2x8x16xf32> to vector<16x16xf32>
    %c1_250 = arith.constant 1 : index
    %c0_251 = arith.constant 0 : index
    %c0_252 = arith.constant 0 : index
    %c0_253 = arith.constant 0 : index
    %371 = vector.load %arg14[%c1_250, %c0_251, %c0_252, %c0_253] : memref<3x4x16x64xf32, #tpu.memory_space<vmem>>, vector<1x1x16x64xf32>
    %372 = vector.shape_cast %371 : vector<1x1x16x64xf32> to vector<16x64xf32>
    %cst_254 = arith.constant dense<0.000000e+00> : vector<16x64xf32>
    %373 = tpu.matmul %370, %372, %cst_254 {dimension_numbers = #tpu.dot_dimension_numbers<[1], [0], [0], [1], [0, 0, 1, 1], [], []>} : vector<16x16xf32>, vector<16x64xf32>, vector<16x64xf32> -> vector<16x64xf32>
    %374 = arith.addf %329, %373 : vector<16x64xf32>
    %c1_255 = arith.constant 1 : index
    %c1_256 = arith.constant 1 : index
    %c0_257 = arith.constant 0 : index
    %c0_258 = arith.constant 0 : index
    %375 = vector.load %arg8[%c1_255, %c1_256, %c0_257, %c0_258] : memref<3x4x64x16xf32, #tpu.memory_space<vmem>>, vector<1x1x64x16xf32>
    %376 = vector.shape_cast %375 : vector<1x1x64x16xf32> to vector<64x16xf32>
    %cst_259 = arith.constant dense<0.000000e+00> : vector<16x16xf32>
    %377 = tpu.matmul %328, %376, %cst_259 {dimension_numbers = #tpu.dot_dimension_numbers<[1], [0], [0], [1], [0, 0, 1, 1], [], []>} : vector<16x64xf32>, vector<64x16xf32>, vector<16x16xf32> -> vector<16x16xf32>
    %c1_260 = arith.constant 1 : index
    %c1_261 = arith.constant 1 : index
    %c0_262 = arith.constant 0 : index
    %c0_263 = arith.constant 0 : index
    %378 = vector.load %arg9[%c1_260, %c1_261, %c0_262, %c0_263] : memref<3x4x1x16xf32, #tpu.memory_space<vmem>>, vector<1x1x1x16xf32>
    %379 = vector.shape_cast %378 : vector<1x1x1x16xf32> to vector<1x16xf32>
    %380 = vector.broadcast %379 : vector<1x16xf32> to vector<16x16xf32>
    %381 = arith.addf %377, %380 : vector<16x16xf32>
    %382 = vector.shape_cast %381 : vector<16x16xf32> to vector<2x8x16xf32>
    %c1_264 = arith.constant 1 : index
    %c1_265 = arith.constant 1 : index
    %c0_266 = arith.constant 0 : index
    %c0_267 = arith.constant 0 : index
    %383 = vector.load %arg10[%c1_264, %c1_265, %c0_266, %c0_267] : memref<3x4x64x16xf32, #tpu.memory_space<vmem>>, vector<1x1x64x16xf32>
    %384 = vector.shape_cast %383 : vector<1x1x64x16xf32> to vector<64x16xf32>
    %cst_268 = arith.constant dense<0.000000e+00> : vector<16x16xf32>
    %385 = tpu.matmul %328, %384, %cst_268 {dimension_numbers = #tpu.dot_dimension_numbers<[1], [0], [0], [1], [0, 0, 1, 1], [], []>} : vector<16x64xf32>, vector<64x16xf32>, vector<16x16xf32> -> vector<16x16xf32>
    %c1_269 = arith.constant 1 : index
    %c1_270 = arith.constant 1 : index
    %c0_271 = arith.constant 0 : index
    %c0_272 = arith.constant 0 : index
    %386 = vector.load %arg11[%c1_269, %c1_270, %c0_271, %c0_272] : memref<3x4x1x16xf32, #tpu.memory_space<vmem>>, vector<1x1x1x16xf32>
    %387 = vector.shape_cast %386 : vector<1x1x1x16xf32> to vector<1x16xf32>
    %388 = vector.broadcast %387 : vector<1x16xf32> to vector<16x16xf32>
    %389 = arith.addf %385, %388 : vector<16x16xf32>
    %390 = vector.shape_cast %389 : vector<16x16xf32> to vector<2x8x16xf32>
    %c1_273 = arith.constant 1 : index
    %c1_274 = arith.constant 1 : index
    %c0_275 = arith.constant 0 : index
    %c0_276 = arith.constant 0 : index
    %391 = vector.load %arg12[%c1_273, %c1_274, %c0_275, %c0_276] : memref<3x4x64x16xf32, #tpu.memory_space<vmem>>, vector<1x1x64x16xf32>
    %392 = vector.shape_cast %391 : vector<1x1x64x16xf32> to vector<64x16xf32>
    %cst_277 = arith.constant dense<0.000000e+00> : vector<16x16xf32>
    %393 = tpu.matmul %328, %392, %cst_277 {dimension_numbers = #tpu.dot_dimension_numbers<[1], [0], [0], [1], [0, 0, 1, 1], [], []>} : vector<16x64xf32>, vector<64x16xf32>, vector<16x16xf32> -> vector<16x16xf32>
    %c1_278 = arith.constant 1 : index
    %c1_279 = arith.constant 1 : index
    %c0_280 = arith.constant 0 : index
    %c0_281 = arith.constant 0 : index
    %394 = vector.load %arg13[%c1_278, %c1_279, %c0_280, %c0_281] : memref<3x4x1x16xf32, #tpu.memory_space<vmem>>, vector<1x1x1x16xf32>
    %395 = vector.shape_cast %394 : vector<1x1x1x16xf32> to vector<1x16xf32>
    %396 = vector.broadcast %395 : vector<1x16xf32> to vector<16x16xf32>
    %397 = arith.addf %393, %396 : vector<16x16xf32>
    %398 = vector.shape_cast %397 : vector<16x16xf32> to vector<2x8x16xf32>
    "tpu.trace_start"() <{level = 10 : i32, message = "bqd,bkd->bqk"}> : () -> ()
    %cst_282 = arith.constant dense<0.000000e+00> : vector<2x8x8xf32>
    %399 = tpu.matmul %382, %390, %cst_282 {dimension_numbers = #tpu.dot_dimension_numbers<[2], [2], [1], [1], [0, 0, 0, 1, 1, 1], [0], [0]>} : vector<2x8x16xf32>, vector<2x8x16xf32>, vector<2x8x8xf32> -> vector<2x8x8xf32>
    "tpu.trace_stop"() : () -> ()
    %cst_283 = arith.constant 2.500000e-01 : f32
    %400 = vector.broadcast %cst_283 : f32 to vector<2x8x8xf32>
    %401 = arith.mulf %399, %400 : vector<2x8x8xf32>
    %402 = vector.shape_cast %36 : vector<8x8xf32> to vector<1x8x8xf32>
    %403 = vector.broadcast %402 : vector<1x8x8xf32> to vector<2x8x8xf32>
    %404 = arith.addf %401, %403 : vector<2x8x8xf32>
    %cst_284 = arith.constant dense<0xFF800000> : vector<2x8xf32>
    %405 = vector.multi_reduction <maximumf>, %404, %cst_284 [2] : vector<2x8x8xf32> to vector<2x8xf32>
    %406 = vector.shape_cast %405 : vector<2x8xf32> to vector<2x8x1xf32>
    %407 = vector.broadcast %406 : vector<2x8x1xf32> to vector<2x8x8xf32>
    %408 = arith.subf %404, %407 : vector<2x8x8xf32>
    %409 = math.exp %408 : vector<2x8x8xf32>
    %cst_285 = arith.constant dense<0.000000e+00> : vector<2x8xf32>
    %410 = vector.multi_reduction <add>, %409, %cst_285 [2] : vector<2x8x8xf32> to vector<2x8xf32>
    %411 = vector.shape_cast %410 : vector<2x8xf32> to vector<2x8x1xf32>
    %412 = vector.broadcast %411 : vector<2x8x1xf32> to vector<2x8x8xf32>
    %413 = arith.divf %409, %412 : vector<2x8x8xf32>
    "tpu.trace_start"() <{level = 10 : i32, message = "bqk,bkd->bqd"}> : () -> ()
    %cst_286 = arith.constant dense<0.000000e+00> : vector<2x8x16xf32>
    %414 = tpu.matmul %413, %398, %cst_286 {dimension_numbers = #tpu.dot_dimension_numbers<[2], [1], [1], [2], [0, 0, 0, 1, 1, 2], [0], [0]>} : vector<2x8x8xf32>, vector<2x8x16xf32>, vector<2x8x16xf32> -> vector<2x8x16xf32>
    "tpu.trace_stop"() : () -> ()
    %415 = vector.shape_cast %414 : vector<2x8x16xf32> to vector<16x16xf32>
    %c1_287 = arith.constant 1 : index
    %c1_288 = arith.constant 1 : index
    %c0_289 = arith.constant 0 : index
    %c0_290 = arith.constant 0 : index
    %416 = vector.load %arg14[%c1_287, %c1_288, %c0_289, %c0_290] : memref<3x4x16x64xf32, #tpu.memory_space<vmem>>, vector<1x1x16x64xf32>
    %417 = vector.shape_cast %416 : vector<1x1x16x64xf32> to vector<16x64xf32>
    %cst_291 = arith.constant dense<0.000000e+00> : vector<16x64xf32>
    %418 = tpu.matmul %415, %417, %cst_291 {dimension_numbers = #tpu.dot_dimension_numbers<[1], [0], [0], [1], [0, 0, 1, 1], [], []>} : vector<16x16xf32>, vector<16x64xf32>, vector<16x64xf32> -> vector<16x64xf32>
    %419 = arith.addf %374, %418 : vector<16x64xf32>
    %c1_292 = arith.constant 1 : index
    %c2_293 = arith.constant 2 : index
    %c0_294 = arith.constant 0 : index
    %c0_295 = arith.constant 0 : index
    %420 = vector.load %arg8[%c1_292, %c2_293, %c0_294, %c0_295] : memref<3x4x64x16xf32, #tpu.memory_space<vmem>>, vector<1x1x64x16xf32>
    %421 = vector.shape_cast %420 : vector<1x1x64x16xf32> to vector<64x16xf32>
    %cst_296 = arith.constant dense<0.000000e+00> : vector<16x16xf32>
    %422 = tpu.matmul %328, %421, %cst_296 {dimension_numbers = #tpu.dot_dimension_numbers<[1], [0], [0], [1], [0, 0, 1, 1], [], []>} : vector<16x64xf32>, vector<64x16xf32>, vector<16x16xf32> -> vector<16x16xf32>
    %c1_297 = arith.constant 1 : index
    %c2_298 = arith.constant 2 : index
    %c0_299 = arith.constant 0 : index
    %c0_300 = arith.constant 0 : index
    %423 = vector.load %arg9[%c1_297, %c2_298, %c0_299, %c0_300] : memref<3x4x1x16xf32, #tpu.memory_space<vmem>>, vector<1x1x1x16xf32>
    %424 = vector.shape_cast %423 : vector<1x1x1x16xf32> to vector<1x16xf32>
    %425 = vector.broadcast %424 : vector<1x16xf32> to vector<16x16xf32>
    %426 = arith.addf %422, %425 : vector<16x16xf32>
    %427 = vector.shape_cast %426 : vector<16x16xf32> to vector<2x8x16xf32>
    %c1_301 = arith.constant 1 : index
    %c2_302 = arith.constant 2 : index
    %c0_303 = arith.constant 0 : index
    %c0_304 = arith.constant 0 : index
    %428 = vector.load %arg10[%c1_301, %c2_302, %c0_303, %c0_304] : memref<3x4x64x16xf32, #tpu.memory_space<vmem>>, vector<1x1x64x16xf32>
    %429 = vector.shape_cast %428 : vector<1x1x64x16xf32> to vector<64x16xf32>
    %cst_305 = arith.constant dense<0.000000e+00> : vector<16x16xf32>
    %430 = tpu.matmul %328, %429, %cst_305 {dimension_numbers = #tpu.dot_dimension_numbers<[1], [0], [0], [1], [0, 0, 1, 1], [], []>} : vector<16x64xf32>, vector<64x16xf32>, vector<16x16xf32> -> vector<16x16xf32>
    %c1_306 = arith.constant 1 : index
    %c2_307 = arith.constant 2 : index
    %c0_308 = arith.constant 0 : index
    %c0_309 = arith.constant 0 : index
    %431 = vector.load %arg11[%c1_306, %c2_307, %c0_308, %c0_309] : memref<3x4x1x16xf32, #tpu.memory_space<vmem>>, vector<1x1x1x16xf32>
    %432 = vector.shape_cast %431 : vector<1x1x1x16xf32> to vector<1x16xf32>
    %433 = vector.broadcast %432 : vector<1x16xf32> to vector<16x16xf32>
    %434 = arith.addf %430, %433 : vector<16x16xf32>
    %435 = vector.shape_cast %434 : vector<16x16xf32> to vector<2x8x16xf32>
    %c1_310 = arith.constant 1 : index
    %c2_311 = arith.constant 2 : index
    %c0_312 = arith.constant 0 : index
    %c0_313 = arith.constant 0 : index
    %436 = vector.load %arg12[%c1_310, %c2_311, %c0_312, %c0_313] : memref<3x4x64x16xf32, #tpu.memory_space<vmem>>, vector<1x1x64x16xf32>
    %437 = vector.shape_cast %436 : vector<1x1x64x16xf32> to vector<64x16xf32>
    %cst_314 = arith.constant dense<0.000000e+00> : vector<16x16xf32>
    %438 = tpu.matmul %328, %437, %cst_314 {dimension_numbers = #tpu.dot_dimension_numbers<[1], [0], [0], [1], [0, 0, 1, 1], [], []>} : vector<16x64xf32>, vector<64x16xf32>, vector<16x16xf32> -> vector<16x16xf32>
    %c1_315 = arith.constant 1 : index
    %c2_316 = arith.constant 2 : index
    %c0_317 = arith.constant 0 : index
    %c0_318 = arith.constant 0 : index
    %439 = vector.load %arg13[%c1_315, %c2_316, %c0_317, %c0_318] : memref<3x4x1x16xf32, #tpu.memory_space<vmem>>, vector<1x1x1x16xf32>
    %440 = vector.shape_cast %439 : vector<1x1x1x16xf32> to vector<1x16xf32>
    %441 = vector.broadcast %440 : vector<1x16xf32> to vector<16x16xf32>
    %442 = arith.addf %438, %441 : vector<16x16xf32>
    %443 = vector.shape_cast %442 : vector<16x16xf32> to vector<2x8x16xf32>
    "tpu.trace_start"() <{level = 10 : i32, message = "bqd,bkd->bqk"}> : () -> ()
    %cst_319 = arith.constant dense<0.000000e+00> : vector<2x8x8xf32>
    %444 = tpu.matmul %427, %435, %cst_319 {dimension_numbers = #tpu.dot_dimension_numbers<[2], [2], [1], [1], [0, 0, 0, 1, 1, 1], [0], [0]>} : vector<2x8x16xf32>, vector<2x8x16xf32>, vector<2x8x8xf32> -> vector<2x8x8xf32>
    "tpu.trace_stop"() : () -> ()
    %cst_320 = arith.constant 2.500000e-01 : f32
    %445 = vector.broadcast %cst_320 : f32 to vector<2x8x8xf32>
    %446 = arith.mulf %444, %445 : vector<2x8x8xf32>
    %447 = vector.shape_cast %36 : vector<8x8xf32> to vector<1x8x8xf32>
    %448 = vector.broadcast %447 : vector<1x8x8xf32> to vector<2x8x8xf32>
    %449 = arith.addf %446, %448 : vector<2x8x8xf32>
    %cst_321 = arith.constant dense<0xFF800000> : vector<2x8xf32>
    %450 = vector.multi_reduction <maximumf>, %449, %cst_321 [2] : vector<2x8x8xf32> to vector<2x8xf32>
    %451 = vector.shape_cast %450 : vector<2x8xf32> to vector<2x8x1xf32>
    %452 = vector.broadcast %451 : vector<2x8x1xf32> to vector<2x8x8xf32>
    %453 = arith.subf %449, %452 : vector<2x8x8xf32>
    %454 = math.exp %453 : vector<2x8x8xf32>
    %cst_322 = arith.constant dense<0.000000e+00> : vector<2x8xf32>
    %455 = vector.multi_reduction <add>, %454, %cst_322 [2] : vector<2x8x8xf32> to vector<2x8xf32>
    %456 = vector.shape_cast %455 : vector<2x8xf32> to vector<2x8x1xf32>
    %457 = vector.broadcast %456 : vector<2x8x1xf32> to vector<2x8x8xf32>
    %458 = arith.divf %454, %457 : vector<2x8x8xf32>
    "tpu.trace_start"() <{level = 10 : i32, message = "bqk,bkd->bqd"}> : () -> ()
    %cst_323 = arith.constant dense<0.000000e+00> : vector<2x8x16xf32>
    %459 = tpu.matmul %458, %443, %cst_323 {dimension_numbers = #tpu.dot_dimension_numbers<[2], [1], [1], [2], [0, 0, 0, 1, 1, 2], [0], [0]>} : vector<2x8x8xf32>, vector<2x8x16xf32>, vector<2x8x16xf32> -> vector<2x8x16xf32>
    "tpu.trace_stop"() : () -> ()
    %460 = vector.shape_cast %459 : vector<2x8x16xf32> to vector<16x16xf32>
    %c1_324 = arith.constant 1 : index
    %c2_325 = arith.constant 2 : index
    %c0_326 = arith.constant 0 : index
    %c0_327 = arith.constant 0 : index
    %461 = vector.load %arg14[%c1_324, %c2_325, %c0_326, %c0_327] : memref<3x4x16x64xf32, #tpu.memory_space<vmem>>, vector<1x1x16x64xf32>
    %462 = vector.shape_cast %461 : vector<1x1x16x64xf32> to vector<16x64xf32>
    %cst_328 = arith.constant dense<0.000000e+00> : vector<16x64xf32>
    %463 = tpu.matmul %460, %462, %cst_328 {dimension_numbers = #tpu.dot_dimension_numbers<[1], [0], [0], [1], [0, 0, 1, 1], [], []>} : vector<16x16xf32>, vector<16x64xf32>, vector<16x64xf32> -> vector<16x64xf32>
    %464 = arith.addf %419, %463 : vector<16x64xf32>
    %c1_329 = arith.constant 1 : index
    %c3_330 = arith.constant 3 : index
    %c0_331 = arith.constant 0 : index
    %c0_332 = arith.constant 0 : index
    %465 = vector.load %arg8[%c1_329, %c3_330, %c0_331, %c0_332] : memref<3x4x64x16xf32, #tpu.memory_space<vmem>>, vector<1x1x64x16xf32>
    %466 = vector.shape_cast %465 : vector<1x1x64x16xf32> to vector<64x16xf32>
    %cst_333 = arith.constant dense<0.000000e+00> : vector<16x16xf32>
    %467 = tpu.matmul %328, %466, %cst_333 {dimension_numbers = #tpu.dot_dimension_numbers<[1], [0], [0], [1], [0, 0, 1, 1], [], []>} : vector<16x64xf32>, vector<64x16xf32>, vector<16x16xf32> -> vector<16x16xf32>
    %c1_334 = arith.constant 1 : index
    %c3_335 = arith.constant 3 : index
    %c0_336 = arith.constant 0 : index
    %c0_337 = arith.constant 0 : index
    %468 = vector.load %arg9[%c1_334, %c3_335, %c0_336, %c0_337] : memref<3x4x1x16xf32, #tpu.memory_space<vmem>>, vector<1x1x1x16xf32>
    %469 = vector.shape_cast %468 : vector<1x1x1x16xf32> to vector<1x16xf32>
    %470 = vector.broadcast %469 : vector<1x16xf32> to vector<16x16xf32>
    %471 = arith.addf %467, %470 : vector<16x16xf32>
    %472 = vector.shape_cast %471 : vector<16x16xf32> to vector<2x8x16xf32>
    %c1_338 = arith.constant 1 : index
    %c3_339 = arith.constant 3 : index
    %c0_340 = arith.constant 0 : index
    %c0_341 = arith.constant 0 : index
    %473 = vector.load %arg10[%c1_338, %c3_339, %c0_340, %c0_341] : memref<3x4x64x16xf32, #tpu.memory_space<vmem>>, vector<1x1x64x16xf32>
    %474 = vector.shape_cast %473 : vector<1x1x64x16xf32> to vector<64x16xf32>
    %cst_342 = arith.constant dense<0.000000e+00> : vector<16x16xf32>
    %475 = tpu.matmul %328, %474, %cst_342 {dimension_numbers = #tpu.dot_dimension_numbers<[1], [0], [0], [1], [0, 0, 1, 1], [], []>} : vector<16x64xf32>, vector<64x16xf32>, vector<16x16xf32> -> vector<16x16xf32>
    %c1_343 = arith.constant 1 : index
    %c3_344 = arith.constant 3 : index
    %c0_345 = arith.constant 0 : index
    %c0_346 = arith.constant 0 : index
    %476 = vector.load %arg11[%c1_343, %c3_344, %c0_345, %c0_346] : memref<3x4x1x16xf32, #tpu.memory_space<vmem>>, vector<1x1x1x16xf32>
    %477 = vector.shape_cast %476 : vector<1x1x1x16xf32> to vector<1x16xf32>
    %478 = vector.broadcast %477 : vector<1x16xf32> to vector<16x16xf32>
    %479 = arith.addf %475, %478 : vector<16x16xf32>
    %480 = vector.shape_cast %479 : vector<16x16xf32> to vector<2x8x16xf32>
    %c1_347 = arith.constant 1 : index
    %c3_348 = arith.constant 3 : index
    %c0_349 = arith.constant 0 : index
    %c0_350 = arith.constant 0 : index
    %481 = vector.load %arg12[%c1_347, %c3_348, %c0_349, %c0_350] : memref<3x4x64x16xf32, #tpu.memory_space<vmem>>, vector<1x1x64x16xf32>
    %482 = vector.shape_cast %481 : vector<1x1x64x16xf32> to vector<64x16xf32>
    %cst_351 = arith.constant dense<0.000000e+00> : vector<16x16xf32>
    %483 = tpu.matmul %328, %482, %cst_351 {dimension_numbers = #tpu.dot_dimension_numbers<[1], [0], [0], [1], [0, 0, 1, 1], [], []>} : vector<16x64xf32>, vector<64x16xf32>, vector<16x16xf32> -> vector<16x16xf32>
    %c1_352 = arith.constant 1 : index
    %c3_353 = arith.constant 3 : index
    %c0_354 = arith.constant 0 : index
    %c0_355 = arith.constant 0 : index
    %484 = vector.load %arg13[%c1_352, %c3_353, %c0_354, %c0_355] : memref<3x4x1x16xf32, #tpu.memory_space<vmem>>, vector<1x1x1x16xf32>
    %485 = vector.shape_cast %484 : vector<1x1x1x16xf32> to vector<1x16xf32>
    %486 = vector.broadcast %485 : vector<1x16xf32> to vector<16x16xf32>
    %487 = arith.addf %483, %486 : vector<16x16xf32>
    %488 = vector.shape_cast %487 : vector<16x16xf32> to vector<2x8x16xf32>
    "tpu.trace_start"() <{level = 10 : i32, message = "bqd,bkd->bqk"}> : () -> ()
    %cst_356 = arith.constant dense<0.000000e+00> : vector<2x8x8xf32>
    %489 = tpu.matmul %472, %480, %cst_356 {dimension_numbers = #tpu.dot_dimension_numbers<[2], [2], [1], [1], [0, 0, 0, 1, 1, 1], [0], [0]>} : vector<2x8x16xf32>, vector<2x8x16xf32>, vector<2x8x8xf32> -> vector<2x8x8xf32>
    "tpu.trace_stop"() : () -> ()
    %cst_357 = arith.constant 2.500000e-01 : f32
    %490 = vector.broadcast %cst_357 : f32 to vector<2x8x8xf32>
    %491 = arith.mulf %489, %490 : vector<2x8x8xf32>
    %492 = vector.shape_cast %36 : vector<8x8xf32> to vector<1x8x8xf32>
    %493 = vector.broadcast %492 : vector<1x8x8xf32> to vector<2x8x8xf32>
    %494 = arith.addf %491, %493 : vector<2x8x8xf32>
    %cst_358 = arith.constant dense<0xFF800000> : vector<2x8xf32>
    %495 = vector.multi_reduction <maximumf>, %494, %cst_358 [2] : vector<2x8x8xf32> to vector<2x8xf32>
    %496 = vector.shape_cast %495 : vector<2x8xf32> to vector<2x8x1xf32>
    %497 = vector.broadcast %496 : vector<2x8x1xf32> to vector<2x8x8xf32>
    %498 = arith.subf %494, %497 : vector<2x8x8xf32>
    %499 = math.exp %498 : vector<2x8x8xf32>
    %cst_359 = arith.constant dense<0.000000e+00> : vector<2x8xf32>
    %500 = vector.multi_reduction <add>, %499, %cst_359 [2] : vector<2x8x8xf32> to vector<2x8xf32>
    %501 = vector.shape_cast %500 : vector<2x8xf32> to vector<2x8x1xf32>
    %502 = vector.broadcast %501 : vector<2x8x1xf32> to vector<2x8x8xf32>
    %503 = arith.divf %499, %502 : vector<2x8x8xf32>
    "tpu.trace_start"() <{level = 10 : i32, message = "bqk,bkd->bqd"}> : () -> ()
    %cst_360 = arith.constant dense<0.000000e+00> : vector<2x8x16xf32>
    %504 = tpu.matmul %503, %488, %cst_360 {dimension_numbers = #tpu.dot_dimension_numbers<[2], [1], [1], [2], [0, 0, 0, 1, 1, 2], [0], [0]>} : vector<2x8x8xf32>, vector<2x8x16xf32>, vector<2x8x16xf32> -> vector<2x8x16xf32>
    "tpu.trace_stop"() : () -> ()
    %505 = vector.shape_cast %504 : vector<2x8x16xf32> to vector<16x16xf32>
    %c1_361 = arith.constant 1 : index
    %c3_362 = arith.constant 3 : index
    %c0_363 = arith.constant 0 : index
    %c0_364 = arith.constant 0 : index
    %506 = vector.load %arg14[%c1_361, %c3_362, %c0_363, %c0_364] : memref<3x4x16x64xf32, #tpu.memory_space<vmem>>, vector<1x1x16x64xf32>
    %507 = vector.shape_cast %506 : vector<1x1x16x64xf32> to vector<16x64xf32>
    %cst_365 = arith.constant dense<0.000000e+00> : vector<16x64xf32>
    %508 = tpu.matmul %505, %507, %cst_365 {dimension_numbers = #tpu.dot_dimension_numbers<[1], [0], [0], [1], [0, 0, 1, 1], [], []>} : vector<16x16xf32>, vector<16x64xf32>, vector<16x64xf32> -> vector<16x64xf32>
    %509 = arith.addf %464, %508 : vector<16x64xf32>
    %510 = arith.addf %302, %509 : vector<16x64xf32>
    %c1_366 = arith.constant 1 : index
    %c0_367 = arith.constant 0 : index
    %c0_368 = arith.constant 0 : index
    %511 = vector.load %arg15[%c1_366, %c0_367, %c0_368] : memref<3x1x64xf32, #tpu.memory_space<vmem>>, vector<1x1x64xf32>
    %512 = vector.shape_cast %511 : vector<1x1x64xf32> to vector<1x64xf32>
    %513 = vector.broadcast %512 : vector<1x64xf32> to vector<16x64xf32>
    %514 = arith.addf %510, %513 : vector<16x64xf32>
    %c1_369 = arith.constant 1 : index
    %c0_370 = arith.constant 0 : index
    %c0_371 = arith.constant 0 : index
    %515 = vector.load %arg16[%c1_369, %c0_370, %c0_371] : memref<3x1x64xf32, #tpu.memory_space<vmem>>, vector<1x1x64xf32>
    %516 = vector.shape_cast %515 : vector<1x1x64xf32> to vector<1x64xf32>
    %c1_372 = arith.constant 1 : index
    %c0_373 = arith.constant 0 : index
    %c0_374 = arith.constant 0 : index
    %517 = vector.load %arg17[%c1_372, %c0_373, %c0_374] : memref<3x1x64xf32, #tpu.memory_space<vmem>>, vector<1x1x64xf32>
    %518 = vector.shape_cast %517 : vector<1x1x64xf32> to vector<1x64xf32>
    %cst_375 = arith.constant dense<0.000000e+00> : vector<16xf32>
    %519 = vector.multi_reduction <add>, %514, %cst_375 [1] : vector<16x64xf32> to vector<16xf32>
    %520 = vector.shape_cast %519 : vector<16xf32> to vector<16x1xf32>
    %cst_376 = arith.constant 6.400000e+01 : f32
    %521 = vector.broadcast %cst_376 : f32 to vector<16x1xf32>
    %522 = arith.divf %520, %521 : vector<16x1xf32>
    %523 = vector.broadcast %522 : vector<16x1xf32> to vector<16x64xf32>
    %524 = arith.subf %514, %523 : vector<16x64xf32>
    %525 = arith.mulf %524, %524 : vector<16x64xf32>
    %cst_377 = arith.constant dense<0.000000e+00> : vector<16xf32>
    %526 = vector.multi_reduction <add>, %525, %cst_377 [1] : vector<16x64xf32> to vector<16xf32>
    %527 = vector.shape_cast %526 : vector<16xf32> to vector<16x1xf32>
    %cst_378 = arith.constant 6.400000e+01 : f32
    %528 = vector.broadcast %cst_378 : f32 to vector<16x1xf32>
    %529 = arith.divf %527, %528 : vector<16x1xf32>
    %530 = vector.broadcast %522 : vector<16x1xf32> to vector<16x64xf32>
    %531 = arith.subf %514, %530 : vector<16x64xf32>
    %cst_379 = arith.constant 9.99999974E-6 : f32
    %532 = vector.broadcast %cst_379 : f32 to vector<16x1xf32>
    %533 = arith.addf %529, %532 : vector<16x1xf32>
    %534 = math.rsqrt %533 : vector<16x1xf32>
    %535 = vector.broadcast %534 : vector<16x1xf32> to vector<16x64xf32>
    %536 = arith.mulf %531, %535 : vector<16x64xf32>
    %537 = vector.broadcast %516 : vector<1x64xf32> to vector<16x64xf32>
    %538 = arith.mulf %536, %537 : vector<16x64xf32>
    %539 = vector.broadcast %518 : vector<1x64xf32> to vector<16x64xf32>
    %540 = arith.addf %538, %539 : vector<16x64xf32>
    %c1_380 = arith.constant 1 : index
    %c0_381 = arith.constant 0 : index
    %c0_382 = arith.constant 0 : index
    %541 = vector.load %arg18[%c1_380, %c0_381, %c0_382] : memref<3x64x256xf32, #tpu.memory_space<vmem>>, vector<1x64x256xf32>
    %542 = vector.shape_cast %541 : vector<1x64x256xf32> to vector<64x256xf32>
    %cst_383 = arith.constant dense<0.000000e+00> : vector<16x256xf32>
    %543 = tpu.matmul %540, %542, %cst_383 {dimension_numbers = #tpu.dot_dimension_numbers<[1], [0], [0], [1], [0, 0, 1, 1], [], []>} : vector<16x64xf32>, vector<64x256xf32>, vector<16x256xf32> -> vector<16x256xf32>
    %c1_384 = arith.constant 1 : index
    %c0_385 = arith.constant 0 : index
    %c0_386 = arith.constant 0 : index
    %544 = vector.load %arg19[%c1_384, %c0_385, %c0_386] : memref<3x1x256xf32, #tpu.memory_space<vmem>>, vector<1x1x256xf32>
    %545 = vector.shape_cast %544 : vector<1x1x256xf32> to vector<1x256xf32>
    %546 = vector.broadcast %545 : vector<1x256xf32> to vector<16x256xf32>
    %547 = arith.addf %543, %546 : vector<16x256xf32>
    %cst_387 = arith.constant 5.000000e-01 : f32
    %548 = vector.broadcast %cst_387 : f32 to vector<16x256xf32>
    %549 = arith.mulf %548, %547 : vector<16x256xf32>
    %cst_388 = arith.constant 4.471500e-02 : f32
    %550 = vector.broadcast %cst_388 : f32 to vector<16x256xf32>
    %551 = arith.mulf %550, %547 : vector<16x256xf32>
    %552 = arith.mulf %551, %547 : vector<16x256xf32>
    %553 = arith.mulf %552, %547 : vector<16x256xf32>
    %554 = arith.addf %547, %553 : vector<16x256xf32>
    %cst_389 = arith.constant 0.797884583 : f32
    %555 = vector.broadcast %cst_389 : f32 to vector<16x256xf32>
    %556 = arith.mulf %555, %554 : vector<16x256xf32>
    %557 = math.tanh %556 : vector<16x256xf32>
    %cst_390 = arith.constant 1.000000e+00 : f32
    %558 = vector.broadcast %cst_390 : f32 to vector<16x256xf32>
    %559 = arith.addf %558, %557 : vector<16x256xf32>
    %560 = arith.mulf %549, %559 : vector<16x256xf32>
    %c1_391 = arith.constant 1 : index
    %c0_392 = arith.constant 0 : index
    %c0_393 = arith.constant 0 : index
    %561 = vector.load %arg20[%c1_391, %c0_392, %c0_393] : memref<3x256x64xf32, #tpu.memory_space<vmem>>, vector<1x256x64xf32>
    %562 = vector.shape_cast %561 : vector<1x256x64xf32> to vector<256x64xf32>
    %cst_394 = arith.constant dense<0.000000e+00> : vector<16x64xf32>
    %563 = tpu.matmul %560, %562, %cst_394 {dimension_numbers = #tpu.dot_dimension_numbers<[1], [0], [0], [1], [0, 0, 1, 1], [], []>} : vector<16x256xf32>, vector<256x64xf32>, vector<16x64xf32> -> vector<16x64xf32>
    %c1_395 = arith.constant 1 : index
    %c0_396 = arith.constant 0 : index
    %c0_397 = arith.constant 0 : index
    %564 = vector.load %arg21[%c1_395, %c0_396, %c0_397] : memref<3x1x64xf32, #tpu.memory_space<vmem>>, vector<1x1x64xf32>
    %565 = vector.shape_cast %564 : vector<1x1x64xf32> to vector<1x64xf32>
    %566 = vector.broadcast %565 : vector<1x64xf32> to vector<16x64xf32>
    %567 = arith.addf %563, %566 : vector<16x64xf32>
    %568 = arith.addf %514, %567 : vector<16x64xf32>
    %c2_398 = arith.constant 2 : index
    %c0_399 = arith.constant 0 : index
    %c0_400 = arith.constant 0 : index
    %569 = vector.load %arg6[%c2_398, %c0_399, %c0_400] : memref<3x1x64xf32, #tpu.memory_space<vmem>>, vector<1x1x64xf32>
    %570 = vector.shape_cast %569 : vector<1x1x64xf32> to vector<1x64xf32>
    %c2_401 = arith.constant 2 : index
    %c0_402 = arith.constant 0 : index
    %c0_403 = arith.constant 0 : index
    %571 = vector.load %arg7[%c2_401, %c0_402, %c0_403] : memref<3x1x64xf32, #tpu.memory_space<vmem>>, vector<1x1x64xf32>
    %572 = vector.shape_cast %571 : vector<1x1x64xf32> to vector<1x64xf32>
    %cst_404 = arith.constant dense<0.000000e+00> : vector<16xf32>
    %573 = vector.multi_reduction <add>, %568, %cst_404 [1] : vector<16x64xf32> to vector<16xf32>
    %574 = vector.shape_cast %573 : vector<16xf32> to vector<16x1xf32>
    %cst_405 = arith.constant 6.400000e+01 : f32
    %575 = vector.broadcast %cst_405 : f32 to vector<16x1xf32>
    %576 = arith.divf %574, %575 : vector<16x1xf32>
    %577 = vector.broadcast %576 : vector<16x1xf32> to vector<16x64xf32>
    %578 = arith.subf %568, %577 : vector<16x64xf32>
    %579 = arith.mulf %578, %578 : vector<16x64xf32>
    %cst_406 = arith.constant dense<0.000000e+00> : vector<16xf32>
    %580 = vector.multi_reduction <add>, %579, %cst_406 [1] : vector<16x64xf32> to vector<16xf32>
    %581 = vector.shape_cast %580 : vector<16xf32> to vector<16x1xf32>
    %cst_407 = arith.constant 6.400000e+01 : f32
    %582 = vector.broadcast %cst_407 : f32 to vector<16x1xf32>
    %583 = arith.divf %581, %582 : vector<16x1xf32>
    %584 = vector.broadcast %576 : vector<16x1xf32> to vector<16x64xf32>
    %585 = arith.subf %568, %584 : vector<16x64xf32>
    %cst_408 = arith.constant 9.99999974E-6 : f32
    %586 = vector.broadcast %cst_408 : f32 to vector<16x1xf32>
    %587 = arith.addf %583, %586 : vector<16x1xf32>
    %588 = math.rsqrt %587 : vector<16x1xf32>
    %589 = vector.broadcast %588 : vector<16x1xf32> to vector<16x64xf32>
    %590 = arith.mulf %585, %589 : vector<16x64xf32>
    %591 = vector.broadcast %570 : vector<1x64xf32> to vector<16x64xf32>
    %592 = arith.mulf %590, %591 : vector<16x64xf32>
    %593 = vector.broadcast %572 : vector<1x64xf32> to vector<16x64xf32>
    %594 = arith.addf %592, %593 : vector<16x64xf32>
    %cst_409 = arith.constant 0.000000e+00 : f32
    %595 = vector.broadcast %cst_409 : f32 to vector<16x64xf32>
    %c2_410 = arith.constant 2 : index
    %c0_411 = arith.constant 0 : index
    %c0_412 = arith.constant 0 : index
    %c0_413 = arith.constant 0 : index
    %596 = vector.load %arg8[%c2_410, %c0_411, %c0_412, %c0_413] : memref<3x4x64x16xf32, #tpu.memory_space<vmem>>, vector<1x1x64x16xf32>
    %597 = vector.shape_cast %596 : vector<1x1x64x16xf32> to vector<64x16xf32>
    %cst_414 = arith.constant dense<0.000000e+00> : vector<16x16xf32>
    %598 = tpu.matmul %594, %597, %cst_414 {dimension_numbers = #tpu.dot_dimension_numbers<[1], [0], [0], [1], [0, 0, 1, 1], [], []>} : vector<16x64xf32>, vector<64x16xf32>, vector<16x16xf32> -> vector<16x16xf32>
    %c2_415 = arith.constant 2 : index
    %c0_416 = arith.constant 0 : index
    %c0_417 = arith.constant 0 : index
    %c0_418 = arith.constant 0 : index
    %599 = vector.load %arg9[%c2_415, %c0_416, %c0_417, %c0_418] : memref<3x4x1x16xf32, #tpu.memory_space<vmem>>, vector<1x1x1x16xf32>
    %600 = vector.shape_cast %599 : vector<1x1x1x16xf32> to vector<1x16xf32>
    %601 = vector.broadcast %600 : vector<1x16xf32> to vector<16x16xf32>
    %602 = arith.addf %598, %601 : vector<16x16xf32>
    %603 = vector.shape_cast %602 : vector<16x16xf32> to vector<2x8x16xf32>
    %c2_419 = arith.constant 2 : index
    %c0_420 = arith.constant 0 : index
    %c0_421 = arith.constant 0 : index
    %c0_422 = arith.constant 0 : index
    %604 = vector.load %arg10[%c2_419, %c0_420, %c0_421, %c0_422] : memref<3x4x64x16xf32, #tpu.memory_space<vmem>>, vector<1x1x64x16xf32>
    %605 = vector.shape_cast %604 : vector<1x1x64x16xf32> to vector<64x16xf32>
    %cst_423 = arith.constant dense<0.000000e+00> : vector<16x16xf32>
    %606 = tpu.matmul %594, %605, %cst_423 {dimension_numbers = #tpu.dot_dimension_numbers<[1], [0], [0], [1], [0, 0, 1, 1], [], []>} : vector<16x64xf32>, vector<64x16xf32>, vector<16x16xf32> -> vector<16x16xf32>
    %c2_424 = arith.constant 2 : index
    %c0_425 = arith.constant 0 : index
    %c0_426 = arith.constant 0 : index
    %c0_427 = arith.constant 0 : index
    %607 = vector.load %arg11[%c2_424, %c0_425, %c0_426, %c0_427] : memref<3x4x1x16xf32, #tpu.memory_space<vmem>>, vector<1x1x1x16xf32>
    %608 = vector.shape_cast %607 : vector<1x1x1x16xf32> to vector<1x16xf32>
    %609 = vector.broadcast %608 : vector<1x16xf32> to vector<16x16xf32>
    %610 = arith.addf %606, %609 : vector<16x16xf32>
    %611 = vector.shape_cast %610 : vector<16x16xf32> to vector<2x8x16xf32>
    %c2_428 = arith.constant 2 : index
    %c0_429 = arith.constant 0 : index
    %c0_430 = arith.constant 0 : index
    %c0_431 = arith.constant 0 : index
    %612 = vector.load %arg12[%c2_428, %c0_429, %c0_430, %c0_431] : memref<3x4x64x16xf32, #tpu.memory_space<vmem>>, vector<1x1x64x16xf32>
    %613 = vector.shape_cast %612 : vector<1x1x64x16xf32> to vector<64x16xf32>
    %cst_432 = arith.constant dense<0.000000e+00> : vector<16x16xf32>
    %614 = tpu.matmul %594, %613, %cst_432 {dimension_numbers = #tpu.dot_dimension_numbers<[1], [0], [0], [1], [0, 0, 1, 1], [], []>} : vector<16x64xf32>, vector<64x16xf32>, vector<16x16xf32> -> vector<16x16xf32>
    %c2_433 = arith.constant 2 : index
    %c0_434 = arith.constant 0 : index
    %c0_435 = arith.constant 0 : index
    %c0_436 = arith.constant 0 : index
    %615 = vector.load %arg13[%c2_433, %c0_434, %c0_435, %c0_436] : memref<3x4x1x16xf32, #tpu.memory_space<vmem>>, vector<1x1x1x16xf32>
    %616 = vector.shape_cast %615 : vector<1x1x1x16xf32> to vector<1x16xf32>
    %617 = vector.broadcast %616 : vector<1x16xf32> to vector<16x16xf32>
    %618 = arith.addf %614, %617 : vector<16x16xf32>
    %619 = vector.shape_cast %618 : vector<16x16xf32> to vector<2x8x16xf32>
    "tpu.trace_start"() <{level = 10 : i32, message = "bqd,bkd->bqk"}> : () -> ()
    %cst_437 = arith.constant dense<0.000000e+00> : vector<2x8x8xf32>
    %620 = tpu.matmul %603, %611, %cst_437 {dimension_numbers = #tpu.dot_dimension_numbers<[2], [2], [1], [1], [0, 0, 0, 1, 1, 1], [0], [0]>} : vector<2x8x16xf32>, vector<2x8x16xf32>, vector<2x8x8xf32> -> vector<2x8x8xf32>
    "tpu.trace_stop"() : () -> ()
    %cst_438 = arith.constant 2.500000e-01 : f32
    %621 = vector.broadcast %cst_438 : f32 to vector<2x8x8xf32>
    %622 = arith.mulf %620, %621 : vector<2x8x8xf32>
    %623 = vector.shape_cast %36 : vector<8x8xf32> to vector<1x8x8xf32>
    %624 = vector.broadcast %623 : vector<1x8x8xf32> to vector<2x8x8xf32>
    %625 = arith.addf %622, %624 : vector<2x8x8xf32>
    %cst_439 = arith.constant dense<0xFF800000> : vector<2x8xf32>
    %626 = vector.multi_reduction <maximumf>, %625, %cst_439 [2] : vector<2x8x8xf32> to vector<2x8xf32>
    %627 = vector.shape_cast %626 : vector<2x8xf32> to vector<2x8x1xf32>
    %628 = vector.broadcast %627 : vector<2x8x1xf32> to vector<2x8x8xf32>
    %629 = arith.subf %625, %628 : vector<2x8x8xf32>
    %630 = math.exp %629 : vector<2x8x8xf32>
    %cst_440 = arith.constant dense<0.000000e+00> : vector<2x8xf32>
    %631 = vector.multi_reduction <add>, %630, %cst_440 [2] : vector<2x8x8xf32> to vector<2x8xf32>
    %632 = vector.shape_cast %631 : vector<2x8xf32> to vector<2x8x1xf32>
    %633 = vector.broadcast %632 : vector<2x8x1xf32> to vector<2x8x8xf32>
    %634 = arith.divf %630, %633 : vector<2x8x8xf32>
    "tpu.trace_start"() <{level = 10 : i32, message = "bqk,bkd->bqd"}> : () -> ()
    %cst_441 = arith.constant dense<0.000000e+00> : vector<2x8x16xf32>
    %635 = tpu.matmul %634, %619, %cst_441 {dimension_numbers = #tpu.dot_dimension_numbers<[2], [1], [1], [2], [0, 0, 0, 1, 1, 2], [0], [0]>} : vector<2x8x8xf32>, vector<2x8x16xf32>, vector<2x8x16xf32> -> vector<2x8x16xf32>
    "tpu.trace_stop"() : () -> ()
    %636 = vector.shape_cast %635 : vector<2x8x16xf32> to vector<16x16xf32>
    %c2_442 = arith.constant 2 : index
    %c0_443 = arith.constant 0 : index
    %c0_444 = arith.constant 0 : index
    %c0_445 = arith.constant 0 : index
    %637 = vector.load %arg14[%c2_442, %c0_443, %c0_444, %c0_445] : memref<3x4x16x64xf32, #tpu.memory_space<vmem>>, vector<1x1x16x64xf32>
    %638 = vector.shape_cast %637 : vector<1x1x16x64xf32> to vector<16x64xf32>
    %cst_446 = arith.constant dense<0.000000e+00> : vector<16x64xf32>
    %639 = tpu.matmul %636, %638, %cst_446 {dimension_numbers = #tpu.dot_dimension_numbers<[1], [0], [0], [1], [0, 0, 1, 1], [], []>} : vector<16x16xf32>, vector<16x64xf32>, vector<16x64xf32> -> vector<16x64xf32>
    %640 = arith.addf %595, %639 : vector<16x64xf32>
    %c2_447 = arith.constant 2 : index
    %c1_448 = arith.constant 1 : index
    %c0_449 = arith.constant 0 : index
    %c0_450 = arith.constant 0 : index
    %641 = vector.load %arg8[%c2_447, %c1_448, %c0_449, %c0_450] : memref<3x4x64x16xf32, #tpu.memory_space<vmem>>, vector<1x1x64x16xf32>
    %642 = vector.shape_cast %641 : vector<1x1x64x16xf32> to vector<64x16xf32>
    %cst_451 = arith.constant dense<0.000000e+00> : vector<16x16xf32>
    %643 = tpu.matmul %594, %642, %cst_451 {dimension_numbers = #tpu.dot_dimension_numbers<[1], [0], [0], [1], [0, 0, 1, 1], [], []>} : vector<16x64xf32>, vector<64x16xf32>, vector<16x16xf32> -> vector<16x16xf32>
    %c2_452 = arith.constant 2 : index
    %c1_453 = arith.constant 1 : index
    %c0_454 = arith.constant 0 : index
    %c0_455 = arith.constant 0 : index
    %644 = vector.load %arg9[%c2_452, %c1_453, %c0_454, %c0_455] : memref<3x4x1x16xf32, #tpu.memory_space<vmem>>, vector<1x1x1x16xf32>
    %645 = vector.shape_cast %644 : vector<1x1x1x16xf32> to vector<1x16xf32>
    %646 = vector.broadcast %645 : vector<1x16xf32> to vector<16x16xf32>
    %647 = arith.addf %643, %646 : vector<16x16xf32>
    %648 = vector.shape_cast %647 : vector<16x16xf32> to vector<2x8x16xf32>
    %c2_456 = arith.constant 2 : index
    %c1_457 = arith.constant 1 : index
    %c0_458 = arith.constant 0 : index
    %c0_459 = arith.constant 0 : index
    %649 = vector.load %arg10[%c2_456, %c1_457, %c0_458, %c0_459] : memref<3x4x64x16xf32, #tpu.memory_space<vmem>>, vector<1x1x64x16xf32>
    %650 = vector.shape_cast %649 : vector<1x1x64x16xf32> to vector<64x16xf32>
    %cst_460 = arith.constant dense<0.000000e+00> : vector<16x16xf32>
    %651 = tpu.matmul %594, %650, %cst_460 {dimension_numbers = #tpu.dot_dimension_numbers<[1], [0], [0], [1], [0, 0, 1, 1], [], []>} : vector<16x64xf32>, vector<64x16xf32>, vector<16x16xf32> -> vector<16x16xf32>
    %c2_461 = arith.constant 2 : index
    %c1_462 = arith.constant 1 : index
    %c0_463 = arith.constant 0 : index
    %c0_464 = arith.constant 0 : index
    %652 = vector.load %arg11[%c2_461, %c1_462, %c0_463, %c0_464] : memref<3x4x1x16xf32, #tpu.memory_space<vmem>>, vector<1x1x1x16xf32>
    %653 = vector.shape_cast %652 : vector<1x1x1x16xf32> to vector<1x16xf32>
    %654 = vector.broadcast %653 : vector<1x16xf32> to vector<16x16xf32>
    %655 = arith.addf %651, %654 : vector<16x16xf32>
    %656 = vector.shape_cast %655 : vector<16x16xf32> to vector<2x8x16xf32>
    %c2_465 = arith.constant 2 : index
    %c1_466 = arith.constant 1 : index
    %c0_467 = arith.constant 0 : index
    %c0_468 = arith.constant 0 : index
    %657 = vector.load %arg12[%c2_465, %c1_466, %c0_467, %c0_468] : memref<3x4x64x16xf32, #tpu.memory_space<vmem>>, vector<1x1x64x16xf32>
    %658 = vector.shape_cast %657 : vector<1x1x64x16xf32> to vector<64x16xf32>
    %cst_469 = arith.constant dense<0.000000e+00> : vector<16x16xf32>
    %659 = tpu.matmul %594, %658, %cst_469 {dimension_numbers = #tpu.dot_dimension_numbers<[1], [0], [0], [1], [0, 0, 1, 1], [], []>} : vector<16x64xf32>, vector<64x16xf32>, vector<16x16xf32> -> vector<16x16xf32>
    %c2_470 = arith.constant 2 : index
    %c1_471 = arith.constant 1 : index
    %c0_472 = arith.constant 0 : index
    %c0_473 = arith.constant 0 : index
    %660 = vector.load %arg13[%c2_470, %c1_471, %c0_472, %c0_473] : memref<3x4x1x16xf32, #tpu.memory_space<vmem>>, vector<1x1x1x16xf32>
    %661 = vector.shape_cast %660 : vector<1x1x1x16xf32> to vector<1x16xf32>
    %662 = vector.broadcast %661 : vector<1x16xf32> to vector<16x16xf32>
    %663 = arith.addf %659, %662 : vector<16x16xf32>
    %664 = vector.shape_cast %663 : vector<16x16xf32> to vector<2x8x16xf32>
    "tpu.trace_start"() <{level = 10 : i32, message = "bqd,bkd->bqk"}> : () -> ()
    %cst_474 = arith.constant dense<0.000000e+00> : vector<2x8x8xf32>
    %665 = tpu.matmul %648, %656, %cst_474 {dimension_numbers = #tpu.dot_dimension_numbers<[2], [2], [1], [1], [0, 0, 0, 1, 1, 1], [0], [0]>} : vector<2x8x16xf32>, vector<2x8x16xf32>, vector<2x8x8xf32> -> vector<2x8x8xf32>
    "tpu.trace_stop"() : () -> ()
    %cst_475 = arith.constant 2.500000e-01 : f32
    %666 = vector.broadcast %cst_475 : f32 to vector<2x8x8xf32>
    %667 = arith.mulf %665, %666 : vector<2x8x8xf32>
    %668 = vector.shape_cast %36 : vector<8x8xf32> to vector<1x8x8xf32>
    %669 = vector.broadcast %668 : vector<1x8x8xf32> to vector<2x8x8xf32>
    %670 = arith.addf %667, %669 : vector<2x8x8xf32>
    %cst_476 = arith.constant dense<0xFF800000> : vector<2x8xf32>
    %671 = vector.multi_reduction <maximumf>, %670, %cst_476 [2] : vector<2x8x8xf32> to vector<2x8xf32>
    %672 = vector.shape_cast %671 : vector<2x8xf32> to vector<2x8x1xf32>
    %673 = vector.broadcast %672 : vector<2x8x1xf32> to vector<2x8x8xf32>
    %674 = arith.subf %670, %673 : vector<2x8x8xf32>
    %675 = math.exp %674 : vector<2x8x8xf32>
    %cst_477 = arith.constant dense<0.000000e+00> : vector<2x8xf32>
    %676 = vector.multi_reduction <add>, %675, %cst_477 [2] : vector<2x8x8xf32> to vector<2x8xf32>
    %677 = vector.shape_cast %676 : vector<2x8xf32> to vector<2x8x1xf32>
    %678 = vector.broadcast %677 : vector<2x8x1xf32> to vector<2x8x8xf32>
    %679 = arith.divf %675, %678 : vector<2x8x8xf32>
    "tpu.trace_start"() <{level = 10 : i32, message = "bqk,bkd->bqd"}> : () -> ()
    %cst_478 = arith.constant dense<0.000000e+00> : vector<2x8x16xf32>
    %680 = tpu.matmul %679, %664, %cst_478 {dimension_numbers = #tpu.dot_dimension_numbers<[2], [1], [1], [2], [0, 0, 0, 1, 1, 2], [0], [0]>} : vector<2x8x8xf32>, vector<2x8x16xf32>, vector<2x8x16xf32> -> vector<2x8x16xf32>
    "tpu.trace_stop"() : () -> ()
    %681 = vector.shape_cast %680 : vector<2x8x16xf32> to vector<16x16xf32>
    %c2_479 = arith.constant 2 : index
    %c1_480 = arith.constant 1 : index
    %c0_481 = arith.constant 0 : index
    %c0_482 = arith.constant 0 : index
    %682 = vector.load %arg14[%c2_479, %c1_480, %c0_481, %c0_482] : memref<3x4x16x64xf32, #tpu.memory_space<vmem>>, vector<1x1x16x64xf32>
    %683 = vector.shape_cast %682 : vector<1x1x16x64xf32> to vector<16x64xf32>
    %cst_483 = arith.constant dense<0.000000e+00> : vector<16x64xf32>
    %684 = tpu.matmul %681, %683, %cst_483 {dimension_numbers = #tpu.dot_dimension_numbers<[1], [0], [0], [1], [0, 0, 1, 1], [], []>} : vector<16x16xf32>, vector<16x64xf32>, vector<16x64xf32> -> vector<16x64xf32>
    %685 = arith.addf %640, %684 : vector<16x64xf32>
    %c2_484 = arith.constant 2 : index
    %c2_485 = arith.constant 2 : index
    %c0_486 = arith.constant 0 : index
    %c0_487 = arith.constant 0 : index
    %686 = vector.load %arg8[%c2_484, %c2_485, %c0_486, %c0_487] : memref<3x4x64x16xf32, #tpu.memory_space<vmem>>, vector<1x1x64x16xf32>
    %687 = vector.shape_cast %686 : vector<1x1x64x16xf32> to vector<64x16xf32>
    %cst_488 = arith.constant dense<0.000000e+00> : vector<16x16xf32>
    %688 = tpu.matmul %594, %687, %cst_488 {dimension_numbers = #tpu.dot_dimension_numbers<[1], [0], [0], [1], [0, 0, 1, 1], [], []>} : vector<16x64xf32>, vector<64x16xf32>, vector<16x16xf32> -> vector<16x16xf32>
    %c2_489 = arith.constant 2 : index
    %c2_490 = arith.constant 2 : index
    %c0_491 = arith.constant 0 : index
    %c0_492 = arith.constant 0 : index
    %689 = vector.load %arg9[%c2_489, %c2_490, %c0_491, %c0_492] : memref<3x4x1x16xf32, #tpu.memory_space<vmem>>, vector<1x1x1x16xf32>
    %690 = vector.shape_cast %689 : vector<1x1x1x16xf32> to vector<1x16xf32>
    %691 = vector.broadcast %690 : vector<1x16xf32> to vector<16x16xf32>
    %692 = arith.addf %688, %691 : vector<16x16xf32>
    %693 = vector.shape_cast %692 : vector<16x16xf32> to vector<2x8x16xf32>
    %c2_493 = arith.constant 2 : index
    %c2_494 = arith.constant 2 : index
    %c0_495 = arith.constant 0 : index
    %c0_496 = arith.constant 0 : index
    %694 = vector.load %arg10[%c2_493, %c2_494, %c0_495, %c0_496] : memref<3x4x64x16xf32, #tpu.memory_space<vmem>>, vector<1x1x64x16xf32>
    %695 = vector.shape_cast %694 : vector<1x1x64x16xf32> to vector<64x16xf32>
    %cst_497 = arith.constant dense<0.000000e+00> : vector<16x16xf32>
    %696 = tpu.matmul %594, %695, %cst_497 {dimension_numbers = #tpu.dot_dimension_numbers<[1], [0], [0], [1], [0, 0, 1, 1], [], []>} : vector<16x64xf32>, vector<64x16xf32>, vector<16x16xf32> -> vector<16x16xf32>
    %c2_498 = arith.constant 2 : index
    %c2_499 = arith.constant 2 : index
    %c0_500 = arith.constant 0 : index
    %c0_501 = arith.constant 0 : index
    %697 = vector.load %arg11[%c2_498, %c2_499, %c0_500, %c0_501] : memref<3x4x1x16xf32, #tpu.memory_space<vmem>>, vector<1x1x1x16xf32>
    %698 = vector.shape_cast %697 : vector<1x1x1x16xf32> to vector<1x16xf32>
    %699 = vector.broadcast %698 : vector<1x16xf32> to vector<16x16xf32>
    %700 = arith.addf %696, %699 : vector<16x16xf32>
    %701 = vector.shape_cast %700 : vector<16x16xf32> to vector<2x8x16xf32>
    %c2_502 = arith.constant 2 : index
    %c2_503 = arith.constant 2 : index
    %c0_504 = arith.constant 0 : index
    %c0_505 = arith.constant 0 : index
    %702 = vector.load %arg12[%c2_502, %c2_503, %c0_504, %c0_505] : memref<3x4x64x16xf32, #tpu.memory_space<vmem>>, vector<1x1x64x16xf32>
    %703 = vector.shape_cast %702 : vector<1x1x64x16xf32> to vector<64x16xf32>
    %cst_506 = arith.constant dense<0.000000e+00> : vector<16x16xf32>
    %704 = tpu.matmul %594, %703, %cst_506 {dimension_numbers = #tpu.dot_dimension_numbers<[1], [0], [0], [1], [0, 0, 1, 1], [], []>} : vector<16x64xf32>, vector<64x16xf32>, vector<16x16xf32> -> vector<16x16xf32>
    %c2_507 = arith.constant 2 : index
    %c2_508 = arith.constant 2 : index
    %c0_509 = arith.constant 0 : index
    %c0_510 = arith.constant 0 : index
    %705 = vector.load %arg13[%c2_507, %c2_508, %c0_509, %c0_510] : memref<3x4x1x16xf32, #tpu.memory_space<vmem>>, vector<1x1x1x16xf32>
    %706 = vector.shape_cast %705 : vector<1x1x1x16xf32> to vector<1x16xf32>
    %707 = vector.broadcast %706 : vector<1x16xf32> to vector<16x16xf32>
    %708 = arith.addf %704, %707 : vector<16x16xf32>
    %709 = vector.shape_cast %708 : vector<16x16xf32> to vector<2x8x16xf32>
    "tpu.trace_start"() <{level = 10 : i32, message = "bqd,bkd->bqk"}> : () -> ()
    %cst_511 = arith.constant dense<0.000000e+00> : vector<2x8x8xf32>
    %710 = tpu.matmul %693, %701, %cst_511 {dimension_numbers = #tpu.dot_dimension_numbers<[2], [2], [1], [1], [0, 0, 0, 1, 1, 1], [0], [0]>} : vector<2x8x16xf32>, vector<2x8x16xf32>, vector<2x8x8xf32> -> vector<2x8x8xf32>
    "tpu.trace_stop"() : () -> ()
    %cst_512 = arith.constant 2.500000e-01 : f32
    %711 = vector.broadcast %cst_512 : f32 to vector<2x8x8xf32>
    %712 = arith.mulf %710, %711 : vector<2x8x8xf32>
    %713 = vector.shape_cast %36 : vector<8x8xf32> to vector<1x8x8xf32>
    %714 = vector.broadcast %713 : vector<1x8x8xf32> to vector<2x8x8xf32>
    %715 = arith.addf %712, %714 : vector<2x8x8xf32>
    %cst_513 = arith.constant dense<0xFF800000> : vector<2x8xf32>
    %716 = vector.multi_reduction <maximumf>, %715, %cst_513 [2] : vector<2x8x8xf32> to vector<2x8xf32>
    %717 = vector.shape_cast %716 : vector<2x8xf32> to vector<2x8x1xf32>
    %718 = vector.broadcast %717 : vector<2x8x1xf32> to vector<2x8x8xf32>
    %719 = arith.subf %715, %718 : vector<2x8x8xf32>
    %720 = math.exp %719 : vector<2x8x8xf32>
    %cst_514 = arith.constant dense<0.000000e+00> : vector<2x8xf32>
    %721 = vector.multi_reduction <add>, %720, %cst_514 [2] : vector<2x8x8xf32> to vector<2x8xf32>
    %722 = vector.shape_cast %721 : vector<2x8xf32> to vector<2x8x1xf32>
    %723 = vector.broadcast %722 : vector<2x8x1xf32> to vector<2x8x8xf32>
    %724 = arith.divf %720, %723 : vector<2x8x8xf32>
    "tpu.trace_start"() <{level = 10 : i32, message = "bqk,bkd->bqd"}> : () -> ()
    %cst_515 = arith.constant dense<0.000000e+00> : vector<2x8x16xf32>
    %725 = tpu.matmul %724, %709, %cst_515 {dimension_numbers = #tpu.dot_dimension_numbers<[2], [1], [1], [2], [0, 0, 0, 1, 1, 2], [0], [0]>} : vector<2x8x8xf32>, vector<2x8x16xf32>, vector<2x8x16xf32> -> vector<2x8x16xf32>
    "tpu.trace_stop"() : () -> ()
    %726 = vector.shape_cast %725 : vector<2x8x16xf32> to vector<16x16xf32>
    %c2_516 = arith.constant 2 : index
    %c2_517 = arith.constant 2 : index
    %c0_518 = arith.constant 0 : index
    %c0_519 = arith.constant 0 : index
    %727 = vector.load %arg14[%c2_516, %c2_517, %c0_518, %c0_519] : memref<3x4x16x64xf32, #tpu.memory_space<vmem>>, vector<1x1x16x64xf32>
    %728 = vector.shape_cast %727 : vector<1x1x16x64xf32> to vector<16x64xf32>
    %cst_520 = arith.constant dense<0.000000e+00> : vector<16x64xf32>
    %729 = tpu.matmul %726, %728, %cst_520 {dimension_numbers = #tpu.dot_dimension_numbers<[1], [0], [0], [1], [0, 0, 1, 1], [], []>} : vector<16x16xf32>, vector<16x64xf32>, vector<16x64xf32> -> vector<16x64xf32>
    %730 = arith.addf %685, %729 : vector<16x64xf32>
    %c2_521 = arith.constant 2 : index
    %c3_522 = arith.constant 3 : index
    %c0_523 = arith.constant 0 : index
    %c0_524 = arith.constant 0 : index
    %731 = vector.load %arg8[%c2_521, %c3_522, %c0_523, %c0_524] : memref<3x4x64x16xf32, #tpu.memory_space<vmem>>, vector<1x1x64x16xf32>
    %732 = vector.shape_cast %731 : vector<1x1x64x16xf32> to vector<64x16xf32>
    %cst_525 = arith.constant dense<0.000000e+00> : vector<16x16xf32>
    %733 = tpu.matmul %594, %732, %cst_525 {dimension_numbers = #tpu.dot_dimension_numbers<[1], [0], [0], [1], [0, 0, 1, 1], [], []>} : vector<16x64xf32>, vector<64x16xf32>, vector<16x16xf32> -> vector<16x16xf32>
    %c2_526 = arith.constant 2 : index
    %c3_527 = arith.constant 3 : index
    %c0_528 = arith.constant 0 : index
    %c0_529 = arith.constant 0 : index
    %734 = vector.load %arg9[%c2_526, %c3_527, %c0_528, %c0_529] : memref<3x4x1x16xf32, #tpu.memory_space<vmem>>, vector<1x1x1x16xf32>
    %735 = vector.shape_cast %734 : vector<1x1x1x16xf32> to vector<1x16xf32>
    %736 = vector.broadcast %735 : vector<1x16xf32> to vector<16x16xf32>
    %737 = arith.addf %733, %736 : vector<16x16xf32>
    %738 = vector.shape_cast %737 : vector<16x16xf32> to vector<2x8x16xf32>
    %c2_530 = arith.constant 2 : index
    %c3_531 = arith.constant 3 : index
    %c0_532 = arith.constant 0 : index
    %c0_533 = arith.constant 0 : index
    %739 = vector.load %arg10[%c2_530, %c3_531, %c0_532, %c0_533] : memref<3x4x64x16xf32, #tpu.memory_space<vmem>>, vector<1x1x64x16xf32>
    %740 = vector.shape_cast %739 : vector<1x1x64x16xf32> to vector<64x16xf32>
    %cst_534 = arith.constant dense<0.000000e+00> : vector<16x16xf32>
    %741 = tpu.matmul %594, %740, %cst_534 {dimension_numbers = #tpu.dot_dimension_numbers<[1], [0], [0], [1], [0, 0, 1, 1], [], []>} : vector<16x64xf32>, vector<64x16xf32>, vector<16x16xf32> -> vector<16x16xf32>
    %c2_535 = arith.constant 2 : index
    %c3_536 = arith.constant 3 : index
    %c0_537 = arith.constant 0 : index
    %c0_538 = arith.constant 0 : index
    %742 = vector.load %arg11[%c2_535, %c3_536, %c0_537, %c0_538] : memref<3x4x1x16xf32, #tpu.memory_space<vmem>>, vector<1x1x1x16xf32>
    %743 = vector.shape_cast %742 : vector<1x1x1x16xf32> to vector<1x16xf32>
    %744 = vector.broadcast %743 : vector<1x16xf32> to vector<16x16xf32>
    %745 = arith.addf %741, %744 : vector<16x16xf32>
    %746 = vector.shape_cast %745 : vector<16x16xf32> to vector<2x8x16xf32>
    %c2_539 = arith.constant 2 : index
    %c3_540 = arith.constant 3 : index
    %c0_541 = arith.constant 0 : index
    %c0_542 = arith.constant 0 : index
    %747 = vector.load %arg12[%c2_539, %c3_540, %c0_541, %c0_542] : memref<3x4x64x16xf32, #tpu.memory_space<vmem>>, vector<1x1x64x16xf32>
    %748 = vector.shape_cast %747 : vector<1x1x64x16xf32> to vector<64x16xf32>
    %cst_543 = arith.constant dense<0.000000e+00> : vector<16x16xf32>
    %749 = tpu.matmul %594, %748, %cst_543 {dimension_numbers = #tpu.dot_dimension_numbers<[1], [0], [0], [1], [0, 0, 1, 1], [], []>} : vector<16x64xf32>, vector<64x16xf32>, vector<16x16xf32> -> vector<16x16xf32>
    %c2_544 = arith.constant 2 : index
    %c3_545 = arith.constant 3 : index
    %c0_546 = arith.constant 0 : index
    %c0_547 = arith.constant 0 : index
    %750 = vector.load %arg13[%c2_544, %c3_545, %c0_546, %c0_547] : memref<3x4x1x16xf32, #tpu.memory_space<vmem>>, vector<1x1x1x16xf32>
    %751 = vector.shape_cast %750 : vector<1x1x1x16xf32> to vector<1x16xf32>
    %752 = vector.broadcast %751 : vector<1x16xf32> to vector<16x16xf32>
    %753 = arith.addf %749, %752 : vector<16x16xf32>
    %754 = vector.shape_cast %753 : vector<16x16xf32> to vector<2x8x16xf32>
    "tpu.trace_start"() <{level = 10 : i32, message = "bqd,bkd->bqk"}> : () -> ()
    %cst_548 = arith.constant dense<0.000000e+00> : vector<2x8x8xf32>
    %755 = tpu.matmul %738, %746, %cst_548 {dimension_numbers = #tpu.dot_dimension_numbers<[2], [2], [1], [1], [0, 0, 0, 1, 1, 1], [0], [0]>} : vector<2x8x16xf32>, vector<2x8x16xf32>, vector<2x8x8xf32> -> vector<2x8x8xf32>
    "tpu.trace_stop"() : () -> ()
    %cst_549 = arith.constant 2.500000e-01 : f32
    %756 = vector.broadcast %cst_549 : f32 to vector<2x8x8xf32>
    %757 = arith.mulf %755, %756 : vector<2x8x8xf32>
    %758 = vector.shape_cast %36 : vector<8x8xf32> to vector<1x8x8xf32>
    %759 = vector.broadcast %758 : vector<1x8x8xf32> to vector<2x8x8xf32>
    %760 = arith.addf %757, %759 : vector<2x8x8xf32>
    %cst_550 = arith.constant dense<0xFF800000> : vector<2x8xf32>
    %761 = vector.multi_reduction <maximumf>, %760, %cst_550 [2] : vector<2x8x8xf32> to vector<2x8xf32>
    %762 = vector.shape_cast %761 : vector<2x8xf32> to vector<2x8x1xf32>
    %763 = vector.broadcast %762 : vector<2x8x1xf32> to vector<2x8x8xf32>
    %764 = arith.subf %760, %763 : vector<2x8x8xf32>
    %765 = math.exp %764 : vector<2x8x8xf32>
    %cst_551 = arith.constant dense<0.000000e+00> : vector<2x8xf32>
    %766 = vector.multi_reduction <add>, %765, %cst_551 [2] : vector<2x8x8xf32> to vector<2x8xf32>
    %767 = vector.shape_cast %766 : vector<2x8xf32> to vector<2x8x1xf32>
    %768 = vector.broadcast %767 : vector<2x8x1xf32> to vector<2x8x8xf32>
    %769 = arith.divf %765, %768 : vector<2x8x8xf32>
    "tpu.trace_start"() <{level = 10 : i32, message = "bqk,bkd->bqd"}> : () -> ()
    %cst_552 = arith.constant dense<0.000000e+00> : vector<2x8x16xf32>
    %770 = tpu.matmul %769, %754, %cst_552 {dimension_numbers = #tpu.dot_dimension_numbers<[2], [1], [1], [2], [0, 0, 0, 1, 1, 2], [0], [0]>} : vector<2x8x8xf32>, vector<2x8x16xf32>, vector<2x8x16xf32> -> vector<2x8x16xf32>
    "tpu.trace_stop"() : () -> ()
    %771 = vector.shape_cast %770 : vector<2x8x16xf32> to vector<16x16xf32>
    %c2_553 = arith.constant 2 : index
    %c3_554 = arith.constant 3 : index
    %c0_555 = arith.constant 0 : index
    %c0_556 = arith.constant 0 : index
    %772 = vector.load %arg14[%c2_553, %c3_554, %c0_555, %c0_556] : memref<3x4x16x64xf32, #tpu.memory_space<vmem>>, vector<1x1x16x64xf32>
    %773 = vector.shape_cast %772 : vector<1x1x16x64xf32> to vector<16x64xf32>
    %cst_557 = arith.constant dense<0.000000e+00> : vector<16x64xf32>
    %774 = tpu.matmul %771, %773, %cst_557 {dimension_numbers = #tpu.dot_dimension_numbers<[1], [0], [0], [1], [0, 0, 1, 1], [], []>} : vector<16x16xf32>, vector<16x64xf32>, vector<16x64xf32> -> vector<16x64xf32>
    %775 = arith.addf %730, %774 : vector<16x64xf32>
    %776 = arith.addf %568, %775 : vector<16x64xf32>
    %c2_558 = arith.constant 2 : index
    %c0_559 = arith.constant 0 : index
    %c0_560 = arith.constant 0 : index
    %777 = vector.load %arg15[%c2_558, %c0_559, %c0_560] : memref<3x1x64xf32, #tpu.memory_space<vmem>>, vector<1x1x64xf32>
    %778 = vector.shape_cast %777 : vector<1x1x64xf32> to vector<1x64xf32>
    %779 = vector.broadcast %778 : vector<1x64xf32> to vector<16x64xf32>
    %780 = arith.addf %776, %779 : vector<16x64xf32>
    %c2_561 = arith.constant 2 : index
    %c0_562 = arith.constant 0 : index
    %c0_563 = arith.constant 0 : index
    %781 = vector.load %arg16[%c2_561, %c0_562, %c0_563] : memref<3x1x64xf32, #tpu.memory_space<vmem>>, vector<1x1x64xf32>
    %782 = vector.shape_cast %781 : vector<1x1x64xf32> to vector<1x64xf32>
    %c2_564 = arith.constant 2 : index
    %c0_565 = arith.constant 0 : index
    %c0_566 = arith.constant 0 : index
    %783 = vector.load %arg17[%c2_564, %c0_565, %c0_566] : memref<3x1x64xf32, #tpu.memory_space<vmem>>, vector<1x1x64xf32>
    %784 = vector.shape_cast %783 : vector<1x1x64xf32> to vector<1x64xf32>
    %cst_567 = arith.constant dense<0.000000e+00> : vector<16xf32>
    %785 = vector.multi_reduction <add>, %780, %cst_567 [1] : vector<16x64xf32> to vector<16xf32>
    %786 = vector.shape_cast %785 : vector<16xf32> to vector<16x1xf32>
    %cst_568 = arith.constant 6.400000e+01 : f32
    %787 = vector.broadcast %cst_568 : f32 to vector<16x1xf32>
    %788 = arith.divf %786, %787 : vector<16x1xf32>
    %789 = vector.broadcast %788 : vector<16x1xf32> to vector<16x64xf32>
    %790 = arith.subf %780, %789 : vector<16x64xf32>
    %791 = arith.mulf %790, %790 : vector<16x64xf32>
    %cst_569 = arith.constant dense<0.000000e+00> : vector<16xf32>
    %792 = vector.multi_reduction <add>, %791, %cst_569 [1] : vector<16x64xf32> to vector<16xf32>
    %793 = vector.shape_cast %792 : vector<16xf32> to vector<16x1xf32>
    %cst_570 = arith.constant 6.400000e+01 : f32
    %794 = vector.broadcast %cst_570 : f32 to vector<16x1xf32>
    %795 = arith.divf %793, %794 : vector<16x1xf32>
    %796 = vector.broadcast %788 : vector<16x1xf32> to vector<16x64xf32>
    %797 = arith.subf %780, %796 : vector<16x64xf32>
    %cst_571 = arith.constant 9.99999974E-6 : f32
    %798 = vector.broadcast %cst_571 : f32 to vector<16x1xf32>
    %799 = arith.addf %795, %798 : vector<16x1xf32>
    %800 = math.rsqrt %799 : vector<16x1xf32>
    %801 = vector.broadcast %800 : vector<16x1xf32> to vector<16x64xf32>
    %802 = arith.mulf %797, %801 : vector<16x64xf32>
    %803 = vector.broadcast %782 : vector<1x64xf32> to vector<16x64xf32>
    %804 = arith.mulf %802, %803 : vector<16x64xf32>
    %805 = vector.broadcast %784 : vector<1x64xf32> to vector<16x64xf32>
    %806 = arith.addf %804, %805 : vector<16x64xf32>
    %c2_572 = arith.constant 2 : index
    %c0_573 = arith.constant 0 : index
    %c0_574 = arith.constant 0 : index
    %807 = vector.load %arg18[%c2_572, %c0_573, %c0_574] : memref<3x64x256xf32, #tpu.memory_space<vmem>>, vector<1x64x256xf32>
    %808 = vector.shape_cast %807 : vector<1x64x256xf32> to vector<64x256xf32>
    %cst_575 = arith.constant dense<0.000000e+00> : vector<16x256xf32>
    %809 = tpu.matmul %806, %808, %cst_575 {dimension_numbers = #tpu.dot_dimension_numbers<[1], [0], [0], [1], [0, 0, 1, 1], [], []>} : vector<16x64xf32>, vector<64x256xf32>, vector<16x256xf32> -> vector<16x256xf32>
    %c2_576 = arith.constant 2 : index
    %c0_577 = arith.constant 0 : index
    %c0_578 = arith.constant 0 : index
    %810 = vector.load %arg19[%c2_576, %c0_577, %c0_578] : memref<3x1x256xf32, #tpu.memory_space<vmem>>, vector<1x1x256xf32>
    %811 = vector.shape_cast %810 : vector<1x1x256xf32> to vector<1x256xf32>
    %812 = vector.broadcast %811 : vector<1x256xf32> to vector<16x256xf32>
    %813 = arith.addf %809, %812 : vector<16x256xf32>
    %cst_579 = arith.constant 5.000000e-01 : f32
    %814 = vector.broadcast %cst_579 : f32 to vector<16x256xf32>
    %815 = arith.mulf %814, %813 : vector<16x256xf32>
    %cst_580 = arith.constant 4.471500e-02 : f32
    %816 = vector.broadcast %cst_580 : f32 to vector<16x256xf32>
    %817 = arith.mulf %816, %813 : vector<16x256xf32>
    %818 = arith.mulf %817, %813 : vector<16x256xf32>
    %819 = arith.mulf %818, %813 : vector<16x256xf32>
    %820 = arith.addf %813, %819 : vector<16x256xf32>
    %cst_581 = arith.constant 0.797884583 : f32
    %821 = vector.broadcast %cst_581 : f32 to vector<16x256xf32>
    %822 = arith.mulf %821, %820 : vector<16x256xf32>
    %823 = math.tanh %822 : vector<16x256xf32>
    %cst_582 = arith.constant 1.000000e+00 : f32
    %824 = vector.broadcast %cst_582 : f32 to vector<16x256xf32>
    %825 = arith.addf %824, %823 : vector<16x256xf32>
    %826 = arith.mulf %815, %825 : vector<16x256xf32>
    %c2_583 = arith.constant 2 : index
    %c0_584 = arith.constant 0 : index
    %c0_585 = arith.constant 0 : index
    %827 = vector.load %arg20[%c2_583, %c0_584, %c0_585] : memref<3x256x64xf32, #tpu.memory_space<vmem>>, vector<1x256x64xf32>
    %828 = vector.shape_cast %827 : vector<1x256x64xf32> to vector<256x64xf32>
    %cst_586 = arith.constant dense<0.000000e+00> : vector<16x64xf32>
    %829 = tpu.matmul %826, %828, %cst_586 {dimension_numbers = #tpu.dot_dimension_numbers<[1], [0], [0], [1], [0, 0, 1, 1], [], []>} : vector<16x256xf32>, vector<256x64xf32>, vector<16x64xf32> -> vector<16x64xf32>
    %c2_587 = arith.constant 2 : index
    %c0_588 = arith.constant 0 : index
    %c0_589 = arith.constant 0 : index
    %830 = vector.load %arg21[%c2_587, %c0_588, %c0_589] : memref<3x1x64xf32, #tpu.memory_space<vmem>>, vector<1x1x64xf32>
    %831 = vector.shape_cast %830 : vector<1x1x64xf32> to vector<1x64xf32>
    %832 = vector.broadcast %831 : vector<1x64xf32> to vector<16x64xf32>
    %833 = arith.addf %829, %832 : vector<16x64xf32>
    %834 = arith.addf %780, %833 : vector<16x64xf32>
    %835 = vector.shape_cast %834 : vector<16x64xf32> to vector<2x8x64xf32>
    %836 = vector.extract_strided_slice %835 {offsets = [0, 7, 0], sizes = [2, 1, 64], strides = [1, 1, 1]} : vector<2x8x64xf32> to vector<2x1x64xf32>
    %837 = vector.shape_cast %836 : vector<2x1x64xf32> to vector<2x64xf32>
    %c0_590 = arith.constant 0 : index
    %c0_591 = arith.constant 0 : index
    %838 = vector.load %arg22[%c0_590, %c0_591] : memref<1x64xf32, #tpu.memory_space<vmem>>, vector<1x64xf32>
    %c0_592 = arith.constant 0 : index
    %c0_593 = arith.constant 0 : index
    %839 = vector.load %arg23[%c0_592, %c0_593] : memref<1x64xf32, #tpu.memory_space<vmem>>, vector<1x64xf32>
    %cst_594 = arith.constant dense<0.000000e+00> : vector<2xf32>
    %840 = vector.multi_reduction <add>, %837, %cst_594 [1] : vector<2x64xf32> to vector<2xf32>
    %841 = vector.shape_cast %840 : vector<2xf32> to vector<2x1xf32>
    %cst_595 = arith.constant 6.400000e+01 : f32
    %842 = vector.broadcast %cst_595 : f32 to vector<2x1xf32>
    %843 = arith.divf %841, %842 : vector<2x1xf32>
    %844 = vector.broadcast %843 : vector<2x1xf32> to vector<2x64xf32>
    %845 = arith.subf %837, %844 : vector<2x64xf32>
    %846 = arith.mulf %845, %845 : vector<2x64xf32>
    %cst_596 = arith.constant dense<0.000000e+00> : vector<2xf32>
    %847 = vector.multi_reduction <add>, %846, %cst_596 [1] : vector<2x64xf32> to vector<2xf32>
    %848 = vector.shape_cast %847 : vector<2xf32> to vector<2x1xf32>
    %cst_597 = arith.constant 6.400000e+01 : f32
    %849 = vector.broadcast %cst_597 : f32 to vector<2x1xf32>
    %850 = arith.divf %848, %849 : vector<2x1xf32>
    %851 = vector.broadcast %843 : vector<2x1xf32> to vector<2x64xf32>
    %852 = arith.subf %837, %851 : vector<2x64xf32>
    %cst_598 = arith.constant 9.99999974E-6 : f32
    %853 = vector.broadcast %cst_598 : f32 to vector<2x1xf32>
    %854 = arith.addf %850, %853 : vector<2x1xf32>
    %855 = math.rsqrt %854 : vector<2x1xf32>
    %856 = vector.broadcast %855 : vector<2x1xf32> to vector<2x64xf32>
    %857 = arith.mulf %852, %856 : vector<2x64xf32>
    %858 = vector.broadcast %838 : vector<1x64xf32> to vector<2x64xf32>
    %859 = arith.mulf %857, %858 : vector<2x64xf32>
    %860 = vector.broadcast %839 : vector<1x64xf32> to vector<2x64xf32>
    %861 = arith.addf %859, %860 : vector<2x64xf32>
    %c0_599 = arith.constant 0 : index
    %c0_600 = arith.constant 0 : index
    %862 = vector.load %arg24[%c0_599, %c0_600] : memref<64x2xf32, #tpu.memory_space<vmem>>, vector<64x2xf32>
    %cst_601 = arith.constant dense<0.000000e+00> : vector<2x2xf32>
    %863 = tpu.matmul %861, %862, %cst_601 {dimension_numbers = #tpu.dot_dimension_numbers<[1], [0], [0], [1], [0, 0, 1, 1], [], []>} : vector<2x64xf32>, vector<64x2xf32>, vector<2x2xf32> -> vector<2x2xf32>
    %c0_602 = arith.constant 0 : index
    %c0_603 = arith.constant 0 : index
    %864 = vector.load %arg25[%c0_602, %c0_603] : memref<1x2xf32, #tpu.memory_space<vmem>>, vector<1x2xf32>
    %865 = vector.broadcast %864 : vector<1x2xf32> to vector<2x2xf32>
    %866 = arith.addf %863, %865 : vector<2x2xf32>
    %c0_604 = arith.constant 0 : index
    %c0_605 = arith.constant 0 : index
    %867 = vector.load %arg26[%c0_604, %c0_605] : memref<2x2xf32, #tpu.memory_space<vmem>>, vector<2x2xf32>
    tpu.vector_store %arg26[%c0_604, %c0_605], %866 {strides = array<i32>} : memref<2x2xf32, #tpu.memory_space<vmem>>, vector<2x2xf32>,
    return
  }
  func.func @transform_0(%arg0: i32) -> (i32, i32, i32) {
    %c0_i32 = arith.constant 0 : i32
    %c0_i32_0 = arith.constant 0 : i32
    %c0_i32_1 = arith.constant 0 : i32
    return %arg0, %c0_i32, %c0_i32_0 : i32, i32, i32
  }
  func.func @transform_1(%arg0: i32) -> (i32, i32) {
    %c0_i32 = arith.constant 0 : i32
    %c0_i32_0 = arith.constant 0 : i32
    %c0_i32_1 = arith.constant 0 : i32
    return %c0_i32, %c0_i32_0 : i32, i32
  }
  func.func @transform_2(%arg0: i32) -> (i32, i32) {
    %c0_i32 = arith.constant 0 : i32
    %c0_i32_0 = arith.constant 0 : i32
    %c0_i32_1 = arith.constant 0 : i32
    return %c0_i32, %c0_i32_0 : i32, i32
  }
  func.func @transform_3(%arg0: i32) -> (i32, i32) {
    %c0_i32 = arith.constant 0 : i32
    %c0_i32_0 = arith.constant 0 : i32
    %c0_i32_1 = arith.constant 0 : i32
    return %c0_i32, %c0_i32_0 : i32, i32
  }
  func.func @transform_4(%arg0: i32) -> (i32, i32) {
    %c0_i32 = arith.constant 0 : i32
    %c0_i32_0 = arith.constant 0 : i32
    %c0_i32_1 = arith.constant 0 : i32
    return %c0_i32, %c0_i32_0 : i32, i32
  }
  func.func @transform_5(%arg0: i32) -> (i32, i32, i32) {
    %c0_i32 = arith.constant 0 : i32
    %c0_i32_0 = arith.constant 0 : i32
    %c0_i32_1 = arith.constant 0 : i32
    %c0_i32_2 = arith.constant 0 : i32
    return %c0_i32, %c0_i32_0, %c0_i32_1 : i32, i32, i32
  }
  func.func @transform_6(%arg0: i32) -> (i32, i32, i32) {
    %c0_i32 = arith.constant 0 : i32
    %c0_i32_0 = arith.constant 0 : i32
    %c0_i32_1 = arith.constant 0 : i32
    %c0_i32_2 = arith.constant 0 : i32
    return %c0_i32, %c0_i32_0, %c0_i32_1 : i32, i32, i32
  }
  func.func @transform_7(%arg0: i32) -> (i32, i32, i32, i32) {
    %c0_i32 = arith.constant 0 : i32
    %c0_i32_0 = arith.constant 0 : i32
    %c0_i32_1 = arith.constant 0 : i32
    %c0_i32_2 = arith.constant 0 : i32
    %c0_i32_3 = arith.constant 0 : i32
    return %c0_i32, %c0_i32_0, %c0_i32_1, %c0_i32_2 : i32, i32, i32, i32
  }
  func.func @transform_8(%arg0: i32) -> (i32, i32, i32, i32) {
    %c0_i32 = arith.constant 0 : i32
    %c0_i32_0 = arith.constant 0 : i32
    %c0_i32_1 = arith.constant 0 : i32
    %c0_i32_2 = arith.constant 0 : i32
    %c0_i32_3 = arith.constant 0 : i32
    return %c0_i32, %c0_i32_0, %c0_i32_1, %c0_i32_2 : i32, i32, i32, i32
  }
  func.func @transform_9(%arg0: i32) -> (i32, i32, i32, i32) {
    %c0_i32 = arith.constant 0 : i32
    %c0_i32_0 = arith.constant 0 : i32
    %c0_i32_1 = arith.constant 0 : i32
    %c0_i32_2 = arith.constant 0 : i32
    %c0_i32_3 = arith.constant 0 : i32
    return %c0_i32, %c0_i32_0, %c0_i32_1, %c0_i32_2 : i32, i32, i32, i32
  }
  func.func @transform_10(%arg0: i32) -> (i32, i32, i32, i32) {
    %c0_i32 = arith.constant 0 : i32
    %c0_i32_0 = arith.constant 0 : i32
    %c0_i32_1 = arith.constant 0 : i32
    %c0_i32_2 = arith.constant 0 : i32
    %c0_i32_3 = arith.constant 0 : i32
    return %c0_i32, %c0_i32_0, %c0_i32_1, %c0_i32_2 : i32, i32, i32, i32
  }
  func.func @transform_11(%arg0: i32) -> (i32, i32, i32, i32) {
    %c0_i32 = arith.constant 0 : i32
    %c0_i32_0 = arith.constant 0 : i32
    %c0_i32_1 = arith.constant 0 : i32
    %c0_i32_2 = arith.constant 0 : i32
    %c0_i32_3 = arith.constant 0 : i32
    return %c0_i32, %c0_i32_0, %c0_i32_1, %c0_i32_2 : i32, i32, i32, i32
  }
  func.func @transform_12(%arg0: i32) -> (i32, i32, i32, i32) {
    %c0_i32 = arith.constant 0 : i32
    %c0_i32_0 = arith.constant 0 : i32
    %c0_i32_1 = arith.constant 0 : i32
    %c0_i32_2 = arith.constant 0 : i32
    %c0_i32_3 = arith.constant 0 : i32
    return %c0_i32, %c0_i32_0, %c0_i32_1, %c0_i32_2 : i32, i32, i32, i32
  }
  func.func @transform_13(%arg0: i32) -> (i32, i32, i32, i32) {
    %c0_i32 = arith.constant 0 : i32
    %c0_i32_0 = arith.constant 0 : i32
    %c0_i32_1 = arith.constant 0 : i32
    %c0_i32_2 = arith.constant 0 : i32
    %c0_i32_3 = arith.constant 0 : i32
    return %c0_i32, %c0_i32_0, %c0_i32_1, %c0_i32_2 : i32, i32, i32, i32
  }
  func.func @transform_14(%arg0: i32) -> (i32, i32, i32) {
    %c0_i32 = arith.constant 0 : i32
    %c0_i32_0 = arith.constant 0 : i32
    %c0_i32_1 = arith.constant 0 : i32
    %c0_i32_2 = arith.constant 0 : i32
    return %c0_i32, %c0_i32_0, %c0_i32_1 : i32, i32, i32
  }
  func.func @transform_15(%arg0: i32) -> (i32, i32, i32) {
    %c0_i32 = arith.constant 0 : i32
    %c0_i32_0 = arith.constant 0 : i32
    %c0_i32_1 = arith.constant 0 : i32
    %c0_i32_2 = arith.constant 0 : i32
    return %c0_i32, %c0_i32_0, %c0_i32_1 : i32, i32, i32
  }
  func.func @transform_16(%arg0: i32) -> (i32, i32, i32) {
    %c0_i32 = arith.constant 0 : i32
    %c0_i32_0 = arith.constant 0 : i32
    %c0_i32_1 = arith.constant 0 : i32
    %c0_i32_2 = arith.constant 0 : i32
    return %c0_i32, %c0_i32_0, %c0_i32_1 : i32, i32, i32
  }
  func.func @transform_17(%arg0: i32) -> (i32, i32, i32) {
    %c0_i32 = arith.constant 0 : i32
    %c0_i32_0 = arith.constant 0 : i32
    %c0_i32_1 = arith.constant 0 : i32
    %c0_i32_2 = arith.constant 0 : i32
    return %c0_i32, %c0_i32_0, %c0_i32_1 : i32, i32, i32
  }
  func.func @transform_18(%arg0: i32) -> (i32, i32, i32) {
    %c0_i32 = arith.constant 0 : i32
    %c0_i32_0 = arith.constant 0 : i32
    %c0_i32_1 = arith.constant 0 : i32
    %c0_i32_2 = arith.constant 0 : i32
    return %c0_i32, %c0_i32_0, %c0_i32_1 : i32, i32, i32
  }
  func.func @transform_19(%arg0: i32) -> (i32, i32, i32) {
    %c0_i32 = arith.constant 0 : i32
    %c0_i32_0 = arith.constant 0 : i32
    %c0_i32_1 = arith.constant 0 : i32
    %c0_i32_2 = arith.constant 0 : i32
    return %c0_i32, %c0_i32_0, %c0_i32_1 : i32, i32, i32
  }
  func.func @transform_20(%arg0: i32) -> (i32, i32, i32) {
    %c0_i32 = arith.constant 0 : i32
    %c0_i32_0 = arith.constant 0 : i32
    %c0_i32_1 = arith.constant 0 : i32
    %c0_i32_2 = arith.constant 0 : i32
    return %c0_i32, %c0_i32_0, %c0_i32_1 : i32, i32, i32
  }
  func.func @transform_21(%arg0: i32) -> (i32, i32) {
    %c0_i32 = arith.constant 0 : i32
    %c0_i32_0 = arith.constant 0 : i32
    %c0_i32_1 = arith.constant 0 : i32
    return %c0_i32, %c0_i32_0 : i32, i32
  }
  func.func @transform_22(%arg0: i32) -> (i32, i32) {
    %c0_i32 = arith.constant 0 : i32
    %c0_i32_0 = arith.constant 0 : i32
    %c0_i32_1 = arith.constant 0 : i32
    return %c0_i32, %c0_i32_0 : i32, i32
  }
  func.func @transform_23(%arg0: i32) -> (i32, i32) {
    %c0_i32 = arith.constant 0 : i32
    %c0_i32_0 = arith.constant 0 : i32
    %c0_i32_1 = arith.constant 0 : i32
    return %c0_i32, %c0_i32_0 : i32, i32
  }
  func.func @transform_24(%arg0: i32) -> (i32, i32) {
    %c0_i32 = arith.constant 0 : i32
    %c0_i32_0 = arith.constant 0 : i32
    %c0_i32_1 = arith.constant 0 : i32
    return %c0_i32, %c0_i32_0 : i32, i32
  }
  func.func @transform_25(%arg0: i32) -> (i32, i32) {
    %c0_i32 = arith.constant 0 : i32
    %c0_i32_0 = arith.constant 0 : i32
    return %arg0, %c0_i32 : i32, i32
  }
}

</mosaic_0001>

<llo_original>
// kernel: timeseries_decoder_forward.1
$region0: #{timeseries_decoder_forward.1}
  #allocation0 [shape = 'u32[]', space=smem, size = 0x4, offset = 0x4, fixed_abs, tag = 'smem constant byte address 0x4 - core index']
  #allocation1 [shape = 'u32[144,128]{1,0:T(1,128)}', space=vmem, size = 0x12000, scoped, tag = 'internal scratch']
  %s0 = inlined_call_operand.vmem [shape: f32[2,8,12], index: 0, kind: input, shape index: {}]
  %s1 = inlined_call_operand.vmem [shape: f32[12,64], index: 1, kind: input, shape index: {}]
  %s2 = inlined_call_operand.vmem [shape: f32[1,64], index: 2, kind: input, shape index: {}]
  %s3 = inlined_call_operand.vmem [shape: f32[1,64], index: 3, kind: input, shape index: {}]
  %s4 = inlined_call_operand.vmem [shape: f32[1,64], index: 4, kind: input, shape index: {}]
  %s5 = inlined_call_operand.vmem [shape: f32[3,1,64], index: 5, kind: input, shape index: {}]
  %s6 = inlined_call_operand.vmem [shape: f32[3,1,64], index: 6, kind: input, shape index: {}]
  %s7 = inlined_call_operand.vmem [shape: f32[3,4,64,16], index: 7, kind: input, shape index: {}]
  %s8 = inlined_call_operand.vmem [shape: f32[3,4,1,16], index: 8, kind: input, shape index: {}]
  %s9 = inlined_call_operand.vmem [shape: f32[3,4,64,16], index: 9, kind: input, shape index: {}]
  %s10 = inlined_call_operand.vmem [shape: f32[3,4,1,16], index: 10, kind: input, shape index: {}]
  %s11 = inlined_call_operand.vmem [shape: f32[3,4,64,16], index: 11, kind: input, shape index: {}]
  %s12 = inlined_call_operand.vmem [shape: f32[3,4,1,16], index: 12, kind: input, shape index: {}]
  %s13 = inlined_call_operand.vmem [shape: f32[3,4,16,64], index: 13, kind: input, shape index: {}]
  %s14 = inlined_call_operand.vmem [shape: f32[3,1,64], index: 14, kind: input, shape index: {}]
  %s15 = inlined_call_operand.vmem [shape: f32[3,1,64], index: 15, kind: input, shape index: {}]
  %s16 = inlined_call_operand.vmem [shape: f32[3,1,64], index: 16, kind: input, shape index: {}]
  %s17 = inlined_call_operand.vmem [shape: f32[3,64,256], index: 17, kind: input, shape index: {}]
  %s18 = inlined_call_operand.vmem [shape: f32[3,1,256], index: 18, kind: input, shape index: {}]
  %s19 = inlined_call_operand.vmem [shape: f32[3,256,64], index: 19, kind: input, shape index: {}]
  %s20 = inlined_call_operand.vmem [shape: f32[3,1,64], index: 20, kind: input, shape index: {}]
  %s21 = inlined_call_operand.vmem [shape: f32[1,64], index: 21, kind: input, shape index: {}]
  %s22 = inlined_call_operand.vmem [shape: f32[1,64], index: 22, kind: input, shape index: {}]
  %s23 = inlined_call_operand.vmem [shape: f32[64,2], index: 23, kind: input, shape index: {}]
  %s24 = inlined_call_operand.vmem [shape: f32[1,2], index: 24, kind: input, shape index: {}]
  %s25 = inlined_call_operand.hbm [shape: f32[2,2], index: 25, kind: output, shape index: {}]
  %s26 = sld [smem:[#allocation0]]
  $region110: #{timeseries_decoder_forward.1} parent=0
    _
  %s28 = ssub.s32 1, %s26
  %s29 = scalar_select 0, %s28, %s26
  $region1: #{timeseries_decoder_forward.1} parent=0
    #allocation2 [shape = 'u8[1024]{0}', space=vmem, size = 0x400, scoped, tag = 'output window, operand 0, single buffered']
    #allocation3 [shape = 's32[1]{0}', space=sflag, size = 0x4, scoped, tag = 'scoped memory for timeseries_decoder_forward.1']
    %30 = vsyncpa [#allocation3], 0
    // Predicated region
    $region2: #{timeseries_decoder_forward.1} parent=1 // pred_check
      _
    $region3: #{timeseries_decoder_forward.1} parent=1 // pred_check_branch
      %32 = sbr.rel (0) target = $region5
    $region4: #{timeseries_decoder_forward.1} parent=1 // pred_region
      _
    $region5: #{timeseries_decoder_forward.1} parent=1 // pred_fallthru
      _
    // Predicated region
    $region6: #{timeseries_decoder_forward.1} parent=1 // pred_check
      _
    $region7: #{timeseries_decoder_forward.1} parent=1 // pred_check_branch
      %34 = sbr.rel (0) target = $region9
    $region8: #{timeseries_decoder_forward.1} parent=1 // pred_region
      _
    $region9: #{timeseries_decoder_forward.1} parent=1 // pred_fallthru
      _
    // Predicated region
    $region10: #{timeseries_decoder_forward.1} parent=1 // pred_check
      _
    $region11: #{timeseries_decoder_forward.1} parent=1 // pred_check_branch
      %36 = sbr.rel (0) target = $region13
    $region12: #{timeseries_decoder_forward.1} parent=1 // pred_region
      _
    $region13: #{timeseries_decoder_forward.1} parent=1 // pred_fallthru
      _
    // Predicated region
    $region14: #{timeseries_decoder_forward.1} parent=1 // pred_check
      _
    $region15: #{timeseries_decoder_forward.1} parent=1 // pred_check_branch
      %38 = sbr.rel (0) target = $region17
    $region16: #{timeseries_decoder_forward.1} parent=1 // pred_region
      _
    $region17: #{timeseries_decoder_forward.1} parent=1 // pred_fallthru
      _
    // Predicated region
    $region18: #{timeseries_decoder_forward.1} parent=1 // pred_check
      _
    $region19: #{timeseries_decoder_forward.1} parent=1 // pred_check_branch
      %40 = sbr.rel (0) target = $region21
    $region20: #{timeseries_decoder_forward.1} parent=1 // pred_region
      _
    $region21: #{timeseries_decoder_forward.1} parent=1 // pred_fallthru
      _
    // Predicated region
    $region22: #{timeseries_decoder_forward.1} parent=1 // pred_check
      _
    $region23: #{timeseries_decoder_forward.1} parent=1 // pred_check_branch
      %42 = sbr.rel (0) target = $region25
    $region24: #{timeseries_decoder_forward.1} parent=1 // pred_region
      _
    $region25: #{timeseries_decoder_forward.1} parent=1 // pred_fallthru
      _
    // Predicated region
    $region26: #{timeseries_decoder_forward.1} parent=1 // pred_check
      _
    $region27: #{timeseries_decoder_forward.1} parent=1 // pred_check_branch
      %44 = sbr.rel (0) target = $region29
    $region28: #{timeseries_decoder_forward.1} parent=1 // pred_region
      _
    $region29: #{timeseries_decoder_forward.1} parent=1 // pred_fallthru
      _
    // Predicated region
    $region30: #{timeseries_decoder_forward.1} parent=1 // pred_check
      _
    $region31: #{timeseries_decoder_forward.1} parent=1 // pred_check_branch
      %46 = sbr.rel (0) target = $region33
    $region32: #{timeseries_decoder_forward.1} parent=1 // pred_region
      _
    $region33: #{timeseries_decoder_forward.1} parent=1 // pred_fallthru
      _
    // Predicated region
    $region34: #{timeseries_decoder_forward.1} parent=1 // pred_check
      _
    $region35: #{timeseries_decoder_forward.1} parent=1 // pred_check_branch
      %48 = sbr.rel (0) target = $region37
    $region36: #{timeseries_decoder_forward.1} parent=1 // pred_region
      _
    $region37: #{timeseries_decoder_forward.1} parent=1 // pred_fallthru
      _
    // Predicated region
    $region38: #{timeseries_decoder_forward.1} parent=1 // pred_check
      _
    $region39: #{timeseries_decoder_forward.1} parent=1 // pred_check_branch
      %50 = sbr.rel (0) target = $region41
    $region40: #{timeseries_decoder_forward.1} parent=1 // pred_region
      _
    $region41: #{timeseries_decoder_forward.1} parent=1 // pred_fallthru
      _
    // Predicated region
    $region42: #{timeseries_decoder_forward.1} parent=1 // pred_check
      _
    $region43: #{timeseries_decoder_forward.1} parent=1 // pred_check_branch
      %52 = sbr.rel (0) target = $region45
    $region44: #{timeseries_decoder_forward.1} parent=1 // pred_region
      _
    $region45: #{timeseries_decoder_forward.1} parent=1 // pred_fallthru
      _
    // Predicated region
    $region46: #{timeseries_decoder_forward.1} parent=1 // pred_check
      _
    $region47: #{timeseries_decoder_forward.1} parent=1 // pred_check_branch
      %54 = sbr.rel (0) target = $region49
    $region48: #{timeseries_decoder_forward.1} parent=1 // pred_region
      _
    $region49: #{timeseries_decoder_forward.1} parent=1 // pred_fallthru
      _
    // Predicated region
    $region50: #{timeseries_decoder_forward.1} parent=1 // pred_check
      _
    $region51: #{timeseries_decoder_forward.1} parent=1 // pred_check_branch
      %56 = sbr.rel (0) target = $region53
    $region52: #{timeseries_decoder_forward.1} parent=1 // pred_region
      _
    $region53: #{timeseries_decoder_forward.1} parent=1 // pred_fallthru
      _
    // Predicated region
    $region54: #{timeseries_decoder_forward.1} parent=1 // pred_check
      _
    $region55: #{timeseries_decoder_forward.1} parent=1 // pred_check_branch
      %58 = sbr.rel (0) target = $region57
    $region56: #{timeseries_decoder_forward.1} parent=1 // pred_region
      _
    $region57: #{timeseries_decoder_forward.1} parent=1 // pred_fallthru
      _
    // Predicated region
    $region58: #{timeseries_decoder_forward.1} parent=1 // pred_check
      _
    $region59: #{timeseries_decoder_forward.1} parent=1 // pred_check_branch
      %60 = sbr.rel (0) target = $region61
    $region60: #{timeseries_decoder_forward.1} parent=1 // pred_region
      _
    $region61: #{timeseries_decoder_forward.1} parent=1 // pred_fallthru
      _
    // Predicated region
    $region62: #{timeseries_decoder_forward.1} parent=1 // pred_check
      _
    $region63: #{timeseries_decoder_forward.1} parent=1 // pred_check_branch
      %62 = sbr.rel (0) target = $region65
    $region64: #{timeseries_decoder_forward.1} parent=1 // pred_region
      _
    $region65: #{timeseries_decoder_forward.1} parent=1 // pred_fallthru
      _
    // Predicated region
    $region66: #{timeseries_decoder_forward.1} parent=1 // pred_check
      _
    $region67: #{timeseries_decoder_forward.1} parent=1 // pred_check_branch
      %64 = sbr.rel (0) target = $region69
    $region68: #{timeseries_decoder_forward.1} parent=1 // pred_region
      _
    $region69: #{timeseries_decoder_forward.1} parent=1 // pred_fallthru
      _
    // Predicated region
    $region70: #{timeseries_decoder_forward.1} parent=1 // pred_check
      _
    $region71: #{timeseries_decoder_forward.1} parent=1 // pred_check_branch
      %66 = sbr.rel (0) target = $region73
    $region72: #{timeseries_decoder_forward.1} parent=1 // pred_region
      _
    $region73: #{timeseries_decoder_forward.1} parent=1 // pred_fallthru
      _
    // Predicated region
    $region74: #{timeseries_decoder_forward.1} parent=1 // pred_check
      _
    $region75: #{timeseries_decoder_forward.1} parent=1 // pred_check_branch
      %68 = sbr.rel (0) target = $region77
    $region76: #{timeseries_decoder_forward.1} parent=1 // pred_region
      _
    $region77: #{timeseries_decoder_forward.1} parent=1 // pred_fallthru
      _
    // Predicated region
    $region78: #{timeseries_decoder_forward.1} parent=1 // pred_check
      _
    $region79: #{timeseries_decoder_forward.1} parent=1 // pred_check_branch
      %70 = sbr.rel (0) target = $region81
    $region80: #{timeseries_decoder_forward.1} parent=1 // pred_region
      _
    $region81: #{timeseries_decoder_forward.1} parent=1 // pred_fallthru
      _
    // Predicated region
    $region82: #{timeseries_decoder_forward.1} parent=1 // pred_check
      _
    $region83: #{timeseries_decoder_forward.1} parent=1 // pred_check_branch
      %72 = sbr.rel (0) target = $region85
    $region84: #{timeseries_decoder_forward.1} parent=1 // pred_region
      _
    $region85: #{timeseries_decoder_forward.1} parent=1 // pred_fallthru
      _
    // Predicated region
    $region86: #{timeseries_decoder_forward.1} parent=1 // pred_check
      _
    $region87: #{timeseries_decoder_forward.1} parent=1 // pred_check_branch
      %74 = sbr.rel (0) target = $region89
    $region88: #{timeseries_decoder_forward.1} parent=1 // pred_region
      _
    $region89: #{timeseries_decoder_forward.1} parent=1 // pred_fallthru
      _
    // Predicated region
    $region90: #{timeseries_decoder_forward.1} parent=1 // pred_check
      _
    $region91: #{timeseries_decoder_forward.1} parent=1 // pred_check_branch
      %76 = sbr.rel (0) target = $region93
    $region92: #{timeseries_decoder_forward.1} parent=1 // pred_region
      _
    $region93: #{timeseries_decoder_forward.1} parent=1 // pred_fallthru
      _
    // Predicated region
    $region94: #{timeseries_decoder_forward.1} parent=1 // pred_check
      _
    $region95: #{timeseries_decoder_forward.1} parent=1 // pred_check_branch
      %78 = sbr.rel (0) target = $region97
    $region96: #{timeseries_decoder_forward.1} parent=1 // pred_region
      _
    $region97: #{timeseries_decoder_forward.1} parent=1 // pred_fallthru
      _
    // Predicated region
    $region98: #{timeseries_decoder_forward.1} parent=1 // pred_check
      _
    $region99: #{timeseries_decoder_forward.1} parent=1 // pred_check_branch
      %80 = sbr.rel (0) target = $region101
    $region100: #{timeseries_decoder_forward.1} parent=1 // pred_region
      _
    $region101: #{timeseries_decoder_forward.1} parent=1 // pred_fallthru
      _
    %v81 = vld [vmem:[%s0] sm:$0xff]
    %v82 = vld [vmem:[%s0 + $0x8] sm:$0xff]
    %v83 = vld [vmem:[%s1] sm:$0xff]
    %v84 = vld [vmem:[%s1 + $0x8] sm:$0xf]
    %v85 = vld [vmem:[%s2] sm:$0x1]
    %v87 = vlaneseq
    %v88 = vshrl.u32 %v87, 7
    %v89 = vsub.s32 0, %v88
    %v90 = vrot.slane %v85, %v89
    %vm92 = vcmask 97280
    %v94 = vsel %vm92, %v81, 0
    %v97 = vsel %vm92, %v82, 0
    %vm99 = vcmask 1043456
    %v101 = vsel %vm99, %v84, 0
    %103 = vmatprep.subr.mxu0 0.0
    %104 = vmatpush1.msra.mxu0 %v83
    %105 = vmatprep.subr.mxu0 0.0
    %106 = vmatpush1.msra.mxu0 %v101
    %107 = vmatprep.subr.mxu0 0.0
    %108 = vmatpush1.msra.mxu0 0.0
    %109 = vmatprep.subr.mxu0 0.0
    %110 = vmatpush1.msra.mxu0 0.0
    %111 = vmatprep.subr.mxu0 0.0
    %112 = vmatpush1.msra.mxu0 0.0
    %113 = vmatprep.subr.mxu0 0.0
    %114 = vmatpush1.msra.mxu0 0.0
    %115 = vmatprep.subr.mxu0 0.0
    %116 = vmatpush1.msra.mxu0 0.0
    %117 = vmatprep.subr.mxu0 0.0
    %118 = vmatpush1.msra.mxu0 0.0
    %119 = vmatprep.subr.mxu0 0.0
    %120 = vmatpush1.msra.mxu0 0.0
    %121 = vmatprep.subr.mxu0 0.0
    %122 = vmatpush1.msra.mxu0 0.0
    %123 = vmatprep.subr.mxu0 0.0
    %124 = vmatpush1.msra.mxu0 0.0
    %125 = vmatprep.subr.mxu0 0.0
    %126 = vmatpush1.msra.mxu0 0.0
    %127 = vmatprep.subr.mxu0 0.0
    %128 = vmatpush1.msra.mxu0 0.0
    %129 = vmatprep.subr.mxu0 0.0
    %130 = vmatpush1.msra.mxu0 0.0
    %131 = vmatprep.subr.mxu0 0.0
    %132 = vmatpush1.msra.mxu0 0.0
    %133 = vmatprep.subr.mxu0 0.0
    %134 = vmatpush1.msra.mxu0 0.0
    %135 = vmatprep.subr.mxu0 0.0
    %136 = vmatpush1.msra.mxu0 0.0
    %137 = vmatprep.subr.mxu0 0.0
    %138 = vmatpush1.msra.mxu0 0.0
    %139 = vmatprep.subr.mxu0 0.0
    %140 = vmatpush1.msra.mxu0 0.0
    %141 = vmatprep.subr.mxu0 0.0
    %142 = vmatpush1.msra.mxu0 0.0
    %143 = vmatprep.subr.mxu0 0.0
    %144 = vmatpush1.msra.mxu0 0.0
    %145 = vmatprep.subr.mxu0 0.0
    %146 = vmatpush1.msra.mxu0 0.0
    %147 = vmatprep.subr.mxu0 0.0
    %148 = vmatpush1.msra.mxu0 0.0
    %149 = vmatprep.subr.mxu0 0.0
    %150 = vmatpush1.msra.mxu0 0.0
    %151 = vmatprep.subr.mxu0 0.0
    %152 = vmatpush1.msra.mxu0 0.0
    %153 = vmatprep.subr.mxu0 0.0
    %154 = vmatpush1.msra.mxu0 0.0
    %155 = vmatprep.subr.mxu0 0.0
    %156 = vmatpush1.msra.mxu0 0.0
    %157 = vmatprep.subr.mxu0 0.0
    %158 = vmatpush1.msra.mxu0 0.0
    %159 = vmatprep.subr.mxu0 0.0
    %160 = vmatpush1.msra.mxu0 0.0
    %161 = vmatprep.subr.mxu0 0.0
    %162 = vmatpush1.msra.mxu0 0.0
    %163 = vmatprep.subr.mxu0 0.0
    %164 = vmatpush1.msra.mxu0 0.0
    %165 = vmatprep.subr.mxu0 0.0
    %166 = vmatpush1.msra.mxu0 0.0
    %167 = vmatprep.mubr.f32.mxu0 0.0
    %168 = vmatmul.mubr.f32.gmra.mrb[0].mxu0 %v94
    %v169 = vpop.f32.mrb[0].mxu0
    %v170 = vadd.f32 %v90, %v169
    %v171 = vpop.f32.mrb[0].mxu0
    %172 = vmatprep.mubr.f32.mxu0 0.0
    %173 = vmatmul.mubr.f32.gmra.mrb[0].mxu0 %v97
    %v174 = vpop.f32.mrb[0].mxu0
    %v175 = vadd.f32 %v90, %v174
    %v176 = vpop.f32.mrb[0].mxu0
    %177 = vdwg.mxu0
    %v178 = vld [vmem:[%s3] sm:$0x1]
    %v179 = vld [vmem:[%s4] sm:$0x1]
    %vm180 = vcmask 523264
    %v181 = vsel %vm180, %v170, 0.0
    %182 = vadd.xlane.f32.xlu0 %v181
    %v183 = vpop.xlane.xlu0 %182
    %v184 = vsel %vm180, %v175, 0.0
    %185 = vadd.xlane.f32.xlu0 %v184
    %v186 = vpop.xlane.xlu0 %185
    %v187 = vrcp.pop 64.0
    %v188 = vmul.f32 %v183, %v187
    %v189 = vmul.f32 %v186, %v187
    %v190 = vsub.f32 %v170, %v188
    %v191 = vsub.f32 %v175, %v189
    %v192 = vmul.f32 %v190, %v190
    %v193 = vmul.f32 %v191, %v191
    %v194 = vsel %vm180, %v192, 0.0
    %195 = vadd.xlane.f32.xlu0 %v194
    %v196 = vpop.xlane.xlu0 %195
    %v197 = vsel %vm180, %v193, 0.0
    %198 = vadd.xlane.f32.xlu0 %v197
    %v199 = vpop.xlane.xlu0 %198
    %v200 = vmul.f32 %v196, %v187
    %v201 = vmul.f32 %v199, %v187
    %v202 = vadd.f32 %v200, 1e-05
    %v203 = vadd.f32 %v201, 1e-05
    %v204 = vrsqrt.pop %v202
    %v205 = vrsqrt.pop %v203
    %v206 = vmul.f32 %v190, %v204
    %v207 = vmul.f32 %v191, %v205
    %v209 = vlaneseq
    %v210 = vshrl.u32 %v209, 7
    %v211 = vsub.s32 0, %v210
    %v212 = vrot.slane %v178, %v211
    %v214 = vmul.f32 %v206, %v212
    %v215 = vmul.f32 %v207, %v212
    %v217 = vlaneseq
    %v218 = vshrl.u32 %v217, 7
    %v219 = vsub.s32 0, %v218
    %v220 = vrot.slane %v179, %v219
    %v222 = vadd.f32 %v214, %v220
    %v223 = vadd.f32 %v215, %v220
    %v224 = vlaneseq
    %v225 = vshrl.u32 %v224, 7
    %v226 = vlaneseq
    %v227 = vand.u32 %v226, 127
    %vm228 = vcmp.gt.s32.totalorder %v227, %v225
    %v229 = vsel %vm228, -1e+30, 0.0
    %v230 = vld [vmem:[%s5] sm:$0x1]
    %v231 = vld [vmem:[%s6] sm:$0x1]
    %v232 = vsel %vm180, %v222, 0.0
    %233 = vadd.xlane.f32.xlu0 %v232
    %v234 = vpop.xlane.xlu0 %233
    %v235 = vsel %vm180, %v223, 0.0
    %236 = vadd.xlane.f32.xlu0 %v235
    %v237 = vpop.xlane.xlu0 %236
    %v238 = vmul.f32 %v234, %v187
    %v239 = vmul.f32 %v237, %v187
    %v240 = vsub.f32 %v222, %v238
    %v241 = vsub.f32 %v223, %v239
    %v242 = vmul.f32 %v240, %v240
    %v243 = vmul.f32 %v241, %v241
    %v244 = vsel %vm180, %v242, 0.0
    %245 = vadd.xlane.f32.xlu0 %v244
    %v246 = vpop.xlane.xlu0 %245
    %v247 = vsel %vm180, %v243, 0.0
    %248 = vadd.xlane.f32.xlu0 %v247
    %v249 = vpop.xlane.xlu0 %248
    %v250 = vmul.f32 %v246, %v187
    %v251 = vmul.f32 %v249, %v187
    %v252 = vadd.f32 %v250, 1e-05
    %v253 = vadd.f32 %v251, 1e-05
    %v254 = vrsqrt.pop %v252
    %v255 = vrsqrt.pop %v253
    %v256 = vmul.f32 %v240, %v254
    %v257 = vmul.f32 %v241, %v255
    %v259 = vlaneseq
    %v260 = vshrl.u32 %v259, 7
    %v261 = vsub.s32 0, %v260
    %v262 = vrot.slane %v230, %v261
    %v264 = vmul.f32 %v256, %v262
    %v265 = vmul.f32 %v257, %v262
    %v267 = vlaneseq
    %v268 = vshrl.u32 %v267, 7
    %v269 = vsub.s32 0, %v268
    %v270 = vrot.slane %v231, %v269
    %v272 = vadd.f32 %v264, %v270
    %v273 = vadd.f32 %v265, %v270
    %v274 = vld [vmem:[%s7] sm:$0xff]
    %v275 = vld [vmem:[%s7 + $0x8] sm:$0xff]
    %v276 = vld [vmem:[%s7 + $0x10] sm:$0xff]
    %v277 = vld [vmem:[%s7 + $0x18] sm:$0xff]
    %v278 = vld [vmem:[%s7 + $0x20] sm:$0xff]
    %v279 = vld [vmem:[%s7 + $0x28] sm:$0xff]
    %v280 = vld [vmem:[%s7 + $0x30] sm:$0xff]
    %v281 = vld [vmem:[%s7 + $0x38] sm:$0xff]
    %v282 = vld [vmem:[%s8] sm:$0x1]
    %v284 = vlaneseq
    %v285 = vshrl.u32 %v284, 7
    %v286 = vsub.s32 0, %v285
    %v287 = vrot.slane %v282, %v286
    %v290 = vsel %vm180, %v272, 0
    %v293 = vsel %vm180, %v273, 0
    %295 = vmatprep.subr.mxu0 0.0
    %296 = vmatpush1.msra.mxu0 %v274
    %297 = vmatprep.subr.mxu0 0.0
    %298 = vmatpush1.msra.mxu0 %v275
    %299 = vmatprep.subr.mxu0 0.0
    %300 = vmatpush1.msra.mxu0 %v276
    %301 = vmatprep.subr.mxu0 0.0
    %302 = vmatpush1.msra.mxu0 %v277
    %303 = vmatprep.subr.mxu0 0.0
    %304 = vmatpush1.msra.mxu0 %v278
    %305 = vmatprep.subr.mxu0 0.0
    %306 = vmatpush1.msra.mxu0 %v279
    %307 = vmatprep.subr.mxu0 0.0
    %308 = vmatpush1.msra.mxu0 %v280
    %309 = vmatprep.subr.mxu0 0.0
    %310 = vmatpush1.msra.mxu0 %v281
    %311 = vmatprep.subr.mxu0 0.0
    %312 = vmatpush1.msra.mxu0 0.0
    %313 = vmatprep.subr.mxu0 0.0
    %314 = vmatpush1.msra.mxu0 0.0
    %315 = vmatprep.subr.mxu0 0.0
    %316 = vmatpush1.msra.mxu0 0.0
    %317 = vmatprep.subr.mxu0 0.0
    %318 = vmatpush1.msra.mxu0 0.0
    %319 = vmatprep.subr.mxu0 0.0
    %320 = vmatpush1.msra.mxu0 0.0
    %321 = vmatprep.subr.mxu0 0.0
    %322 = vmatpush1.msra.mxu0 0.0
    %323 = vmatprep.subr.mxu0 0.0
    %324 = vmatpush1.msra.mxu0 0.0
    %325 = vmatprep.subr.mxu0 0.0
    %326 = vmatpush1.msra.mxu0 0.0
    %327 = vmatprep.subr.mxu0 0.0
    %328 = vmatpush1.msra.mxu0 0.0
    %329 = vmatprep.subr.mxu0 0.0
    %330 = vmatpush1.msra.mxu0 0.0
    %331 = vmatprep.subr.mxu0 0.0
    %332 = vmatpush1.msra.mxu0 0.0
    %333 = vmatprep.subr.mxu0 0.0
    %334 = vmatpush1.msra.mxu0 0.0
    %335 = vmatprep.subr.mxu0 0.0
    %336 = vmatpush1.msra.mxu0 0.0
    %337 = vmatprep.subr.mxu0 0.0
    %338 = vmatpush1.msra.mxu0 0.0
    %339 = vmatprep.subr.mxu0 0.0
    %340 = vmatpush1.msra.mxu0 0.0
    %341 = vmatprep.subr.mxu0 0.0
    %342 = vmatpush1.msra.mxu0 0.0
    %343 = vmatprep.subr.mxu0 0.0
    %344 = vmatpush1.msra.mxu0 0.0
    %345 = vmatprep.subr.mxu0 0.0
    %346 = vmatpush1.msra.mxu0 0.0
    %347 = vmatprep.subr.mxu0 0.0
    %348 = vmatpush1.msra.mxu0 0.0
    %349 = vmatprep.subr.mxu0 0.0
    %350 = vmatpush1.msra.mxu0 0.0
    %351 = vmatprep.subr.mxu0 0.0
    %352 = vmatpush1.msra.mxu0 0.0
    %353 = vmatprep.subr.mxu0 0.0
    %354 = vmatpush1.msra.mxu0 0.0
    %355 = vmatprep.subr.mxu0 0.0
    %356 = vmatpush1.msra.mxu0 0.0
    %357 = vmatprep.subr.mxu0 0.0
    %358 = vmatpush1.msra.mxu0 0.0
    %359 = vmatprep.mubr.f32.mxu0 0.0
    %360 = vmatmul.mubr.f32.gmra.mrb[0].mxu0 %v290
    %v361 = vpop.f32.mrb[0].mxu0
    %v362 = vadd.f32 %v287, %v361
    %v363 = vpop.f32.mrb[0].mxu0
    %364 = vmatprep.mubr.f32.mxu0 0.0
    %365 = vmatmul.mubr.f32.gmra.mrb[0].mxu0 %v293
    %v366 = vpop.f32.mrb[0].mxu0
    %v367 = vadd.f32 %v287, %v366
    %v368 = vpop.f32.mrb[0].mxu0
    %369 = vdwg.mxu0
    %v370 = vld [vmem:[%s9] sm:$0xff]
    %v371 = vld [vmem:[%s9 + $0x8] sm:$0xff]
    %v372 = vld [vmem:[%s9 + $0x10] sm:$0xff]
    %v373 = vld [vmem:[%s9 + $0x18] sm:$0xff]
    %v374 = vld [vmem:[%s9 + $0x20] sm:$0xff]
    %v375 = vld [vmem:[%s9 + $0x28] sm:$0xff]
    %v376 = vld [vmem:[%s9 + $0x30] sm:$0xff]
    %v377 = vld [vmem:[%s9 + $0x38] sm:$0xff]
    %v378 = vld [vmem:[%s10] sm:$0x1]
    %v380 = vlaneseq
    %v381 = vshrl.u32 %v380, 7
    %v382 = vsub.s32 0, %v381
    %v383 = vrot.slane %v378, %v382
    %385 = vmatprep.subr.mxu0 0.0
    %386 = vmatpush1.msra.mxu0 %v370
    %387 = vmatprep.subr.mxu0 0.0
    %388 = vmatpush1.msra.mxu0 %v371
    %389 = vmatprep.subr.mxu0 0.0
    %390 = vmatpush1.msra.mxu0 %v372
    %391 = vmatprep.subr.mxu0 0.0
    %392 = vmatpush1.msra.mxu0 %v373
    %393 = vmatprep.subr.mxu0 0.0
    %394 = vmatpush1.msra.mxu0 %v374
    %395 = vmatprep.subr.mxu0 0.0
    %396 = vmatpush1.msra.mxu0 %v375
    %397 = vmatprep.subr.mxu0 0.0
    %398 = vmatpush1.msra.mxu0 %v376
    %399 = vmatprep.subr.mxu0 0.0
    %400 = vmatpush1.msra.mxu0 %v377
    %401 = vmatprep.subr.mxu0 0.0
    %402 = vmatpush1.msra.mxu0 0.0
    %403 = vmatprep.subr.mxu0 0.0
    %404 = vmatpush1.msra.mxu0 0.0
    %405 = vmatprep.subr.mxu0 0.0
    %406 = vmatpush1.msra.mxu0 0.0
    %407 = vmatprep.subr.mxu0 0.0
    %408 = vmatpush1.msra.mxu0 0.0
    %409 = vmatprep.subr.mxu0 0.0
    %410 = vmatpush1.msra.mxu0 0.0
    %411 = vmatprep.subr.mxu0 0.0
    %412 = vmatpush1.msra.mxu0 0.0
    %413 = vmatprep.subr.mxu0 0.0
    %414 = vmatpush1.msra.mxu0 0.0
    %415 = vmatprep.subr.mxu0 0.0
    %416 = vmatpush1.msra.mxu0 0.0
    %417 = vmatprep.subr.mxu0 0.0
    %418 = vmatpush1.msra.mxu0 0.0
    %419 = vmatprep.subr.mxu0 0.0
    %420 = vmatpush1.msra.mxu0 0.0
    %421 = vmatprep.subr.mxu0 0.0
    %422 = vmatpush1.msra.mxu0 0.0
    %423 = vmatprep.subr.mxu0 0.0
    %424 = vmatpush1.msra.mxu0 0.0
    %425 = vmatprep.subr.mxu0 0.0
    %426 = vmatpush1.msra.mxu0 0.0
    %427 = vmatprep.subr.mxu0 0.0
    %428 = vmatpush1.msra.mxu0 0.0
    %429 = vmatprep.subr.mxu0 0.0
    %430 = vmatpush1.msra.mxu0 0.0
    %431 = vmatprep.subr.mxu0 0.0
    %432 = vmatpush1.msra.mxu0 0.0
    %433 = vmatprep.subr.mxu0 0.0
    %434 = vmatpush1.msra.mxu0 0.0
    %435 = vmatprep.subr.mxu0 0.0
    %436 = vmatpush1.msra.mxu0 0.0
    %437 = vmatprep.subr.mxu0 0.0
    %438 = vmatpush1.msra.mxu0 0.0
    %439 = vmatprep.subr.mxu0 0.0
    %440 = vmatpush1.msra.mxu0 0.0
    %441 = vmatprep.subr.mxu0 0.0
    %442 = vmatpush1.msra.mxu0 0.0
    %443 = vmatprep.subr.mxu0 0.0
    %444 = vmatpush1.msra.mxu0 0.0
    %445 = vmatprep.subr.mxu0 0.0
    %446 = vmatpush1.msra.mxu0 0.0
    %447 = vmatprep.subr.mxu0 0.0
    %448 = vmatpush1.msra.mxu0 0.0
    %449 = vmatprep.mubr.f32.mxu0 0.0
    %450 = vmatmul.mubr.f32.gmra.mrb[0].mxu0 %v290
    %v451 = vpop.f32.mrb[0].mxu0
    %v452 = vadd.f32 %v383, %v451
    %v453 = vpop.f32.mrb[0].mxu0
    %454 = vmatprep.mubr.f32.mxu0 0.0
    %455 = vmatmul.mubr.f32.gmra.mrb[0].mxu0 %v293
    %v456 = vpop.f32.mrb[0].mxu0
    %v457 = vadd.f32 %v383, %v456
    %v458 = vpop.f32.mrb[0].mxu0
    %459 = vdwg.mxu0
    %v460 = vld [vmem:[%s11] sm:$0xff]
    %v461 = vld [vmem:[%s11 + $0x8] sm:$0xff]
    %v462 = vld [vmem:[%s11 + $0x10] sm:$0xff]
    %v463 = vld [vmem:[%s11 + $0x18] sm:$0xff]
    %v464 = vld [vmem:[%s11 + $0x20] sm:$0xff]
    %v465 = vld [vmem:[%s11 + $0x28] sm:$0xff]
    %v466 = vld [vmem:[%s11 + $0x30] sm:$0xff]
    %v467 = vld [vmem:[%s11 + $0x38] sm:$0xff]
    %v468 = vld [vmem:[%s12] sm:$0x1]
    %v470 = vlaneseq
    %v471 = vshrl.u32 %v470, 7
    %v472 = vsub.s32 0, %v471
    %v473 = vrot.slane %v468, %v472
    %475 = vmatprep.subr.mxu0 0.0
    %476 = vmatpush1.msra.mxu0 %v460
    %477 = vmatprep.subr.mxu0 0.0
    %478 = vmatpush1.msra.mxu0 %v461
    %479 = vmatprep.subr.mxu0 0.0
    %480 = vmatpush1.msra.mxu0 %v462
    %481 = vmatprep.subr.mxu0 0.0
    %482 = vmatpush1.msra.mxu0 %v463
    %483 = vmatprep.subr.mxu0 0.0
    %484 = vmatpush1.msra.mxu0 %v464
    %485 = vmatprep.subr.mxu0 0.0
    %486 = vmatpush1.msra.mxu0 %v465
    %487 = vmatprep.subr.mxu0 0.0
    %488 = vmatpush1.msra.mxu0 %v466
    %489 = vmatprep.subr.mxu0 0.0
    %490 = vmatpush1.msra.mxu0 %v467
    %491 = vmatprep.subr.mxu0 0.0
    %492 = vmatpush1.msra.mxu0 0.0
    %493 = vmatprep.subr.mxu0 0.0
    %494 = vmatpush1.msra.mxu0 0.0
    %495 = vmatprep.subr.mxu0 0.0
    %496 = vmatpush1.msra.mxu0 0.0
    %497 = vmatprep.subr.mxu0 0.0
    %498 = vmatpush1.msra.mxu0 0.0
    %499 = vmatprep.subr.mxu0 0.0
    %500 = vmatpush1.msra.mxu0 0.0
    %501 = vmatprep.subr.mxu0 0.0
    %502 = vmatpush1.msra.mxu0 0.0
    %503 = vmatprep.subr.mxu0 0.0
    %504 = vmatpush1.msra.mxu0 0.0
    %505 = vmatprep.subr.mxu0 0.0
    %506 = vmatpush1.msra.mxu0 0.0
    %507 = vmatprep.subr.mxu0 0.0
    %508 = vmatpush1.msra.mxu0 0.0
    %509 = vmatprep.subr.mxu0 0.0
    %510 = vmatpush1.msra.mxu0 0.0
    %511 = vmatprep.subr.mxu0 0.0
    %512 = vmatpush1.msra.mxu0 0.0
    %513 = vmatprep.subr.mxu0 0.0
    %514 = vmatpush1.msra.mxu0 0.0
    %515 = vmatprep.subr.mxu0 0.0
    %516 = vmatpush1.msra.mxu0 0.0
    %517 = vmatprep.subr.mxu0 0.0
    %518 = vmatpush1.msra.mxu0 0.0
    %519 = vmatprep.subr.mxu0 0.0
    %520 = vmatpush1.msra.mxu0 0.0
    %521 = vmatprep.subr.mxu0 0.0
    %522 = vmatpush1.msra.mxu0 0.0
    %523 = vmatprep.subr.mxu0 0.0
    %524 = vmatpush1.msra.mxu0 0.0
    %525 = vmatprep.subr.mxu0 0.0
    %526 = vmatpush1.msra.mxu0 0.0
    %527 = vmatprep.subr.mxu0 0.0
    %528 = vmatpush1.msra.mxu0 0.0
    %529 = vmatprep.subr.mxu0 0.0
    %530 = vmatpush1.msra.mxu0 0.0
    %531 = vmatprep.subr.mxu0 0.0
    %532 = vmatpush1.msra.mxu0 0.0
    %533 = vmatprep.subr.mxu0 0.0
    %534 = vmatpush1.msra.mxu0 0.0
    %535 = vmatprep.subr.mxu0 0.0
    %536 = vmatpush1.msra.mxu0 0.0
    %537 = vmatprep.subr.mxu0 0.0
    %538 = vmatpush1.msra.mxu0 0.0
    %539 = vmatprep.mubr.f32.mxu0 0.0
    %540 = vmatmul.mubr.f32.gmra.mrb[0].mxu0 %v290
    %v541 = vpop.f32.mrb[0].mxu0
    %v542 = vadd.f32 %v473, %v541
    %v543 = vpop.f32.mrb[0].mxu0
    %544 = vmatprep.mubr.f32.mxu0 0.0
    %545 = vmatmul.mubr.f32.gmra.mrb[0].mxu0 %v293
    %v546 = vpop.f32.mrb[0].mxu0
    %v547 = vadd.f32 %v473, %v546
    %v548 = vpop.f32.mrb[0].mxu0
    %549 = vdwg.mxu0
    %vm550 = vcmask 130048
    %v552 = vsel %vm550, %v362, 0
    %v555 = vsel %vm550, %v452, 0
    %557 = vmatprep.subr.mxu0 0.0
    %558 = vmatpush1.xpose.msra.mxu0 %v555
    %559 = vmatprep.subr.mxu0 0.0
    %560 = vmatpush1.xpose.msra.mxu0 0.0
    %561 = vmatprep.subr.mxu0 0.0
    %562 = vmatpush1.xpose.msra.mxu0 0.0
    %563 = vmatprep.subr.mxu0 0.0
    %564 = vmatpush1.xpose.msra.mxu0 0.0
    %565 = vmatprep.subr.mxu0 0.0
    %566 = vmatpush1.xpose.msra.mxu0 0.0
    %567 = vmatprep.subr.mxu0 0.0
    %568 = vmatpush1.xpose.msra.mxu0 0.0
    %569 = vmatprep.subr.mxu0 0.0
    %570 = vmatpush1.xpose.msra.mxu0 0.0
    %571 = vmatprep.subr.mxu0 0.0
    %572 = vmatpush1.xpose.msra.mxu0 0.0
    %573 = vmatprep.subr.mxu0 0.0
    %574 = vmatpush1.xpose.msra.mxu0 0.0
    %575 = vmatprep.subr.mxu0 0.0
    %576 = vmatpush1.xpose.msra.mxu0 0.0
    %577 = vmatprep.subr.mxu0 0.0
    %578 = vmatpush1.xpose.msra.mxu0 0.0
    %579 = vmatprep.subr.mxu0 0.0
    %580 = vmatpush1.xpose.msra.mxu0 0.0
    %581 = vmatprep.subr.mxu0 0.0
    %582 = vmatpush1.xpose.msra.mxu0 0.0
    %583 = vmatprep.subr.mxu0 0.0
    %584 = vmatpush1.xpose.msra.mxu0 0.0
    %585 = vmatprep.subr.mxu0 0.0
    %586 = vmatpush1.xpose.msra.mxu0 0.0
    %587 = vmatprep.subr.mxu0 0.0
    %588 = vmatpush1.xpose.msra.mxu0 0.0
    %589 = vmatprep.subr.mxu0 0.0
    %590 = vmatpush1.xpose.msra.mxu0 0.0
    %591 = vmatprep.subr.mxu0 0.0
    %592 = vmatpush1.xpose.msra.mxu0 0.0
    %593 = vmatprep.subr.mxu0 0.0
    %594 = vmatpush1.xpose.msra.mxu0 0.0
    %595 = vmatprep.subr.mxu0 0.0
    %596 = vmatpush1.xpose.msra.mxu0 0.0
    %597 = vmatprep.subr.mxu0 0.0
    %598 = vmatpush1.xpose.msra.mxu0 0.0
    %599 = vmatprep.subr.mxu0 0.0
    %600 = vmatpush1.xpose.msra.mxu0 0.0
    %601 = vmatprep.subr.mxu0 0.0
    %602 = vmatpush1.xpose.msra.mxu0 0.0
    %603 = vmatprep.subr.mxu0 0.0
    %604 = vmatpush1.xpose.msra.mxu0 0.0
    %605 = vmatprep.subr.mxu0 0.0
    %606 = vmatpush1.xpose.msra.mxu0 0.0
    %607 = vmatprep.subr.mxu0 0.0
    %608 = vmatpush1.xpose.msra.mxu0 0.0
    %609 = vmatprep.subr.mxu0 0.0
    %610 = vmatpush1.xpose.msra.mxu0 0.0
    %611 = vmatprep.subr.mxu0 0.0
    %612 = vmatpush1.xpose.msra.mxu0 0.0
    %613 = vmatprep.subr.mxu0 0.0
    %614 = vmatpush1.xpose.msra.mxu0 0.0
    %615 = vmatprep.subr.mxu0 0.0
    %616 = vmatpush1.xpose.msra.mxu0 0.0
    %617 = vmatprep.subr.mxu0 0.0
    %618 = vmatpush1.xpose.msra.mxu0 0.0
    %619 = vmatprep.subr.mxu0 0.0
    %620 = vmatpush1.xpose.msra.mxu0 0.0
    %621 = vmatprep.mubr.f32.mxu0 0.0
    %622 = vmatmul.mubr.f32.gmra.mrb[0].mxu0 %v552
    %v623 = vpop.f32.mrb[0].mxu0
    %v624 = vadd.f32 0.0, %v623
    %v625 = vpop.f32.mrb[0].mxu0
    %626 = vdwg.mxu0
    %v628 = vsel %vm550, %v367, 0
    %v631 = vsel %vm550, %v457, 0
    %633 = vmatprep.subr.mxu0 0.0
    %634 = vmatpush1.xpose.msra.mxu0 %v631
    %635 = vmatprep.subr.mxu0 0.0
    %636 = vmatpush1.xpose.msra.mxu0 0.0
    %637 = vmatprep.subr.mxu0 0.0
    %638 = vmatpush1.xpose.msra.mxu0 0.0
    %639 = vmatprep.subr.mxu0 0.0
    %640 = vmatpush1.xpose.msra.mxu0 0.0
    %641 = vmatprep.subr.mxu0 0.0
    %642 = vmatpush1.xpose.msra.mxu0 0.0
    %643 = vmatprep.subr.mxu0 0.0
    %644 = vmatpush1.xpose.msra.mxu0 0.0
    %645 = vmatprep.subr.mxu0 0.0
    %646 = vmatpush1.xpose.msra.mxu0 0.0
    %647 = vmatprep.subr.mxu0 0.0
    %648 = vmatpush1.xpose.msra.mxu0 0.0
    %649 = vmatprep.subr.mxu0 0.0
    %650 = vmatpush1.xpose.msra.mxu0 0.0
    %651 = vmatprep.subr.mxu0 0.0
    %652 = vmatpush1.xpose.msra.mxu0 0.0
    %653 = vmatprep.subr.mxu0 0.0
    %654 = vmatpush1.xpose.msra.mxu0 0.0
    %655 = vmatprep.subr.mxu0 0.0
    %656 = vmatpush1.xpose.msra.mxu0 0.0
    %657 = vmatprep.subr.mxu0 0.0
    %658 = vmatpush1.xpose.msra.mxu0 0.0
    %659 = vmatprep.subr.mxu0 0.0
    %660 = vmatpush1.xpose.msra.mxu0 0.0
    %661 = vmatprep.subr.mxu0 0.0
    %662 = vmatpush1.xpose.msra.mxu0 0.0
    %663 = vmatprep.subr.mxu0 0.0
    %664 = vmatpush1.xpose.msra.mxu0 0.0
    %665 = vmatprep.subr.mxu0 0.0
    %666 = vmatpush1.xpose.msra.mxu0 0.0
    %667 = vmatprep.subr.mxu0 0.0
    %668 = vmatpush1.xpose.msra.mxu0 0.0
    %669 = vmatprep.subr.mxu0 0.0
    %670 = vmatpush1.xpose.msra.mxu0 0.0
    %671 = vmatprep.subr.mxu0 0.0
    %672 = vmatpush1.xpose.msra.mxu0 0.0
    %673 = vmatprep.subr.mxu0 0.0
    %674 = vmatpush1.xpose.msra.mxu0 0.0
    %675 = vmatprep.subr.mxu0 0.0
    %676 = vmatpush1.xpose.msra.mxu0 0.0
    %677 = vmatprep.subr.mxu0 0.0
    %678 = vmatpush1.xpose.msra.mxu0 0.0
    %679 = vmatprep.subr.mxu0 0.0
    %680 = vmatpush1.xpose.msra.mxu0 0.0
    %681 = vmatprep.subr.mxu0 0.0
    %682 = vmatpush1.xpose.msra.mxu0 0.0
    %683 = vmatprep.subr.mxu0 0.0
    %684 = vmatpush1.xpose.msra.mxu0 0.0
    %685 = vmatprep.subr.mxu0 0.0
    %686 = vmatpush1.xpose.msra.mxu0 0.0
    %687 = vmatprep.subr.mxu0 0.0
    %688 = vmatpush1.xpose.msra.mxu0 0.0
    %689 = vmatprep.subr.mxu0 0.0
    %690 = vmatpush1.xpose.msra.mxu0 0.0
    %691 = vmatprep.subr.mxu0 0.0
    %692 = vmatpush1.xpose.msra.mxu0 0.0
    %693 = vmatprep.subr.mxu0 0.0
    %694 = vmatpush1.xpose.msra.mxu0 0.0
    %695 = vmatprep.subr.mxu0 0.0
    %696 = vmatpush1.xpose.msra.mxu0 0.0
    %697 = vmatprep.mubr.f32.mxu0 0.0
    %698 = vmatmul.mubr.f32.gmra.mrb[0].mxu0 %v628
    %v699 = vpop.f32.mrb[0].mxu0
    %v700 = vadd.f32 0.0, %v699
    %v701 = vpop.f32.mrb[0].mxu0
    %702 = vdwg.mxu0
    %v703 = vmul.f32 %v624, 0.25
    %v704 = vmul.f32 %v700, 0.25
    %v705 = vadd.f32 %v703, %v229
    %v706 = vadd.f32 %v704, %v229
    %vm707 = vcmask 64512
    %v708 = vsel %vm707, %v705, -inf
    %709 = vmax.xlane.f32.xlu0 %v708
    %v710 = vpop.xlane.xlu0 %709
    %v711 = vsel %vm707, %v706, -inf
    %712 = vmax.xlane.f32.xlu0 %v711
    %v713 = vpop.xlane.xlu0 %712
    %v714 = vsub.f32 %v705, %v710
    %v715 = vsub.f32 %v706, %v713
    %v716 = vmul.f32 %v714, 1.442695
    %v717 = vpow.pop %v716
    %v718 = vmul.f32 %v715, 1.442695
    %v719 = vpow.pop %v718
    %v720 = vsel %vm707, %v717, 0.0
    %721 = vadd.xlane.f32.xlu0 %v720
    %v722 = vpop.xlane.xlu0 %721
    %v723 = vsel %vm707, %v719, 0.0
    %724 = vadd.xlane.f32.xlu0 %v723
    %v725 = vpop.xlane.xlu0 %724
    %v726 = vrcp.pop %v722
    %v727 = vmul.f32 %v717, %v726
    %v728 = vrcp.pop %v725
    %v729 = vmul.f32 %v719, %v728
    %v731 = vsel %vm707, %v727, 0
    %733 = vmatprep.subr.mxu0 0.0
    %734 = vmatpush1.msra.mxu0 %v542
    %735 = vmatprep.subr.mxu0 0.0
    %736 = vmatpush1.msra.mxu0 0.0
    %737 = vmatprep.subr.mxu0 0.0
    %738 = vmatpush1.msra.mxu0 0.0
    %739 = vmatprep.subr.mxu0 0.0
    %740 = vmatpush1.msra.mxu0 0.0
    %741 = vmatprep.subr.mxu0 0.0
    %742 = vmatpush1.msra.mxu0 0.0
    %743 = vmatprep.subr.mxu0 0.0
    %744 = vmatpush1.msra.mxu0 0.0
    %745 = vmatprep.subr.mxu0 0.0
    %746 = vmatpush1.msra.mxu0 0.0
    %747 = vmatprep.subr.mxu0 0.0
    %748 = vmatpush1.msra.mxu0 0.0
    %749 = vmatprep.subr.mxu0 0.0
    %750 = vmatpush1.msra.mxu0 0.0
    %751 = vmatprep.subr.mxu0 0.0
    %752 = vmatpush1.msra.mxu0 0.0
    %753 = vmatprep.subr.mxu0 0.0
    %754 = vmatpush1.msra.mxu0 0.0
    %755 = vmatprep.subr.mxu0 0.0
    %756 = vmatpush1.msra.mxu0 0.0
    %757 = vmatprep.subr.mxu0 0.0
    %758 = vmatpush1.msra.mxu0 0.0
    %759 = vmatprep.subr.mxu0 0.0
    %760 = vmatpush1.msra.mxu0 0.0
    %761 = vmatprep.subr.mxu0 0.0
    %762 = vmatpush1.msra.mxu0 0.0
    %763 = vmatprep.subr.mxu0 0.0
    %764 = vmatpush1.msra.mxu0 0.0
    %765 = vmatprep.subr.mxu0 0.0
    %766 = vmatpush1.msra.mxu0 0.0
    %767 = vmatprep.subr.mxu0 0.0
    %768 = vmatpush1.msra.mxu0 0.0
    %769 = vmatprep.subr.mxu0 0.0
    %770 = vmatpush1.msra.mxu0 0.0
    %771 = vmatprep.subr.mxu0 0.0
    %772 = vmatpush1.msra.mxu0 0.0
    %773 = vmatprep.subr.mxu0 0.0
    %774 = vmatpush1.msra.mxu0 0.0
    %775 = vmatprep.subr.mxu0 0.0
    %776 = vmatpush1.msra.mxu0 0.0
    %777 = vmatprep.subr.mxu0 0.0
    %778 = vmatpush1.msra.mxu0 0.0
    %779 = vmatprep.subr.mxu0 0.0
    %780 = vmatpush1.msra.mxu0 0.0
    %781 = vmatprep.subr.mxu0 0.0
    %782 = vmatpush1.msra.mxu0 0.0
    %783 = vmatprep.subr.mxu0 0.0
    %784 = vmatpush1.msra.mxu0 0.0
    %785 = vmatprep.subr.mxu0 0.0
    %786 = vmatpush1.msra.mxu0 0.0
    %787 = vmatprep.subr.mxu0 0.0
    %788 = vmatpush1.msra.mxu0 0.0
    %789 = vmatprep.subr.mxu0 0.0
    %790 = vmatpush1.msra.mxu0 0.0
    %791 = vmatprep.subr.mxu0 0.0
    %792 = vmatpush1.msra.mxu0 0.0
    %793 = vmatprep.subr.mxu0 0.0
    %794 = vmatpush1.msra.mxu0 0.0
    %795 = vmatprep.subr.mxu0 0.0
    %796 = vmatpush1.msra.mxu0 0.0
    %797 = vmatprep.mubr.f32.mxu0 0.0
    %798 = vmatmul.mubr.f32.gmra.mrb[0].mxu0 %v731
    %v799 = vpop.f32.mrb[0].mxu0
    %v800 = vadd.f32 0.0, %v799
    %v801 = vpop.f32.mrb[0].mxu0
    %802 = vdwg.mxu0
    %v804 = vsel %vm707, %v729, 0
    %806 = vmatprep.subr.mxu0 0.0
    %807 = vmatpush1.msra.mxu0 %v547
    %808 = vmatprep.subr.mxu0 0.0
    %809 = vmatpush1.msra.mxu0 0.0
    %810 = vmatprep.subr.mxu0 0.0
    %811 = vmatpush1.msra.mxu0 0.0
    %812 = vmatprep.subr.mxu0 0.0
    %813 = vmatpush1.msra.mxu0 0.0
    %814 = vmatprep.subr.mxu0 0.0
    %815 = vmatpush1.msra.mxu0 0.0
    %816 = vmatprep.subr.mxu0 0.0
    %817 = vmatpush1.msra.mxu0 0.0
    %818 = vmatprep.subr.mxu0 0.0
    %819 = vmatpush1.msra.mxu0 0.0
    %820 = vmatprep.subr.mxu0 0.0
    %821 = vmatpush1.msra.mxu0 0.0
    %822 = vmatprep.subr.mxu0 0.0
    %823 = vmatpush1.msra.mxu0 0.0
    %824 = vmatprep.subr.mxu0 0.0
    %825 = vmatpush1.msra.mxu0 0.0
    %826 = vmatprep.subr.mxu0 0.0
    %827 = vmatpush1.msra.mxu0 0.0
    %828 = vmatprep.subr.mxu0 0.0
    %829 = vmatpush1.msra.mxu0 0.0
    %830 = vmatprep.subr.mxu0 0.0
    %831 = vmatpush1.msra.mxu0 0.0
    %832 = vmatprep.subr.mxu0 0.0
    %833 = vmatpush1.msra.mxu0 0.0
    %834 = vmatprep.subr.mxu0 0.0
    %835 = vmatpush1.msra.mxu0 0.0
    %836 = vmatprep.subr.mxu0 0.0
    %837 = vmatpush1.msra.mxu0 0.0
    %838 = vmatprep.subr.mxu0 0.0
    %839 = vmatpush1.msra.mxu0 0.0
    %840 = vmatprep.subr.mxu0 0.0
    %841 = vmatpush1.msra.mxu0 0.0
    %842 = vmatprep.subr.mxu0 0.0
    %843 = vmatpush1.msra.mxu0 0.0
    %844 = vmatprep.subr.mxu0 0.0
    %845 = vmatpush1.msra.mxu0 0.0
    %846 = vmatprep.subr.mxu0 0.0
    %847 = vmatpush1.msra.mxu0 0.0
    %848 = vmatprep.subr.mxu0 0.0
    %849 = vmatpush1.msra.mxu0 0.0
    %850 = vmatprep.subr.mxu0 0.0
    %851 = vmatpush1.msra.mxu0 0.0
    %852 = vmatprep.subr.mxu0 0.0
    %853 = vmatpush1.msra.mxu0 0.0
    %854 = vmatprep.subr.mxu0 0.0
    %855 = vmatpush1.msra.mxu0 0.0
    %856 = vmatprep.subr.mxu0 0.0
    %857 = vmatpush1.msra.mxu0 0.0
    %858 = vmatprep.subr.mxu0 0.0
    %859 = vmatpush1.msra.mxu0 0.0
    %860 = vmatprep.subr.mxu0 0.0
    %861 = vmatpush1.msra.mxu0 0.0
    %862 = vmatprep.subr.mxu0 0.0
    %863 = vmatpush1.msra.mxu0 0.0
    %864 = vmatprep.subr.mxu0 0.0
    %865 = vmatpush1.msra.mxu0 0.0
    %866 = vmatprep.subr.mxu0 0.0
    %867 = vmatpush1.msra.mxu0 0.0
    %868 = vmatprep.subr.mxu0 0.0
    %869 = vmatpush1.msra.mxu0 0.0
    %870 = vmatprep.mubr.f32.mxu0 0.0
    %871 = vmatmul.mubr.f32.gmra.mrb[0].mxu0 %v804
    %v872 = vpop.f32.mrb[0].mxu0
    %v873 = vadd.f32 0.0, %v872
    %v874 = vpop.f32.mrb[0].mxu0
    %875 = vdwg.mxu0
    %v876 = vld [vmem:[%s13] sm:$0xff]
    %v877 = vld [vmem:[%s13 + $0x8] sm:$0xff]
    %s878 = scalar_lea.vmem %s7, 64
    %v879 = vld [vmem:[%s878] sm:$0xff]
    %v880 = vld [vmem:[%s878 + $0x8] sm:$0xff]
    %v881 = vld [vmem:[%s878 + $0x10] sm:$0xff]
    %v882 = vld [vmem:[%s878 + $0x18] sm:$0xff]
    %v883 = vld [vmem:[%s878 + $0x20] sm:$0xff]
    %v884 = vld [vmem:[%s878 + $0x28] sm:$0xff]
    %v885 = vld [vmem:[%s878 + $0x30] sm:$0xff]
    %v886 = vld [vmem:[%s878 + $0x38] sm:$0xff]
    %s887 = scalar_lea.vmem %s8, 1
    %v888 = vld [vmem:[%s887] sm:$0x1]
    %v890 = vlaneseq
    %v891 = vshrl.u32 %v890, 7
    %v892 = vsub.s32 0, %v891
    %v893 = vrot.slane %v888, %v892
    %895 = vmatprep.subr.mxu0 0.0
    %896 = vmatpush1.msra.mxu0 %v879
    %897 = vmatprep.subr.mxu0 0.0
    %898 = vmatpush1.msra.mxu0 %v880
    %899 = vmatprep.subr.mxu0 0.0
    %900 = vmatpush1.msra.mxu0 %v881
    %901 = vmatprep.subr.mxu0 0.0
    %902 = vmatpush1.msra.mxu0 %v882
    %903 = vmatprep.subr.mxu0 0.0
    %904 = vmatpush1.msra.mxu0 %v883
    %905 = vmatprep.subr.mxu0 0.0
    %906 = vmatpush1.msra.mxu0 %v884
    %907 = vmatprep.subr.mxu0 0.0
    %908 = vmatpush1.msra.mxu0 %v885
    %909 = vmatprep.subr.mxu0 0.0
    %910 = vmatpush1.msra.mxu0 %v886
    %911 = vmatprep.subr.mxu0 0.0
    %912 = vmatpush1.msra.mxu0 0.0
    %913 = vmatprep.subr.mxu0 0.0
    %914 = vmatpush1.msra.mxu0 0.0
    %915 = vmatprep.subr.mxu0 0.0
    %916 = vmatpush1.msra.mxu0 0.0
    %917 = vmatprep.subr.mxu0 0.0
    %918 = vmatpush1.msra.mxu0 0.0
    %919 = vmatprep.subr.mxu0 0.0
    %920 = vmatpush1.msra.mxu0 0.0
    %921 = vmatprep.subr.mxu0 0.0
    %922 = vmatpush1.msra.mxu0 0.0
    %923 = vmatprep.subr.mxu0 0.0
    %924 = vmatpush1.msra.mxu0 0.0
    %925 = vmatprep.subr.mxu0 0.0
    %926 = vmatpush1.msra.mxu0 0.0
    %927 = vmatprep.subr.mxu0 0.0
    %928 = vmatpush1.msra.mxu0 0.0
    %929 = vmatprep.subr.mxu0 0.0
    %930 = vmatpush1.msra.mxu0 0.0
    %931 = vmatprep.subr.mxu0 0.0
    %932 = vmatpush1.msra.mxu0 0.0
    %933 = vmatprep.subr.mxu0 0.0
    %934 = vmatpush1.msra.mxu0 0.0
    %935 = vmatprep.subr.mxu0 0.0
    %936 = vmatpush1.msra.mxu0 0.0
    %937 = vmatprep.subr.mxu0 0.0
    %938 = vmatpush1.msra.mxu0 0.0
    %939 = vmatprep.subr.mxu0 0.0
    %940 = vmatpush1.msra.mxu0 0.0
    %941 = vmatprep.subr.mxu0 0.0
    %942 = vmatpush1.msra.mxu0 0.0
    %943 = vmatprep.subr.mxu0 0.0
    %944 = vmatpush1.msra.mxu0 0.0
    %945 = vmatprep.subr.mxu0 0.0
    %946 = vmatpush1.msra.mxu0 0.0
    %947 = vmatprep.subr.mxu0 0.0
    %948 = vmatpush1.msra.mxu0 0.0
    %949 = vmatprep.subr.mxu0 0.0
    %950 = vmatpush1.msra.mxu0 0.0
    %951 = vmatprep.subr.mxu0 0.0
    %952 = vmatpush1.msra.mxu0 0.0
    %953 = vmatprep.subr.mxu0 0.0
    %954 = vmatpush1.msra.mxu0 0.0
    %955 = vmatprep.subr.mxu0 0.0
    %956 = vmatpush1.msra.mxu0 0.0
    %957 = vmatprep.subr.mxu0 0.0
    %958 = vmatpush1.msra.mxu0 0.0
    %959 = vmatprep.mubr.f32.mxu0 0.0
    %960 = vmatmul.mubr.f32.gmra.mrb[0].mxu0 %v290
    %v961 = vpop.f32.mrb[0].mxu0
    %v962 = vadd.f32 %v893, %v961
    %v963 = vpop.f32.mrb[0].mxu0
    %964 = vmatprep.mubr.f32.mxu0 0.0
    %965 = vmatmul.mubr.f32.gmra.mrb[0].mxu0 %v293
    %v966 = vpop.f32.mrb[0].mxu0
    %v967 = vadd.f32 %v893, %v966
    %v968 = vpop.f32.mrb[0].mxu0
    %969 = vdwg.mxu0
    %s970 = scalar_lea.vmem %s9, 64
    %v971 = vld [vmem:[%s970] sm:$0xff]
    %v972 = vld [vmem:[%s970 + $0x8] sm:$0xff]
    %v973 = vld [vmem:[%s970 + $0x10] sm:$0xff]
    %v974 = vld [vmem:[%s970 + $0x18] sm:$0xff]
    %v975 = vld [vmem:[%s970 + $0x20] sm:$0xff]
    %v976 = vld [vmem:[%s970 + $0x28] sm:$0xff]
    %v977 = vld [vmem:[%s970 + $0x30] sm:$0xff]
    %v978 = vld [vmem:[%s970 + $0x38] sm:$0xff]
    %s979 = scalar_lea.vmem %s10, 1
    %v980 = vld [vmem:[%s979] sm:$0x1]
    %v982 = vlaneseq
    %v983 = vshrl.u32 %v982, 7
    %v984 = vsub.s32 0, %v983
    %v985 = vrot.slane %v980, %v984
    %987 = vmatprep.subr.mxu0 0.0
    %988 = vmatpush1.msra.mxu0 %v971
    %989 = vmatprep.subr.mxu0 0.0
    %990 = vmatpush1.msra.mxu0 %v972
    %991 = vmatprep.subr.mxu0 0.0
    %992 = vmatpush1.msra.mxu0 %v973
    %993 = vmatprep.subr.mxu0 0.0
    %994 = vmatpush1.msra.mxu0 %v974
    %995 = vmatprep.subr.mxu0 0.0
    %996 = vmatpush1.msra.mxu0 %v975
    %997 = vmatprep.subr.mxu0 0.0
    %998 = vmatpush1.msra.mxu0 %v976
    %999 = vmatprep.subr.mxu0 0.0
    %1000 = vmatpush1.msra.mxu0 %v977
    %1001 = vmatprep.subr.mxu0 0.0
    %1002 = vmatpush1.msra.mxu0 %v978
    %1003 = vmatprep.subr.mxu0 0.0
    %1004 = vmatpush1.msra.mxu0 0.0
    %1005 = vmatprep.subr.mxu0 0.0
    %1006 = vmatpush1.msra.mxu0 0.0
    %1007 = vmatprep.subr.mxu0 0.0
    %1008 = vmatpush1.msra.mxu0 0.0
    %1009 = vmatprep.subr.mxu0 0.0
    %1010 = vmatpush1.msra.mxu0 0.0
    %1011 = vmatprep.subr.mxu0 0.0
    %1012 = vmatpush1.msra.mxu0 0.0
    %1013 = vmatprep.subr.mxu0 0.0
    %1014 = vmatpush1.msra.mxu0 0.0
    %1015 = vmatprep.subr.mxu0 0.0
    %1016 = vmatpush1.msra.mxu0 0.0
    %1017 = vmatprep.subr.mxu0 0.0
    %1018 = vmatpush1.msra.mxu0 0.0
    %1019 = vmatprep.subr.mxu0 0.0
    %1020 = vmatpush1.msra.mxu0 0.0
    %1021 = vmatprep.subr.mxu0 0.0
    %1022 = vmatpush1.msra.mxu0 0.0
    %1023 = vmatprep.subr.mxu0 0.0
    %1024 = vmatpush1.msra.mxu0 0.0
    %1025 = vmatprep.subr.mxu0 0.0
    %1026 = vmatpush1.msra.mxu0 0.0
    %1027 = vmatprep.subr.mxu0 0.0
    %1028 = vmatpush1.msra.mxu0 0.0
    %1029 = vmatprep.subr.mxu0 0.0
    %1030 = vmatpush1.msra.mxu0 0.0
    %1031 = vmatprep.subr.mxu0 0.0
    %1032 = vmatpush1.msra.mxu0 0.0
    %1033 = vmatprep.subr.mxu0 0.0
    %1034 = vmatpush1.msra.mxu0 0.0
    %1035 = vmatprep.subr.mxu0 0.0
    %1036 = vmatpush1.msra.mxu0 0.0
    %1037 = vmatprep.subr.mxu0 0.0
    %1038 = vmatpush1.msra.mxu0 0.0
    %1039 = vmatprep.subr.mxu0 0.0
    %1040 = vmatpush1.msra.mxu0 0.0
    %1041 = vmatprep.subr.mxu0 0.0
    %1042 = vmatpush1.msra.mxu0 0.0
    %1043 = vmatprep.subr.mxu0 0.0
    %1044 = vmatpush1.msra.mxu0 0.0
    %1045 = vmatprep.subr.mxu0 0.0
    %1046 = vmatpush1.msra.mxu0 0.0
    %1047 = vmatprep.subr.mxu0 0.0
    %1048 = vmatpush1.msra.mxu0 0.0
    %1049 = vmatprep.subr.mxu0 0.0
    %1050 = vmatpush1.msra.mxu0 0.0
    %1051 = vmatprep.mubr.f32.mxu0 0.0
    %1052 = vmatmul.mubr.f32.gmra.mrb[0].mxu0 %v290
    %v1053 = vpop.f32.mrb[0].mxu0
    %v1054 = vadd.f32 %v985, %v1053
    %v1055 = vpop.f32.mrb[0].mxu0
    %1056 = vmatprep.mubr.f32.mxu0 0.0
    %1057 = vmatmul.mubr.f32.gmra.mrb[0].mxu0 %v293
    %v1058 = vpop.f32.mrb[0].mxu0
    %v1059 = vadd.f32 %v985, %v1058
    %v1060 = vpop.f32.mrb[0].mxu0
    %1061 = vdwg.mxu0
    %s1062 = scalar_lea.vmem %s11, 64
    %v1063 = vld [vmem:[%s1062] sm:$0xff]
    %v1064 = vld [vmem:[%s1062 + $0x8] sm:$0xff]
    %v1065 = vld [vmem:[%s1062 + $0x10] sm:$0xff]
    %v1066 = vld [vmem:[%s1062 + $0x18] sm:$0xff]
    %v1067 = vld [vmem:[%s1062 + $0x20] sm:$0xff]
    %v1068 = vld [vmem:[%s1062 + $0x28] sm:$0xff]
    %v1069 = vld [vmem:[%s1062 + $0x30] sm:$0xff]
    %v1070 = vld [vmem:[%s1062 + $0x38] sm:$0xff]
    %s1071 = scalar_lea.vmem %s12, 1
    %v1072 = vld [vmem:[%s1071] sm:$0x1]
    %v1074 = vlaneseq
    %v1075 = vshrl.u32 %v1074, 7
    %v1076 = vsub.s32 0, %v1075
    %v1077 = vrot.slane %v1072, %v1076
    %1079 = vmatprep.subr.mxu0 0.0
    %1080 = vmatpush1.msra.mxu0 %v1063
    %1081 = vmatprep.subr.mxu0 0.0
    %1082 = vmatpush1.msra.mxu0 %v1064
    %1083 = vmatprep.subr.mxu0 0.0
    %1084 = vmatpush1.msra.mxu0 %v1065
    %1085 = vmatprep.subr.mxu0 0.0
    %1086 = vmatpush1.msra.mxu0 %v1066
    %1087 = vmatprep.subr.mxu0 0.0
    %1088 = vmatpush1.msra.mxu0 %v1067
    %1089 = vmatprep.subr.mxu0 0.0
    %1090 = vmatpush1.msra.mxu0 %v1068
    %1091 = vmatprep.subr.mxu0 0.0
    %1092 = vmatpush1.msra.mxu0 %v1069
    %1093 = vmatprep.subr.mxu0 0.0
    %1094 = vmatpush1.msra.mxu0 %v1070
    %1095 = vmatprep.subr.mxu0 0.0
    %1096 = vmatpush1.msra.mxu0 0.0
    %1097 = vmatprep.subr.mxu0 0.0
    %1098 = vmatpush1.msra.mxu0 0.0
    %1099 = vmatprep.subr.mxu0 0.0
    %1100 = vmatpush1.msra.mxu0 0.0
    %1101 = vmatprep.subr.mxu0 0.0
    %1102 = vmatpush1.msra.mxu0 0.0
    %1103 = vmatprep.subr.mxu0 0.0
    %1104 = vmatpush1.msra.mxu0 0.0
    %1105 = vmatprep.subr.mxu0 0.0
    %1106 = vmatpush1.msra.mxu0 0.0
    %1107 = vmatprep.subr.mxu0 0.0
    %1108 = vmatpush1.msra.mxu0 0.0
    %1109 = vmatprep.subr.mxu0 0.0
    %1110 = vmatpush1.msra.mxu0 0.0
    %1111 = vmatprep.subr.mxu0 0.0
    %1112 = vmatpush1.msra.mxu0 0.0
    %1113 = vmatprep.subr.mxu0 0.0
    %1114 = vmatpush1.msra.mxu0 0.0
    %1115 = vmatprep.subr.mxu0 0.0
    %1116 = vmatpush1.msra.mxu0 0.0
    %1117 = vmatprep.subr.mxu0 0.0
    %1118 = vmatpush1.msra.mxu0 0.0
    %1119 = vmatprep.subr.mxu0 0.0
    %1120 = vmatpush1.msra.mxu0 0.0
    %1121 = vmatprep.subr.mxu0 0.0
    %1122 = vmatpush1.msra.mxu0 0.0
    %1123 = vmatprep.subr.mxu0 0.0
    %1124 = vmatpush1.msra.mxu0 0.0
    %1125 = vmatprep.subr.mxu0 0.0
    %1126 = vmatpush1.msra.mxu0 0.0
    %1127 = vmatprep.subr.mxu0 0.0
    %1128 = vmatpush1.msra.mxu0 0.0
    %1129 = vmatprep.subr.mxu0 0.0
    %1130 = vmatpush1.msra.mxu0 0.0
    %1131 = vmatprep.subr.mxu0 0.0
    %1132 = vmatpush1.msra.mxu0 0.0
    %1133 = vmatprep.subr.mxu0 0.0
    %1134 = vmatpush1.msra.mxu0 0.0
    %1135 = vmatprep.subr.mxu0 0.0
    %1136 = vmatpush1.msra.mxu0 0.0
    %1137 = vmatprep.subr.mxu0 0.0
    %1138 = vmatpush1.msra.mxu0 0.0
    %1139 = vmatprep.subr.mxu0 0.0
    %1140 = vmatpush1.msra.mxu0 0.0
    %1141 = vmatprep.subr.mxu0 0.0
    %1142 = vmatpush1.msra.mxu0 0.0
    %1143 = vmatprep.mubr.f32.mxu0 0.0
    %1144 = vmatmul.mubr.f32.gmra.mrb[0].mxu0 %v290
    %v1145 = vpop.f32.mrb[0].mxu0
    %v1146 = vadd.f32 %v1077, %v1145
    %v1147 = vpop.f32.mrb[0].mxu0
    %1148 = vmatprep.mubr.f32.mxu0 0.0
    %1149 = vmatmul.mubr.f32.gmra.mrb[0].mxu0 %v293
    %v1150 = vpop.f32.mrb[0].mxu0
    %v1151 = vadd.f32 %v1077, %v1150
    %v1152 = vpop.f32.mrb[0].mxu0
    %1153 = vdwg.mxu0
    %v1155 = vsel %vm550, %v962, 0
    %v1158 = vsel %vm550, %v1054, 0
    %1160 = vmatprep.subr.mxu0 0.0
    %1161 = vmatpush1.xpose.msra.mxu0 %v1158
    %1162 = vmatprep.subr.mxu0 0.0
    %1163 = vmatpush1.xpose.msra.mxu0 0.0
    %1164 = vmatprep.subr.mxu0 0.0
    %1165 = vmatpush1.xpose.msra.mxu0 0.0
    %1166 = vmatprep.subr.mxu0 0.0
    %1167 = vmatpush1.xpose.msra.mxu0 0.0
    %1168 = vmatprep.subr.mxu0 0.0
    %1169 = vmatpush1.xpose.msra.mxu0 0.0
    %1170 = vmatprep.subr.mxu0 0.0
    %1171 = vmatpush1.xpose.msra.mxu0 0.0
    %1172 = vmatprep.subr.mxu0 0.0
    %1173 = vmatpush1.xpose.msra.mxu0 0.0
    %1174 = vmatprep.subr.mxu0 0.0
    %1175 = vmatpush1.xpose.msra.mxu0 0.0
    %1176 = vmatprep.subr.mxu0 0.0
    %1177 = vmatpush1.xpose.msra.mxu0 0.0
    %1178 = vmatprep.subr.mxu0 0.0
    %1179 = vmatpush1.xpose.msra.mxu0 0.0
    %1180 = vmatprep.subr.mxu0 0.0
    %1181 = vmatpush1.xpose.msra.mxu0 0.0
    %1182 = vmatprep.subr.mxu0 0.0
    %1183 = vmatpush1.xpose.msra.mxu0 0.0
    %1184 = vmatprep.subr.mxu0 0.0
    %1185 = vmatpush1.xpose.msra.mxu0 0.0
    %1186 = vmatprep.subr.mxu0 0.0
    %1187 = vmatpush1.xpose.msra.mxu0 0.0
    %1188 = vmatprep.subr.mxu0 0.0
    %1189 = vmatpush1.xpose.msra.mxu0 0.0
    %1190 = vmatprep.subr.mxu0 0.0
    %1191 = vmatpush1.xpose.msra.mxu0 0.0
    %1192 = vmatprep.subr.mxu0 0.0
    %1193 = vmatpush1.xpose.msra.mxu0 0.0
    %1194 = vmatprep.subr.mxu0 0.0
    %1195 = vmatpush1.xpose.msra.mxu0 0.0
    %1196 = vmatprep.subr.mxu0 0.0
    %1197 = vmatpush1.xpose.msra.mxu0 0.0
    %1198 = vmatprep.subr.mxu0 0.0
    %1199 = vmatpush1.xpose.msra.mxu0 0.0
    %1200 = vmatprep.subr.mxu0 0.0
    %1201 = vmatpush1.xpose.msra.mxu0 0.0
    %1202 = vmatprep.subr.mxu0 0.0
    %1203 = vmatpush1.xpose.msra.mxu0 0.0
    %1204 = vmatprep.subr.mxu0 0.0
    %1205 = vmatpush1.xpose.msra.mxu0 0.0
    %1206 = vmatprep.subr.mxu0 0.0
    %1207 = vmatpush1.xpose.msra.mxu0 0.0
    %1208 = vmatprep.subr.mxu0 0.0
    %1209 = vmatpush1.xpose.msra.mxu0 0.0
    %1210 = vmatprep.subr.mxu0 0.0
    %1211 = vmatpush1.xpose.msra.mxu0 0.0
    %1212 = vmatprep.subr.mxu0 0.0
    %1213 = vmatpush1.xpose.msra.mxu0 0.0
    %1214 = vmatprep.subr.mxu0 0.0
    %1215 = vmatpush1.xpose.msra.mxu0 0.0
    %1216 = vmatprep.subr.mxu0 0.0
    %1217 = vmatpush1.xpose.msra.mxu0 0.0
    %1218 = vmatprep.subr.mxu0 0.0
    %1219 = vmatpush1.xpose.msra.mxu0 0.0
    %1220 = vmatprep.subr.mxu0 0.0
    %1221 = vmatpush1.xpose.msra.mxu0 0.0
    %1222 = vmatprep.subr.mxu0 0.0
    %1223 = vmatpush1.xpose.msra.mxu0 0.0
    %1224 = vmatprep.mubr.f32.mxu0 0.0
    %1225 = vmatmul.mubr.f32.gmra.mrb[0].mxu0 %v1155
    %v1226 = vpop.f32.mrb[0].mxu0
    %v1227 = vadd.f32 0.0, %v1226
    %v1228 = vpop.f32.mrb[0].mxu0
    %1229 = vdwg.mxu0
    %v1231 = vsel %vm550, %v967, 0
    %v1234 = vsel %vm550, %v1059, 0
    %1236 = vmatprep.subr.mxu0 0.0
    %1237 = vmatpush1.xpose.msra.mxu0 %v1234
    %1238 = vmatprep.subr.mxu0 0.0
    %1239 = vmatpush1.xpose.msra.mxu0 0.0
    %1240 = vmatprep.subr.mxu0 0.0
    %1241 = vmatpush1.xpose.msra.mxu0 0.0
    %1242 = vmatprep.subr.mxu0 0.0
    %1243 = vmatpush1.xpose.msra.mxu0 0.0
    %1244 = vmatprep.subr.mxu0 0.0
    %1245 = vmatpush1.xpose.msra.mxu0 0.0
    %1246 = vmatprep.subr.mxu0 0.0
    %1247 = vmatpush1.xpose.msra.mxu0 0.0
    %1248 = vmatprep.subr.mxu0 0.0
    %1249 = vmatpush1.xpose.msra.mxu0 0.0
    %1250 = vmatprep.subr.mxu0 0.0
    %1251 = vmatpush1.xpose.msra.mxu0 0.0
    %1252 = vmatprep.subr.mxu0 0.0
    %1253 = vmatpush1.xpose.msra.mxu0 0.0
    %1254 = vmatprep.subr.mxu0 0.0
    %1255 = vmatpush1.xpose.msra.mxu0 0.0
    %1256 = vmatprep.subr.mxu0 0.0
    %1257 = vmatpush1.xpose.msra.mxu0 0.0
    %1258 = vmatprep.subr.mxu0 0.0
    %1259 = vmatpush1.xpose.msra.mxu0 0.0
    %1260 = vmatprep.subr.mxu0 0.0
    %1261 = vmatpush1.xpose.msra.mxu0 0.0
    %1262 = vmatprep.subr.mxu0 0.0
    %1263 = vmatpush1.xpose.msra.mxu0 0.0
    %1264 = vmatprep.subr.mxu0 0.0
    %1265 = vmatpush1.xpose.msra.mxu0 0.0
    %1266 = vmatprep.subr.mxu0 0.0
    %1267 = vmatpush1.xpose.msra.mxu0 0.0
    %1268 = vmatprep.subr.mxu0 0.0
    %1269 = vmatpush1.xpose.msra.mxu0 0.0
    %1270 = vmatprep.subr.mxu0 0.0
    %1271 = vmatpush1.xpose.msra.mxu0 0.0
    %1272 = vmatprep.subr.mxu0 0.0
    %1273 = vmatpush1.xpose.msra.mxu0 0.0
    %1274 = vmatprep.subr.mxu0 0.0
    %1275 = vmatpush1.xpose.msra.mxu0 0.0
    %1276 = vmatprep.subr.mxu0 0.0
    %1277 = vmatpush1.xpose.msra.mxu0 0.0
    %1278 = vmatprep.subr.mxu0 0.0
    %1279 = vmatpush1.xpose.msra.mxu0 0.0
    %1280 = vmatprep.subr.mxu0 0.0
    %1281 = vmatpush1.xpose.msra.mxu0 0.0
    %1282 = vmatprep.subr.mxu0 0.0
    %1283 = vmatpush1.xpose.msra.mxu0 0.0
    %1284 = vmatprep.subr.mxu0 0.0
    %1285 = vmatpush1.xpose.msra.mxu0 0.0
    %1286 = vmatprep.subr.mxu0 0.0
    %1287 = vmatpush1.xpose.msra.mxu0 0.0
    %1288 = vmatprep.subr.mxu0 0.0
    %1289 = vmatpush1.xpose.msra.mxu0 0.0
    %1290 = vmatprep.subr.mxu0 0.0
    %1291 = vmatpush1.xpose.msra.mxu0 0.0
    %1292 = vmatprep.subr.mxu0 0.0
    %1293 = vmatpush1.xpose.msra.mxu0 0.0
    %1294 = vmatprep.subr.mxu0 0.0
    %1295 = vmatpush1.xpose.msra.mxu0 0.0
    %1296 = vmatprep.subr.mxu0 0.0
    %1297 = vmatpush1.xpose.msra.mxu0 0.0
    %1298 = vmatprep.subr.mxu0 0.0
    %1299 = vmatpush1.xpose.msra.mxu0 0.0
    %1300 = vmatprep.mubr.f32.mxu0 0.0
    %1301 = vmatmul.mubr.f32.gmra.mrb[0].mxu0 %v1231
    %v1302 = vpop.f32.mrb[0].mxu0
    %v1303 = vadd.f32 0.0, %v1302
    %v1304 = vpop.f32.mrb[0].mxu0
    %1305 = vdwg.mxu0
    %v1306 = vmul.f32 %v1227, 0.25
    %v1307 = vmul.f32 %v1303, 0.25
    %v1308 = vadd.f32 %v1306, %v229
    %v1309 = vadd.f32 %v1307, %v229
    %v1310 = vsel %vm707, %v1308, -inf
    %1311 = vmax.xlane.f32.xlu0 %v1310
    %v1312 = vpop.xlane.xlu0 %1311
    %v1313 = vsel %vm707, %v1309, -inf
    %1314 = vmax.xlane.f32.xlu0 %v1313
    %v1315 = vpop.xlane.xlu0 %1314
    %v1316 = vsub.f32 %v1308, %v1312
    %v1317 = vsub.f32 %v1309, %v1315
    %v1318 = vmul.f32 %v1316, 1.442695
    %v1319 = vpow.pop %v1318
    %v1320 = vmul.f32 %v1317, 1.442695
    %v1321 = vpow.pop %v1320
    %v1322 = vsel %vm707, %v1319, 0.0
    %1323 = vadd.xlane.f32.xlu0 %v1322
    %v1324 = vpop.xlane.xlu0 %1323
    %v1325 = vsel %vm707, %v1321, 0.0
    %1326 = vadd.xlane.f32.xlu0 %v1325
    %v1327 = vpop.xlane.xlu0 %1326
    %v1328 = vrcp.pop %v1324
    %v1329 = vmul.f32 %v1319, %v1328
    %v1330 = vrcp.pop %v1327
    %v1331 = vmul.f32 %v1321, %v1330
    %v1333 = vsel %vm707, %v1329, 0
    %1335 = vmatprep.subr.mxu0 0.0
    %1336 = vmatpush1.msra.mxu0 %v1146
    %1337 = vmatprep.subr.mxu0 0.0
    %1338 = vmatpush1.msra.mxu0 0.0
    %1339 = vmatprep.subr.mxu0 0.0
    %1340 = vmatpush1.msra.mxu0 0.0
    %1341 = vmatprep.subr.mxu0 0.0
    %1342 = vmatpush1.msra.mxu0 0.0
    %1343 = vmatprep.subr.mxu0 0.0
    %1344 = vmatpush1.msra.mxu0 0.0
    %1345 = vmatprep.subr.mxu0 0.0
    %1346 = vmatpush1.msra.mxu0 0.0
    %1347 = vmatprep.subr.mxu0 0.0
    %1348 = vmatpush1.msra.mxu0 0.0
    %1349 = vmatprep.subr.mxu0 0.0
    %1350 = vmatpush1.msra.mxu0 0.0
    %1351 = vmatprep.subr.mxu0 0.0
    %1352 = vmatpush1.msra.mxu0 0.0
    %1353 = vmatprep.subr.mxu0 0.0
    %1354 = vmatpush1.msra.mxu0 0.0
    %1355 = vmatprep.subr.mxu0 0.0
    %1356 = vmatpush1.msra.mxu0 0.0
    %1357 = vmatprep.subr.mxu0 0.0
    %1358 = vmatpush1.msra.mxu0 0.0
    %1359 = vmatprep.subr.mxu0 0.0
    %1360 = vmatpush1.msra.mxu0 0.0
    %1361 = vmatprep.subr.mxu0 0.0
    %1362 = vmatpush1.msra.mxu0 0.0
    %1363 = vmatprep.subr.mxu0 0.0
    %1364 = vmatpush1.msra.mxu0 0.0
    %1365 = vmatprep.subr.mxu0 0.0
    %1366 = vmatpush1.msra.mxu0 0.0
    %1367 = vmatprep.subr.mxu0 0.0
    %1368 = vmatpush1.msra.mxu0 0.0
    %1369 = vmatprep.subr.mxu0 0.0
    %1370 = vmatpush1.msra.mxu0 0.0
    %1371 = vmatprep.subr.mxu0 0.0
    %1372 = vmatpush1.msra.mxu0 0.0
    %1373 = vmatprep.subr.mxu0 0.0
    %1374 = vmatpush1.msra.mxu0 0.0
    %1375 = vmatprep.subr.mxu0 0.0
    %1376 = vmatpush1.msra.mxu0 0.0
    %1377 = vmatprep.subr.mxu0 0.0
    %1378 = vmatpush1.msra.mxu0 0.0
    %1379 = vmatprep.subr.mxu0 0.0
    %1380 = vmatpush1.msra.mxu0 0.0
    %1381 = vmatprep.subr.mxu0 0.0
    %1382 = vmatpush1.msra.mxu0 0.0
    %1383 = vmatprep.subr.mxu0 0.0
    %1384 = vmatpush1.msra.mxu0 0.0
    %1385 = vmatprep.subr.mxu0 0.0
    %1386 = vmatpush1.msra.mxu0 0.0
    %1387 = vmatprep.subr.mxu0 0.0
    %1388 = vmatpush1.msra.mxu0 0.0
    %1389 = vmatprep.subr.mxu0 0.0
    %1390 = vmatpush1.msra.mxu0 0.0
    %1391 = vmatprep.subr.mxu0 0.0
    %1392 = vmatpush1.msra.mxu0 0.0
    %1393 = vmatprep.subr.mxu0 0.0
    %1394 = vmatpush1.msra.mxu0 0.0
    %1395 = vmatprep.subr.mxu0 0.0
    %1396 = vmatpush1.msra.mxu0 0.0
    %1397 = vmatprep.subr.mxu0 0.0
    %1398 = vmatpush1.msra.mxu0 0.0
    %1399 = vmatprep.mubr.f32.mxu0 0.0
    %1400 = vmatmul.mubr.f32.gmra.mrb[0].mxu0 %v1333
    %v1401 = vpop.f32.mrb[0].mxu0
    %v1402 = vadd.f32 0.0, %v1401
    %v1403 = vpop.f32.mrb[0].mxu0
    %1404 = vdwg.mxu0
    %v1406 = vsel %vm707, %v1331, 0
    %1408 = vmatprep.subr.mxu0 0.0
    %1409 = vmatpush1.msra.mxu0 %v1151
    %1410 = vmatprep.subr.mxu0 0.0
    %1411 = vmatpush1.msra.mxu0 0.0
    %1412 = vmatprep.subr.mxu0 0.0
    %1413 = vmatpush1.msra.mxu0 0.0
    %1414 = vmatprep.subr.mxu0 0.0
    %1415 = vmatpush1.msra.mxu0 0.0
    %1416 = vmatprep.subr.mxu0 0.0
    %1417 = vmatpush1.msra.mxu0 0.0
    %1418 = vmatprep.subr.mxu0 0.0
    %1419 = vmatpush1.msra.mxu0 0.0
    %1420 = vmatprep.subr.mxu0 0.0
    %1421 = vmatpush1.msra.mxu0 0.0
    %1422 = vmatprep.subr.mxu0 0.0
    %1423 = vmatpush1.msra.mxu0 0.0
    %1424 = vmatprep.subr.mxu0 0.0
    %1425 = vmatpush1.msra.mxu0 0.0
    %1426 = vmatprep.subr.mxu0 0.0
    %1427 = vmatpush1.msra.mxu0 0.0
    %1428 = vmatprep.subr.mxu0 0.0
    %1429 = vmatpush1.msra.mxu0 0.0
    %1430 = vmatprep.subr.mxu0 0.0
    %1431 = vmatpush1.msra.mxu0 0.0
    %1432 = vmatprep.subr.mxu0 0.0
    %1433 = vmatpush1.msra.mxu0 0.0
    %1434 = vmatprep.subr.mxu0 0.0
    %1435 = vmatpush1.msra.mxu0 0.0
    %1436 = vmatprep.subr.mxu0 0.0
    %1437 = vmatpush1.msra.mxu0 0.0
    %1438 = vmatprep.subr.mxu0 0.0
    %1439 = vmatpush1.msra.mxu0 0.0
    %1440 = vmatprep.subr.mxu0 0.0
    %1441 = vmatpush1.msra.mxu0 0.0
    %1442 = vmatprep.subr.mxu0 0.0
    %1443 = vmatpush1.msra.mxu0 0.0
    %1444 = vmatprep.subr.mxu0 0.0
    %1445 = vmatpush1.msra.mxu0 0.0
    %1446 = vmatprep.subr.mxu0 0.0
    %1447 = vmatpush1.msra.mxu0 0.0
    %1448 = vmatprep.subr.mxu0 0.0
    %1449 = vmatpush1.msra.mxu0 0.0
    %1450 = vmatprep.subr.mxu0 0.0
    %1451 = vmatpush1.msra.mxu0 0.0
    %1452 = vmatprep.subr.mxu0 0.0
    %1453 = vmatpush1.msra.mxu0 0.0
    %1454 = vmatprep.subr.mxu0 0.0
    %1455 = vmatpush1.msra.mxu0 0.0
    %1456 = vmatprep.subr.mxu0 0.0
    %1457 = vmatpush1.msra.mxu0 0.0
    %1458 = vmatprep.subr.mxu0 0.0
    %1459 = vmatpush1.msra.mxu0 0.0
    %1460 = vmatprep.subr.mxu0 0.0
    %1461 = vmatpush1.msra.mxu0 0.0
    %1462 = vmatprep.subr.mxu0 0.0
    %1463 = vmatpush1.msra.mxu0 0.0
    %1464 = vmatprep.subr.mxu0 0.0
    %1465 = vmatpush1.msra.mxu0 0.0
    %1466 = vmatprep.subr.mxu0 0.0
    %1467 = vmatpush1.msra.mxu0 0.0
    %1468 = vmatprep.subr.mxu0 0.0
    %1469 = vmatpush1.msra.mxu0 0.0
    %1470 = vmatprep.subr.mxu0 0.0
    %1471 = vmatpush1.msra.mxu0 0.0
    %1472 = vmatprep.mubr.f32.mxu0 0.0
    %1473 = vmatmul.mubr.f32.gmra.mrb[0].mxu0 %v1406
    %v1474 = vpop.f32.mrb[0].mxu0
    %v1475 = vadd.f32 0.0, %v1474
    %v1476 = vpop.f32.mrb[0].mxu0
    %1477 = vdwg.mxu0
    %s1478 = scalar_lea.vmem %s13, 16
    %v1479 = vld [vmem:[%s1478] sm:$0xff]
    %v1480 = vld [vmem:[%s1478 + $0x8] sm:$0xff]
    %v1482 = vsel %vm550, %v1402, 0
    %v1485 = vsel %vm550, %v1475, 0
    %1487 = vmatprep.subr.mxu0 0.0
    %1488 = vmatpush1.msra.mxu0 %v1479
    %1489 = vmatprep.subr.mxu0 0.0
    %1490 = vmatpush1.msra.mxu0 %v1480
    %1491 = vmatprep.subr.mxu0 0.0
    %1492 = vmatpush1.msra.mxu0 0.0
    %1493 = vmatprep.subr.mxu0 0.0
    %1494 = vmatpush1.msra.mxu0 0.0
    %1495 = vmatprep.subr.mxu0 0.0
    %1496 = vmatpush1.msra.mxu0 0.0
    %1497 = vmatprep.subr.mxu0 0.0
    %1498 = vmatpush1.msra.mxu0 0.0
    %1499 = vmatprep.subr.mxu0 0.0
    %1500 = vmatpush1.msra.mxu0 0.0
    %1501 = vmatprep.subr.mxu0 0.0
    %1502 = vmatpush1.msra.mxu0 0.0
    %1503 = vmatprep.subr.mxu0 0.0
    %1504 = vmatpush1.msra.mxu0 0.0
    %1505 = vmatprep.subr.mxu0 0.0
    %1506 = vmatpush1.msra.mxu0 0.0
    %1507 = vmatprep.subr.mxu0 0.0
    %1508 = vmatpush1.msra.mxu0 0.0
    %1509 = vmatprep.subr.mxu0 0.0
    %1510 = vmatpush1.msra.mxu0 0.0
    %1511 = vmatprep.subr.mxu0 0.0
    %1512 = vmatpush1.msra.mxu0 0.0
    %1513 = vmatprep.subr.mxu0 0.0
    %1514 = vmatpush1.msra.mxu0 0.0
    %1515 = vmatprep.subr.mxu0 0.0
    %1516 = vmatpush1.msra.mxu0 0.0
    %1517 = vmatprep.subr.mxu0 0.0
    %1518 = vmatpush1.msra.mxu0 0.0
    %1519 = vmatprep.subr.mxu0 0.0
    %1520 = vmatpush1.msra.mxu0 0.0
    %1521 = vmatprep.subr.mxu0 0.0
    %1522 = vmatpush1.msra.mxu0 0.0
    %1523 = vmatprep.subr.mxu0 0.0
    %1524 = vmatpush1.msra.mxu0 0.0
    %1525 = vmatprep.subr.mxu0 0.0
    %1526 = vmatpush1.msra.mxu0 0.0
    %1527 = vmatprep.subr.mxu0 0.0
    %1528 = vmatpush1.msra.mxu0 0.0
    %1529 = vmatprep.subr.mxu0 0.0
    %1530 = vmatpush1.msra.mxu0 0.0
    %1531 = vmatprep.subr.mxu0 0.0
    %1532 = vmatpush1.msra.mxu0 0.0
    %1533 = vmatprep.subr.mxu0 0.0
    %1534 = vmatpush1.msra.mxu0 0.0
    %1535 = vmatprep.subr.mxu0 0.0
    %1536 = vmatpush1.msra.mxu0 0.0
    %1537 = vmatprep.subr.mxu0 0.0
    %1538 = vmatpush1.msra.mxu0 0.0
    %1539 = vmatprep.subr.mxu0 0.0
    %1540 = vmatpush1.msra.mxu0 0.0
    %1541 = vmatprep.subr.mxu0 0.0
    %1542 = vmatpush1.msra.mxu0 0.0
    %1543 = vmatprep.subr.mxu0 0.0
    %1544 = vmatpush1.msra.mxu0 0.0
    %1545 = vmatprep.subr.mxu0 0.0
    %1546 = vmatpush1.msra.mxu0 0.0
    %1547 = vmatprep.subr.mxu0 0.0
    %1548 = vmatpush1.msra.mxu0 0.0
    %1549 = vmatprep.subr.mxu0 0.0
    %1550 = vmatpush1.msra.mxu0 0.0
    %1551 = vmatprep.mubr.f32.mxu0 0.0
    %1552 = vmatmul.mubr.f32.gmra.mrb[0].mxu0 %v1482
    %v1553 = vpop.f32.mrb[0].mxu0
    %v1554 = vadd.f32 0.0, %v1553
    %v1555 = vpop.f32.mrb[0].mxu0
    %1556 = vmatprep.mubr.f32.mxu0 0.0
    %1557 = vmatmul.mubr.f32.gmra.mrb[0].mxu0 %v1485
    %v1558 = vpop.f32.mrb[0].mxu0
    %v1559 = vadd.f32 0.0, %v1558
    %v1560 = vpop.f32.mrb[0].mxu0
    %1561 = vdwg.mxu0
    %v1563 = vsel %vm550, %v800, 0
    %v1566 = vsel %vm550, %v873, 0
    %1568 = vmatprep.subr.mxu0 0.0
    %1569 = vmatpush1.msra.mxu0 %v876
    %1570 = vmatprep.subr.mxu0 0.0
    %1571 = vmatpush1.msra.mxu0 %v877
    %1572 = vmatprep.subr.mxu0 0.0
    %1573 = vmatpush1.msra.mxu0 0.0
    %1574 = vmatprep.subr.mxu0 0.0
    %1575 = vmatpush1.msra.mxu0 0.0
    %1576 = vmatprep.subr.mxu0 0.0
    %1577 = vmatpush1.msra.mxu0 0.0
    %1578 = vmatprep.subr.mxu0 0.0
    %1579 = vmatpush1.msra.mxu0 0.0
    %1580 = vmatprep.subr.mxu0 0.0
    %1581 = vmatpush1.msra.mxu0 0.0
    %1582 = vmatprep.subr.mxu0 0.0
    %1583 = vmatpush1.msra.mxu0 0.0
    %1584 = vmatprep.subr.mxu0 0.0
    %1585 = vmatpush1.msra.mxu0 0.0
    %1586 = vmatprep.subr.mxu0 0.0
    %1587 = vmatpush1.msra.mxu0 0.0
    %1588 = vmatprep.subr.mxu0 0.0
    %1589 = vmatpush1.msra.mxu0 0.0
    %1590 = vmatprep.subr.mxu0 0.0
    %1591 = vmatpush1.msra.mxu0 0.0
    %1592 = vmatprep.subr.mxu0 0.0
    %1593 = vmatpush1.msra.mxu0 0.0
    %1594 = vmatprep.subr.mxu0 0.0
    %1595 = vmatpush1.msra.mxu0 0.0
    %1596 = vmatprep.subr.mxu0 0.0
    %1597 = vmatpush1.msra.mxu0 0.0
    %1598 = vmatprep.subr.mxu0 0.0
    %1599 = vmatpush1.msra.mxu0 0.0
    %1600 = vmatprep.subr.mxu0 0.0
    %1601 = vmatpush1.msra.mxu0 0.0
    %1602 = vmatprep.subr.mxu0 0.0
    %1603 = vmatpush1.msra.mxu0 0.0
    %1604 = vmatprep.subr.mxu0 0.0
    %1605 = vmatpush1.msra.mxu0 0.0
    %1606 = vmatprep.subr.mxu0 0.0
    %1607 = vmatpush1.msra.mxu0 0.0
    %1608 = vmatprep.subr.mxu0 0.0
    %1609 = vmatpush1.msra.mxu0 0.0
    %1610 = vmatprep.subr.mxu0 0.0
    %1611 = vmatpush1.msra.mxu0 0.0
    %1612 = vmatprep.subr.mxu0 0.0
    %1613 = vmatpush1.msra.mxu0 0.0
    %1614 = vmatprep.subr.mxu0 0.0
    %1615 = vmatpush1.msra.mxu0 0.0
    %1616 = vmatprep.subr.mxu0 0.0
    %1617 = vmatpush1.msra.mxu0 0.0
    %1618 = vmatprep.subr.mxu0 0.0
    %1619 = vmatpush1.msra.mxu0 0.0
    %1620 = vmatprep.subr.mxu0 0.0
    %1621 = vmatpush1.msra.mxu0 0.0
    %1622 = vmatprep.subr.mxu0 0.0
    %1623 = vmatpush1.msra.mxu0 0.0
    %1624 = vmatprep.subr.mxu0 0.0
    %1625 = vmatpush1.msra.mxu0 0.0
    %1626 = vmatprep.subr.mxu0 0.0
    %1627 = vmatpush1.msra.mxu0 0.0
    %1628 = vmatprep.subr.mxu0 0.0
    %1629 = vmatpush1.msra.mxu0 0.0
    %1630 = vmatprep.subr.mxu0 0.0
    %1631 = vmatpush1.msra.mxu0 0.0
    %1632 = vmatprep.mubr.f32.mxu0 0.0
    %1633 = vmatmul.mubr.f32.gmra.mrb[0].mxu0 %v1563
    %v1634 = vpop.f32.mrb[0].mxu0
    %v1635 = vadd.f32 %v1554, %v1634
    %v1636 = vpop.f32.mrb[0].mxu0
    %1637 = vmatprep.mubr.f32.mxu0 0.0
    %1638 = vmatmul.mubr.f32.gmra.mrb[0].mxu0 %v1566
    %v1639 = vpop.f32.mrb[0].mxu0
    %v1640 = vadd.f32 %v1559, %v1639
    %v1641 = vpop.f32.mrb[0].mxu0
    %1642 = vdwg.mxu0
    %s1643 = scalar_lea.vmem %s7, 128
    %v1644 = vld [vmem:[%s1643] sm:$0xff]
    %v1645 = vld [vmem:[%s1643 + $0x8] sm:$0xff]
    %v1646 = vld [vmem:[%s1643 + $0x10] sm:$0xff]
    %v1647 = vld [vmem:[%s1643 + $0x18] sm:$0xff]
    %v1648 = vld [vmem:[%s1643 + $0x20] sm:$0xff]
    %v1649 = vld [vmem:[%s1643 + $0x28] sm:$0xff]
    %v1650 = vld [vmem:[%s1643 + $0x30] sm:$0xff]
    %v1651 = vld [vmem:[%s1643 + $0x38] sm:$0xff]
    %s1652 = scalar_lea.vmem %s8, 2
    %v1653 = vld [vmem:[%s1652] sm:$0x1]
    %v1655 = vlaneseq
    %v1656 = vshrl.u32 %v1655, 7
    %v1657 = vsub.s32 0, %v1656
    %v1658 = vrot.slane %v1653, %v1657
    %1660 = vmatprep.subr.mxu0 0.0
    %1661 = vmatpush1.msra.mxu0 %v1644
    %1662 = vmatprep.subr.mxu0 0.0
    %1663 = vmatpush1.msra.mxu0 %v1645
    %1664 = vmatprep.subr.mxu0 0.0
    %1665 = vmatpush1.msra.mxu0 %v1646
    %1666 = vmatprep.subr.mxu0 0.0
    %1667 = vmatpush1.msra.mxu0 %v1647
    %1668 = vmatprep.subr.mxu0 0.0
    %1669 = vmatpush1.msra.mxu0 %v1648
    %1670 = vmatprep.subr.mxu0 0.0
    %1671 = vmatpush1.msra.mxu0 %v1649
    %1672 = vmatprep.subr.mxu0 0.0
    %1673 = vmatpush1.msra.mxu0 %v1650
    %1674 = vmatprep.subr.mxu0 0.0
    %1675 = vmatpush1.msra.mxu0 %v1651
    %1676 = vmatprep.subr.mxu0 0.0
    %1677 = vmatpush1.msra.mxu0 0.0
    %1678 = vmatprep.subr.mxu0 0.0
    %1679 = vmatpush1.msra.mxu0 0.0
    %1680 = vmatprep.subr.mxu0 0.0
    %1681 = vmatpush1.msra.mxu0 0.0
    %1682 = vmatprep.subr.mxu0 0.0
    %1683 = vmatpush1.msra.mxu0 0.0
    %1684 = vmatprep.subr.mxu0 0.0
    %1685 = vmatpush1.msra.mxu0 0.0
    %1686 = vmatprep.subr.mxu0 0.0
    %1687 = vmatpush1.msra.mxu0 0.0
    %1688 = vmatprep.subr.mxu0 0.0
    %1689 = vmatpush1.msra.mxu0 0.0
    %1690 = vmatprep.subr.mxu0 0.0
    %1691 = vmatpush1.msra.mxu0 0.0
    %1692 = vmatprep.subr.mxu0 0.0
    %1693 = vmatpush1.msra.mxu0 0.0
    %1694 = vmatprep.subr.mxu0 0.0
    %1695 = vmatpush1.msra.mxu0 0.0
    %1696 = vmatprep.subr.mxu0 0.0
    %1697 = vmatpush1.msra.mxu0 0.0
    %1698 = vmatprep.subr.mxu0 0.0
    %1699 = vmatpush1.msra.mxu0 0.0
    %1700 = vmatprep.subr.mxu0 0.0
    %1701 = vmatpush1.msra.mxu0 0.0
    %1702 = vmatprep.subr.mxu0 0.0
    %1703 = vmatpush1.msra.mxu0 0.0
    %1704 = vmatprep.subr.mxu0 0.0
    %1705 = vmatpush1.msra.mxu0 0.0
    %1706 = vmatprep.subr.mxu0 0.0
    %1707 = vmatpush1.msra.mxu0 0.0
    %1708 = vmatprep.subr.mxu0 0.0
    %1709 = vmatpush1.msra.mxu0 0.0
    %1710 = vmatprep.subr.mxu0 0.0
    %1711 = vmatpush1.msra.mxu0 0.0
    %1712 = vmatprep.subr.mxu0 0.0
    %1713 = vmatpush1.msra.mxu0 0.0
    %1714 = vmatprep.subr.mxu0 0.0
    %1715 = vmatpush1.msra.mxu0 0.0
    %1716 = vmatprep.subr.mxu0 0.0
    %1717 = vmatpush1.msra.mxu0 0.0
    %1718 = vmatprep.subr.mxu0 0.0
    %1719 = vmatpush1.msra.mxu0 0.0
    %1720 = vmatprep.subr.mxu0 0.0
    %1721 = vmatpush1.msra.mxu0 0.0
    %1722 = vmatprep.subr.mxu0 0.0
    %1723 = vmatpush1.msra.mxu0 0.0
    %1724 = vmatprep.mubr.f32.mxu0 0.0
    %1725 = vmatmul.mubr.f32.gmra.mrb[0].mxu0 %v290
    %v1726 = vpop.f32.mrb[0].mxu0
    %v1727 = vadd.f32 %v1658, %v1726
    %v1728 = vpop.f32.mrb[0].mxu0
    %1729 = vmatprep.mubr.f32.mxu0 0.0
    %1730 = vmatmul.mubr.f32.gmra.mrb[0].mxu0 %v293
    %v1731 = vpop.f32.mrb[0].mxu0
    %v1732 = vadd.f32 %v1658, %v1731
    %v1733 = vpop.f32.mrb[0].mxu0
    %1734 = vdwg.mxu0
    %s1735 = scalar_lea.vmem %s9, 128
    %v1736 = vld [vmem:[%s1735] sm:$0xff]
    %v1737 = vld [vmem:[%s1735 + $0x8] sm:$0xff]
    %v1738 = vld [vmem:[%s1735 + $0x10] sm:$0xff]
    %v1739 = vld [vmem:[%s1735 + $0x18] sm:$0xff]
    %v1740 = vld [vmem:[%s1735 + $0x20] sm:$0xff]
    %v1741 = vld [vmem:[%s1735 + $0x28] sm:$0xff]
    %v1742 = vld [vmem:[%s1735 + $0x30] sm:$0xff]
    %v1743 = vld [vmem:[%s1735 + $0x38] sm:$0xff]
    %s1744 = scalar_lea.vmem %s10, 2
    %v1745 = vld [vmem:[%s1744] sm:$0x1]
    %v1747 = vlaneseq
    %v1748 = vshrl.u32 %v1747, 7
    %v1749 = vsub.s32 0, %v1748
    %v1750 = vrot.slane %v1745, %v1749
    %1752 = vmatprep.subr.mxu0 0.0
    %1753 = vmatpush1.msra.mxu0 %v1736
    %1754 = vmatprep.subr.mxu0 0.0
    %1755 = vmatpush1.msra.mxu0 %v1737
    %1756 = vmatprep.subr.mxu0 0.0
    %1757 = vmatpush1.msra.mxu0 %v1738
    %1758 = vmatprep.subr.mxu0 0.0
    %1759 = vmatpush1.msra.mxu0 %v1739
    %1760 = vmatprep.subr.mxu0 0.0
    %1761 = vmatpush1.msra.mxu0 %v1740
    %1762 = vmatprep.subr.mxu0 0.0
    %1763 = vmatpush1.msra.mxu0 %v1741
    %1764 = vmatprep.subr.mxu0 0.0
    %1765 = vmatpush1.msra.mxu0 %v1742
    %1766 = vmatprep.subr.mxu0 0.0
    %1767 = vmatpush1.msra.mxu0 %v1743
    %1768 = vmatprep.subr.mxu0 0.0
    %1769 = vmatpush1.msra.mxu0 0.0
    %1770 = vmatprep.subr.mxu0 0.0
    %1771 = vmatpush1.msra.mxu0 0.0
    %1772 = vmatprep.subr.mxu0 0.0
    %1773 = vmatpush1.msra.mxu0 0.0
    %1774 = vmatprep.subr.mxu0 0.0
    %1775 = vmatpush1.msra.mxu0 0.0
    %1776 = vmatprep.subr.mxu0 0.0
    %1777 = vmatpush1.msra.mxu0 0.0
    %1778 = vmatprep.subr.mxu0 0.0
    %1779 = vmatpush1.msra.mxu0 0.0
    %1780 = vmatprep.subr.mxu0 0.0
    %1781 = vmatpush1.msra.mxu0 0.0
    %1782 = vmatprep.subr.mxu0 0.0
    %1783 = vmatpush1.msra.mxu0 0.0
    %1784 = vmatprep.subr.mxu0 0.0
    %1785 = vmatpush1.msra.mxu0 0.0
    %1786 = vmatprep.subr.mxu0 0.0
    %1787 = vmatpush1.msra.mxu0 0.0
    %1788 = vmatprep.subr.mxu0 0.0
    %1789 = vmatpush1.msra.mxu0 0.0
    %1790 = vmatprep.subr.mxu0 0.0
    %1791 = vmatpush1.msra.mxu0 0.0
    %1792 = vmatprep.subr.mxu0 0.0
    %1793 = vmatpush1.msra.mxu0 0.0
    %1794 = vmatprep.subr.mxu0 0.0
    %1795 = vmatpush1.msra.mxu0 0.0
    %1796 = vmatprep.subr.mxu0 0.0
    %1797 = vmatpush1.msra.mxu0 0.0
    %1798 = vmatprep.subr.mxu0 0.0
    %1799 = vmatpush1.msra.mxu0 0.0
    %1800 = vmatprep.subr.mxu0 0.0
    %1801 = vmatpush1.msra.mxu0 0.0
    %1802 = vmatprep.subr.mxu0 0.0
    %1803 = vmatpush1.msra.mxu0 0.0
    %1804 = vmatprep.subr.mxu0 0.0
    %1805 = vmatpush1.msra.mxu0 0.0
    %1806 = vmatprep.subr.mxu0 0.0
    %1807 = vmatpush1.msra.mxu0 0.0
    %1808 = vmatprep.subr.mxu0 0.0
    %1809 = vmatpush1.msra.mxu0 0.0
    %1810 = vmatprep.subr.mxu0 0.0
    %1811 = vmatpush1.msra.mxu0 0.0
    %1812 = vmatprep.subr.mxu0 0.0
    %1813 = vmatpush1.msra.mxu0 0.0
    %1814 = vmatprep.subr.mxu0 0.0
    %1815 = vmatpush1.msra.mxu0 0.0
    %1816 = vmatprep.mubr.f32.mxu0 0.0
    %1817 = vmatmul.mubr.f32.gmra.mrb[0].mxu0 %v290
    %v1818 = vpop.f32.mrb[0].mxu0
    %v1819 = vadd.f32 %v1750, %v1818
    %v1820 = vpop.f32.mrb[0].mxu0
    %1821 = vmatprep.mubr.f32.mxu0 0.0
    %1822 = vmatmul.mubr.f32.gmra.mrb[0].mxu0 %v293
    %v1823 = vpop.f32.mrb[0].mxu0
    %v1824 = vadd.f32 %v1750, %v1823
    %v1825 = vpop.f32.mrb[0].mxu0
    %1826 = vdwg.mxu0
    %s1827 = scalar_lea.vmem %s11, 128
    %v1828 = vld [vmem:[%s1827] sm:$0xff]
    %v1829 = vld [vmem:[%s1827 + $0x8] sm:$0xff]
    %v1830 = vld [vmem:[%s1827 + $0x10] sm:$0xff]
    %v1831 = vld [vmem:[%s1827 + $0x18] sm:$0xff]
    %v1832 = vld [vmem:[%s1827 + $0x20] sm:$0xff]
    %v1833 = vld [vmem:[%s1827 + $0x28] sm:$0xff]
    %v1834 = vld [vmem:[%s1827 + $0x30] sm:$0xff]
    %v1835 = vld [vmem:[%s1827 + $0x38] sm:$0xff]
    %s1836 = scalar_lea.vmem %s12, 2
    %v1837 = vld [vmem:[%s1836] sm:$0x1]
    %v1839 = vlaneseq
    %v1840 = vshrl.u32 %v1839, 7
    %v1841 = vsub.s32 0, %v1840
    %v1842 = vrot.slane %v1837, %v1841
    %1844 = vmatprep.subr.mxu0 0.0
    %1845 = vmatpush1.msra.mxu0 %v1828
    %1846 = vmatprep.subr.mxu0 0.0
    %1847 = vmatpush1.msra.mxu0 %v1829
    %1848 = vmatprep.subr.mxu0 0.0
    %1849 = vmatpush1.msra.mxu0 %v1830
    %1850 = vmatprep.subr.mxu0 0.0
    %1851 = vmatpush1.msra.mxu0 %v1831
    %1852 = vmatprep.subr.mxu0 0.0
    %1853 = vmatpush1.msra.mxu0 %v1832
    %1854 = vmatprep.subr.mxu0 0.0
    %1855 = vmatpush1.msra.mxu0 %v1833
    %1856 = vmatprep.subr.mxu0 0.0
    %1857 = vmatpush1.msra.mxu0 %v1834
    %1858 = vmatprep.subr.mxu0 0.0
    %1859 = vmatpush1.msra.mxu0 %v1835
    %1860 = vmatprep.subr.mxu0 0.0
    %1861 = vmatpush1.msra.mxu0 0.0
    %1862 = vmatprep.subr.mxu0 0.0
    %1863 = vmatpush1.msra.mxu0 0.0
    %1864 = vmatprep.subr.mxu0 0.0
    %1865 = vmatpush1.msra.mxu0 0.0
    %1866 = vmatprep.subr.mxu0 0.0
    %1867 = vmatpush1.msra.mxu0 0.0
    %1868 = vmatprep.subr.mxu0 0.0
    %1869 = vmatpush1.msra.mxu0 0.0
    %1870 = vmatprep.subr.mxu0 0.0
    %1871 = vmatpush1.msra.mxu0 0.0
    %1872 = vmatprep.subr.mxu0 0.0
    %1873 = vmatpush1.msra.mxu0 0.0
    %1874 = vmatprep.subr.mxu0 0.0
    %1875 = vmatpush1.msra.mxu0 0.0
    %1876 = vmatprep.subr.mxu0 0.0
    %1877 = vmatpush1.msra.mxu0 0.0
    %1878 = vmatprep.subr.mxu0 0.0
    %1879 = vmatpush1.msra.mxu0 0.0
    %1880 = vmatprep.subr.mxu0 0.0
    %1881 = vmatpush1.msra.mxu0 0.0
    %1882 = vmatprep.subr.mxu0 0.0
    %1883 = vmatpush1.msra.mxu0 0.0
    %1884 = vmatprep.subr.mxu0 0.0
    %1885 = vmatpush1.msra.mxu0 0.0
    %1886 = vmatprep.subr.mxu0 0.0
    %1887 = vmatpush1.msra.mxu0 0.0
    %1888 = vmatprep.subr.mxu0 0.0
    %1889 = vmatpush1.msra.mxu0 0.0
    %1890 = vmatprep.subr.mxu0 0.0
    %1891 = vmatpush1.msra.mxu0 0.0
    %1892 = vmatprep.subr.mxu0 0.0
    %1893 = vmatpush1.msra.mxu0 0.0
    %1894 = vmatprep.subr.mxu0 0.0
    %1895 = vmatpush1.msra.mxu0 0.0
    %1896 = vmatprep.subr.mxu0 0.0
    %1897 = vmatpush1.msra.mxu0 0.0
    %1898 = vmatprep.subr.mxu0 0.0
    %1899 = vmatpush1.msra.mxu0 0.0
    %1900 = vmatprep.subr.mxu0 0.0
    %1901 = vmatpush1.msra.mxu0 0.0
    %1902 = vmatprep.subr.mxu0 0.0
    %1903 = vmatpush1.msra.mxu0 0.0
    %1904 = vmatprep.subr.mxu0 0.0
    %1905 = vmatpush1.msra.mxu0 0.0
    %1906 = vmatprep.subr.mxu0 0.0
    %1907 = vmatpush1.msra.mxu0 0.0
    %1908 = vmatprep.mubr.f32.mxu0 0.0
    %1909 = vmatmul.mubr.f32.gmra.mrb[0].mxu0 %v290
    %v1910 = vpop.f32.mrb[0].mxu0
    %v1911 = vadd.f32 %v1842, %v1910
    %v1912 = vpop.f32.mrb[0].mxu0
    %1913 = vmatprep.mubr.f32.mxu0 0.0
    %1914 = vmatmul.mubr.f32.gmra.mrb[0].mxu0 %v293
    %v1915 = vpop.f32.mrb[0].mxu0
    %v1916 = vadd.f32 %v1842, %v1915
    %v1917 = vpop.f32.mrb[0].mxu0
    %1918 = vdwg.mxu0
    %v1920 = vsel %vm550, %v1727, 0
    %v1923 = vsel %vm550, %v1819, 0
    %1925 = vmatprep.subr.mxu0 0.0
    %1926 = vmatpush1.xpose.msra.mxu0 %v1923
    %1927 = vmatprep.subr.mxu0 0.0
    %1928 = vmatpush1.xpose.msra.mxu0 0.0
    %1929 = vmatprep.subr.mxu0 0.0
    %1930 = vmatpush1.xpose.msra.mxu0 0.0
    %1931 = vmatprep.subr.mxu0 0.0
    %1932 = vmatpush1.xpose.msra.mxu0 0.0
    %1933 = vmatprep.subr.mxu0 0.0
    %1934 = vmatpush1.xpose.msra.mxu0 0.0
    %1935 = vmatprep.subr.mxu0 0.0
    %1936 = vmatpush1.xpose.msra.mxu0 0.0
    %1937 = vmatprep.subr.mxu0 0.0
    %1938 = vmatpush1.xpose.msra.mxu0 0.0
    %1939 = vmatprep.subr.mxu0 0.0
    %1940 = vmatpush1.xpose.msra.mxu0 0.0
    %1941 = vmatprep.subr.mxu0 0.0
    %1942 = vmatpush1.xpose.msra.mxu0 0.0
    %1943 = vmatprep.subr.mxu0 0.0
    %1944 = vmatpush1.xpose.msra.mxu0 0.0
    %1945 = vmatprep.subr.mxu0 0.0
    %1946 = vmatpush1.xpose.msra.mxu0 0.0
    %1947 = vmatprep.subr.mxu0 0.0
    %1948 = vmatpush1.xpose.msra.mxu0 0.0
    %1949 = vmatprep.subr.mxu0 0.0
    %1950 = vmatpush1.xpose.msra.mxu0 0.0
    %1951 = vmatprep.subr.mxu0 0.0
    %1952 = vmatpush1.xpose.msra.mxu0 0.0
    %1953 = vmatprep.subr.mxu0 0.0
    %1954 = vmatpush1.xpose.msra.mxu0 0.0
    %1955 = vmatprep.subr.mxu0 0.0
    %1956 = vmatpush1.xpose.msra.mxu0 0.0
    %1957 = vmatprep.subr.mxu0 0.0
    %1958 = vmatpush1.xpose.msra.mxu0 0.0
    %1959 = vmatprep.subr.mxu0 0.0
    %1960 = vmatpush1.xpose.msra.mxu0 0.0
    %1961 = vmatprep.subr.mxu0 0.0
    %1962 = vmatpush1.xpose.msra.mxu0 0.0
    %1963 = vmatprep.subr.mxu0 0.0
    %1964 = vmatpush1.xpose.msra.mxu0 0.0
    %1965 = vmatprep.subr.mxu0 0.0
    %1966 = vmatpush1.xpose.msra.mxu0 0.0
    %1967 = vmatprep.subr.mxu0 0.0
    %1968 = vmatpush1.xpose.msra.mxu0 0.0
    %1969 = vmatprep.subr.mxu0 0.0
    %1970 = vmatpush1.xpose.msra.mxu0 0.0
    %1971 = vmatprep.subr.mxu0 0.0
    %1972 = vmatpush1.xpose.msra.mxu0 0.0
    %1973 = vmatprep.subr.mxu0 0.0
    %1974 = vmatpush1.xpose.msra.mxu0 0.0
    %1975 = vmatprep.subr.mxu0 0.0
    %1976 = vmatpush1.xpose.msra.mxu0 0.0
    %1977 = vmatprep.subr.mxu0 0.0
    %1978 = vmatpush1.xpose.msra.mxu0 0.0
    %1979 = vmatprep.subr.mxu0 0.0
    %1980 = vmatpush1.xpose.msra.mxu0 0.0
    %1981 = vmatprep.subr.mxu0 0.0
    %1982 = vmatpush1.xpose.msra.mxu0 0.0
    %1983 = vmatprep.subr.mxu0 0.0
    %1984 = vmatpush1.xpose.msra.mxu0 0.0
    %1985 = vmatprep.subr.mxu0 0.0
    %1986 = vmatpush1.xpose.msra.mxu0 0.0
    %1987 = vmatprep.subr.mxu0 0.0
    %1988 = vmatpush1.xpose.msra.mxu0 0.0
    %1989 = vmatprep.mubr.f32.mxu0 0.0
    %1990 = vmatmul.mubr.f32.gmra.mrb[0].mxu0 %v1920
    %v1991 = vpop.f32.mrb[0].mxu0
    %v1992 = vadd.f32 0.0, %v1991
    %v1993 = vpop.f32.mrb[0].mxu0
    %1994 = vdwg.mxu0
    %v1996 = vsel %vm550, %v1732, 0
    %v1999 = vsel %vm550, %v1824, 0
    %2001 = vmatprep.subr.mxu0 0.0
    %2002 = vmatpush1.xpose.msra.mxu0 %v1999
    %2003 = vmatprep.subr.mxu0 0.0
    %2004 = vmatpush1.xpose.msra.mxu0 0.0
    %2005 = vmatprep.subr.mxu0 0.0
    %2006 = vmatpush1.xpose.msra.mxu0 0.0
    %2007 = vmatprep.subr.mxu0 0.0
    %2008 = vmatpush1.xpose.msra.mxu0 0.0
    %2009 = vmatprep.subr.mxu0 0.0
    %2010 = vmatpush1.xpose.msra.mxu0 0.0
    %2011 = vmatprep.subr.mxu0 0.0
    %2012 = vmatpush1.xpose.msra.mxu0 0.0
    %2013 = vmatprep.subr.mxu0 0.0
    %2014 = vmatpush1.xpose.msra.mxu0 0.0
    %2015 = vmatprep.subr.mxu0 0.0
    %2016 = vmatpush1.xpose.msra.mxu0 0.0
    %2017 = vmatprep.subr.mxu0 0.0
    %2018 = vmatpush1.xpose.msra.mxu0 0.0
    %2019 = vmatprep.subr.mxu0 0.0
    %2020 = vmatpush1.xpose.msra.mxu0 0.0
    %2021 = vmatprep.subr.mxu0 0.0
    %2022 = vmatpush1.xpose.msra.mxu0 0.0
    %2023 = vmatprep.subr.mxu0 0.0
    %2024 = vmatpush1.xpose.msra.mxu0 0.0
    %2025 = vmatprep.subr.mxu0 0.0
    %2026 = vmatpush1.xpose.msra.mxu0 0.0
    %2027 = vmatprep.subr.mxu0 0.0
    %2028 = vmatpush1.xpose.msra.mxu0 0.0
    %2029 = vmatprep.subr.mxu0 0.0
    %2030 = vmatpush1.xpose.msra.mxu0 0.0
    %2031 = vmatprep.subr.mxu0 0.0
    %2032 = vmatpush1.xpose.msra.mxu0 0.0
    %2033 = vmatprep.subr.mxu0 0.0
    %2034 = vmatpush1.xpose.msra.mxu0 0.0
    %2035 = vmatprep.subr.mxu0 0.0
    %2036 = vmatpush1.xpose.msra.mxu0 0.0
    %2037 = vmatprep.subr.mxu0 0.0
    %2038 = vmatpush1.xpose.msra.mxu0 0.0
    %2039 = vmatprep.subr.mxu0 0.0
    %2040 = vmatpush1.xpose.msra.mxu0 0.0
    %2041 = vmatprep.subr.mxu0 0.0
    %2042 = vmatpush1.xpose.msra.mxu0 0.0
    %2043 = vmatprep.subr.mxu0 0.0
    %2044 = vmatpush1.xpose.msra.mxu0 0.0
    %2045 = vmatprep.subr.mxu0 0.0
    %2046 = vmatpush1.xpose.msra.mxu0 0.0
    %2047 = vmatprep.subr.mxu0 0.0
    %2048 = vmatpush1.xpose.msra.mxu0 0.0
    %2049 = vmatprep.subr.mxu0 0.0
    %2050 = vmatpush1.xpose.msra.mxu0 0.0
    %2051 = vmatprep.subr.mxu0 0.0
    %2052 = vmatpush1.xpose.msra.mxu0 0.0
    %2053 = vmatprep.subr.mxu0 0.0
    %2054 = vmatpush1.xpose.msra.mxu0 0.0
    %2055 = vmatprep.subr.mxu0 0.0
    %2056 = vmatpush1.xpose.msra.mxu0 0.0
    %2057 = vmatprep.subr.mxu0 0.0
    %2058 = vmatpush1.xpose.msra.mxu0 0.0
    %2059 = vmatprep.subr.mxu0 0.0
    %2060 = vmatpush1.xpose.msra.mxu0 0.0
    %2061 = vmatprep.subr.mxu0 0.0
    %2062 = vmatpush1.xpose.msra.mxu0 0.0
    %2063 = vmatprep.subr.mxu0 0.0
    %2064 = vmatpush1.xpose.msra.mxu0 0.0
    %2065 = vmatprep.mubr.f32.mxu0 0.0
    %2066 = vmatmul.mubr.f32.gmra.mrb[0].mxu0 %v1996
    %v2067 = vpop.f32.mrb[0].mxu0
    %v2068 = vadd.f32 0.0, %v2067
    %v2069 = vpop.f32.mrb[0].mxu0
    %2070 = vdwg.mxu0
    %v2071 = vmul.f32 %v1992, 0.25
    %v2072 = vmul.f32 %v2068, 0.25
    %v2073 = vadd.f32 %v2071, %v229
    %v2074 = vadd.f32 %v2072, %v229
    %v2075 = vsel %vm707, %v2073, -inf
    %2076 = vmax.xlane.f32.xlu0 %v2075
    %v2077 = vpop.xlane.xlu0 %2076
    %v2078 = vsel %vm707, %v2074, -inf
    %2079 = vmax.xlane.f32.xlu0 %v2078
    %v2080 = vpop.xlane.xlu0 %2079
    %v2081 = vsub.f32 %v2073, %v2077
    %v2082 = vsub.f32 %v2074, %v2080
    %v2083 = vmul.f32 %v2081, 1.442695
    %v2084 = vpow.pop %v2083
    %v2085 = vmul.f32 %v2082, 1.442695
    %v2086 = vpow.pop %v2085
    %v2087 = vsel %vm707, %v2084, 0.0
    %2088 = vadd.xlane.f32.xlu0 %v2087
    %v2089 = vpop.xlane.xlu0 %2088
    %v2090 = vsel %vm707, %v2086, 0.0
    %2091 = vadd.xlane.f32.xlu0 %v2090
    %v2092 = vpop.xlane.xlu0 %2091
    %v2093 = vrcp.pop %v2089
    %v2094 = vmul.f32 %v2084, %v2093
    %v2095 = vrcp.pop %v2092
    %v2096 = vmul.f32 %v2086, %v2095
    %v2098 = vsel %vm707, %v2094, 0
    %2100 = vmatprep.subr.mxu0 0.0
    %2101 = vmatpush1.msra.mxu0 %v1911
    %2102 = vmatprep.subr.mxu0 0.0
    %2103 = vmatpush1.msra.mxu0 0.0
    %2104 = vmatprep.subr.mxu0 0.0
    %2105 = vmatpush1.msra.mxu0 0.0
    %2106 = vmatprep.subr.mxu0 0.0
    %2107 = vmatpush1.msra.mxu0 0.0
    %2108 = vmatprep.subr.mxu0 0.0
    %2109 = vmatpush1.msra.mxu0 0.0
    %2110 = vmatprep.subr.mxu0 0.0
    %2111 = vmatpush1.msra.mxu0 0.0
    %2112 = vmatprep.subr.mxu0 0.0
    %2113 = vmatpush1.msra.mxu0 0.0
    %2114 = vmatprep.subr.mxu0 0.0
    %2115 = vmatpush1.msra.mxu0 0.0
    %2116 = vmatprep.subr.mxu0 0.0
    %2117 = vmatpush1.msra.mxu0 0.0
    %2118 = vmatprep.subr.mxu0 0.0
    %2119 = vmatpush1.msra.mxu0 0.0
    %2120 = vmatprep.subr.mxu0 0.0
    %2121 = vmatpush1.msra.mxu0 0.0
    %2122 = vmatprep.subr.mxu0 0.0
    %2123 = vmatpush1.msra.mxu0 0.0
    %2124 = vmatprep.subr.mxu0 0.0
    %2125 = vmatpush1.msra.mxu0 0.0
    %2126 = vmatprep.subr.mxu0 0.0
    %2127 = vmatpush1.msra.mxu0 0.0
    %2128 = vmatprep.subr.mxu0 0.0
    %2129 = vmatpush1.msra.mxu0 0.0
    %2130 = vmatprep.subr.mxu0 0.0
    %2131 = vmatpush1.msra.mxu0 0.0
    %2132 = vmatprep.subr.mxu0 0.0
    %2133 = vmatpush1.msra.mxu0 0.0
    %2134 = vmatprep.subr.mxu0 0.0
    %2135 = vmatpush1.msra.mxu0 0.0
    %2136 = vmatprep.subr.mxu0 0.0
    %2137 = vmatpush1.msra.mxu0 0.0
    %2138 = vmatprep.subr.mxu0 0.0
    %2139 = vmatpush1.msra.mxu0 0.0
    %2140 = vmatprep.subr.mxu0 0.0
    %2141 = vmatpush1.msra.mxu0 0.0
    %2142 = vmatprep.subr.mxu0 0.0
    %2143 = vmatpush1.msra.mxu0 0.0
    %2144 = vmatprep.subr.mxu0 0.0
    %2145 = vmatpush1.msra.mxu0 0.0
    %2146 = vmatprep.subr.mxu0 0.0
    %2147 = vmatpush1.msra.mxu0 0.0
    %2148 = vmatprep.subr.mxu0 0.0
    %2149 = vmatpush1.msra.mxu0 0.0
    %2150 = vmatprep.subr.mxu0 0.0
    %2151 = vmatpush1.msra.mxu0 0.0
    %2152 = vmatprep.subr.mxu0 0.0
    %2153 = vmatpush1.msra.mxu0 0.0
    %2154 = vmatprep.subr.mxu0 0.0
    %2155 = vmatpush1.msra.mxu0 0.0
    %2156 = vmatprep.subr.mxu0 0.0
    %2157 = vmatpush1.msra.mxu0 0.0
    %2158 = vmatprep.subr.mxu0 0.0
    %2159 = vmatpush1.msra.mxu0 0.0
    %2160 = vmatprep.subr.mxu0 0.0
    %2161 = vmatpush1.msra.mxu0 0.0
    %2162 = vmatprep.subr.mxu0 0.0
    %2163 = vmatpush1.msra.mxu0 0.0
    %2164 = vmatprep.mubr.f32.mxu0 0.0
    %2165 = vmatmul.mubr.f32.gmra.mrb[0].mxu0 %v2098
    %v2166 = vpop.f32.mrb[0].mxu0
    %v2167 = vadd.f32 0.0, %v2166
    %v2168 = vpop.f32.mrb[0].mxu0
    %2169 = vdwg.mxu0
    %v2171 = vsel %vm707, %v2096, 0
    %2173 = vmatprep.subr.mxu0 0.0
    %2174 = vmatpush1.msra.mxu0 %v1916
    %2175 = vmatprep.subr.mxu0 0.0
    %2176 = vmatpush1.msra.mxu0 0.0
    %2177 = vmatprep.subr.mxu0 0.0
    %2178 = vmatpush1.msra.mxu0 0.0
    %2179 = vmatprep.subr.mxu0 0.0
    %2180 = vmatpush1.msra.mxu0 0.0
    %2181 = vmatprep.subr.mxu0 0.0
    %2182 = vmatpush1.msra.mxu0 0.0
    %2183 = vmatprep.subr.mxu0 0.0
    %2184 = vmatpush1.msra.mxu0 0.0
    %2185 = vmatprep.subr.mxu0 0.0
    %2186 = vmatpush1.msra.mxu0 0.0
    %2187 = vmatprep.subr.mxu0 0.0
    %2188 = vmatpush1.msra.mxu0 0.0
    %2189 = vmatprep.subr.mxu0 0.0
    %2190 = vmatpush1.msra.mxu0 0.0
    %2191 = vmatprep.subr.mxu0 0.0
    %2192 = vmatpush1.msra.mxu0 0.0
    %2193 = vmatprep.subr.mxu0 0.0
    %2194 = vmatpush1.msra.mxu0 0.0
    %2195 = vmatprep.subr.mxu0 0.0
    %2196 = vmatpush1.msra.mxu0 0.0
    %2197 = vmatprep.subr.mxu0 0.0
    %2198 = vmatpush1.msra.mxu0 0.0
    %2199 = vmatprep.subr.mxu0 0.0
    %2200 = vmatpush1.msra.mxu0 0.0
    %2201 = vmatprep.subr.mxu0 0.0
    %2202 = vmatpush1.msra.mxu0 0.0
    %2203 = vmatprep.subr.mxu0 0.0
    %2204 = vmatpush1.msra.mxu0 0.0
    %2205 = vmatprep.subr.mxu0 0.0
    %2206 = vmatpush1.msra.mxu0 0.0
    %2207 = vmatprep.subr.mxu0 0.0
    %2208 = vmatpush1.msra.mxu0 0.0
    %2209 = vmatprep.subr.mxu0 0.0
    %2210 = vmatpush1.msra.mxu0 0.0
    %2211 = vmatprep.subr.mxu0 0.0
    %2212 = vmatpush1.msra.mxu0 0.0
    %2213 = vmatprep.subr.mxu0 0.0
    %2214 = vmatpush1.msra.mxu0 0.0
    %2215 = vmatprep.subr.mxu0 0.0
    %2216 = vmatpush1.msra.mxu0 0.0
    %2217 = vmatprep.subr.mxu0 0.0
    %2218 = vmatpush1.msra.mxu0 0.0
    %2219 = vmatprep.subr.mxu0 0.0
    %2220 = vmatpush1.msra.mxu0 0.0
    %2221 = vmatprep.subr.mxu0 0.0
    %2222 = vmatpush1.msra.mxu0 0.0
    %2223 = vmatprep.subr.mxu0 0.0
    %2224 = vmatpush1.msra.mxu0 0.0
    %2225 = vmatprep.subr.mxu0 0.0
    %2226 = vmatpush1.msra.mxu0 0.0
    %2227 = vmatprep.subr.mxu0 0.0
    %2228 = vmatpush1.msra.mxu0 0.0
    %2229 = vmatprep.subr.mxu0 0.0
    %2230 = vmatpush1.msra.mxu0 0.0
    %2231 = vmatprep.subr.mxu0 0.0
    %2232 = vmatpush1.msra.mxu0 0.0
    %2233 = vmatprep.subr.mxu0 0.0
    %2234 = vmatpush1.msra.mxu0 0.0
    %2235 = vmatprep.subr.mxu0 0.0
    %2236 = vmatpush1.msra.mxu0 0.0
    %2237 = vmatprep.mubr.f32.mxu0 0.0
    %2238 = vmatmul.mubr.f32.gmra.mrb[0].mxu0 %v2171
    %v2239 = vpop.f32.mrb[0].mxu0
    %v2240 = vadd.f32 0.0, %v2239
    %v2241 = vpop.f32.mrb[0].mxu0
    %2242 = vdwg.mxu0
    %s2243 = scalar_lea.vmem %s13, 32
    %v2244 = vld [vmem:[%s2243] sm:$0xff]
    %v2245 = vld [vmem:[%s2243 + $0x8] sm:$0xff]
    %v2247 = vsel %vm550, %v2167, 0
    %v2250 = vsel %vm550, %v2240, 0
    %2252 = vmatprep.subr.mxu0 0.0
    %2253 = vmatpush1.msra.mxu0 %v2244
    %2254 = vmatprep.subr.mxu0 0.0
    %2255 = vmatpush1.msra.mxu0 %v2245
    %2256 = vmatprep.subr.mxu0 0.0
    %2257 = vmatpush1.msra.mxu0 0.0
    %2258 = vmatprep.subr.mxu0 0.0
    %2259 = vmatpush1.msra.mxu0 0.0
    %2260 = vmatprep.subr.mxu0 0.0
    %2261 = vmatpush1.msra.mxu0 0.0
    %2262 = vmatprep.subr.mxu0 0.0
    %2263 = vmatpush1.msra.mxu0 0.0
    %2264 = vmatprep.subr.mxu0 0.0
    %2265 = vmatpush1.msra.mxu0 0.0
    %2266 = vmatprep.subr.mxu0 0.0
    %2267 = vmatpush1.msra.mxu0 0.0
    %2268 = vmatprep.subr.mxu0 0.0
    %2269 = vmatpush1.msra.mxu0 0.0
    %2270 = vmatprep.subr.mxu0 0.0
    %2271 = vmatpush1.msra.mxu0 0.0
    %2272 = vmatprep.subr.mxu0 0.0
    %2273 = vmatpush1.msra.mxu0 0.0
    %2274 = vmatprep.subr.mxu0 0.0
    %2275 = vmatpush1.msra.mxu0 0.0
    %2276 = vmatprep.subr.mxu0 0.0
    %2277 = vmatpush1.msra.mxu0 0.0
    %2278 = vmatprep.subr.mxu0 0.0
    %2279 = vmatpush1.msra.mxu0 0.0
    %2280 = vmatprep.subr.mxu0 0.0
    %2281 = vmatpush1.msra.mxu0 0.0
    %2282 = vmatprep.subr.mxu0 0.0
    %2283 = vmatpush1.msra.mxu0 0.0
    %2284 = vmatprep.subr.mxu0 0.0
    %2285 = vmatpush1.msra.mxu0 0.0
    %2286 = vmatprep.subr.mxu0 0.0
    %2287 = vmatpush1.msra.mxu0 0.0
    %2288 = vmatprep.subr.mxu0 0.0
    %2289 = vmatpush1.msra.mxu0 0.0
    %2290 = vmatprep.subr.mxu0 0.0
    %2291 = vmatpush1.msra.mxu0 0.0
    %2292 = vmatprep.subr.mxu0 0.0
    %2293 = vmatpush1.msra.mxu0 0.0
    %2294 = vmatprep.subr.mxu0 0.0
    %2295 = vmatpush1.msra.mxu0 0.0
    %2296 = vmatprep.subr.mxu0 0.0
    %2297 = vmatpush1.msra.mxu0 0.0
    %2298 = vmatprep.subr.mxu0 0.0
    %2299 = vmatpush1.msra.mxu0 0.0
    %2300 = vmatprep.subr.mxu0 0.0
    %2301 = vmatpush1.msra.mxu0 0.0
    %2302 = vmatprep.subr.mxu0 0.0
    %2303 = vmatpush1.msra.mxu0 0.0
    %2304 = vmatprep.subr.mxu0 0.0
    %2305 = vmatpush1.msra.mxu0 0.0
    %2306 = vmatprep.subr.mxu0 0.0
    %2307 = vmatpush1.msra.mxu0 0.0
    %2308 = vmatprep.subr.mxu0 0.0
    %2309 = vmatpush1.msra.mxu0 0.0
    %2310 = vmatprep.subr.mxu0 0.0
    %2311 = vmatpush1.msra.mxu0 0.0
    %2312 = vmatprep.subr.mxu0 0.0
    %2313 = vmatpush1.msra.mxu0 0.0
    %2314 = vmatprep.subr.mxu0 0.0
    %2315 = vmatpush1.msra.mxu0 0.0
    %2316 = vmatprep.mubr.f32.mxu0 0.0
    %2317 = vmatmul.mubr.f32.gmra.mrb[0].mxu0 %v2247
    %v2318 = vpop.f32.mrb[0].mxu0
    %v2319 = vadd.f32 0.0, %v2318
    %v2320 = vpop.f32.mrb[0].mxu0
    %2321 = vmatprep.mubr.f32.mxu0 0.0
    %2322 = vmatmul.mubr.f32.gmra.mrb[0].mxu0 %v2250
    %v2323 = vpop.f32.mrb[0].mxu0
    %v2324 = vadd.f32 0.0, %v2323
    %v2325 = vpop.f32.mrb[0].mxu0
    %2326 = vdwg.mxu0
    %v2327 = vadd.f32 %v1635, %v2319
    %v2328 = vadd.f32 %v1640, %v2324
    %s2329 = scalar_lea.vmem %s7, 192
    %v2330 = vld [vmem:[%s2329] sm:$0xff]
    %v2331 = vld [vmem:[%s2329 + $0x8] sm:$0xff]
    %v2332 = vld [vmem:[%s2329 + $0x10] sm:$0xff]
    %v2333 = vld [vmem:[%s2329 + $0x18] sm:$0xff]
    %v2334 = vld [vmem:[%s2329 + $0x20] sm:$0xff]
    %v2335 = vld [vmem:[%s2329 + $0x28] sm:$0xff]
    %v2336 = vld [vmem:[%s2329 + $0x30] sm:$0xff]
    %v2337 = vld [vmem:[%s2329 + $0x38] sm:$0xff]
    %s2338 = scalar_lea.vmem %s8, 3
    %v2339 = vld [vmem:[%s2338] sm:$0x1]
    %v2341 = vlaneseq
    %v2342 = vshrl.u32 %v2341, 7
    %v2343 = vsub.s32 0, %v2342
    %v2344 = vrot.slane %v2339, %v2343
    %2346 = vmatprep.subr.mxu0 0.0
    %2347 = vmatpush1.msra.mxu0 %v2330
    %2348 = vmatprep.subr.mxu0 0.0
    %2349 = vmatpush1.msra.mxu0 %v2331
    %2350 = vmatprep.subr.mxu0 0.0
    %2351 = vmatpush1.msra.mxu0 %v2332
    %2352 = vmatprep.subr.mxu0 0.0
    %2353 = vmatpush1.msra.mxu0 %v2333
    %2354 = vmatprep.subr.mxu0 0.0
    %2355 = vmatpush1.msra.mxu0 %v2334
    %2356 = vmatprep.subr.mxu0 0.0
    %2357 = vmatpush1.msra.mxu0 %v2335
    %2358 = vmatprep.subr.mxu0 0.0
    %2359 = vmatpush1.msra.mxu0 %v2336
    %2360 = vmatprep.subr.mxu0 0.0
    %2361 = vmatpush1.msra.mxu0 %v2337
    %2362 = vmatprep.subr.mxu0 0.0
    %2363 = vmatpush1.msra.mxu0 0.0
    %2364 = vmatprep.subr.mxu0 0.0
    %2365 = vmatpush1.msra.mxu0 0.0
    %2366 = vmatprep.subr.mxu0 0.0
    %2367 = vmatpush1.msra.mxu0 0.0
    %2368 = vmatprep.subr.mxu0 0.0
    %2369 = vmatpush1.msra.mxu0 0.0
    %2370 = vmatprep.subr.mxu0 0.0
    %2371 = vmatpush1.msra.mxu0 0.0
    %2372 = vmatprep.subr.mxu0 0.0
    %2373 = vmatpush1.msra.mxu0 0.0
    %2374 = vmatprep.subr.mxu0 0.0
    %2375 = vmatpush1.msra.mxu0 0.0
    %2376 = vmatprep.subr.mxu0 0.0
    %2377 = vmatpush1.msra.mxu0 0.0
    %2378 = vmatprep.subr.mxu0 0.0
    %2379 = vmatpush1.msra.mxu0 0.0
    %2380 = vmatprep.subr.mxu0 0.0
    %2381 = vmatpush1.msra.mxu0 0.0
    %2382 = vmatprep.subr.mxu0 0.0
    %2383 = vmatpush1.msra.mxu0 0.0
    %2384 = vmatprep.subr.mxu0 0.0
    %2385 = vmatpush1.msra.mxu0 0.0
    %2386 = vmatprep.subr.mxu0 0.0
    %2387 = vmatpush1.msra.mxu0 0.0
    %2388 = vmatprep.subr.mxu0 0.0
    %2389 = vmatpush1.msra.mxu0 0.0
    %2390 = vmatprep.subr.mxu0 0.0
    %2391 = vmatpush1.msra.mxu0 0.0
    %2392 = vmatprep.subr.mxu0 0.0
    %2393 = vmatpush1.msra.mxu0 0.0
    %2394 = vmatprep.subr.mxu0 0.0
    %2395 = vmatpush1.msra.mxu0 0.0
    %2396 = vmatprep.subr.mxu0 0.0
    %2397 = vmatpush1.msra.mxu0 0.0
    %2398 = vmatprep.subr.mxu0 0.0
    %2399 = vmatpush1.msra.mxu0 0.0
    %2400 = vmatprep.subr.mxu0 0.0
    %2401 = vmatpush1.msra.mxu0 0.0
    %2402 = vmatprep.subr.mxu0 0.0
    %2403 = vmatpush1.msra.mxu0 0.0
    %2404 = vmatprep.subr.mxu0 0.0
    %2405 = vmatpush1.msra.mxu0 0.0
    %2406 = vmatprep.subr.mxu0 0.0
    %2407 = vmatpush1.msra.mxu0 0.0
    %2408 = vmatprep.subr.mxu0 0.0
    %2409 = vmatpush1.msra.mxu0 0.0
    %2410 = vmatprep.mubr.f32.mxu0 0.0
    %2411 = vmatmul.mubr.f32.gmra.mrb[0].mxu0 %v290
    %v2412 = vpop.f32.mrb[0].mxu0
    %v2413 = vadd.f32 %v2344, %v2412
    %v2414 = vpop.f32.mrb[0].mxu0
    %2415 = vmatprep.mubr.f32.mxu0 0.0
    %2416 = vmatmul.mubr.f32.gmra.mrb[0].mxu0 %v293
    %v2417 = vpop.f32.mrb[0].mxu0
    %v2418 = vadd.f32 %v2344, %v2417
    %v2419 = vpop.f32.mrb[0].mxu0
    %2420 = vdwg.mxu0
    %s2421 = scalar_lea.vmem %s9, 192
    %v2422 = vld [vmem:[%s2421] sm:$0xff]
    %v2423 = vld [vmem:[%s2421 + $0x8] sm:$0xff]
    %v2424 = vld [vmem:[%s2421 + $0x10] sm:$0xff]
    %v2425 = vld [vmem:[%s2421 + $0x18] sm:$0xff]
    %v2426 = vld [vmem:[%s2421 + $0x20] sm:$0xff]
    %v2427 = vld [vmem:[%s2421 + $0x28] sm:$0xff]
    %v2428 = vld [vmem:[%s2421 + $0x30] sm:$0xff]
    %v2429 = vld [vmem:[%s2421 + $0x38] sm:$0xff]
    %s2430 = scalar_lea.vmem %s10, 3
    %v2431 = vld [vmem:[%s2430] sm:$0x1]
    %v2433 = vlaneseq
    %v2434 = vshrl.u32 %v2433, 7
    %v2435 = vsub.s32 0, %v2434
    %v2436 = vrot.slane %v2431, %v2435
    %2438 = vmatprep.subr.mxu0 0.0
    %2439 = vmatpush1.msra.mxu0 %v2422
    %2440 = vmatprep.subr.mxu0 0.0
    %2441 = vmatpush1.msra.mxu0 %v2423
    %2442 = vmatprep.subr.mxu0 0.0
    %2443 = vmatpush1.msra.mxu0 %v2424
    %2444 = vmatprep.subr.mxu0 0.0
    %2445 = vmatpush1.msra.mxu0 %v2425
    %2446 = vmatprep.subr.mxu0 0.0
    %2447 = vmatpush1.msra.mxu0 %v2426
    %2448 = vmatprep.subr.mxu0 0.0
    %2449 = vmatpush1.msra.mxu0 %v2427
    %2450 = vmatprep.subr.mxu0 0.0
    %2451 = vmatpush1.msra.mxu0 %v2428
    %2452 = vmatprep.subr.mxu0 0.0
    %2453 = vmatpush1.msra.mxu0 %v2429
    %2454 = vmatprep.subr.mxu0 0.0
    %2455 = vmatpush1.msra.mxu0 0.0
    %2456 = vmatprep.subr.mxu0 0.0
    %2457 = vmatpush1.msra.mxu0 0.0
    %2458 = vmatprep.subr.mxu0 0.0
    %2459 = vmatpush1.msra.mxu0 0.0
    %2460 = vmatprep.subr.mxu0 0.0
    %2461 = vmatpush1.msra.mxu0 0.0
    %2462 = vmatprep.subr.mxu0 0.0
    %2463 = vmatpush1.msra.mxu0 0.0
    %2464 = vmatprep.subr.mxu0 0.0
    %2465 = vmatpush1.msra.mxu0 0.0
    %2466 = vmatprep.subr.mxu0 0.0
    %2467 = vmatpush1.msra.mxu0 0.0
    %2468 = vmatprep.subr.mxu0 0.0
    %2469 = vmatpush1.msra.mxu0 0.0
    %2470 = vmatprep.subr.mxu0 0.0
    %2471 = vmatpush1.msra.mxu0 0.0
    %2472 = vmatprep.subr.mxu0 0.0
    %2473 = vmatpush1.msra.mxu0 0.0
    %2474 = vmatprep.subr.mxu0 0.0
    %2475 = vmatpush1.msra.mxu0 0.0
    %2476 = vmatprep.subr.mxu0 0.0
    %2477 = vmatpush1.msra.mxu0 0.0
    %2478 = vmatprep.subr.mxu0 0.0
    %2479 = vmatpush1.msra.mxu0 0.0
    %2480 = vmatprep.subr.mxu0 0.0
    %2481 = vmatpush1.msra.mxu0 0.0
    %2482 = vmatprep.subr.mxu0 0.0
    %2483 = vmatpush1.msra.mxu0 0.0
    %2484 = vmatprep.subr.mxu0 0.0
    %2485 = vmatpush1.msra.mxu0 0.0
    %2486 = vmatprep.subr.mxu0 0.0
    %2487 = vmatpush1.msra.mxu0 0.0
    %2488 = vmatprep.subr.mxu0 0.0
    %2489 = vmatpush1.msra.mxu0 0.0
    %2490 = vmatprep.subr.mxu0 0.0
    %2491 = vmatpush1.msra.mxu0 0.0
    %2492 = vmatprep.subr.mxu0 0.0
    %2493 = vmatpush1.msra.mxu0 0.0
    %2494 = vmatprep.subr.mxu0 0.0
    %2495 = vmatpush1.msra.mxu0 0.0
    %2496 = vmatprep.subr.mxu0 0.0
    %2497 = vmatpush1.msra.mxu0 0.0
    %2498 = vmatprep.subr.mxu0 0.0
    %2499 = vmatpush1.msra.mxu0 0.0
    %2500 = vmatprep.subr.mxu0 0.0
    %2501 = vmatpush1.msra.mxu0 0.0
    %2502 = vmatprep.mubr.f32.mxu0 0.0
    %2503 = vmatmul.mubr.f32.gmra.mrb[0].mxu0 %v290
    %v2504 = vpop.f32.mrb[0].mxu0
    %v2505 = vadd.f32 %v2436, %v2504
    %v2506 = vpop.f32.mrb[0].mxu0
    %2507 = vmatprep.mubr.f32.mxu0 0.0
    %2508 = vmatmul.mubr.f32.gmra.mrb[0].mxu0 %v293
    %v2509 = vpop.f32.mrb[0].mxu0
    %v2510 = vadd.f32 %v2436, %v2509
    %v2511 = vpop.f32.mrb[0].mxu0
    %2512 = vdwg.mxu0
    %s2513 = scalar_lea.vmem %s11, 192
    %v2514 = vld [vmem:[%s2513] sm:$0xff]
    %v2515 = vld [vmem:[%s2513 + $0x8] sm:$0xff]
    %v2516 = vld [vmem:[%s2513 + $0x10] sm:$0xff]
    %v2517 = vld [vmem:[%s2513 + $0x18] sm:$0xff]
    %v2518 = vld [vmem:[%s2513 + $0x20] sm:$0xff]
    %v2519 = vld [vmem:[%s2513 + $0x28] sm:$0xff]
    %v2520 = vld [vmem:[%s2513 + $0x30] sm:$0xff]
    %v2521 = vld [vmem:[%s2513 + $0x38] sm:$0xff]
    %s2522 = scalar_lea.vmem %s12, 3
    %v2523 = vld [vmem:[%s2522] sm:$0x1]
    %v2525 = vlaneseq
    %v2526 = vshrl.u32 %v2525, 7
    %v2527 = vsub.s32 0, %v2526
    %v2528 = vrot.slane %v2523, %v2527
    %2530 = vmatprep.subr.mxu0 0.0
    %2531 = vmatpush1.msra.mxu0 %v2514
    %2532 = vmatprep.subr.mxu0 0.0
    %2533 = vmatpush1.msra.mxu0 %v2515
    %2534 = vmatprep.subr.mxu0 0.0
    %2535 = vmatpush1.msra.mxu0 %v2516
    %2536 = vmatprep.subr.mxu0 0.0
    %2537 = vmatpush1.msra.mxu0 %v2517
    %2538 = vmatprep.subr.mxu0 0.0
    %2539 = vmatpush1.msra.mxu0 %v2518
    %2540 = vmatprep.subr.mxu0 0.0
    %2541 = vmatpush1.msra.mxu0 %v2519
    %2542 = vmatprep.subr.mxu0 0.0
    %2543 = vmatpush1.msra.mxu0 %v2520
    %2544 = vmatprep.subr.mxu0 0.0
    %2545 = vmatpush1.msra.mxu0 %v2521
    %2546 = vmatprep.subr.mxu0 0.0
    %2547 = vmatpush1.msra.mxu0 0.0
    %2548 = vmatprep.subr.mxu0 0.0
    %2549 = vmatpush1.msra.mxu0 0.0
    %2550 = vmatprep.subr.mxu0 0.0
    %2551 = vmatpush1.msra.mxu0 0.0
    %2552 = vmatprep.subr.mxu0 0.0
    %2553 = vmatpush1.msra.mxu0 0.0
    %2554 = vmatprep.subr.mxu0 0.0
    %2555 = vmatpush1.msra.mxu0 0.0
    %2556 = vmatprep.subr.mxu0 0.0
    %2557 = vmatpush1.msra.mxu0 0.0
    %2558 = vmatprep.subr.mxu0 0.0
    %2559 = vmatpush1.msra.mxu0 0.0
    %2560 = vmatprep.subr.mxu0 0.0
    %2561 = vmatpush1.msra.mxu0 0.0
    %2562 = vmatprep.subr.mxu0 0.0
    %2563 = vmatpush1.msra.mxu0 0.0
    %2564 = vmatprep.subr.mxu0 0.0
    %2565 = vmatpush1.msra.mxu0 0.0
    %2566 = vmatprep.subr.mxu0 0.0
    %2567 = vmatpush1.msra.mxu0 0.0
    %2568 = vmatprep.subr.mxu0 0.0
    %2569 = vmatpush1.msra.mxu0 0.0
    %2570 = vmatprep.subr.mxu0 0.0
    %2571 = vmatpush1.msra.mxu0 0.0
    %2572 = vmatprep.subr.mxu0 0.0
    %2573 = vmatpush1.msra.mxu0 0.0
    %2574 = vmatprep.subr.mxu0 0.0
    %2575 = vmatpush1.msra.mxu0 0.0
    %2576 = vmatprep.subr.mxu0 0.0
    %2577 = vmatpush1.msra.mxu0 0.0
    %2578 = vmatprep.subr.mxu0 0.0
    %2579 = vmatpush1.msra.mxu0 0.0
    %2580 = vmatprep.subr.mxu0 0.0
    %2581 = vmatpush1.msra.mxu0 0.0
    %2582 = vmatprep.subr.mxu0 0.0
    %2583 = vmatpush1.msra.mxu0 0.0
    %2584 = vmatprep.subr.mxu0 0.0
    %2585 = vmatpush1.msra.mxu0 0.0
    %2586 = vmatprep.subr.mxu0 0.0
    %2587 = vmatpush1.msra.mxu0 0.0
    %2588 = vmatprep.subr.mxu0 0.0
    %2589 = vmatpush1.msra.mxu0 0.0
    %2590 = vmatprep.subr.mxu0 0.0
    %2591 = vmatpush1.msra.mxu0 0.0
    %2592 = vmatprep.subr.mxu0 0.0
    %2593 = vmatpush1.msra.mxu0 0.0
    %2594 = vmatprep.mubr.f32.mxu0 0.0
    %2595 = vmatmul.mubr.f32.gmra.mrb[0].mxu0 %v290
    %v2596 = vpop.f32.mrb[0].mxu0
    %v2597 = vadd.f32 %v2528, %v2596
    %v2598 = vpop.f32.mrb[0].mxu0
    %2599 = vmatprep.mubr.f32.mxu0 0.0
    %2600 = vmatmul.mubr.f32.gmra.mrb[0].mxu0 %v293
    %v2601 = vpop.f32.mrb[0].mxu0
    %v2602 = vadd.f32 %v2528, %v2601
    %v2603 = vpop.f32.mrb[0].mxu0
    %2604 = vdwg.mxu0
    %v2606 = vsel %vm550, %v2413, 0
    %v2609 = vsel %vm550, %v2505, 0
    %2611 = vmatprep.subr.mxu0 0.0
    %2612 = vmatpush1.xpose.msra.mxu0 %v2609
    %2613 = vmatprep.subr.mxu0 0.0
    %2614 = vmatpush1.xpose.msra.mxu0 0.0
    %2615 = vmatprep.subr.mxu0 0.0
    %2616 = vmatpush1.xpose.msra.mxu0 0.0
    %2617 = vmatprep.subr.mxu0 0.0
    %2618 = vmatpush1.xpose.msra.mxu0 0.0
    %2619 = vmatprep.subr.mxu0 0.0
    %2620 = vmatpush1.xpose.msra.mxu0 0.0
    %2621 = vmatprep.subr.mxu0 0.0
    %2622 = vmatpush1.xpose.msra.mxu0 0.0
    %2623 = vmatprep.subr.mxu0 0.0
    %2624 = vmatpush1.xpose.msra.mxu0 0.0
    %2625 = vmatprep.subr.mxu0 0.0
    %2626 = vmatpush1.xpose.msra.mxu0 0.0
    %2627 = vmatprep.subr.mxu0 0.0
    %2628 = vmatpush1.xpose.msra.mxu0 0.0
    %2629 = vmatprep.subr.mxu0 0.0
    %2630 = vmatpush1.xpose.msra.mxu0 0.0
    %2631 = vmatprep.subr.mxu0 0.0
    %2632 = vmatpush1.xpose.msra.mxu0 0.0
    %2633 = vmatprep.subr.mxu0 0.0
    %2634 = vmatpush1.xpose.msra.mxu0 0.0
    %2635 = vmatprep.subr.mxu0 0.0
    %2636 = vmatpush1.xpose.msra.mxu0 0.0
    %2637 = vmatprep.subr.mxu0 0.0
    %2638 = vmatpush1.xpose.msra.mxu0 0.0
    %2639 = vmatprep.subr.mxu0 0.0
    %2640 = vmatpush1.xpose.msra.mxu0 0.0
    %2641 = vmatprep.subr.mxu0 0.0
    %2642 = vmatpush1.xpose.msra.mxu0 0.0
    %2643 = vmatprep.subr.mxu0 0.0
    %2644 = vmatpush1.xpose.msra.mxu0 0.0
    %2645 = vmatprep.subr.mxu0 0.0
    %2646 = vmatpush1.xpose.msra.mxu0 0.0
    %2647 = vmatprep.subr.mxu0 0.0
    %2648 = vmatpush1.xpose.msra.mxu0 0.0
    %2649 = vmatprep.subr.mxu0 0.0
    %2650 = vmatpush1.xpose.msra.mxu0 0.0
    %2651 = vmatprep.subr.mxu0 0.0
    %2652 = vmatpush1.xpose.msra.mxu0 0.0
    %2653 = vmatprep.subr.mxu0 0.0
    %2654 = vmatpush1.xpose.msra.mxu0 0.0
    %2655 = vmatprep.subr.mxu0 0.0
    %2656 = vmatpush1.xpose.msra.mxu0 0.0
    %2657 = vmatprep.subr.mxu0 0.0
    %2658 = vmatpush1.xpose.msra.mxu0 0.0
    %2659 = vmatprep.subr.mxu0 0.0
    %2660 = vmatpush1.xpose.msra.mxu0 0.0
    %2661 = vmatprep.subr.mxu0 0.0
    %2662 = vmatpush1.xpose.msra.mxu0 0.0
    %2663 = vmatprep.subr.mxu0 0.0
    %2664 = vmatpush1.xpose.msra.mxu0 0.0
    %2665 = vmatprep.subr.mxu0 0.0
    %2666 = vmatpush1.xpose.msra.mxu0 0.0
    %2667 = vmatprep.subr.mxu0 0.0
    %2668 = vmatpush1.xpose.msra.mxu0 0.0
    %2669 = vmatprep.subr.mxu0 0.0
    %2670 = vmatpush1.xpose.msra.mxu0 0.0
    %2671 = vmatprep.subr.mxu0 0.0
    %2672 = vmatpush1.xpose.msra.mxu0 0.0
    %2673 = vmatprep.subr.mxu0 0.0
    %2674 = vmatpush1.xpose.msra.mxu0 0.0
    %2675 = vmatprep.mubr.f32.mxu0 0.0
    %2676 = vmatmul.mubr.f32.gmra.mrb[0].mxu0 %v2606
    %v2677 = vpop.f32.mrb[0].mxu0
    %v2678 = vadd.f32 0.0, %v2677
    %v2679 = vpop.f32.mrb[0].mxu0
    %2680 = vdwg.mxu0
    %v2682 = vsel %vm550, %v2418, 0
    %v2685 = vsel %vm550, %v2510, 0
    %2687 = vmatprep.subr.mxu0 0.0
    %2688 = vmatpush1.xpose.msra.mxu0 %v2685
    %2689 = vmatprep.subr.mxu0 0.0
    %2690 = vmatpush1.xpose.msra.mxu0 0.0
    %2691 = vmatprep.subr.mxu0 0.0
    %2692 = vmatpush1.xpose.msra.mxu0 0.0
    %2693 = vmatprep.subr.mxu0 0.0
    %2694 = vmatpush1.xpose.msra.mxu0 0.0
    %2695 = vmatprep.subr.mxu0 0.0
    %2696 = vmatpush1.xpose.msra.mxu0 0.0
    %2697 = vmatprep.subr.mxu0 0.0
    %2698 = vmatpush1.xpose.msra.mxu0 0.0
    %2699 = vmatprep.subr.mxu0 0.0
    %2700 = vmatpush1.xpose.msra.mxu0 0.0
    %2701 = vmatprep.subr.mxu0 0.0
    %2702 = vmatpush1.xpose.msra.mxu0 0.0
    %2703 = vmatprep.subr.mxu0 0.0
    %2704 = vmatpush1.xpose.msra.mxu0 0.0
    %2705 = vmatprep.subr.mxu0 0.0
    %2706 = vmatpush1.xpose.msra.mxu0 0.0
    %2707 = vmatprep.subr.mxu0 0.0
    %2708 = vmatpush1.xpose.msra.mxu0 0.0
    %2709 = vmatprep.subr.mxu0 0.0
    %2710 = vmatpush1.xpose.msra.mxu0 0.0
    %2711 = vmatprep.subr.mxu0 0.0
    %2712 = vmatpush1.xpose.msra.mxu0 0.0
    %2713 = vmatprep.subr.mxu0 0.0
    %2714 = vmatpush1.xpose.msra.mxu0 0.0
    %2715 = vmatprep.subr.mxu0 0.0
    %2716 = vmatpush1.xpose.msra.mxu0 0.0
    %2717 = vmatprep.subr.mxu0 0.0
    %2718 = vmatpush1.xpose.msra.mxu0 0.0
    %2719 = vmatprep.subr.mxu0 0.0
    %2720 = vmatpush1.xpose.msra.mxu0 0.0
    %2721 = vmatprep.subr.mxu0 0.0
    %2722 = vmatpush1.xpose.msra.mxu0 0.0
    %2723 = vmatprep.subr.mxu0 0.0
    %2724 = vmatpush1.xpose.msra.mxu0 0.0
    %2725 = vmatprep.subr.mxu0 0.0
    %2726 = vmatpush1.xpose.msra.mxu0 0.0
    %2727 = vmatprep.subr.mxu0 0.0
    %2728 = vmatpush1.xpose.msra.mxu0 0.0
    %2729 = vmatprep.subr.mxu0 0.0
    %2730 = vmatpush1.xpose.msra.mxu0 0.0
    %2731 = vmatprep.subr.mxu0 0.0
    %2732 = vmatpush1.xpose.msra.mxu0 0.0
    %2733 = vmatprep.subr.mxu0 0.0
    %2734 = vmatpush1.xpose.msra.mxu0 0.0
    %2735 = vmatprep.subr.mxu0 0.0
    %2736 = vmatpush1.xpose.msra.mxu0 0.0
    %2737 = vmatprep.subr.mxu0 0.0
    %2738 = vmatpush1.xpose.msra.mxu0 0.0
    %2739 = vmatprep.subr.mxu0 0.0
    %2740 = vmatpush1.xpose.msra.mxu0 0.0
    %2741 = vmatprep.subr.mxu0 0.0
    %2742 = vmatpush1.xpose.msra.mxu0 0.0
    %2743 = vmatprep.subr.mxu0 0.0
    %2744 = vmatpush1.xpose.msra.mxu0 0.0
    %2745 = vmatprep.subr.mxu0 0.0
    %2746 = vmatpush1.xpose.msra.mxu0 0.0
    %2747 = vmatprep.subr.mxu0 0.0
    %2748 = vmatpush1.xpose.msra.mxu0 0.0
    %2749 = vmatprep.subr.mxu0 0.0
    %2750 = vmatpush1.xpose.msra.mxu0 0.0
    %2751 = vmatprep.mubr.f32.mxu0 0.0
    %2752 = vmatmul.mubr.f32.gmra.mrb[0].mxu0 %v2682
    %v2753 = vpop.f32.mrb[0].mxu0
    %v2754 = vadd.f32 0.0, %v2753
    %v2755 = vpop.f32.mrb[0].mxu0
    %2756 = vdwg.mxu0
    %v2757 = vmul.f32 %v2678, 0.25
    %v2758 = vmul.f32 %v2754, 0.25
    %v2759 = vadd.f32 %v2757, %v229
    %v2760 = vadd.f32 %v2758, %v229
    %v2761 = vsel %vm707, %v2759, -inf
    %2762 = vmax.xlane.f32.xlu0 %v2761
    %v2763 = vpop.xlane.xlu0 %2762
    %v2764 = vsel %vm707, %v2760, -inf
    %2765 = vmax.xlane.f32.xlu0 %v2764
    %v2766 = vpop.xlane.xlu0 %2765
    %v2767 = vsub.f32 %v2759, %v2763
    %v2768 = vsub.f32 %v2760, %v2766
    %v2769 = vmul.f32 %v2767, 1.442695
    %v2770 = vpow.pop %v2769
    %v2771 = vmul.f32 %v2768, 1.442695
    %v2772 = vpow.pop %v2771
    %v2773 = vsel %vm707, %v2770, 0.0
    %2774 = vadd.xlane.f32.xlu0 %v2773
    %v2775 = vpop.xlane.xlu0 %2774
    %v2776 = vsel %vm707, %v2772, 0.0
    %2777 = vadd.xlane.f32.xlu0 %v2776
    %v2778 = vpop.xlane.xlu0 %2777
    %v2779 = vrcp.pop %v2775
    %v2780 = vmul.f32 %v2770, %v2779
    %v2781 = vrcp.pop %v2778
    %v2782 = vmul.f32 %v2772, %v2781
    %v2784 = vsel %vm707, %v2780, 0
    %2786 = vmatprep.subr.mxu0 0.0
    %2787 = vmatpush1.msra.mxu0 %v2597
    %2788 = vmatprep.subr.mxu0 0.0
    %2789 = vmatpush1.msra.mxu0 0.0
    %2790 = vmatprep.subr.mxu0 0.0
    %2791 = vmatpush1.msra.mxu0 0.0
    %2792 = vmatprep.subr.mxu0 0.0
    %2793 = vmatpush1.msra.mxu0 0.0
    %2794 = vmatprep.subr.mxu0 0.0
    %2795 = vmatpush1.msra.mxu0 0.0
    %2796 = vmatprep.subr.mxu0 0.0
    %2797 = vmatpush1.msra.mxu0 0.0
    %2798 = vmatprep.subr.mxu0 0.0
    %2799 = vmatpush1.msra.mxu0 0.0
    %2800 = vmatprep.subr.mxu0 0.0
    %2801 = vmatpush1.msra.mxu0 0.0
    %2802 = vmatprep.subr.mxu0 0.0
    %2803 = vmatpush1.msra.mxu0 0.0
    %2804 = vmatprep.subr.mxu0 0.0
    %2805 = vmatpush1.msra.mxu0 0.0
    %2806 = vmatprep.subr.mxu0 0.0
    %2807 = vmatpush1.msra.mxu0 0.0
    %2808 = vmatprep.subr.mxu0 0.0
    %2809 = vmatpush1.msra.mxu0 0.0
    %2810 = vmatprep.subr.mxu0 0.0
    %2811 = vmatpush1.msra.mxu0 0.0
    %2812 = vmatprep.subr.mxu0 0.0
    %2813 = vmatpush1.msra.mxu0 0.0
    %2814 = vmatprep.subr.mxu0 0.0
    %2815 = vmatpush1.msra.mxu0 0.0
    %2816 = vmatprep.subr.mxu0 0.0
    %2817 = vmatpush1.msra.mxu0 0.0
    %2818 = vmatprep.subr.mxu0 0.0
    %2819 = vmatpush1.msra.mxu0 0.0
    %2820 = vmatprep.subr.mxu0 0.0
    %2821 = vmatpush1.msra.mxu0 0.0
    %2822 = vmatprep.subr.mxu0 0.0
    %2823 = vmatpush1.msra.mxu0 0.0
    %2824 = vmatprep.subr.mxu0 0.0
    %2825 = vmatpush1.msra.mxu0 0.0
    %2826 = vmatprep.subr.mxu0 0.0
    %2827 = vmatpush1.msra.mxu0 0.0
    %2828 = vmatprep.subr.mxu0 0.0
    %2829 = vmatpush1.msra.mxu0 0.0
    %2830 = vmatprep.subr.mxu0 0.0
    %2831 = vmatpush1.msra.mxu0 0.0
    %2832 = vmatprep.subr.mxu0 0.0
    %2833 = vmatpush1.msra.mxu0 0.0
    %2834 = vmatprep.subr.mxu0 0.0
    %2835 = vmatpush1.msra.mxu0 0.0
    %2836 = vmatprep.subr.mxu0 0.0
    %2837 = vmatpush1.msra.mxu0 0.0
    %2838 = vmatprep.subr.mxu0 0.0
    %2839 = vmatpush1.msra.mxu0 0.0
    %2840 = vmatprep.subr.mxu0 0.0
    %2841 = vmatpush1.msra.mxu0 0.0
    %2842 = vmatprep.subr.mxu0 0.0
    %2843 = vmatpush1.msra.mxu0 0.0
    %2844 = vmatprep.subr.mxu0 0.0
    %2845 = vmatpush1.msra.mxu0 0.0
    %2846 = vmatprep.subr.mxu0 0.0
    %2847 = vmatpush1.msra.mxu0 0.0
    %2848 = vmatprep.subr.mxu0 0.0
    %2849 = vmatpush1.msra.mxu0 0.0
    %2850 = vmatprep.mubr.f32.mxu0 0.0
    %2851 = vmatmul.mubr.f32.gmra.mrb[0].mxu0 %v2784
    %v2852 = vpop.f32.mrb[0].mxu0
    %v2853 = vadd.f32 0.0, %v2852
    %v2854 = vpop.f32.mrb[0].mxu0
    %2855 = vdwg.mxu0
    %v2857 = vsel %vm707, %v2782, 0
    %2859 = vmatprep.subr.mxu0 0.0
    %2860 = vmatpush1.msra.mxu0 %v2602
    %2861 = vmatprep.subr.mxu0 0.0
    %2862 = vmatpush1.msra.mxu0 0.0
    %2863 = vmatprep.subr.mxu0 0.0
    %2864 = vmatpush1.msra.mxu0 0.0
    %2865 = vmatprep.subr.mxu0 0.0
    %2866 = vmatpush1.msra.mxu0 0.0
    %2867 = vmatprep.subr.mxu0 0.0
    %2868 = vmatpush1.msra.mxu0 0.0
    %2869 = vmatprep.subr.mxu0 0.0
    %2870 = vmatpush1.msra.mxu0 0.0
    %2871 = vmatprep.subr.mxu0 0.0
    %2872 = vmatpush1.msra.mxu0 0.0
    %2873 = vmatprep.subr.mxu0 0.0
    %2874 = vmatpush1.msra.mxu0 0.0
    %2875 = vmatprep.subr.mxu0 0.0
    %2876 = vmatpush1.msra.mxu0 0.0
    %2877 = vmatprep.subr.mxu0 0.0
    %2878 = vmatpush1.msra.mxu0 0.0
    %2879 = vmatprep.subr.mxu0 0.0
    %2880 = vmatpush1.msra.mxu0 0.0
    %2881 = vmatprep.subr.mxu0 0.0
    %2882 = vmatpush1.msra.mxu0 0.0
    %2883 = vmatprep.subr.mxu0 0.0
    %2884 = vmatpush1.msra.mxu0 0.0
    %2885 = vmatprep.subr.mxu0 0.0
    %2886 = vmatpush1.msra.mxu0 0.0
    %2887 = vmatprep.subr.mxu0 0.0
    %2888 = vmatpush1.msra.mxu0 0.0
    %2889 = vmatprep.subr.mxu0 0.0
    %2890 = vmatpush1.msra.mxu0 0.0
    %2891 = vmatprep.subr.mxu0 0.0
    %2892 = vmatpush1.msra.mxu0 0.0
    %2893 = vmatprep.subr.mxu0 0.0
    %2894 = vmatpush1.msra.mxu0 0.0
    %2895 = vmatprep.subr.mxu0 0.0
    %2896 = vmatpush1.msra.mxu0 0.0
    %2897 = vmatprep.subr.mxu0 0.0
    %2898 = vmatpush1.msra.mxu0 0.0
    %2899 = vmatprep.subr.mxu0 0.0
    %2900 = vmatpush1.msra.mxu0 0.0
    %2901 = vmatprep.subr.mxu0 0.0
    %2902 = vmatpush1.msra.mxu0 0.0
    %2903 = vmatprep.subr.mxu0 0.0
    %2904 = vmatpush1.msra.mxu0 0.0
    %2905 = vmatprep.subr.mxu0 0.0
    %2906 = vmatpush1.msra.mxu0 0.0
    %2907 = vmatprep.subr.mxu0 0.0
    %2908 = vmatpush1.msra.mxu0 0.0
    %2909 = vmatprep.subr.mxu0 0.0
    %2910 = vmatpush1.msra.mxu0 0.0
    %2911 = vmatprep.subr.mxu0 0.0
    %2912 = vmatpush1.msra.mxu0 0.0
    %2913 = vmatprep.subr.mxu0 0.0
    %2914 = vmatpush1.msra.mxu0 0.0
    %2915 = vmatprep.subr.mxu0 0.0
    %2916 = vmatpush1.msra.mxu0 0.0
    %2917 = vmatprep.subr.mxu0 0.0
    %2918 = vmatpush1.msra.mxu0 0.0
    %2919 = vmatprep.subr.mxu0 0.0
    %2920 = vmatpush1.msra.mxu0 0.0
    %2921 = vmatprep.subr.mxu0 0.0
    %2922 = vmatpush1.msra.mxu0 0.0
    %2923 = vmatprep.mubr.f32.mxu0 0.0
    %2924 = vmatmul.mubr.f32.gmra.mrb[0].mxu0 %v2857
    %v2925 = vpop.f32.mrb[0].mxu0
    %v2926 = vadd.f32 0.0, %v2925
    %v2927 = vpop.f32.mrb[0].mxu0
    %2928 = vdwg.mxu0
    %s2929 = scalar_lea.vmem %s13, 48
    %v2930 = vld [vmem:[%s2929] sm:$0xff]
    %v2931 = vld [vmem:[%s2929 + $0x8] sm:$0xff]
    %v2933 = vsel %vm550, %v2853, 0
    %v2936 = vsel %vm550, %v2926, 0
    %2938 = vmatprep.subr.mxu0 0.0
    %2939 = vmatpush1.msra.mxu0 %v2930
    %2940 = vmatprep.subr.mxu0 0.0
    %2941 = vmatpush1.msra.mxu0 %v2931
    %2942 = vmatprep.subr.mxu0 0.0
    %2943 = vmatpush1.msra.mxu0 0.0
    %2944 = vmatprep.subr.mxu0 0.0
    %2945 = vmatpush1.msra.mxu0 0.0
    %2946 = vmatprep.subr.mxu0 0.0
    %2947 = vmatpush1.msra.mxu0 0.0
    %2948 = vmatprep.subr.mxu0 0.0
    %2949 = vmatpush1.msra.mxu0 0.0
    %2950 = vmatprep.subr.mxu0 0.0
    %2951 = vmatpush1.msra.mxu0 0.0
    %2952 = vmatprep.subr.mxu0 0.0
    %2953 = vmatpush1.msra.mxu0 0.0
    %2954 = vmatprep.subr.mxu0 0.0
    %2955 = vmatpush1.msra.mxu0 0.0
    %2956 = vmatprep.subr.mxu0 0.0
    %2957 = vmatpush1.msra.mxu0 0.0
    %2958 = vmatprep.subr.mxu0 0.0
    %2959 = vmatpush1.msra.mxu0 0.0
    %2960 = vmatprep.subr.mxu0 0.0
    %2961 = vmatpush1.msra.mxu0 0.0
    %2962 = vmatprep.subr.mxu0 0.0
    %2963 = vmatpush1.msra.mxu0 0.0
    %2964 = vmatprep.subr.mxu0 0.0
    %2965 = vmatpush1.msra.mxu0 0.0
    %2966 = vmatprep.subr.mxu0 0.0
    %2967 = vmatpush1.msra.mxu0 0.0
    %2968 = vmatprep.subr.mxu0 0.0
    %2969 = vmatpush1.msra.mxu0 0.0
    %2970 = vmatprep.subr.mxu0 0.0
    %2971 = vmatpush1.msra.mxu0 0.0
    %2972 = vmatprep.subr.mxu0 0.0
    %2973 = vmatpush1.msra.mxu0 0.0
    %2974 = vmatprep.subr.mxu0 0.0
    %2975 = vmatpush1.msra.mxu0 0.0
    %2976 = vmatprep.subr.mxu0 0.0
    %2977 = vmatpush1.msra.mxu0 0.0
    %2978 = vmatprep.subr.mxu0 0.0
    %2979 = vmatpush1.msra.mxu0 0.0
    %2980 = vmatprep.subr.mxu0 0.0
    %2981 = vmatpush1.msra.mxu0 0.0
    %2982 = vmatprep.subr.mxu0 0.0
    %2983 = vmatpush1.msra.mxu0 0.0
    %2984 = vmatprep.subr.mxu0 0.0
    %2985 = vmatpush1.msra.mxu0 0.0
    %2986 = vmatprep.subr.mxu0 0.0
    %2987 = vmatpush1.msra.mxu0 0.0
    %2988 = vmatprep.subr.mxu0 0.0
    %2989 = vmatpush1.msra.mxu0 0.0
    %2990 = vmatprep.subr.mxu0 0.0
    %2991 = vmatpush1.msra.mxu0 0.0
    %2992 = vmatprep.subr.mxu0 0.0
    %2993 = vmatpush1.msra.mxu0 0.0
    %2994 = vmatprep.subr.mxu0 0.0
    %2995 = vmatpush1.msra.mxu0 0.0
    %2996 = vmatprep.subr.mxu0 0.0
    %2997 = vmatpush1.msra.mxu0 0.0
    %2998 = vmatprep.subr.mxu0 0.0
    %2999 = vmatpush1.msra.mxu0 0.0
    %3000 = vmatprep.subr.mxu0 0.0
    %3001 = vmatpush1.msra.mxu0 0.0
    %3002 = vmatprep.mubr.f32.mxu0 0.0
    %3003 = vmatmul.mubr.f32.gmra.mrb[0].mxu0 %v2933
    %v3004 = vpop.f32.mrb[0].mxu0
    %v3005 = vadd.f32 0.0, %v3004
    %v3006 = vpop.f32.mrb[0].mxu0
    %3007 = vmatprep.mubr.f32.mxu0 0.0
    %3008 = vmatmul.mubr.f32.gmra.mrb[0].mxu0 %v2936
    %v3009 = vpop.f32.mrb[0].mxu0
    %v3010 = vadd.f32 0.0, %v3009
    %v3011 = vpop.f32.mrb[0].mxu0
    %3012 = vdwg.mxu0
    %v3013 = vadd.f32 %v2327, %v3005
    %v3014 = vadd.f32 %v2328, %v3010
    %v3015 = vadd.f32 %v222, %v3013
    %v3016 = vadd.f32 %v223, %v3014
    %v3017 = vld [vmem:[%s14] sm:$0x1]
    %v3019 = vlaneseq
    %v3020 = vshrl.u32 %v3019, 7
    %v3021 = vsub.s32 0, %v3020
    %v3022 = vrot.slane %v3017, %v3021
    %v3024 = vadd.f32 %v3015, %v3022
    %v3025 = vadd.f32 %v3016, %v3022
    %v3026 = vld [vmem:[%s15] sm:$0x1]
    %v3027 = vld [vmem:[%s16] sm:$0x1]
    %v3028 = vsel %vm180, %v3024, 0.0
    %3029 = vadd.xlane.f32.xlu0 %v3028
    %v3030 = vpop.xlane.xlu0 %3029
    %v3031 = vsel %vm180, %v3025, 0.0
    %3032 = vadd.xlane.f32.xlu0 %v3031
    %v3033 = vpop.xlane.xlu0 %3032
    %v3034 = vmul.f32 %v3030, %v187
    %v3035 = vmul.f32 %v3033, %v187
    %v3036 = vsub.f32 %v3024, %v3034
    %v3037 = vsub.f32 %v3025, %v3035
    %v3038 = vmul.f32 %v3036, %v3036
    %v3039 = vmul.f32 %v3037, %v3037
    %v3040 = vsel %vm180, %v3038, 0.0
    %3041 = vadd.xlane.f32.xlu0 %v3040
    %v3042 = vpop.xlane.xlu0 %3041
    %v3043 = vsel %vm180, %v3039, 0.0
    %3044 = vadd.xlane.f32.xlu0 %v3043
    %v3045 = vpop.xlane.xlu0 %3044
    %v3046 = vmul.f32 %v3042, %v187
    %v3047 = vmul.f32 %v3045, %v187
    %v3048 = vadd.f32 %v3046, 1e-05
    %v3049 = vadd.f32 %v3047, 1e-05
    %v3050 = vrsqrt.pop %v3048
    %v3051 = vrsqrt.pop %v3049
    %v3052 = vmul.f32 %v3036, %v3050
    %v3053 = vmul.f32 %v3037, %v3051
    %v3055 = vlaneseq
    %v3056 = vshrl.u32 %v3055, 7
    %v3057 = vsub.s32 0, %v3056
    %v3058 = vrot.slane %v3026, %v3057
    %v3060 = vmul.f32 %v3052, %v3058
    %v3061 = vmul.f32 %v3053, %v3058
    %v3063 = vlaneseq
    %v3064 = vshrl.u32 %v3063, 7
    %v3065 = vsub.s32 0, %v3064
    %v3066 = vrot.slane %v3027, %v3065
    %v3068 = vadd.f32 %v3060, %v3066
    %v3069 = vadd.f32 %v3061, %v3066
    %v3070 = vld [vmem:[%s17] sm:$0xff]
    %v3071 = vld [vmem:[%s17 + $0x8] sm:$0xff]
    %v3072 = vld [vmem:[%s17 + $0x10] sm:$0xff]
    %v3073 = vld [vmem:[%s17 + $0x18] sm:$0xff]
    %v3074 = vld [vmem:[%s17 + $0x20] sm:$0xff]
    %v3075 = vld [vmem:[%s17 + $0x28] sm:$0xff]
    %v3076 = vld [vmem:[%s17 + $0x30] sm:$0xff]
    %v3077 = vld [vmem:[%s17 + $0x38] sm:$0xff]
    %v3078 = vld [vmem:[%s17 + $0x40] sm:$0xff]
    %v3079 = vld [vmem:[%s17 + $0x48] sm:$0xff]
    %v3080 = vld [vmem:[%s17 + $0x50] sm:$0xff]
    %v3081 = vld [vmem:[%s17 + $0x58] sm:$0xff]
    %v3082 = vld [vmem:[%s17 + $0x60] sm:$0xff]
    %v3083 = vld [vmem:[%s17 + $0x68] sm:$0xff]
    %v3084 = vld [vmem:[%s17 + $0x70] sm:$0xff]
    %v3085 = vld [vmem:[%s17 + $0x78] sm:$0xff]
    %v3086 = vld [vmem:[%s18] sm:$0x3]
    %v3088 = vlaneseq
    %v3089 = vshrl.u32 %v3088, 7
    %v3090 = vsub.s32 0, %v3089
    %v3091 = vrot.slane %v3086, %v3090
    %v3092 = vlaneseq
    %v3093 = vshrl.u32 %v3092, 7
    %v3094 = vsub.s32 1, %v3093
    %v3095 = vrot.slane %v3086, %v3094
    %v3099 = vsel %vm180, %v3068, 0
    %v3102 = vsel %vm180, %v3069, 0
    %3104 = vmatprep.subr.mxu0 %v3071
    %3105 = vmatpush1.msra.mxu0 %v3070
    %3106 = vmatprep.subr.mxu0 %v3073
    %3107 = vmatpush1.msra.mxu0 %v3072
    %3108 = vmatprep.subr.mxu0 %v3075
    %3109 = vmatpush1.msra.mxu0 %v3074
    %3110 = vmatprep.subr.mxu0 %v3077
    %3111 = vmatpush1.msra.mxu0 %v3076
    %3112 = vmatprep.subr.mxu0 %v3079
    %3113 = vmatpush1.msra.mxu0 %v3078
    %3114 = vmatprep.subr.mxu0 %v3081
    %3115 = vmatpush1.msra.mxu0 %v3080
    %3116 = vmatprep.subr.mxu0 %v3083
    %3117 = vmatpush1.msra.mxu0 %v3082
    %3118 = vmatprep.subr.mxu0 %v3085
    %3119 = vmatpush1.msra.mxu0 %v3084
    %3120 = vmatprep.subr.mxu0 0.0
    %3121 = vmatpush1.msra.mxu0 0.0
    %3122 = vmatprep.subr.mxu0 0.0
    %3123 = vmatpush1.msra.mxu0 0.0
    %3124 = vmatprep.subr.mxu0 0.0
    %3125 = vmatpush1.msra.mxu0 0.0
    %3126 = vmatprep.subr.mxu0 0.0
    %3127 = vmatpush1.msra.mxu0 0.0
    %3128 = vmatprep.subr.mxu0 0.0
    %3129 = vmatpush1.msra.mxu0 0.0
    %3130 = vmatprep.subr.mxu0 0.0
    %3131 = vmatpush1.msra.mxu0 0.0
    %3132 = vmatprep.subr.mxu0 0.0
    %3133 = vmatpush1.msra.mxu0 0.0
    %3134 = vmatprep.subr.mxu0 0.0
    %3135 = vmatpush1.msra.mxu0 0.0
    %3136 = vmatprep.subr.mxu0 0.0
    %3137 = vmatpush1.msra.mxu0 0.0
    %3138 = vmatprep.subr.mxu0 0.0
    %3139 = vmatpush1.msra.mxu0 0.0
    %3140 = vmatprep.subr.mxu0 0.0
    %3141 = vmatpush1.msra.mxu0 0.0
    %3142 = vmatprep.subr.mxu0 0.0
    %3143 = vmatpush1.msra.mxu0 0.0
    %3144 = vmatprep.subr.mxu0 0.0
    %3145 = vmatpush1.msra.mxu0 0.0
    %3146 = vmatprep.subr.mxu0 0.0
    %3147 = vmatpush1.msra.mxu0 0.0
    %3148 = vmatprep.subr.mxu0 0.0
    %3149 = vmatpush1.msra.mxu0 0.0
    %3150 = vmatprep.subr.mxu0 0.0
    %3151 = vmatpush1.msra.mxu0 0.0
    %3152 = vmatprep.subr.mxu0 0.0
    %3153 = vmatpush1.msra.mxu0 0.0
    %3154 = vmatprep.subr.mxu0 0.0
    %3155 = vmatpush1.msra.mxu0 0.0
    %3156 = vmatprep.subr.mxu0 0.0
    %3157 = vmatpush1.msra.mxu0 0.0
    %3158 = vmatprep.subr.mxu0 0.0
    %3159 = vmatpush1.msra.mxu0 0.0
    %3160 = vmatprep.subr.mxu0 0.0
    %3161 = vmatpush1.msra.mxu0 0.0
    %3162 = vmatprep.subr.mxu0 0.0
    %3163 = vmatpush1.msra.mxu0 0.0
    %3164 = vmatprep.subr.mxu0 0.0
    %3165 = vmatpush1.msra.mxu0 0.0
    %3166 = vmatprep.subr.mxu0 0.0
    %3167 = vmatpush1.msra.mxu0 0.0
    %3168 = vmatprep.mubr.f32.mxu0 0.0
    %3169 = vmatmul.mubr.f32.gmra.mrb[0].mxu0 %v3099
    %v3170 = vpop.f32.mrb[0].mxu0
    %v3171 = vadd.f32 %v3091, %v3170
    %v3172 = vpop.f32.mrb[0].mxu0
    %v3173 = vadd.f32 %v3095, %v3172
    %3174 = vmatprep.mubr.f32.mxu0 0.0
    %3175 = vmatmul.mubr.f32.gmra.mrb[0].mxu0 %v3102
    %v3176 = vpop.f32.mrb[0].mxu0
    %v3177 = vadd.f32 %v3091, %v3176
    %v3178 = vpop.f32.mrb[0].mxu0
    %v3179 = vadd.f32 %v3095, %v3178
    %3180 = vdwg.mxu0
    %v3181 = vmul.f32 %v3171, 0.5
    %v3182 = vmul.f32 %v3173, 0.5
    %v3183 = vmul.f32 %v3177, 0.5
    %v3184 = vmul.f32 %v3179, 0.5
    %v3185 = vmul.f32 %v3171, 0.044715
    %v3186 = vmul.f32 %v3173, 0.044715
    %v3187 = vmul.f32 %v3177, 0.044715
    %v3188 = vmul.f32 %v3179, 0.044715
    %v3189 = vmul.f32 %v3185, %v3171
    %v3190 = vmul.f32 %v3186, %v3173
    %v3191 = vmul.f32 %v3187, %v3177
    %v3192 = vmul.f32 %v3188, %v3179
    %v3193 = vmul.f32 %v3189, %v3171
    %v3194 = vmul.f32 %v3190, %v3173
    %v3195 = vmul.f32 %v3191, %v3177
    %v3196 = vmul.f32 %v3192, %v3179
    %v3197 = vadd.f32 %v3171, %v3193
    %v3198 = vadd.f32 %v3173, %v3194
    %v3199 = vadd.f32 %v3177, %v3195
    %v3200 = vadd.f32 %v3179, %v3196
    %v3201 = vmul.f32 %v3197, 0.7978846
    %v3202 = vmul.f32 %v3198, 0.7978846
    %v3203 = vmul.f32 %v3199, 0.7978846
    %v3204 = vmul.f32 %v3200, 0.7978846
    %v3205 = vtanh.pop %v3201
    %v3206 = vtanh.pop %v3202
    %v3207 = vtanh.pop %v3203
    %v3208 = vtanh.pop %v3204
    %v3209 = vadd.f32 %v3205, 1.0
    %v3210 = vadd.f32 %v3206, 1.0
    %v3211 = vadd.f32 %v3207, 1.0
    %v3212 = vadd.f32 %v3208, 1.0
    %v3213 = vmul.f32 %v3181, %v3209
    %v3214 = vmul.f32 %v3182, %v3210
    %v3215 = vmul.f32 %v3183, %v3211
    %v3216 = vmul.f32 %v3184, %v3212
    %v3217 = vld [vmem:[%s19] sm:$0xff]
    %v3218 = vld [vmem:[%s19 + $0x8] sm:$0xff]
    %v3219 = vld [vmem:[%s19 + $0x10] sm:$0xff]
    %v3220 = vld [vmem:[%s19 + $0x18] sm:$0xff]
    %v3221 = vld [vmem:[%s19 + $0x20] sm:$0xff]
    %v3222 = vld [vmem:[%s19 + $0x28] sm:$0xff]
    %v3223 = vld [vmem:[%s19 + $0x30] sm:$0xff]
    %v3224 = vld [vmem:[%s19 + $0x38] sm:$0xff]
    %v3225 = vld [vmem:[%s19 + $0x40] sm:$0xff]
    %v3226 = vld [vmem:[%s19 + $0x48] sm:$0xff]
    %v3227 = vld [vmem:[%s19 + $0x50] sm:$0xff]
    %v3228 = vld [vmem:[%s19 + $0x58] sm:$0xff]
    %v3229 = vld [vmem:[%s19 + $0x60] sm:$0xff]
    %v3230 = vld [vmem:[%s19 + $0x68] sm:$0xff]
    %v3231 = vld [vmem:[%s19 + $0x70] sm:$0xff]
    %v3232 = vld [vmem:[%s19 + $0x78] sm:$0xff]
    %v3233 = vld [vmem:[%s19 + $0x80] sm:$0xff]
    %v3234 = vld [vmem:[%s19 + $0x88] sm:$0xff]
    %v3235 = vld [vmem:[%s19 + $0x90] sm:$0xff]
    %v3236 = vld [vmem:[%s19 + $0x98] sm:$0xff]
    %v3237 = vld [vmem:[%s19 + $0xa0] sm:$0xff]
    %v3238 = vld [vmem:[%s19 + $0xa8] sm:$0xff]
    %v3239 = vld [vmem:[%s19 + $0xb0] sm:$0xff]
    %v3240 = vld [vmem:[%s19 + $0xb8] sm:$0xff]
    %v3241 = vld [vmem:[%s19 + $0xc0] sm:$0xff]
    %v3242 = vld [vmem:[%s19 + $0xc8] sm:$0xff]
    %v3243 = vld [vmem:[%s19 + $0xd0] sm:$0xff]
    %v3244 = vld [vmem:[%s19 + $0xd8] sm:$0xff]
    %v3245 = vld [vmem:[%s19 + $0xe0] sm:$0xff]
    %v3246 = vld [vmem:[%s19 + $0xe8] sm:$0xff]
    %v3247 = vld [vmem:[%s19 + $0xf0] sm:$0xff]
    %v3248 = vld [vmem:[%s19 + $0xf8] sm:$0xff]
    %v3249 = vld [vmem:[%s20] sm:$0x1]
    %v3251 = vlaneseq
    %v3252 = vshrl.u32 %v3251, 7
    %v3253 = vsub.s32 0, %v3252
    %v3254 = vrot.slane %v3249, %v3253
    %3256 = vmatprep.subr.mxu0 0.0
    %3257 = vmatpush1.msra.mxu0 %v3217
    %3258 = vmatprep.subr.mxu0 0.0
    %3259 = vmatpush1.msra.mxu0 %v3218
    %3260 = vmatprep.subr.mxu0 0.0
    %3261 = vmatpush1.msra.mxu0 %v3219
    %3262 = vmatprep.subr.mxu0 0.0
    %3263 = vmatpush1.msra.mxu0 %v3220
    %3264 = vmatprep.subr.mxu0 0.0
    %3265 = vmatpush1.msra.mxu0 %v3221
    %3266 = vmatprep.subr.mxu0 0.0
    %3267 = vmatpush1.msra.mxu0 %v3222
    %3268 = vmatprep.subr.mxu0 0.0
    %3269 = vmatpush1.msra.mxu0 %v3223
    %3270 = vmatprep.subr.mxu0 0.0
    %3271 = vmatpush1.msra.mxu0 %v3224
    %3272 = vmatprep.subr.mxu0 0.0
    %3273 = vmatpush1.msra.mxu0 %v3225
    %3274 = vmatprep.subr.mxu0 0.0
    %3275 = vmatpush1.msra.mxu0 %v3226
    %3276 = vmatprep.subr.mxu0 0.0
    %3277 = vmatpush1.msra.mxu0 %v3227
    %3278 = vmatprep.subr.mxu0 0.0
    %3279 = vmatpush1.msra.mxu0 %v3228
    %3280 = vmatprep.subr.mxu0 0.0
    %3281 = vmatpush1.msra.mxu0 %v3229
    %3282 = vmatprep.subr.mxu0 0.0
    %3283 = vmatpush1.msra.mxu0 %v3230
    %3284 = vmatprep.subr.mxu0 0.0
    %3285 = vmatpush1.msra.mxu0 %v3231
    %3286 = vmatprep.subr.mxu0 0.0
    %3287 = vmatpush1.msra.mxu0 %v3232
    %3288 = vmatprep.subr.mxu0 0.0
    %3289 = vmatpush1.msra.mxu0 %v3233
    %3290 = vmatprep.subr.mxu0 0.0
    %3291 = vmatpush1.msra.mxu0 %v3234
    %3292 = vmatprep.subr.mxu0 0.0
    %3293 = vmatpush1.msra.mxu0 %v3235
    %3294 = vmatprep.subr.mxu0 0.0
    %3295 = vmatpush1.msra.mxu0 %v3236
    %3296 = vmatprep.subr.mxu0 0.0
    %3297 = vmatpush1.msra.mxu0 %v3237
    %3298 = vmatprep.subr.mxu0 0.0
    %3299 = vmatpush1.msra.mxu0 %v3238
    %3300 = vmatprep.subr.mxu0 0.0
    %3301 = vmatpush1.msra.mxu0 %v3239
    %3302 = vmatprep.subr.mxu0 0.0
    %3303 = vmatpush1.msra.mxu0 %v3240
    %3304 = vmatprep.subr.mxu0 0.0
    %3305 = vmatpush1.msra.mxu0 %v3241
    %3306 = vmatprep.subr.mxu0 0.0
    %3307 = vmatpush1.msra.mxu0 %v3242
    %3308 = vmatprep.subr.mxu0 0.0
    %3309 = vmatpush1.msra.mxu0 %v3243
    %3310 = vmatprep.subr.mxu0 0.0
    %3311 = vmatpush1.msra.mxu0 %v3244
    %3312 = vmatprep.subr.mxu0 0.0
    %3313 = vmatpush1.msra.mxu0 %v3245
    %3314 = vmatprep.subr.mxu0 0.0
    %3315 = vmatpush1.msra.mxu0 %v3246
    %3316 = vmatprep.subr.mxu0 0.0
    %3317 = vmatpush1.msra.mxu0 %v3247
    %3318 = vmatprep.subr.mxu0 0.0
    %3319 = vmatpush1.msra.mxu0 %v3248
    %3320 = vmatprep.mubr.f32.mxu0 %v3214
    %3321 = vmatmul.mubr.f32.gmra.mrb[0].mxu0 %v3213
    %v3322 = vpop.f32.mrb[0].mxu0
    %v3323 = vadd.f32 %v3254, %v3322
    %v3324 = vpop.f32.mrb[0].mxu0
    %3325 = vmatprep.mubr.f32.mxu0 %v3216
    %3326 = vmatmul.mubr.f32.gmra.mrb[0].mxu0 %v3215
    %v3327 = vpop.f32.mrb[0].mxu0
    %v3328 = vadd.f32 %v3254, %v3327
    %v3329 = vpop.f32.mrb[0].mxu0
    %3330 = vdwg.mxu0
    %v3331 = vadd.f32 %v3024, %v3323
    %v3332 = vadd.f32 %v3025, %v3328
    %s3333 = scalar_lea.vmem %s5, 1
    %v3334 = vld [vmem:[%s3333] sm:$0x1]
    %s3335 = scalar_lea.vmem %s6, 1
    %v3336 = vld [vmem:[%s3335] sm:$0x1]
    %v3337 = vsel %vm180, %v3331, 0.0
    %3338 = vadd.xlane.f32.xlu0 %v3337
    %v3339 = vpop.xlane.xlu0 %3338
    %v3340 = vsel %vm180, %v3332, 0.0
    %3341 = vadd.xlane.f32.xlu0 %v3340
    %v3342 = vpop.xlane.xlu0 %3341
    %v3343 = vmul.f32 %v3339, %v187
    %v3344 = vmul.f32 %v3342, %v187
    %v3345 = vsub.f32 %v3331, %v3343
    %v3346 = vsub.f32 %v3332, %v3344
    %v3347 = vmul.f32 %v3345, %v3345
    %v3348 = vmul.f32 %v3346, %v3346
    %v3349 = vsel %vm180, %v3347, 0.0
    %3350 = vadd.xlane.f32.xlu0 %v3349
    %v3351 = vpop.xlane.xlu0 %3350
    %v3352 = vsel %vm180, %v3348, 0.0
    %3353 = vadd.xlane.f32.xlu0 %v3352
    %v3354 = vpop.xlane.xlu0 %3353
    %v3355 = vmul.f32 %v3351, %v187
    %v3356 = vmul.f32 %v3354, %v187
    %v3357 = vadd.f32 %v3355, 1e-05
    %v3358 = vadd.f32 %v3356, 1e-05
    %v3359 = vrsqrt.pop %v3357
    %v3360 = vrsqrt.pop %v3358
    %v3361 = vmul.f32 %v3345, %v3359
    %v3362 = vmul.f32 %v3346, %v3360
    %v3364 = vlaneseq
    %v3365 = vshrl.u32 %v3364, 7
    %v3366 = vsub.s32 0, %v3365
    %v3367 = vrot.slane %v3334, %v3366
    %v3369 = vmul.f32 %v3361, %v3367
    %v3370 = vmul.f32 %v3362, %v3367
    %v3372 = vlaneseq
    %v3373 = vshrl.u32 %v3372, 7
    %v3374 = vsub.s32 0, %v3373
    %v3375 = vrot.slane %v3336, %v3374
    %v3377 = vadd.f32 %v3369, %v3375
    %v3378 = vadd.f32 %v3370, %v3375
    %s3379 = scalar_lea.vmem %s7, 256
    %v3380 = vld [vmem:[%s3379] sm:$0xff]
    %v3381 = vld [vmem:[%s3379 + $0x8] sm:$0xff]
    %v3382 = vld [vmem:[%s3379 + $0x10] sm:$0xff]
    %v3383 = vld [vmem:[%s3379 + $0x18] sm:$0xff]
    %v3384 = vld [vmem:[%s3379 + $0x20] sm:$0xff]
    %v3385 = vld [vmem:[%s3379 + $0x28] sm:$0xff]
    %v3386 = vld [vmem:[%s3379 + $0x30] sm:$0xff]
    %v3387 = vld [vmem:[%s3379 + $0x38] sm:$0xff]
    %s3388 = scalar_lea.vmem %s8, 4
    %v3389 = vld [vmem:[%s3388] sm:$0x1]
    %v3391 = vlaneseq
    %v3392 = vshrl.u32 %v3391, 7
    %v3393 = vsub.s32 0, %v3392
    %v3394 = vrot.slane %v3389, %v3393
    %v3397 = vsel %vm180, %v3377, 0
    %v3400 = vsel %vm180, %v3378, 0
    %3402 = vmatprep.subr.mxu0 0.0
    %3403 = vmatpush1.msra.mxu0 %v3380
    %3404 = vmatprep.subr.mxu0 0.0
    %3405 = vmatpush1.msra.mxu0 %v3381
    %3406 = vmatprep.subr.mxu0 0.0
    %3407 = vmatpush1.msra.mxu0 %v3382
    %3408 = vmatprep.subr.mxu0 0.0
    %3409 = vmatpush1.msra.mxu0 %v3383
    %3410 = vmatprep.subr.mxu0 0.0
    %3411 = vmatpush1.msra.mxu0 %v3384
    %3412 = vmatprep.subr.mxu0 0.0
    %3413 = vmatpush1.msra.mxu0 %v3385
    %3414 = vmatprep.subr.mxu0 0.0
    %3415 = vmatpush1.msra.mxu0 %v3386
    %3416 = vmatprep.subr.mxu0 0.0
    %3417 = vmatpush1.msra.mxu0 %v3387
    %3418 = vmatprep.subr.mxu0 0.0
    %3419 = vmatpush1.msra.mxu0 0.0
    %3420 = vmatprep.subr.mxu0 0.0
    %3421 = vmatpush1.msra.mxu0 0.0
    %3422 = vmatprep.subr.mxu0 0.0
    %3423 = vmatpush1.msra.mxu0 0.0
    %3424 = vmatprep.subr.mxu0 0.0
    %3425 = vmatpush1.msra.mxu0 0.0
    %3426 = vmatprep.subr.mxu0 0.0
    %3427 = vmatpush1.msra.mxu0 0.0
    %3428 = vmatprep.subr.mxu0 0.0
    %3429 = vmatpush1.msra.mxu0 0.0
    %3430 = vmatprep.subr.mxu0 0.0
    %3431 = vmatpush1.msra.mxu0 0.0
    %3432 = vmatprep.subr.mxu0 0.0
    %3433 = vmatpush1.msra.mxu0 0.0
    %3434 = vmatprep.subr.mxu0 0.0
    %3435 = vmatpush1.msra.mxu0 0.0
    %3436 = vmatprep.subr.mxu0 0.0
    %3437 = vmatpush1.msra.mxu0 0.0
    %3438 = vmatprep.subr.mxu0 0.0
    %3439 = vmatpush1.msra.mxu0 0.0
    %3440 = vmatprep.subr.mxu0 0.0
    %3441 = vmatpush1.msra.mxu0 0.0
    %3442 = vmatprep.subr.mxu0 0.0
    %3443 = vmatpush1.msra.mxu0 0.0
    %3444 = vmatprep.subr.mxu0 0.0
    %3445 = vmatpush1.msra.mxu0 0.0
    %3446 = vmatprep.subr.mxu0 0.0
    %3447 = vmatpush1.msra.mxu0 0.0
    %3448 = vmatprep.subr.mxu0 0.0
    %3449 = vmatpush1.msra.mxu0 0.0
    %3450 = vmatprep.subr.mxu0 0.0
    %3451 = vmatpush1.msra.mxu0 0.0
    %3452 = vmatprep.subr.mxu0 0.0
    %3453 = vmatpush1.msra.mxu0 0.0
    %3454 = vmatprep.subr.mxu0 0.0
    %3455 = vmatpush1.msra.mxu0 0.0
    %3456 = vmatprep.subr.mxu0 0.0
    %3457 = vmatpush1.msra.mxu0 0.0
    %3458 = vmatprep.subr.mxu0 0.0
    %3459 = vmatpush1.msra.mxu0 0.0
    %3460 = vmatprep.subr.mxu0 0.0
    %3461 = vmatpush1.msra.mxu0 0.0
    %3462 = vmatprep.subr.mxu0 0.0
    %3463 = vmatpush1.msra.mxu0 0.0
    %3464 = vmatprep.subr.mxu0 0.0
    %3465 = vmatpush1.msra.mxu0 0.0
    %3466 = vmatprep.mubr.f32.mxu0 0.0
    %3467 = vmatmul.mubr.f32.gmra.mrb[0].mxu0 %v3397
    %v3468 = vpop.f32.mrb[0].mxu0
    %v3469 = vadd.f32 %v3394, %v3468
    %v3470 = vpop.f32.mrb[0].mxu0
    %3471 = vmatprep.mubr.f32.mxu0 0.0
    %3472 = vmatmul.mubr.f32.gmra.mrb[0].mxu0 %v3400
    %v3473 = vpop.f32.mrb[0].mxu0
    %v3474 = vadd.f32 %v3394, %v3473
    %v3475 = vpop.f32.mrb[0].mxu0
    %3476 = vdwg.mxu0
    %s3477 = scalar_lea.vmem %s9, 256
    %v3478 = vld [vmem:[%s3477] sm:$0xff]
    %v3479 = vld [vmem:[%s3477 + $0x8] sm:$0xff]
    %v3480 = vld [vmem:[%s3477 + $0x10] sm:$0xff]
    %v3481 = vld [vmem:[%s3477 + $0x18] sm:$0xff]
    %v3482 = vld [vmem:[%s3477 + $0x20] sm:$0xff]
    %v3483 = vld [vmem:[%s3477 + $0x28] sm:$0xff]
    %v3484 = vld [vmem:[%s3477 + $0x30] sm:$0xff]
    %v3485 = vld [vmem:[%s3477 + $0x38] sm:$0xff]
    %s3486 = scalar_lea.vmem %s10, 4
    %v3487 = vld [vmem:[%s3486] sm:$0x1]
    %v3489 = vlaneseq
    %v3490 = vshrl.u32 %v3489, 7
    %v3491 = vsub.s32 0, %v3490
    %v3492 = vrot.slane %v3487, %v3491
    %3494 = vmatprep.subr.mxu0 0.0
    %3495 = vmatpush1.msra.mxu0 %v3478
    %3496 = vmatprep.subr.mxu0 0.0
    %3497 = vmatpush1.msra.mxu0 %v3479
    %3498 = vmatprep.subr.mxu0 0.0
    %3499 = vmatpush1.msra.mxu0 %v3480
    %3500 = vmatprep.subr.mxu0 0.0
    %3501 = vmatpush1.msra.mxu0 %v3481
    %3502 = vmatprep.subr.mxu0 0.0
    %3503 = vmatpush1.msra.mxu0 %v3482
    %3504 = vmatprep.subr.mxu0 0.0
    %3505 = vmatpush1.msra.mxu0 %v3483
    %3506 = vmatprep.subr.mxu0 0.0
    %3507 = vmatpush1.msra.mxu0 %v3484
    %3508 = vmatprep.subr.mxu0 0.0
    %3509 = vmatpush1.msra.mxu0 %v3485
    %3510 = vmatprep.subr.mxu0 0.0
    %3511 = vmatpush1.msra.mxu0 0.0
    %3512 = vmatprep.subr.mxu0 0.0
    %3513 = vmatpush1.msra.mxu0 0.0
    %3514 = vmatprep.subr.mxu0 0.0
    %3515 = vmatpush1.msra.mxu0 0.0
    %3516 = vmatprep.subr.mxu0 0.0
    %3517 = vmatpush1.msra.mxu0 0.0
    %3518 = vmatprep.subr.mxu0 0.0
    %3519 = vmatpush1.msra.mxu0 0.0
    %3520 = vmatprep.subr.mxu0 0.0
    %3521 = vmatpush1.msra.mxu0 0.0
    %3522 = vmatprep.subr.mxu0 0.0
    %3523 = vmatpush1.msra.mxu0 0.0
    %3524 = vmatprep.subr.mxu0 0.0
    %3525 = vmatpush1.msra.mxu0 0.0
    %3526 = vmatprep.subr.mxu0 0.0
    %3527 = vmatpush1.msra.mxu0 0.0
    %3528 = vmatprep.subr.mxu0 0.0
    %3529 = vmatpush1.msra.mxu0 0.0
    %3530 = vmatprep.subr.mxu0 0.0
    %3531 = vmatpush1.msra.mxu0 0.0
    %3532 = vmatprep.subr.mxu0 0.0
    %3533 = vmatpush1.msra.mxu0 0.0
    %3534 = vmatprep.subr.mxu0 0.0
    %3535 = vmatpush1.msra.mxu0 0.0
    %3536 = vmatprep.subr.mxu0 0.0
    %3537 = vmatpush1.msra.mxu0 0.0
    %3538 = vmatprep.subr.mxu0 0.0
    %3539 = vmatpush1.msra.mxu0 0.0
    %3540 = vmatprep.subr.mxu0 0.0
    %3541 = vmatpush1.msra.mxu0 0.0
    %3542 = vmatprep.subr.mxu0 0.0
    %3543 = vmatpush1.msra.mxu0 0.0
    %3544 = vmatprep.subr.mxu0 0.0
    %3545 = vmatpush1.msra.mxu0 0.0
    %3546 = vmatprep.subr.mxu0 0.0
    %3547 = vmatpush1.msra.mxu0 0.0
    %3548 = vmatprep.subr.mxu0 0.0
    %3549 = vmatpush1.msra.mxu0 0.0
    %3550 = vmatprep.subr.mxu0 0.0
    %3551 = vmatpush1.msra.mxu0 0.0
    %3552 = vmatprep.subr.mxu0 0.0
    %3553 = vmatpush1.msra.mxu0 0.0
    %3554 = vmatprep.subr.mxu0 0.0
    %3555 = vmatpush1.msra.mxu0 0.0
    %3556 = vmatprep.subr.mxu0 0.0
    %3557 = vmatpush1.msra.mxu0 0.0
    %3558 = vmatprep.mubr.f32.mxu0 0.0
    %3559 = vmatmul.mubr.f32.gmra.mrb[0].mxu0 %v3397
    %v3560 = vpop.f32.mrb[0].mxu0
    %v3561 = vadd.f32 %v3492, %v3560
    %v3562 = vpop.f32.mrb[0].mxu0
    %3563 = vmatprep.mubr.f32.mxu0 0.0
    %3564 = vmatmul.mubr.f32.gmra.mrb[0].mxu0 %v3400
    %v3565 = vpop.f32.mrb[0].mxu0
    %v3566 = vadd.f32 %v3492, %v3565
    %v3567 = vpop.f32.mrb[0].mxu0
    %3568 = vdwg.mxu0
    %s3569 = scalar_lea.vmem %s11, 256
    %v3570 = vld [vmem:[%s3569] sm:$0xff]
    %v3571 = vld [vmem:[%s3569 + $0x8] sm:$0xff]
    %v3572 = vld [vmem:[%s3569 + $0x10] sm:$0xff]
    %v3573 = vld [vmem:[%s3569 + $0x18] sm:$0xff]
    %v3574 = vld [vmem:[%s3569 + $0x20] sm:$0xff]
    %v3575 = vld [vmem:[%s3569 + $0x28] sm:$0xff]
    %v3576 = vld [vmem:[%s3569 + $0x30] sm:$0xff]
    %v3577 = vld [vmem:[%s3569 + $0x38] sm:$0xff]
    %s3578 = scalar_lea.vmem %s12, 4
    %v3579 = vld [vmem:[%s3578] sm:$0x1]
    %v3581 = vlaneseq
    %v3582 = vshrl.u32 %v3581, 7
    %v3583 = vsub.s32 0, %v3582
    %v3584 = vrot.slane %v3579, %v3583
    %3586 = vmatprep.subr.mxu0 0.0
    %3587 = vmatpush1.msra.mxu0 %v3570
    %3588 = vmatprep.subr.mxu0 0.0
    %3589 = vmatpush1.msra.mxu0 %v3571
    %3590 = vmatprep.subr.mxu0 0.0
    %3591 = vmatpush1.msra.mxu0 %v3572
    %3592 = vmatprep.subr.mxu0 0.0
    %3593 = vmatpush1.msra.mxu0 %v3573
    %3594 = vmatprep.subr.mxu0 0.0
    %3595 = vmatpush1.msra.mxu0 %v3574
    %3596 = vmatprep.subr.mxu0 0.0
    %3597 = vmatpush1.msra.mxu0 %v3575
    %3598 = vmatprep.subr.mxu0 0.0
    %3599 = vmatpush1.msra.mxu0 %v3576
    %3600 = vmatprep.subr.mxu0 0.0
    %3601 = vmatpush1.msra.mxu0 %v3577
    %3602 = vmatprep.subr.mxu0 0.0
    %3603 = vmatpush1.msra.mxu0 0.0
    %3604 = vmatprep.subr.mxu0 0.0
    %3605 = vmatpush1.msra.mxu0 0.0
    %3606 = vmatprep.subr.mxu0 0.0
    %3607 = vmatpush1.msra.mxu0 0.0
    %3608 = vmatprep.subr.mxu0 0.0
    %3609 = vmatpush1.msra.mxu0 0.0
    %3610 = vmatprep.subr.mxu0 0.0
    %3611 = vmatpush1.msra.mxu0 0.0
    %3612 = vmatprep.subr.mxu0 0.0
    %3613 = vmatpush1.msra.mxu0 0.0
    %3614 = vmatprep.subr.mxu0 0.0
    %3615 = vmatpush1.msra.mxu0 0.0
    %3616 = vmatprep.subr.mxu0 0.0
    %3617 = vmatpush1.msra.mxu0 0.0
    %3618 = vmatprep.subr.mxu0 0.0
    %3619 = vmatpush1.msra.mxu0 0.0
    %3620 = vmatprep.subr.mxu0 0.0
    %3621 = vmatpush1.msra.mxu0 0.0
    %3622 = vmatprep.subr.mxu0 0.0
    %3623 = vmatpush1.msra.mxu0 0.0
    %3624 = vmatprep.subr.mxu0 0.0
    %3625 = vmatpush1.msra.mxu0 0.0
    %3626 = vmatprep.subr.mxu0 0.0
    %3627 = vmatpush1.msra.mxu0 0.0
    %3628 = vmatprep.subr.mxu0 0.0
    %3629 = vmatpush1.msra.mxu0 0.0
    %3630 = vmatprep.subr.mxu0 0.0
    %3631 = vmatpush1.msra.mxu0 0.0
    %3632 = vmatprep.subr.mxu0 0.0
    %3633 = vmatpush1.msra.mxu0 0.0
    %3634 = vmatprep.subr.mxu0 0.0
    %3635 = vmatpush1.msra.mxu0 0.0
    %3636 = vmatprep.subr.mxu0 0.0
    %3637 = vmatpush1.msra.mxu0 0.0
    %3638 = vmatprep.subr.mxu0 0.0
    %3639 = vmatpush1.msra.mxu0 0.0
    %3640 = vmatprep.subr.mxu0 0.0
    %3641 = vmatpush1.msra.mxu0 0.0
    %3642 = vmatprep.subr.mxu0 0.0
    %3643 = vmatpush1.msra.mxu0 0.0
    %3644 = vmatprep.subr.mxu0 0.0
    %3645 = vmatpush1.msra.mxu0 0.0
    %3646 = vmatprep.subr.mxu0 0.0
    %3647 = vmatpush1.msra.mxu0 0.0
    %3648 = vmatprep.subr.mxu0 0.0
    %3649 = vmatpush1.msra.mxu0 0.0
    %3650 = vmatprep.mubr.f32.mxu0 0.0
    %3651 = vmatmul.mubr.f32.gmra.mrb[0].mxu0 %v3397
    %v3652 = vpop.f32.mrb[0].mxu0
    %v3653 = vadd.f32 %v3584, %v3652
    %v3654 = vpop.f32.mrb[0].mxu0
    %3655 = vmatprep.mubr.f32.mxu0 0.0
    %3656 = vmatmul.mubr.f32.gmra.mrb[0].mxu0 %v3400
    %v3657 = vpop.f32.mrb[0].mxu0
    %v3658 = vadd.f32 %v3584, %v3657
    %v3659 = vpop.f32.mrb[0].mxu0
    %3660 = vdwg.mxu0
    %v3662 = vsel %vm550, %v3469, 0
    %v3665 = vsel %vm550, %v3561, 0
    %3667 = vmatprep.subr.mxu0 0.0
    %3668 = vmatpush1.xpose.msra.mxu0 %v3665
    %3669 = vmatprep.subr.mxu0 0.0
    %3670 = vmatpush1.xpose.msra.mxu0 0.0
    %3671 = vmatprep.subr.mxu0 0.0
    %3672 = vmatpush1.xpose.msra.mxu0 0.0
    %3673 = vmatprep.subr.mxu0 0.0
    %3674 = vmatpush1.xpose.msra.mxu0 0.0
    %3675 = vmatprep.subr.mxu0 0.0
    %3676 = vmatpush1.xpose.msra.mxu0 0.0
    %3677 = vmatprep.subr.mxu0 0.0
    %3678 = vmatpush1.xpose.msra.mxu0 0.0
    %3679 = vmatprep.subr.mxu0 0.0
    %3680 = vmatpush1.xpose.msra.mxu0 0.0
    %3681 = vmatprep.subr.mxu0 0.0
    %3682 = vmatpush1.xpose.msra.mxu0 0.0
    %3683 = vmatprep.subr.mxu0 0.0
    %3684 = vmatpush1.xpose.msra.mxu0 0.0
    %3685 = vmatprep.subr.mxu0 0.0
    %3686 = vmatpush1.xpose.msra.mxu0 0.0
    %3687 = vmatprep.subr.mxu0 0.0
    %3688 = vmatpush1.xpose.msra.mxu0 0.0
    %3689 = vmatprep.subr.mxu0 0.0
    %3690 = vmatpush1.xpose.msra.mxu0 0.0
    %3691 = vmatprep.subr.mxu0 0.0
    %3692 = vmatpush1.xpose.msra.mxu0 0.0
    %3693 = vmatprep.subr.mxu0 0.0
    %3694 = vmatpush1.xpose.msra.mxu0 0.0
    %3695 = vmatprep.subr.mxu0 0.0
    %3696 = vmatpush1.xpose.msra.mxu0 0.0
    %3697 = vmatprep.subr.mxu0 0.0
    %3698 = vmatpush1.xpose.msra.mxu0 0.0
    %3699 = vmatprep.subr.mxu0 0.0
    %3700 = vmatpush1.xpose.msra.mxu0 0.0
    %3701 = vmatprep.subr.mxu0 0.0
    %3702 = vmatpush1.xpose.msra.mxu0 0.0
    %3703 = vmatprep.subr.mxu0 0.0
    %3704 = vmatpush1.xpose.msra.mxu0 0.0
    %3705 = vmatprep.subr.mxu0 0.0
    %3706 = vmatpush1.xpose.msra.mxu0 0.0
    %3707 = vmatprep.subr.mxu0 0.0
    %3708 = vmatpush1.xpose.msra.mxu0 0.0
    %3709 = vmatprep.subr.mxu0 0.0
    %3710 = vmatpush1.xpose.msra.mxu0 0.0
    %3711 = vmatprep.subr.mxu0 0.0
    %3712 = vmatpush1.xpose.msra.mxu0 0.0
    %3713 = vmatprep.subr.mxu0 0.0
    %3714 = vmatpush1.xpose.msra.mxu0 0.0
    %3715 = vmatprep.subr.mxu0 0.0
    %3716 = vmatpush1.xpose.msra.mxu0 0.0
    %3717 = vmatprep.subr.mxu0 0.0
    %3718 = vmatpush1.xpose.msra.mxu0 0.0
    %3719 = vmatprep.subr.mxu0 0.0
    %3720 = vmatpush1.xpose.msra.mxu0 0.0
    %3721 = vmatprep.subr.mxu0 0.0
    %3722 = vmatpush1.xpose.msra.mxu0 0.0
    %3723 = vmatprep.subr.mxu0 0.0
    %3724 = vmatpush1.xpose.msra.mxu0 0.0
    %3725 = vmatprep.subr.mxu0 0.0
    %3726 = vmatpush1.xpose.msra.mxu0 0.0
    %3727 = vmatprep.subr.mxu0 0.0
    %3728 = vmatpush1.xpose.msra.mxu0 0.0
    %3729 = vmatprep.subr.mxu0 0.0
    %3730 = vmatpush1.xpose.msra.mxu0 0.0
    %3731 = vmatprep.mubr.f32.mxu0 0.0
    %3732 = vmatmul.mubr.f32.gmra.mrb[0].mxu0 %v3662
    %v3733 = vpop.f32.mrb[0].mxu0
    %v3734 = vadd.f32 0.0, %v3733
    %v3735 = vpop.f32.mrb[0].mxu0
    %3736 = vdwg.mxu0
    %v3738 = vsel %vm550, %v3474, 0
    %v3741 = vsel %vm550, %v3566, 0
    %3743 = vmatprep.subr.mxu0 0.0
    %3744 = vmatpush1.xpose.msra.mxu0 %v3741
    %3745 = vmatprep.subr.mxu0 0.0
    %3746 = vmatpush1.xpose.msra.mxu0 0.0
    %3747 = vmatprep.subr.mxu0 0.0
    %3748 = vmatpush1.xpose.msra.mxu0 0.0
    %3749 = vmatprep.subr.mxu0 0.0
    %3750 = vmatpush1.xpose.msra.mxu0 0.0
    %3751 = vmatprep.subr.mxu0 0.0
    %3752 = vmatpush1.xpose.msra.mxu0 0.0
    %3753 = vmatprep.subr.mxu0 0.0
    %3754 = vmatpush1.xpose.msra.mxu0 0.0
    %3755 = vmatprep.subr.mxu0 0.0
    %3756 = vmatpush1.xpose.msra.mxu0 0.0
    %3757 = vmatprep.subr.mxu0 0.0
    %3758 = vmatpush1.xpose.msra.mxu0 0.0
    %3759 = vmatprep.subr.mxu0 0.0
    %3760 = vmatpush1.xpose.msra.mxu0 0.0
    %3761 = vmatprep.subr.mxu0 0.0
    %3762 = vmatpush1.xpose.msra.mxu0 0.0
    %3763 = vmatprep.subr.mxu0 0.0
    %3764 = vmatpush1.xpose.msra.mxu0 0.0
    %3765 = vmatprep.subr.mxu0 0.0
    %3766 = vmatpush1.xpose.msra.mxu0 0.0
    %3767 = vmatprep.subr.mxu0 0.0
    %3768 = vmatpush1.xpose.msra.mxu0 0.0
    %3769 = vmatprep.subr.mxu0 0.0
    %3770 = vmatpush1.xpose.msra.mxu0 0.0
    %3771 = vmatprep.subr.mxu0 0.0
    %3772 = vmatpush1.xpose.msra.mxu0 0.0
    %3773 = vmatprep.subr.mxu0 0.0
    %3774 = vmatpush1.xpose.msra.mxu0 0.0
    %3775 = vmatprep.subr.mxu0 0.0
    %3776 = vmatpush1.xpose.msra.mxu0 0.0
    %3777 = vmatprep.subr.mxu0 0.0
    %3778 = vmatpush1.xpose.msra.mxu0 0.0
    %3779 = vmatprep.subr.mxu0 0.0
    %3780 = vmatpush1.xpose.msra.mxu0 0.0
    %3781 = vmatprep.subr.mxu0 0.0
    %3782 = vmatpush1.xpose.msra.mxu0 0.0
    %3783 = vmatprep.subr.mxu0 0.0
    %3784 = vmatpush1.xpose.msra.mxu0 0.0
    %3785 = vmatprep.subr.mxu0 0.0
    %3786 = vmatpush1.xpose.msra.mxu0 0.0
    %3787 = vmatprep.subr.mxu0 0.0
    %3788 = vmatpush1.xpose.msra.mxu0 0.0
    %3789 = vmatprep.subr.mxu0 0.0
    %3790 = vmatpush1.xpose.msra.mxu0 0.0
    %3791 = vmatprep.subr.mxu0 0.0
    %3792 = vmatpush1.xpose.msra.mxu0 0.0
    %3793 = vmatprep.subr.mxu0 0.0
    %3794 = vmatpush1.xpose.msra.mxu0 0.0
    %3795 = vmatprep.subr.mxu0 0.0
    %3796 = vmatpush1.xpose.msra.mxu0 0.0
    %3797 = vmatprep.subr.mxu0 0.0
    %3798 = vmatpush1.xpose.msra.mxu0 0.0
    %3799 = vmatprep.subr.mxu0 0.0
    %3800 = vmatpush1.xpose.msra.mxu0 0.0
    %3801 = vmatprep.subr.mxu0 0.0
    %3802 = vmatpush1.xpose.msra.mxu0 0.0
    %3803 = vmatprep.subr.mxu0 0.0
    %3804 = vmatpush1.xpose.msra.mxu0 0.0
    %3805 = vmatprep.subr.mxu0 0.0
    %3806 = vmatpush1.xpose.msra.mxu0 0.0
    %3807 = vmatprep.mubr.f32.mxu0 0.0
    %3808 = vmatmul.mubr.f32.gmra.mrb[0].mxu0 %v3738
    %v3809 = vpop.f32.mrb[0].mxu0
    %v3810 = vadd.f32 0.0, %v3809
    %v3811 = vpop.f32.mrb[0].mxu0
    %3812 = vdwg.mxu0
    %v3813 = vmul.f32 %v3734, 0.25
    %v3814 = vmul.f32 %v3810, 0.25
    %v3815 = vadd.f32 %v3813, %v229
    %v3816 = vadd.f32 %v3814, %v229
    %v3817 = vsel %vm707, %v3815, -inf
    %3818 = vmax.xlane.f32.xlu0 %v3817
    %v3819 = vpop.xlane.xlu0 %3818
    %v3820 = vsel %vm707, %v3816, -inf
    %3821 = vmax.xlane.f32.xlu0 %v3820
    %v3822 = vpop.xlane.xlu0 %3821
    %v3823 = vsub.f32 %v3815, %v3819
    %v3824 = vsub.f32 %v3816, %v3822
    %v3825 = vmul.f32 %v3823, 1.442695
    %v3826 = vpow.pop %v3825
    %v3827 = vmul.f32 %v3824, 1.442695
    %v3828 = vpow.pop %v3827
    %v3829 = vsel %vm707, %v3826, 0.0
    %3830 = vadd.xlane.f32.xlu0 %v3829
    %v3831 = vpop.xlane.xlu0 %3830
    %v3832 = vsel %vm707, %v3828, 0.0
    %3833 = vadd.xlane.f32.xlu0 %v3832
    %v3834 = vpop.xlane.xlu0 %3833
    %v3835 = vrcp.pop %v3831
    %v3836 = vmul.f32 %v3826, %v3835
    %v3837 = vrcp.pop %v3834
    %v3838 = vmul.f32 %v3828, %v3837
    %v3840 = vsel %vm707, %v3836, 0
    %3842 = vmatprep.subr.mxu0 0.0
    %3843 = vmatpush1.msra.mxu0 %v3653
    %3844 = vmatprep.subr.mxu0 0.0
    %3845 = vmatpush1.msra.mxu0 0.0
    %3846 = vmatprep.subr.mxu0 0.0
    %3847 = vmatpush1.msra.mxu0 0.0
    %3848 = vmatprep.subr.mxu0 0.0
    %3849 = vmatpush1.msra.mxu0 0.0
    %3850 = vmatprep.subr.mxu0 0.0
    %3851 = vmatpush1.msra.mxu0 0.0
    %3852 = vmatprep.subr.mxu0 0.0
    %3853 = vmatpush1.msra.mxu0 0.0
    %3854 = vmatprep.subr.mxu0 0.0
    %3855 = vmatpush1.msra.mxu0 0.0
    %3856 = vmatprep.subr.mxu0 0.0
    %3857 = vmatpush1.msra.mxu0 0.0
    %3858 = vmatprep.subr.mxu0 0.0
    %3859 = vmatpush1.msra.mxu0 0.0
    %3860 = vmatprep.subr.mxu0 0.0
    %3861 = vmatpush1.msra.mxu0 0.0
    %3862 = vmatprep.subr.mxu0 0.0
    %3863 = vmatpush1.msra.mxu0 0.0
    %3864 = vmatprep.subr.mxu0 0.0
    %3865 = vmatpush1.msra.mxu0 0.0
    %3866 = vmatprep.subr.mxu0 0.0
    %3867 = vmatpush1.msra.mxu0 0.0
    %3868 = vmatprep.subr.mxu0 0.0
    %3869 = vmatpush1.msra.mxu0 0.0
    %3870 = vmatprep.subr.mxu0 0.0
    %3871 = vmatpush1.msra.mxu0 0.0
    %3872 = vmatprep.subr.mxu0 0.0
    %3873 = vmatpush1.msra.mxu0 0.0
    %3874 = vmatprep.subr.mxu0 0.0
    %3875 = vmatpush1.msra.mxu0 0.0
    %3876 = vmatprep.subr.mxu0 0.0
    %3877 = vmatpush1.msra.mxu0 0.0
    %3878 = vmatprep.subr.mxu0 0.0
    %3879 = vmatpush1.msra.mxu0 0.0
    %3880 = vmatprep.subr.mxu0 0.0
    %3881 = vmatpush1.msra.mxu0 0.0
    %3882 = vmatprep.subr.mxu0 0.0
    %3883 = vmatpush1.msra.mxu0 0.0
    %3884 = vmatprep.subr.mxu0 0.0
    %3885 = vmatpush1.msra.mxu0 0.0
    %3886 = vmatprep.subr.mxu0 0.0
    %3887 = vmatpush1.msra.mxu0 0.0
    %3888 = vmatprep.subr.mxu0 0.0
    %3889 = vmatpush1.msra.mxu0 0.0
    %3890 = vmatprep.subr.mxu0 0.0
    %3891 = vmatpush1.msra.mxu0 0.0
    %3892 = vmatprep.subr.mxu0 0.0
    %3893 = vmatpush1.msra.mxu0 0.0
    %3894 = vmatprep.subr.mxu0 0.0
    %3895 = vmatpush1.msra.mxu0 0.0
    %3896 = vmatprep.subr.mxu0 0.0
    %3897 = vmatpush1.msra.mxu0 0.0
    %3898 = vmatprep.subr.mxu0 0.0
    %3899 = vmatpush1.msra.mxu0 0.0
    %3900 = vmatprep.subr.mxu0 0.0
    %3901 = vmatpush1.msra.mxu0 0.0
    %3902 = vmatprep.subr.mxu0 0.0
    %3903 = vmatpush1.msra.mxu0 0.0
    %3904 = vmatprep.subr.mxu0 0.0
    %3905 = vmatpush1.msra.mxu0 0.0
    %3906 = vmatprep.mubr.f32.mxu0 0.0
    %3907 = vmatmul.mubr.f32.gmra.mrb[0].mxu0 %v3840
    %v3908 = vpop.f32.mrb[0].mxu0
    %v3909 = vadd.f32 0.0, %v3908
    %v3910 = vpop.f32.mrb[0].mxu0
    %3911 = vdwg.mxu0
    %v3913 = vsel %vm707, %v3838, 0
    %3915 = vmatprep.subr.mxu0 0.0
    %3916 = vmatpush1.msra.mxu0 %v3658
    %3917 = vmatprep.subr.mxu0 0.0
    %3918 = vmatpush1.msra.mxu0 0.0
    %3919 = vmatprep.subr.mxu0 0.0
    %3920 = vmatpush1.msra.mxu0 0.0
    %3921 = vmatprep.subr.mxu0 0.0
    %3922 = vmatpush1.msra.mxu0 0.0
    %3923 = vmatprep.subr.mxu0 0.0
    %3924 = vmatpush1.msra.mxu0 0.0
    %3925 = vmatprep.subr.mxu0 0.0
    %3926 = vmatpush1.msra.mxu0 0.0
    %3927 = vmatprep.subr.mxu0 0.0
    %3928 = vmatpush1.msra.mxu0 0.0
    %3929 = vmatprep.subr.mxu0 0.0
    %3930 = vmatpush1.msra.mxu0 0.0
    %3931 = vmatprep.subr.mxu0 0.0
    %3932 = vmatpush1.msra.mxu0 0.0
    %3933 = vmatprep.subr.mxu0 0.0
    %3934 = vmatpush1.msra.mxu0 0.0
    %3935 = vmatprep.subr.mxu0 0.0
    %3936 = vmatpush1.msra.mxu0 0.0
    %3937 = vmatprep.subr.mxu0 0.0
    %3938 = vmatpush1.msra.mxu0 0.0
    %3939 = vmatprep.subr.mxu0 0.0
    %3940 = vmatpush1.msra.mxu0 0.0
    %3941 = vmatprep.subr.mxu0 0.0
    %3942 = vmatpush1.msra.mxu0 0.0
    %3943 = vmatprep.subr.mxu0 0.0
    %3944 = vmatpush1.msra.mxu0 0.0
    %3945 = vmatprep.subr.mxu0 0.0
    %3946 = vmatpush1.msra.mxu0 0.0
    %3947 = vmatprep.subr.mxu0 0.0
    %3948 = vmatpush1.msra.mxu0 0.0
    %3949 = vmatprep.subr.mxu0 0.0
    %3950 = vmatpush1.msra.mxu0 0.0
    %3951 = vmatprep.subr.mxu0 0.0
    %3952 = vmatpush1.msra.mxu0 0.0
    %3953 = vmatprep.subr.mxu0 0.0
    %3954 = vmatpush1.msra.mxu0 0.0
    %3955 = vmatprep.subr.mxu0 0.0
    %3956 = vmatpush1.msra.mxu0 0.0
    %3957 = vmatprep.subr.mxu0 0.0
    %3958 = vmatpush1.msra.mxu0 0.0
    %3959 = vmatprep.subr.mxu0 0.0
    %3960 = vmatpush1.msra.mxu0 0.0
    %3961 = vmatprep.subr.mxu0 0.0
    %3962 = vmatpush1.msra.mxu0 0.0
    %3963 = vmatprep.subr.mxu0 0.0
    %3964 = vmatpush1.msra.mxu0 0.0
    %3965 = vmatprep.subr.mxu0 0.0
    %3966 = vmatpush1.msra.mxu0 0.0
    %3967 = vmatprep.subr.mxu0 0.0
    %3968 = vmatpush1.msra.mxu0 0.0
    %3969 = vmatprep.subr.mxu0 0.0
    %3970 = vmatpush1.msra.mxu0 0.0
    %3971 = vmatprep.subr.mxu0 0.0
    %3972 = vmatpush1.msra.mxu0 0.0
    %3973 = vmatprep.subr.mxu0 0.0
    %3974 = vmatpush1.msra.mxu0 0.0
    %3975 = vmatprep.subr.mxu0 0.0
    %3976 = vmatpush1.msra.mxu0 0.0
    %3977 = vmatprep.subr.mxu0 0.0
    %3978 = vmatpush1.msra.mxu0 0.0
    %3979 = vmatprep.mubr.f32.mxu0 0.0
    %3980 = vmatmul.mubr.f32.gmra.mrb[0].mxu0 %v3913
    %v3981 = vpop.f32.mrb[0].mxu0
    %v3982 = vadd.f32 0.0, %v3981
    %v3983 = vpop.f32.mrb[0].mxu0
    %3984 = vdwg.mxu0
    %s3985 = scalar_lea.vmem %s13, 64
    %v3986 = vld [vmem:[%s3985] sm:$0xff]
    %v3987 = vld [vmem:[%s3985 + $0x8] sm:$0xff]
    %s3988 = scalar_lea.vmem %s7, 320
    %v3989 = vld [vmem:[%s3988] sm:$0xff]
    %v3990 = vld [vmem:[%s3988 + $0x8] sm:$0xff]
    %v3991 = vld [vmem:[%s3988 + $0x10] sm:$0xff]
    %v3992 = vld [vmem:[%s3988 + $0x18] sm:$0xff]
    %v3993 = vld [vmem:[%s3988 + $0x20] sm:$0xff]
    %v3994 = vld [vmem:[%s3988 + $0x28] sm:$0xff]
    %v3995 = vld [vmem:[%s3988 + $0x30] sm:$0xff]
    %v3996 = vld [vmem:[%s3988 + $0x38] sm:$0xff]
    %s3997 = scalar_lea.vmem %s8, 5
    %v3998 = vld [vmem:[%s3997] sm:$0x1]
    %v4000 = vlaneseq
    %v4001 = vshrl.u32 %v4000, 7
    %v4002 = vsub.s32 0, %v4001
    %v4003 = vrot.slane %v3998, %v4002
    %4005 = vmatprep.subr.mxu0 0.0
    %4006 = vmatpush1.msra.mxu0 %v3989
    %4007 = vmatprep.subr.mxu0 0.0
    %4008 = vmatpush1.msra.mxu0 %v3990
    %4009 = vmatprep.subr.mxu0 0.0
    %4010 = vmatpush1.msra.mxu0 %v3991
    %4011 = vmatprep.subr.mxu0 0.0
    %4012 = vmatpush1.msra.mxu0 %v3992
    %4013 = vmatprep.subr.mxu0 0.0
    %4014 = vmatpush1.msra.mxu0 %v3993
    %4015 = vmatprep.subr.mxu0 0.0
    %4016 = vmatpush1.msra.mxu0 %v3994
    %4017 = vmatprep.subr.mxu0 0.0
    %4018 = vmatpush1.msra.mxu0 %v3995
    %4019 = vmatprep.subr.mxu0 0.0
    %4020 = vmatpush1.msra.mxu0 %v3996
    %4021 = vmatprep.subr.mxu0 0.0
    %4022 = vmatpush1.msra.mxu0 0.0
    %4023 = vmatprep.subr.mxu0 0.0
    %4024 = vmatpush1.msra.mxu0 0.0
    %4025 = vmatprep.subr.mxu0 0.0
    %4026 = vmatpush1.msra.mxu0 0.0
    %4027 = vmatprep.subr.mxu0 0.0
    %4028 = vmatpush1.msra.mxu0 0.0
    %4029 = vmatprep.subr.mxu0 0.0
    %4030 = vmatpush1.msra.mxu0 0.0
    %4031 = vmatprep.subr.mxu0 0.0
    %4032 = vmatpush1.msra.mxu0 0.0
    %4033 = vmatprep.subr.mxu0 0.0
    %4034 = vmatpush1.msra.mxu0 0.0
    %4035 = vmatprep.subr.mxu0 0.0
    %4036 = vmatpush1.msra.mxu0 0.0
    %4037 = vmatprep.subr.mxu0 0.0
    %4038 = vmatpush1.msra.mxu0 0.0
    %4039 = vmatprep.subr.mxu0 0.0
    %4040 = vmatpush1.msra.mxu0 0.0
    %4041 = vmatprep.subr.mxu0 0.0
    %4042 = vmatpush1.msra.mxu0 0.0
    %4043 = vmatprep.subr.mxu0 0.0
    %4044 = vmatpush1.msra.mxu0 0.0
    %4045 = vmatprep.subr.mxu0 0.0
    %4046 = vmatpush1.msra.mxu0 0.0
    %4047 = vmatprep.subr.mxu0 0.0
    %4048 = vmatpush1.msra.mxu0 0.0
    %4049 = vmatprep.subr.mxu0 0.0
    %4050 = vmatpush1.msra.mxu0 0.0
    %4051 = vmatprep.subr.mxu0 0.0
    %4052 = vmatpush1.msra.mxu0 0.0
    %4053 = vmatprep.subr.mxu0 0.0
    %4054 = vmatpush1.msra.mxu0 0.0
    %4055 = vmatprep.subr.mxu0 0.0
    %4056 = vmatpush1.msra.mxu0 0.0
    %4057 = vmatprep.subr.mxu0 0.0
    %4058 = vmatpush1.msra.mxu0 0.0
    %4059 = vmatprep.subr.mxu0 0.0
    %4060 = vmatpush1.msra.mxu0 0.0
    %4061 = vmatprep.subr.mxu0 0.0
    %4062 = vmatpush1.msra.mxu0 0.0
    %4063 = vmatprep.subr.mxu0 0.0
    %4064 = vmatpush1.msra.mxu0 0.0
    %4065 = vmatprep.subr.mxu0 0.0
    %4066 = vmatpush1.msra.mxu0 0.0
    %4067 = vmatprep.subr.mxu0 0.0
    %4068 = vmatpush1.msra.mxu0 0.0
    %4069 = vmatprep.mubr.f32.mxu0 0.0
    %4070 = vmatmul.mubr.f32.gmra.mrb[0].mxu0 %v3397
    %v4071 = vpop.f32.mrb[0].mxu0
    %v4072 = vadd.f32 %v4003, %v4071
    %v4073 = vpop.f32.mrb[0].mxu0
    %4074 = vmatprep.mubr.f32.mxu0 0.0
    %4075 = vmatmul.mubr.f32.gmra.mrb[0].mxu0 %v3400
    %v4076 = vpop.f32.mrb[0].mxu0
    %v4077 = vadd.f32 %v4003, %v4076
    %v4078 = vpop.f32.mrb[0].mxu0
    %4079 = vdwg.mxu0
    %s4080 = scalar_lea.vmem %s9, 320
    %v4081 = vld [vmem:[%s4080] sm:$0xff]
    %v4082 = vld [vmem:[%s4080 + $0x8] sm:$0xff]
    %v4083 = vld [vmem:[%s4080 + $0x10] sm:$0xff]
    %v4084 = vld [vmem:[%s4080 + $0x18] sm:$0xff]
    %v4085 = vld [vmem:[%s4080 + $0x20] sm:$0xff]
    %v4086 = vld [vmem:[%s4080 + $0x28] sm:$0xff]
    %v4087 = vld [vmem:[%s4080 + $0x30] sm:$0xff]
    %v4088 = vld [vmem:[%s4080 + $0x38] sm:$0xff]
    %s4089 = scalar_lea.vmem %s10, 5
    %v4090 = vld [vmem:[%s4089] sm:$0x1]
    %v4092 = vlaneseq
    %v4093 = vshrl.u32 %v4092, 7
    %v4094 = vsub.s32 0, %v4093
    %v4095 = vrot.slane %v4090, %v4094
    %4097 = vmatprep.subr.mxu0 0.0
    %4098 = vmatpush1.msra.mxu0 %v4081
    %4099 = vmatprep.subr.mxu0 0.0
    %4100 = vmatpush1.msra.mxu0 %v4082
    %4101 = vmatprep.subr.mxu0 0.0
    %4102 = vmatpush1.msra.mxu0 %v4083
    %4103 = vmatprep.subr.mxu0 0.0
    %4104 = vmatpush1.msra.mxu0 %v4084
    %4105 = vmatprep.subr.mxu0 0.0
    %4106 = vmatpush1.msra.mxu0 %v4085
    %4107 = vmatprep.subr.mxu0 0.0
    %4108 = vmatpush1.msra.mxu0 %v4086
    %4109 = vmatprep.subr.mxu0 0.0
    %4110 = vmatpush1.msra.mxu0 %v4087
    %4111 = vmatprep.subr.mxu0 0.0
    %4112 = vmatpush1.msra.mxu0 %v4088
    %4113 = vmatprep.subr.mxu0 0.0
    %4114 = vmatpush1.msra.mxu0 0.0
    %4115 = vmatprep.subr.mxu0 0.0
    %4116 = vmatpush1.msra.mxu0 0.0
    %4117 = vmatprep.subr.mxu0 0.0
    %4118 = vmatpush1.msra.mxu0 0.0
    %4119 = vmatprep.subr.mxu0 0.0
    %4120 = vmatpush1.msra.mxu0 0.0
    %4121 = vmatprep.subr.mxu0 0.0
    %4122 = vmatpush1.msra.mxu0 0.0
    %4123 = vmatprep.subr.mxu0 0.0
    %4124 = vmatpush1.msra.mxu0 0.0
    %4125 = vmatprep.subr.mxu0 0.0
    %4126 = vmatpush1.msra.mxu0 0.0
    %4127 = vmatprep.subr.mxu0 0.0
    %4128 = vmatpush1.msra.mxu0 0.0
    %4129 = vmatprep.subr.mxu0 0.0
    %4130 = vmatpush1.msra.mxu0 0.0
    %4131 = vmatprep.subr.mxu0 0.0
    %4132 = vmatpush1.msra.mxu0 0.0
    %4133 = vmatprep.subr.mxu0 0.0
    %4134 = vmatpush1.msra.mxu0 0.0
    %4135 = vmatprep.subr.mxu0 0.0
    %4136 = vmatpush1.msra.mxu0 0.0
    %4137 = vmatprep.subr.mxu0 0.0
    %4138 = vmatpush1.msra.mxu0 0.0
    %4139 = vmatprep.subr.mxu0 0.0
    %4140 = vmatpush1.msra.mxu0 0.0
    %4141 = vmatprep.subr.mxu0 0.0
    %4142 = vmatpush1.msra.mxu0 0.0
    %4143 = vmatprep.subr.mxu0 0.0
    %4144 = vmatpush1.msra.mxu0 0.0
    %4145 = vmatprep.subr.mxu0 0.0
    %4146 = vmatpush1.msra.mxu0 0.0
    %4147 = vmatprep.subr.mxu0 0.0
    %4148 = vmatpush1.msra.mxu0 0.0
    %4149 = vmatprep.subr.mxu0 0.0
    %4150 = vmatpush1.msra.mxu0 0.0
    %4151 = vmatprep.subr.mxu0 0.0
    %4152 = vmatpush1.msra.mxu0 0.0
    %4153 = vmatprep.subr.mxu0 0.0
    %4154 = vmatpush1.msra.mxu0 0.0
    %4155 = vmatprep.subr.mxu0 0.0
    %4156 = vmatpush1.msra.mxu0 0.0
    %4157 = vmatprep.subr.mxu0 0.0
    %4158 = vmatpush1.msra.mxu0 0.0
    %4159 = vmatprep.subr.mxu0 0.0
    %4160 = vmatpush1.msra.mxu0 0.0
    %4161 = vmatprep.mubr.f32.mxu0 0.0
    %4162 = vmatmul.mubr.f32.gmra.mrb[0].mxu0 %v3397
    %v4163 = vpop.f32.mrb[0].mxu0
    %v4164 = vadd.f32 %v4095, %v4163
    %v4165 = vpop.f32.mrb[0].mxu0
    %4166 = vmatprep.mubr.f32.mxu0 0.0
    %4167 = vmatmul.mubr.f32.gmra.mrb[0].mxu0 %v3400
    %v4168 = vpop.f32.mrb[0].mxu0
    %v4169 = vadd.f32 %v4095, %v4168
    %v4170 = vpop.f32.mrb[0].mxu0
    %4171 = vdwg.mxu0
    %s4172 = scalar_lea.vmem %s11, 320
    %v4173 = vld [vmem:[%s4172] sm:$0xff]
    %v4174 = vld [vmem:[%s4172 + $0x8] sm:$0xff]
    %v4175 = vld [vmem:[%s4172 + $0x10] sm:$0xff]
    %v4176 = vld [vmem:[%s4172 + $0x18] sm:$0xff]
    %v4177 = vld [vmem:[%s4172 + $0x20] sm:$0xff]
    %v4178 = vld [vmem:[%s4172 + $0x28] sm:$0xff]
    %v4179 = vld [vmem:[%s4172 + $0x30] sm:$0xff]
    %v4180 = vld [vmem:[%s4172 + $0x38] sm:$0xff]
    %s4181 = scalar_lea.vmem %s12, 5
    %v4182 = vld [vmem:[%s4181] sm:$0x1]
    %v4184 = vlaneseq
    %v4185 = vshrl.u32 %v4184, 7
    %v4186 = vsub.s32 0, %v4185
    %v4187 = vrot.slane %v4182, %v4186
    %4189 = vmatprep.subr.mxu0 0.0
    %4190 = vmatpush1.msra.mxu0 %v4173
    %4191 = vmatprep.subr.mxu0 0.0
    %4192 = vmatpush1.msra.mxu0 %v4174
    %4193 = vmatprep.subr.mxu0 0.0
    %4194 = vmatpush1.msra.mxu0 %v4175
    %4195 = vmatprep.subr.mxu0 0.0
    %4196 = vmatpush1.msra.mxu0 %v4176
    %4197 = vmatprep.subr.mxu0 0.0
    %4198 = vmatpush1.msra.mxu0 %v4177
    %4199 = vmatprep.subr.mxu0 0.0
    %4200 = vmatpush1.msra.mxu0 %v4178
    %4201 = vmatprep.subr.mxu0 0.0
    %4202 = vmatpush1.msra.mxu0 %v4179
    %4203 = vmatprep.subr.mxu0 0.0
    %4204 = vmatpush1.msra.mxu0 %v4180
    %4205 = vmatprep.subr.mxu0 0.0
    %4206 = vmatpush1.msra.mxu0 0.0
    %4207 = vmatprep.subr.mxu0 0.0
    %4208 = vmatpush1.msra.mxu0 0.0
    %4209 = vmatprep.subr.mxu0 0.0
    %4210 = vmatpush1.msra.mxu0 0.0
    %4211 = vmatprep.subr.mxu0 0.0
    %4212 = vmatpush1.msra.mxu0 0.0
    %4213 = vmatprep.subr.mxu0 0.0
    %4214 = vmatpush1.msra.mxu0 0.0
    %4215 = vmatprep.subr.mxu0 0.0
    %4216 = vmatpush1.msra.mxu0 0.0
    %4217 = vmatprep.subr.mxu0 0.0
    %4218 = vmatpush1.msra.mxu0 0.0
    %4219 = vmatprep.subr.mxu0 0.0
    %4220 = vmatpush1.msra.mxu0 0.0
    %4221 = vmatprep.subr.mxu0 0.0
    %4222 = vmatpush1.msra.mxu0 0.0
    %4223 = vmatprep.subr.mxu0 0.0
    %4224 = vmatpush1.msra.mxu0 0.0
    %4225 = vmatprep.subr.mxu0 0.0
    %4226 = vmatpush1.msra.mxu0 0.0
    %4227 = vmatprep.subr.mxu0 0.0
    %4228 = vmatpush1.msra.mxu0 0.0
    %4229 = vmatprep.subr.mxu0 0.0
    %4230 = vmatpush1.msra.mxu0 0.0
    %4231 = vmatprep.subr.mxu0 0.0
    %4232 = vmatpush1.msra.mxu0 0.0
    %4233 = vmatprep.subr.mxu0 0.0
    %4234 = vmatpush1.msra.mxu0 0.0
    %4235 = vmatprep.subr.mxu0 0.0
    %4236 = vmatpush1.msra.mxu0 0.0
    %4237 = vmatprep.subr.mxu0 0.0
    %4238 = vmatpush1.msra.mxu0 0.0
    %4239 = vmatprep.subr.mxu0 0.0
    %4240 = vmatpush1.msra.mxu0 0.0
    %4241 = vmatprep.subr.mxu0 0.0
    %4242 = vmatpush1.msra.mxu0 0.0
    %4243 = vmatprep.subr.mxu0 0.0
    %4244 = vmatpush1.msra.mxu0 0.0
    %4245 = vmatprep.subr.mxu0 0.0
    %4246 = vmatpush1.msra.mxu0 0.0
    %4247 = vmatprep.subr.mxu0 0.0
    %4248 = vmatpush1.msra.mxu0 0.0
    %4249 = vmatprep.subr.mxu0 0.0
    %4250 = vmatpush1.msra.mxu0 0.0
    %4251 = vmatprep.subr.mxu0 0.0
    %4252 = vmatpush1.msra.mxu0 0.0
    %4253 = vmatprep.mubr.f32.mxu0 0.0
    %4254 = vmatmul.mubr.f32.gmra.mrb[0].mxu0 %v3397
    %v4255 = vpop.f32.mrb[0].mxu0
    %v4256 = vadd.f32 %v4187, %v4255
    %v4257 = vpop.f32.mrb[0].mxu0
    %4258 = vmatprep.mubr.f32.mxu0 0.0
    %4259 = vmatmul.mubr.f32.gmra.mrb[0].mxu0 %v3400
    %v4260 = vpop.f32.mrb[0].mxu0
    %v4261 = vadd.f32 %v4187, %v4260
    %v4262 = vpop.f32.mrb[0].mxu0
    %4263 = vdwg.mxu0
    %v4265 = vsel %vm550, %v4072, 0
    %v4268 = vsel %vm550, %v4164, 0
    %4270 = vmatprep.subr.mxu0 0.0
    %4271 = vmatpush1.xpose.msra.mxu0 %v4268
    %4272 = vmatprep.subr.mxu0 0.0
    %4273 = vmatpush1.xpose.msra.mxu0 0.0
    %4274 = vmatprep.subr.mxu0 0.0
    %4275 = vmatpush1.xpose.msra.mxu0 0.0
    %4276 = vmatprep.subr.mxu0 0.0
    %4277 = vmatpush1.xpose.msra.mxu0 0.0
    %4278 = vmatprep.subr.mxu0 0.0
    %4279 = vmatpush1.xpose.msra.mxu0 0.0
    %4280 = vmatprep.subr.mxu0 0.0
    %4281 = vmatpush1.xpose.msra.mxu0 0.0
    %4282 = vmatprep.subr.mxu0 0.0
    %4283 = vmatpush1.xpose.msra.mxu0 0.0
    %4284 = vmatprep.subr.mxu0 0.0
    %4285 = vmatpush1.xpose.msra.mxu0 0.0
    %4286 = vmatprep.subr.mxu0 0.0
    %4287 = vmatpush1.xpose.msra.mxu0 0.0
    %4288 = vmatprep.subr.mxu0 0.0
    %4289 = vmatpush1.xpose.msra.mxu0 0.0
    %4290 = vmatprep.subr.mxu0 0.0
    %4291 = vmatpush1.xpose.msra.mxu0 0.0
    %4292 = vmatprep.subr.mxu0 0.0
    %4293 = vmatpush1.xpose.msra.mxu0 0.0
    %4294 = vmatprep.subr.mxu0 0.0
    %4295 = vmatpush1.xpose.msra.mxu0 0.0
    %4296 = vmatprep.subr.mxu0 0.0
    %4297 = vmatpush1.xpose.msra.mxu0 0.0
    %4298 = vmatprep.subr.mxu0 0.0
    %4299 = vmatpush1.xpose.msra.mxu0 0.0
    %4300 = vmatprep.subr.mxu0 0.0
    %4301 = vmatpush1.xpose.msra.mxu0 0.0
    %4302 = vmatprep.subr.mxu0 0.0
    %4303 = vmatpush1.xpose.msra.mxu0 0.0
    %4304 = vmatprep.subr.mxu0 0.0
    %4305 = vmatpush1.xpose.msra.mxu0 0.0
    %4306 = vmatprep.subr.mxu0 0.0
    %4307 = vmatpush1.xpose.msra.mxu0 0.0
    %4308 = vmatprep.subr.mxu0 0.0
    %4309 = vmatpush1.xpose.msra.mxu0 0.0
    %4310 = vmatprep.subr.mxu0 0.0
    %4311 = vmatpush1.xpose.msra.mxu0 0.0
    %4312 = vmatprep.subr.mxu0 0.0
    %4313 = vmatpush1.xpose.msra.mxu0 0.0
    %4314 = vmatprep.subr.mxu0 0.0
    %4315 = vmatpush1.xpose.msra.mxu0 0.0
    %4316 = vmatprep.subr.mxu0 0.0
    %4317 = vmatpush1.xpose.msra.mxu0 0.0
    %4318 = vmatprep.subr.mxu0 0.0
    %4319 = vmatpush1.xpose.msra.mxu0 0.0
    %4320 = vmatprep.subr.mxu0 0.0
    %4321 = vmatpush1.xpose.msra.mxu0 0.0
    %4322 = vmatprep.subr.mxu0 0.0
    %4323 = vmatpush1.xpose.msra.mxu0 0.0
    %4324 = vmatprep.subr.mxu0 0.0
    %4325 = vmatpush1.xpose.msra.mxu0 0.0
    %4326 = vmatprep.subr.mxu0 0.0
    %4327 = vmatpush1.xpose.msra.mxu0 0.0
    %4328 = vmatprep.subr.mxu0 0.0
    %4329 = vmatpush1.xpose.msra.mxu0 0.0
    %4330 = vmatprep.subr.mxu0 0.0
    %4331 = vmatpush1.xpose.msra.mxu0 0.0
    %4332 = vmatprep.subr.mxu0 0.0
    %4333 = vmatpush1.xpose.msra.mxu0 0.0
    %4334 = vmatprep.mubr.f32.mxu0 0.0
    %4335 = vmatmul.mubr.f32.gmra.mrb[0].mxu0 %v4265
    %v4336 = vpop.f32.mrb[0].mxu0
    %v4337 = vadd.f32 0.0, %v4336
    %v4338 = vpop.f32.mrb[0].mxu0
    %4339 = vdwg.mxu0
    %v4341 = vsel %vm550, %v4077, 0
    %v4344 = vsel %vm550, %v4169, 0
    %4346 = vmatprep.subr.mxu0 0.0
    %4347 = vmatpush1.xpose.msra.mxu0 %v4344
    %4348 = vmatprep.subr.mxu0 0.0
    %4349 = vmatpush1.xpose.msra.mxu0 0.0
    %4350 = vmatprep.subr.mxu0 0.0
    %4351 = vmatpush1.xpose.msra.mxu0 0.0
    %4352 = vmatprep.subr.mxu0 0.0
    %4353 = vmatpush1.xpose.msra.mxu0 0.0
    %4354 = vmatprep.subr.mxu0 0.0
    %4355 = vmatpush1.xpose.msra.mxu0 0.0
    %4356 = vmatprep.subr.mxu0 0.0
    %4357 = vmatpush1.xpose.msra.mxu0 0.0
    %4358 = vmatprep.subr.mxu0 0.0
    %4359 = vmatpush1.xpose.msra.mxu0 0.0
    %4360 = vmatprep.subr.mxu0 0.0
    %4361 = vmatpush1.xpose.msra.mxu0 0.0
    %4362 = vmatprep.subr.mxu0 0.0
    %4363 = vmatpush1.xpose.msra.mxu0 0.0
    %4364 = vmatprep.subr.mxu0 0.0
    %4365 = vmatpush1.xpose.msra.mxu0 0.0
    %4366 = vmatprep.subr.mxu0 0.0
    %4367 = vmatpush1.xpose.msra.mxu0 0.0
    %4368 = vmatprep.subr.mxu0 0.0
    %4369 = vmatpush1.xpose.msra.mxu0 0.0
    %4370 = vmatprep.subr.mxu0 0.0
    %4371 = vmatpush1.xpose.msra.mxu0 0.0
    %4372 = vmatprep.subr.mxu0 0.0
    %4373 = vmatpush1.xpose.msra.mxu0 0.0
    %4374 = vmatprep.subr.mxu0 0.0
    %4375 = vmatpush1.xpose.msra.mxu0 0.0
    %4376 = vmatprep.subr.mxu0 0.0
    %4377 = vmatpush1.xpose.msra.mxu0 0.0
    %4378 = vmatprep.subr.mxu0 0.0
    %4379 = vmatpush1.xpose.msra.mxu0 0.0
    %4380 = vmatprep.subr.mxu0 0.0
    %4381 = vmatpush1.xpose.msra.mxu0 0.0
    %4382 = vmatprep.subr.mxu0 0.0
    %4383 = vmatpush1.xpose.msra.mxu0 0.0
    %4384 = vmatprep.subr.mxu0 0.0
    %4385 = vmatpush1.xpose.msra.mxu0 0.0
    %4386 = vmatprep.subr.mxu0 0.0
    %4387 = vmatpush1.xpose.msra.mxu0 0.0
    %4388 = vmatprep.subr.mxu0 0.0
    %4389 = vmatpush1.xpose.msra.mxu0 0.0
    %4390 = vmatprep.subr.mxu0 0.0
    %4391 = vmatpush1.xpose.msra.mxu0 0.0
    %4392 = vmatprep.subr.mxu0 0.0
    %4393 = vmatpush1.xpose.msra.mxu0 0.0
    %4394 = vmatprep.subr.mxu0 0.0
    %4395 = vmatpush1.xpose.msra.mxu0 0.0
    %4396 = vmatprep.subr.mxu0 0.0
    %4397 = vmatpush1.xpose.msra.mxu0 0.0
    %4398 = vmatprep.subr.mxu0 0.0
    %4399 = vmatpush1.xpose.msra.mxu0 0.0
    %4400 = vmatprep.subr.mxu0 0.0
    %4401 = vmatpush1.xpose.msra.mxu0 0.0
    %4402 = vmatprep.subr.mxu0 0.0
    %4403 = vmatpush1.xpose.msra.mxu0 0.0
    %4404 = vmatprep.subr.mxu0 0.0
    %4405 = vmatpush1.xpose.msra.mxu0 0.0
    %4406 = vmatprep.subr.mxu0 0.0
    %4407 = vmatpush1.xpose.msra.mxu0 0.0
    %4408 = vmatprep.subr.mxu0 0.0
    %4409 = vmatpush1.xpose.msra.mxu0 0.0
    %4410 = vmatprep.mubr.f32.mxu0 0.0
    %4411 = vmatmul.mubr.f32.gmra.mrb[0].mxu0 %v4341
    %v4412 = vpop.f32.mrb[0].mxu0
    %v4413 = vadd.f32 0.0, %v4412
    %v4414 = vpop.f32.mrb[0].mxu0
    %4415 = vdwg.mxu0
    %v4416 = vmul.f32 %v4337, 0.25
    %v4417 = vmul.f32 %v4413, 0.25
    %v4418 = vadd.f32 %v4416, %v229
    %v4419 = vadd.f32 %v4417, %v229
    %v4420 = vsel %vm707, %v4418, -inf
    %4421 = vmax.xlane.f32.xlu0 %v4420
    %v4422 = vpop.xlane.xlu0 %4421
    %v4423 = vsel %vm707, %v4419, -inf
    %4424 = vmax.xlane.f32.xlu0 %v4423
    %v4425 = vpop.xlane.xlu0 %4424
    %v4426 = vsub.f32 %v4418, %v4422
    %v4427 = vsub.f32 %v4419, %v4425
    %v4428 = vmul.f32 %v4426, 1.442695
    %v4429 = vpow.pop %v4428
    %v4430 = vmul.f32 %v4427, 1.442695
    %v4431 = vpow.pop %v4430
    %v4432 = vsel %vm707, %v4429, 0.0
    %4433 = vadd.xlane.f32.xlu0 %v4432
    %v4434 = vpop.xlane.xlu0 %4433
    %v4435 = vsel %vm707, %v4431, 0.0
    %4436 = vadd.xlane.f32.xlu0 %v4435
    %v4437 = vpop.xlane.xlu0 %4436
    %v4438 = vrcp.pop %v4434
    %v4439 = vmul.f32 %v4429, %v4438
    %v4440 = vrcp.pop %v4437
    %v4441 = vmul.f32 %v4431, %v4440
    %v4443 = vsel %vm707, %v4439, 0
    %4445 = vmatprep.subr.mxu0 0.0
    %4446 = vmatpush1.msra.mxu0 %v4256
    %4447 = vmatprep.subr.mxu0 0.0
    %4448 = vmatpush1.msra.mxu0 0.0
    %4449 = vmatprep.subr.mxu0 0.0
    %4450 = vmatpush1.msra.mxu0 0.0
    %4451 = vmatprep.subr.mxu0 0.0
    %4452 = vmatpush1.msra.mxu0 0.0
    %4453 = vmatprep.subr.mxu0 0.0
    %4454 = vmatpush1.msra.mxu0 0.0
    %4455 = vmatprep.subr.mxu0 0.0
    %4456 = vmatpush1.msra.mxu0 0.0
    %4457 = vmatprep.subr.mxu0 0.0
    %4458 = vmatpush1.msra.mxu0 0.0
    %4459 = vmatprep.subr.mxu0 0.0
    %4460 = vmatpush1.msra.mxu0 0.0
    %4461 = vmatprep.subr.mxu0 0.0
    %4462 = vmatpush1.msra.mxu0 0.0
    %4463 = vmatprep.subr.mxu0 0.0
    %4464 = vmatpush1.msra.mxu0 0.0
    %4465 = vmatprep.subr.mxu0 0.0
    %4466 = vmatpush1.msra.mxu0 0.0
    %4467 = vmatprep.subr.mxu0 0.0
    %4468 = vmatpush1.msra.mxu0 0.0
    %4469 = vmatprep.subr.mxu0 0.0
    %4470 = vmatpush1.msra.mxu0 0.0
    %4471 = vmatprep.subr.mxu0 0.0
    %4472 = vmatpush1.msra.mxu0 0.0
    %4473 = vmatprep.subr.mxu0 0.0
    %4474 = vmatpush1.msra.mxu0 0.0
    %4475 = vmatprep.subr.mxu0 0.0
    %4476 = vmatpush1.msra.mxu0 0.0
    %4477 = vmatprep.subr.mxu0 0.0
    %4478 = vmatpush1.msra.mxu0 0.0
    %4479 = vmatprep.subr.mxu0 0.0
    %4480 = vmatpush1.msra.mxu0 0.0
    %4481 = vmatprep.subr.mxu0 0.0
    %4482 = vmatpush1.msra.mxu0 0.0
    %4483 = vmatprep.subr.mxu0 0.0
    %4484 = vmatpush1.msra.mxu0 0.0
    %4485 = vmatprep.subr.mxu0 0.0
    %4486 = vmatpush1.msra.mxu0 0.0
    %4487 = vmatprep.subr.mxu0 0.0
    %4488 = vmatpush1.msra.mxu0 0.0
    %4489 = vmatprep.subr.mxu0 0.0
    %4490 = vmatpush1.msra.mxu0 0.0
    %4491 = vmatprep.subr.mxu0 0.0
    %4492 = vmatpush1.msra.mxu0 0.0
    %4493 = vmatprep.subr.mxu0 0.0
    %4494 = vmatpush1.msra.mxu0 0.0
    %4495 = vmatprep.subr.mxu0 0.0
    %4496 = vmatpush1.msra.mxu0 0.0
    %4497 = vmatprep.subr.mxu0 0.0
    %4498 = vmatpush1.msra.mxu0 0.0
    %4499 = vmatprep.subr.mxu0 0.0
    %4500 = vmatpush1.msra.mxu0 0.0
    %4501 = vmatprep.subr.mxu0 0.0
    %4502 = vmatpush1.msra.mxu0 0.0
    %4503 = vmatprep.subr.mxu0 0.0
    %4504 = vmatpush1.msra.mxu0 0.0
    %4505 = vmatprep.subr.mxu0 0.0
    %4506 = vmatpush1.msra.mxu0 0.0
    %4507 = vmatprep.subr.mxu0 0.0
    %4508 = vmatpush1.msra.mxu0 0.0
    %4509 = vmatprep.mubr.f32.mxu0 0.0
    %4510 = vmatmul.mubr.f32.gmra.mrb[0].mxu0 %v4443
    %v4511 = vpop.f32.mrb[0].mxu0
    %v4512 = vadd.f32 0.0, %v4511
    %v4513 = vpop.f32.mrb[0].mxu0
    %4514 = vdwg.mxu0
    %v4516 = vsel %vm707, %v4441, 0
    %4518 = vmatprep.subr.mxu0 0.0
    %4519 = vmatpush1.msra.mxu0 %v4261
    %4520 = vmatprep.subr.mxu0 0.0
    %4521 = vmatpush1.msra.mxu0 0.0
    %4522 = vmatprep.subr.mxu0 0.0
    %4523 = vmatpush1.msra.mxu0 0.0
    %4524 = vmatprep.subr.mxu0 0.0
    %4525 = vmatpush1.msra.mxu0 0.0
    %4526 = vmatprep.subr.mxu0 0.0
    %4527 = vmatpush1.msra.mxu0 0.0
    %4528 = vmatprep.subr.mxu0 0.0
    %4529 = vmatpush1.msra.mxu0 0.0
    %4530 = vmatprep.subr.mxu0 0.0
    %4531 = vmatpush1.msra.mxu0 0.0
    %4532 = vmatprep.subr.mxu0 0.0
    %4533 = vmatpush1.msra.mxu0 0.0
    %4534 = vmatprep.subr.mxu0 0.0
    %4535 = vmatpush1.msra.mxu0 0.0
    %4536 = vmatprep.subr.mxu0 0.0
    %4537 = vmatpush1.msra.mxu0 0.0
    %4538 = vmatprep.subr.mxu0 0.0
    %4539 = vmatpush1.msra.mxu0 0.0
    %4540 = vmatprep.subr.mxu0 0.0
    %4541 = vmatpush1.msra.mxu0 0.0
    %4542 = vmatprep.subr.mxu0 0.0
    %4543 = vmatpush1.msra.mxu0 0.0
    %4544 = vmatprep.subr.mxu0 0.0
    %4545 = vmatpush1.msra.mxu0 0.0
    %4546 = vmatprep.subr.mxu0 0.0
    %4547 = vmatpush1.msra.mxu0 0.0
    %4548 = vmatprep.subr.mxu0 0.0
    %4549 = vmatpush1.msra.mxu0 0.0
    %4550 = vmatprep.subr.mxu0 0.0
    %4551 = vmatpush1.msra.mxu0 0.0
    %4552 = vmatprep.subr.mxu0 0.0
    %4553 = vmatpush1.msra.mxu0 0.0
    %4554 = vmatprep.subr.mxu0 0.0
    %4555 = vmatpush1.msra.mxu0 0.0
    %4556 = vmatprep.subr.mxu0 0.0
    %4557 = vmatpush1.msra.mxu0 0.0
    %4558 = vmatprep.subr.mxu0 0.0
    %4559 = vmatpush1.msra.mxu0 0.0
    %4560 = vmatprep.subr.mxu0 0.0
    %4561 = vmatpush1.msra.mxu0 0.0
    %4562 = vmatprep.subr.mxu0 0.0
    %4563 = vmatpush1.msra.mxu0 0.0
    %4564 = vmatprep.subr.mxu0 0.0
    %4565 = vmatpush1.msra.mxu0 0.0
    %4566 = vmatprep.subr.mxu0 0.0
    %4567 = vmatpush1.msra.mxu0 0.0
    %4568 = vmatprep.subr.mxu0 0.0
    %4569 = vmatpush1.msra.mxu0 0.0
    %4570 = vmatprep.subr.mxu0 0.0
    %4571 = vmatpush1.msra.mxu0 0.0
    %4572 = vmatprep.subr.mxu0 0.0
    %4573 = vmatpush1.msra.mxu0 0.0
    %4574 = vmatprep.subr.mxu0 0.0
    %4575 = vmatpush1.msra.mxu0 0.0
    %4576 = vmatprep.subr.mxu0 0.0
    %4577 = vmatpush1.msra.mxu0 0.0
    %4578 = vmatprep.subr.mxu0 0.0
    %4579 = vmatpush1.msra.mxu0 0.0
    %4580 = vmatprep.subr.mxu0 0.0
    %4581 = vmatpush1.msra.mxu0 0.0
    %4582 = vmatprep.mubr.f32.mxu0 0.0
    %4583 = vmatmul.mubr.f32.gmra.mrb[0].mxu0 %v4516
    %v4584 = vpop.f32.mrb[0].mxu0
    %v4585 = vadd.f32 0.0, %v4584
    %v4586 = vpop.f32.mrb[0].mxu0
    %4587 = vdwg.mxu0
    %s4588 = scalar_lea.vmem %s13, 80
    %v4589 = vld [vmem:[%s4588] sm:$0xff]
    %v4590 = vld [vmem:[%s4588 + $0x8] sm:$0xff]
    %v4592 = vsel %vm550, %v4512, 0
    %v4595 = vsel %vm550, %v4585, 0
    %4597 = vmatprep.subr.mxu0 0.0
    %4598 = vmatpush1.msra.mxu0 %v4589
    %4599 = vmatprep.subr.mxu0 0.0
    %4600 = vmatpush1.msra.mxu0 %v4590
    %4601 = vmatprep.subr.mxu0 0.0
    %4602 = vmatpush1.msra.mxu0 0.0
    %4603 = vmatprep.subr.mxu0 0.0
    %4604 = vmatpush1.msra.mxu0 0.0
    %4605 = vmatprep.subr.mxu0 0.0
    %4606 = vmatpush1.msra.mxu0 0.0
    %4607 = vmatprep.subr.mxu0 0.0
    %4608 = vmatpush1.msra.mxu0 0.0
    %4609 = vmatprep.subr.mxu0 0.0
    %4610 = vmatpush1.msra.mxu0 0.0
    %4611 = vmatprep.subr.mxu0 0.0
    %4612 = vmatpush1.msra.mxu0 0.0
    %4613 = vmatprep.subr.mxu0 0.0
    %4614 = vmatpush1.msra.mxu0 0.0
    %4615 = vmatprep.subr.mxu0 0.0
    %4616 = vmatpush1.msra.mxu0 0.0
    %4617 = vmatprep.subr.mxu0 0.0
    %4618 = vmatpush1.msra.mxu0 0.0
    %4619 = vmatprep.subr.mxu0 0.0
    %4620 = vmatpush1.msra.mxu0 0.0
    %4621 = vmatprep.subr.mxu0 0.0
    %4622 = vmatpush1.msra.mxu0 0.0
    %4623 = vmatprep.subr.mxu0 0.0
    %4624 = vmatpush1.msra.mxu0 0.0
    %4625 = vmatprep.subr.mxu0 0.0
    %4626 = vmatpush1.msra.mxu0 0.0
    %4627 = vmatprep.subr.mxu0 0.0
    %4628 = vmatpush1.msra.mxu0 0.0
    %4629 = vmatprep.subr.mxu0 0.0
    %4630 = vmatpush1.msra.mxu0 0.0
    %4631 = vmatprep.subr.mxu0 0.0
    %4632 = vmatpush1.msra.mxu0 0.0
    %4633 = vmatprep.subr.mxu0 0.0
    %4634 = vmatpush1.msra.mxu0 0.0
    %4635 = vmatprep.subr.mxu0 0.0
    %4636 = vmatpush1.msra.mxu0 0.0
    %4637 = vmatprep.subr.mxu0 0.0
    %4638 = vmatpush1.msra.mxu0 0.0
    %4639 = vmatprep.subr.mxu0 0.0
    %4640 = vmatpush1.msra.mxu0 0.0
    %4641 = vmatprep.subr.mxu0 0.0
    %4642 = vmatpush1.msra.mxu0 0.0
    %4643 = vmatprep.subr.mxu0 0.0
    %4644 = vmatpush1.msra.mxu0 0.0
    %4645 = vmatprep.subr.mxu0 0.0
    %4646 = vmatpush1.msra.mxu0 0.0
    %4647 = vmatprep.subr.mxu0 0.0
    %4648 = vmatpush1.msra.mxu0 0.0
    %4649 = vmatprep.subr.mxu0 0.0
    %4650 = vmatpush1.msra.mxu0 0.0
    %4651 = vmatprep.subr.mxu0 0.0
    %4652 = vmatpush1.msra.mxu0 0.0
    %4653 = vmatprep.subr.mxu0 0.0
    %4654 = vmatpush1.msra.mxu0 0.0
    %4655 = vmatprep.subr.mxu0 0.0
    %4656 = vmatpush1.msra.mxu0 0.0
    %4657 = vmatprep.subr.mxu0 0.0
    %4658 = vmatpush1.msra.mxu0 0.0
    %4659 = vmatprep.subr.mxu0 0.0
    %4660 = vmatpush1.msra.mxu0 0.0
    %4661 = vmatprep.mubr.f32.mxu0 0.0
    %4662 = vmatmul.mubr.f32.gmra.mrb[0].mxu0 %v4592
    %v4663 = vpop.f32.mrb[0].mxu0
    %v4664 = vadd.f32 0.0, %v4663
    %v4665 = vpop.f32.mrb[0].mxu0
    %4666 = vmatprep.mubr.f32.mxu0 0.0
    %4667 = vmatmul.mubr.f32.gmra.mrb[0].mxu0 %v4595
    %v4668 = vpop.f32.mrb[0].mxu0
    %v4669 = vadd.f32 0.0, %v4668
    %v4670 = vpop.f32.mrb[0].mxu0
    %4671 = vdwg.mxu0
    %v4673 = vsel %vm550, %v3909, 0
    %v4676 = vsel %vm550, %v3982, 0
    %4678 = vmatprep.subr.mxu0 0.0
    %4679 = vmatpush1.msra.mxu0 %v3986
    %4680 = vmatprep.subr.mxu0 0.0
    %4681 = vmatpush1.msra.mxu0 %v3987
    %4682 = vmatprep.subr.mxu0 0.0
    %4683 = vmatpush1.msra.mxu0 0.0
    %4684 = vmatprep.subr.mxu0 0.0
    %4685 = vmatpush1.msra.mxu0 0.0
    %4686 = vmatprep.subr.mxu0 0.0
    %4687 = vmatpush1.msra.mxu0 0.0
    %4688 = vmatprep.subr.mxu0 0.0
    %4689 = vmatpush1.msra.mxu0 0.0
    %4690 = vmatprep.subr.mxu0 0.0
    %4691 = vmatpush1.msra.mxu0 0.0
    %4692 = vmatprep.subr.mxu0 0.0
    %4693 = vmatpush1.msra.mxu0 0.0
    %4694 = vmatprep.subr.mxu0 0.0
    %4695 = vmatpush1.msra.mxu0 0.0
    %4696 = vmatprep.subr.mxu0 0.0
    %4697 = vmatpush1.msra.mxu0 0.0
    %4698 = vmatprep.subr.mxu0 0.0
    %4699 = vmatpush1.msra.mxu0 0.0
    %4700 = vmatprep.subr.mxu0 0.0
    %4701 = vmatpush1.msra.mxu0 0.0
    %4702 = vmatprep.subr.mxu0 0.0
    %4703 = vmatpush1.msra.mxu0 0.0
    %4704 = vmatprep.subr.mxu0 0.0
    %4705 = vmatpush1.msra.mxu0 0.0
    %4706 = vmatprep.subr.mxu0 0.0
    %4707 = vmatpush1.msra.mxu0 0.0
    %4708 = vmatprep.subr.mxu0 0.0
    %4709 = vmatpush1.msra.mxu0 0.0
    %4710 = vmatprep.subr.mxu0 0.0
    %4711 = vmatpush1.msra.mxu0 0.0
    %4712 = vmatprep.subr.mxu0 0.0
    %4713 = vmatpush1.msra.mxu0 0.0
    %4714 = vmatprep.subr.mxu0 0.0
    %4715 = vmatpush1.msra.mxu0 0.0
    %4716 = vmatprep.subr.mxu0 0.0
    %4717 = vmatpush1.msra.mxu0 0.0
    %4718 = vmatprep.subr.mxu0 0.0
    %4719 = vmatpush1.msra.mxu0 0.0
    %4720 = vmatprep.subr.mxu0 0.0
    %4721 = vmatpush1.msra.mxu0 0.0
    %4722 = vmatprep.subr.mxu0 0.0
    %4723 = vmatpush1.msra.mxu0 0.0
    %4724 = vmatprep.subr.mxu0 0.0
    %4725 = vmatpush1.msra.mxu0 0.0
    %4726 = vmatprep.subr.mxu0 0.0
    %4727 = vmatpush1.msra.mxu0 0.0
    %4728 = vmatprep.subr.mxu0 0.0
    %4729 = vmatpush1.msra.mxu0 0.0
    %4730 = vmatprep.subr.mxu0 0.0
    %4731 = vmatpush1.msra.mxu0 0.0
    %4732 = vmatprep.subr.mxu0 0.0
    %4733 = vmatpush1.msra.mxu0 0.0
    %4734 = vmatprep.subr.mxu0 0.0
    %4735 = vmatpush1.msra.mxu0 0.0
    %4736 = vmatprep.subr.mxu0 0.0
    %4737 = vmatpush1.msra.mxu0 0.0
    %4738 = vmatprep.subr.mxu0 0.0
    %4739 = vmatpush1.msra.mxu0 0.0
    %4740 = vmatprep.subr.mxu0 0.0
    %4741 = vmatpush1.msra.mxu0 0.0
    %4742 = vmatprep.mubr.f32.mxu0 0.0
    %4743 = vmatmul.mubr.f32.gmra.mrb[0].mxu0 %v4673
    %v4744 = vpop.f32.mrb[0].mxu0
    %v4745 = vadd.f32 %v4664, %v4744
    %v4746 = vpop.f32.mrb[0].mxu0
    %4747 = vmatprep.mubr.f32.mxu0 0.0
    %4748 = vmatmul.mubr.f32.gmra.mrb[0].mxu0 %v4676
    %v4749 = vpop.f32.mrb[0].mxu0
    %v4750 = vadd.f32 %v4669, %v4749
    %v4751 = vpop.f32.mrb[0].mxu0
    %4752 = vdwg.mxu0
    %s4753 = scalar_lea.vmem %s7, 384
    %v4754 = vld [vmem:[%s4753] sm:$0xff]
    %v4755 = vld [vmem:[%s4753 + $0x8] sm:$0xff]
    %v4756 = vld [vmem:[%s4753 + $0x10] sm:$0xff]
    %v4757 = vld [vmem:[%s4753 + $0x18] sm:$0xff]
    %v4758 = vld [vmem:[%s4753 + $0x20] sm:$0xff]
    %v4759 = vld [vmem:[%s4753 + $0x28] sm:$0xff]
    %v4760 = vld [vmem:[%s4753 + $0x30] sm:$0xff]
    %v4761 = vld [vmem:[%s4753 + $0x38] sm:$0xff]
    %s4762 = scalar_lea.vmem %s8, 6
    %v4763 = vld [vmem:[%s4762] sm:$0x1]
    %v4765 = vlaneseq
    %v4766 = vshrl.u32 %v4765, 7
    %v4767 = vsub.s32 0, %v4766
    %v4768 = vrot.slane %v4763, %v4767
    %4770 = vmatprep.subr.mxu0 0.0
    %4771 = vmatpush1.msra.mxu0 %v4754
    %4772 = vmatprep.subr.mxu0 0.0
    %4773 = vmatpush1.msra.mxu0 %v4755
    %4774 = vmatprep.subr.mxu0 0.0
    %4775 = vmatpush1.msra.mxu0 %v4756
    %4776 = vmatprep.subr.mxu0 0.0
    %4777 = vmatpush1.msra.mxu0 %v4757
    %4778 = vmatprep.subr.mxu0 0.0
    %4779 = vmatpush1.msra.mxu0 %v4758
    %4780 = vmatprep.subr.mxu0 0.0
    %4781 = vmatpush1.msra.mxu0 %v4759
    %4782 = vmatprep.subr.mxu0 0.0
    %4783 = vmatpush1.msra.mxu0 %v4760
    %4784 = vmatprep.subr.mxu0 0.0
    %4785 = vmatpush1.msra.mxu0 %v4761
    %4786 = vmatprep.subr.mxu0 0.0
    %4787 = vmatpush1.msra.mxu0 0.0
    %4788 = vmatprep.subr.mxu0 0.0
    %4789 = vmatpush1.msra.mxu0 0.0
    %4790 = vmatprep.subr.mxu0 0.0
    %4791 = vmatpush1.msra.mxu0 0.0
    %4792 = vmatprep.subr.mxu0 0.0
    %4793 = vmatpush1.msra.mxu0 0.0
    %4794 = vmatprep.subr.mxu0 0.0
    %4795 = vmatpush1.msra.mxu0 0.0
    %4796 = vmatprep.subr.mxu0 0.0
    %4797 = vmatpush1.msra.mxu0 0.0
    %4798 = vmatprep.subr.mxu0 0.0
    %4799 = vmatpush1.msra.mxu0 0.0
    %4800 = vmatprep.subr.mxu0 0.0
    %4801 = vmatpush1.msra.mxu0 0.0
    %4802 = vmatprep.subr.mxu0 0.0
    %4803 = vmatpush1.msra.mxu0 0.0
    %4804 = vmatprep.subr.mxu0 0.0
    %4805 = vmatpush1.msra.mxu0 0.0
    %4806 = vmatprep.subr.mxu0 0.0
    %4807 = vmatpush1.msra.mxu0 0.0
    %4808 = vmatprep.subr.mxu0 0.0
    %4809 = vmatpush1.msra.mxu0 0.0
    %4810 = vmatprep.subr.mxu0 0.0
    %4811 = vmatpush1.msra.mxu0 0.0
    %4812 = vmatprep.subr.mxu0 0.0
    %4813 = vmatpush1.msra.mxu0 0.0
    %4814 = vmatprep.subr.mxu0 0.0
    %4815 = vmatpush1.msra.mxu0 0.0
    %4816 = vmatprep.subr.mxu0 0.0
    %4817 = vmatpush1.msra.mxu0 0.0
    %4818 = vmatprep.subr.mxu0 0.0
    %4819 = vmatpush1.msra.mxu0 0.0
    %4820 = vmatprep.subr.mxu0 0.0
    %4821 = vmatpush1.msra.mxu0 0.0
    %4822 = vmatprep.subr.mxu0 0.0
    %4823 = vmatpush1.msra.mxu0 0.0
    %4824 = vmatprep.subr.mxu0 0.0
    %4825 = vmatpush1.msra.mxu0 0.0
    %4826 = vmatprep.subr.mxu0 0.0
    %4827 = vmatpush1.msra.mxu0 0.0
    %4828 = vmatprep.subr.mxu0 0.0
    %4829 = vmatpush1.msra.mxu0 0.0
    %4830 = vmatprep.subr.mxu0 0.0
    %4831 = vmatpush1.msra.mxu0 0.0
    %4832 = vmatprep.subr.mxu0 0.0
    %4833 = vmatpush1.msra.mxu0 0.0
    %4834 = vmatprep.mubr.f32.mxu0 0.0
    %4835 = vmatmul.mubr.f32.gmra.mrb[0].mxu0 %v3397
    %v4836 = vpop.f32.mrb[0].mxu0
    %v4837 = vadd.f32 %v4768, %v4836
    %v4838 = vpop.f32.mrb[0].mxu0
    %4839 = vmatprep.mubr.f32.mxu0 0.0
    %4840 = vmatmul.mubr.f32.gmra.mrb[0].mxu0 %v3400
    %v4841 = vpop.f32.mrb[0].mxu0
    %v4842 = vadd.f32 %v4768, %v4841
    %v4843 = vpop.f32.mrb[0].mxu0
    %4844 = vdwg.mxu0
    %s4845 = scalar_lea.vmem %s9, 384
    %v4846 = vld [vmem:[%s4845] sm:$0xff]
    %v4847 = vld [vmem:[%s4845 + $0x8] sm:$0xff]
    %v4848 = vld [vmem:[%s4845 + $0x10] sm:$0xff]
    %v4849 = vld [vmem:[%s4845 + $0x18] sm:$0xff]
    %v4850 = vld [vmem:[%s4845 + $0x20] sm:$0xff]
    %v4851 = vld [vmem:[%s4845 + $0x28] sm:$0xff]
    %v4852 = vld [vmem:[%s4845 + $0x30] sm:$0xff]
    %v4853 = vld [vmem:[%s4845 + $0x38] sm:$0xff]
    %s4854 = scalar_lea.vmem %s10, 6
    %v4855 = vld [vmem:[%s4854] sm:$0x1]
    %v4857 = vlaneseq
    %v4858 = vshrl.u32 %v4857, 7
    %v4859 = vsub.s32 0, %v4858
    %v4860 = vrot.slane %v4855, %v4859
    %4862 = vmatprep.subr.mxu0 0.0
    %4863 = vmatpush1.msra.mxu0 %v4846
    %4864 = vmatprep.subr.mxu0 0.0
    %4865 = vmatpush1.msra.mxu0 %v4847
    %4866 = vmatprep.subr.mxu0 0.0
    %4867 = vmatpush1.msra.mxu0 %v4848
    %4868 = vmatprep.subr.mxu0 0.0
    %4869 = vmatpush1.msra.mxu0 %v4849
    %4870 = vmatprep.subr.mxu0 0.0
    %4871 = vmatpush1.msra.mxu0 %v4850
    %4872 = vmatprep.subr.mxu0 0.0
    %4873 = vmatpush1.msra.mxu0 %v4851
    %4874 = vmatprep.subr.mxu0 0.0
    %4875 = vmatpush1.msra.mxu0 %v4852
    %4876 = vmatprep.subr.mxu0 0.0
    %4877 = vmatpush1.msra.mxu0 %v4853
    %4878 = vmatprep.subr.mxu0 0.0
    %4879 = vmatpush1.msra.mxu0 0.0
    %4880 = vmatprep.subr.mxu0 0.0
    %4881 = vmatpush1.msra.mxu0 0.0
    %4882 = vmatprep.subr.mxu0 0.0
    %4883 = vmatpush1.msra.mxu0 0.0
    %4884 = vmatprep.subr.mxu0 0.0
    %4885 = vmatpush1.msra.mxu0 0.0
    %4886 = vmatprep.subr.mxu0 0.0
    %4887 = vmatpush1.msra.mxu0 0.0
    %4888 = vmatprep.subr.mxu0 0.0
    %4889 = vmatpush1.msra.mxu0 0.0
    %4890 = vmatprep.subr.mxu0 0.0
    %4891 = vmatpush1.msra.mxu0 0.0
    %4892 = vmatprep.subr.mxu0 0.0
    %4893 = vmatpush1.msra.mxu0 0.0
    %4894 = vmatprep.subr.mxu0 0.0
    %4895 = vmatpush1.msra.mxu0 0.0
    %4896 = vmatprep.subr.mxu0 0.0
    %4897 = vmatpush1.msra.mxu0 0.0
    %4898 = vmatprep.subr.mxu0 0.0
    %4899 = vmatpush1.msra.mxu0 0.0
    %4900 = vmatprep.subr.mxu0 0.0
    %4901 = vmatpush1.msra.mxu0 0.0
    %4902 = vmatprep.subr.mxu0 0.0
    %4903 = vmatpush1.msra.mxu0 0.0
    %4904 = vmatprep.subr.mxu0 0.0
    %4905 = vmatpush1.msra.mxu0 0.0
    %4906 = vmatprep.subr.mxu0 0.0
    %4907 = vmatpush1.msra.mxu0 0.0
    %4908 = vmatprep.subr.mxu0 0.0
    %4909 = vmatpush1.msra.mxu0 0.0
    %4910 = vmatprep.subr.mxu0 0.0
    %4911 = vmatpush1.msra.mxu0 0.0
    %4912 = vmatprep.subr.mxu0 0.0
    %4913 = vmatpush1.msra.mxu0 0.0
    %4914 = vmatprep.subr.mxu0 0.0
    %4915 = vmatpush1.msra.mxu0 0.0
    %4916 = vmatprep.subr.mxu0 0.0
    %4917 = vmatpush1.msra.mxu0 0.0
    %4918 = vmatprep.subr.mxu0 0.0
    %4919 = vmatpush1.msra.mxu0 0.0
    %4920 = vmatprep.subr.mxu0 0.0
    %4921 = vmatpush1.msra.mxu0 0.0
    %4922 = vmatprep.subr.mxu0 0.0
    %4923 = vmatpush1.msra.mxu0 0.0
    %4924 = vmatprep.subr.mxu0 0.0
    %4925 = vmatpush1.msra.mxu0 0.0
    %4926 = vmatprep.mubr.f32.mxu0 0.0
    %4927 = vmatmul.mubr.f32.gmra.mrb[0].mxu0 %v3397
    %v4928 = vpop.f32.mrb[0].mxu0
    %v4929 = vadd.f32 %v4860, %v4928
    %v4930 = vpop.f32.mrb[0].mxu0
    %4931 = vmatprep.mubr.f32.mxu0 0.0
    %4932 = vmatmul.mubr.f32.gmra.mrb[0].mxu0 %v3400
    %v4933 = vpop.f32.mrb[0].mxu0
    %v4934 = vadd.f32 %v4860, %v4933
    %v4935 = vpop.f32.mrb[0].mxu0
    %4936 = vdwg.mxu0
    %s4937 = scalar_lea.vmem %s11, 384
    %v4938 = vld [vmem:[%s4937] sm:$0xff]
    %v4939 = vld [vmem:[%s4937 + $0x8] sm:$0xff]
    %v4940 = vld [vmem:[%s4937 + $0x10] sm:$0xff]
    %v4941 = vld [vmem:[%s4937 + $0x18] sm:$0xff]
    %v4942 = vld [vmem:[%s4937 + $0x20] sm:$0xff]
    %v4943 = vld [vmem:[%s4937 + $0x28] sm:$0xff]
    %v4944 = vld [vmem:[%s4937 + $0x30] sm:$0xff]
    %v4945 = vld [vmem:[%s4937 + $0x38] sm:$0xff]
    %s4946 = scalar_lea.vmem %s12, 6
    %v4947 = vld [vmem:[%s4946] sm:$0x1]
    %v4949 = vlaneseq
    %v4950 = vshrl.u32 %v4949, 7
    %v4951 = vsub.s32 0, %v4950
    %v4952 = vrot.slane %v4947, %v4951
    %4954 = vmatprep.subr.mxu0 0.0
    %4955 = vmatpush1.msra.mxu0 %v4938
    %4956 = vmatprep.subr.mxu0 0.0
    %4957 = vmatpush1.msra.mxu0 %v4939
    %4958 = vmatprep.subr.mxu0 0.0
    %4959 = vmatpush1.msra.mxu0 %v4940
    %4960 = vmatprep.subr.mxu0 0.0
    %4961 = vmatpush1.msra.mxu0 %v4941
    %4962 = vmatprep.subr.mxu0 0.0
    %4963 = vmatpush1.msra.mxu0 %v4942
    %4964 = vmatprep.subr.mxu0 0.0
    %4965 = vmatpush1.msra.mxu0 %v4943
    %4966 = vmatprep.subr.mxu0 0.0
    %4967 = vmatpush1.msra.mxu0 %v4944
    %4968 = vmatprep.subr.mxu0 0.0
    %4969 = vmatpush1.msra.mxu0 %v4945
    %4970 = vmatprep.subr.mxu0 0.0
    %4971 = vmatpush1.msra.mxu0 0.0
    %4972 = vmatprep.subr.mxu0 0.0
    %4973 = vmatpush1.msra.mxu0 0.0
    %4974 = vmatprep.subr.mxu0 0.0
    %4975 = vmatpush1.msra.mxu0 0.0
    %4976 = vmatprep.subr.mxu0 0.0
    %4977 = vmatpush1.msra.mxu0 0.0
    %4978 = vmatprep.subr.mxu0 0.0
    %4979 = vmatpush1.msra.mxu0 0.0
    %4980 = vmatprep.subr.mxu0 0.0
    %4981 = vmatpush1.msra.mxu0 0.0
    %4982 = vmatprep.subr.mxu0 0.0
    %4983 = vmatpush1.msra.mxu0 0.0
    %4984 = vmatprep.subr.mxu0 0.0
    %4985 = vmatpush1.msra.mxu0 0.0
    %4986 = vmatprep.subr.mxu0 0.0
    %4987 = vmatpush1.msra.mxu0 0.0
    %4988 = vmatprep.subr.mxu0 0.0
    %4989 = vmatpush1.msra.mxu0 0.0
    %4990 = vmatprep.subr.mxu0 0.0
    %4991 = vmatpush1.msra.mxu0 0.0
    %4992 = vmatprep.subr.mxu0 0.0
    %4993 = vmatpush1.msra.mxu0 0.0
    %4994 = vmatprep.subr.mxu0 0.0
    %4995 = vmatpush1.msra.mxu0 0.0
    %4996 = vmatprep.subr.mxu0 0.0
    %4997 = vmatpush1.msra.mxu0 0.0
    %4998 = vmatprep.subr.mxu0 0.0
    %4999 = vmatpush1.msra.mxu0 0.0
    %5000 = vmatprep.subr.mxu0 0.0
    %5001 = vmatpush1.msra.mxu0 0.0
    %5002 = vmatprep.subr.mxu0 0.0
    %5003 = vmatpush1.msra.mxu0 0.0
    %5004 = vmatprep.subr.mxu0 0.0
    %5005 = vmatpush1.msra.mxu0 0.0
    %5006 = vmatprep.subr.mxu0 0.0
    %5007 = vmatpush1.msra.mxu0 0.0
    %5008 = vmatprep.subr.mxu0 0.0
    %5009 = vmatpush1.msra.mxu0 0.0
    %5010 = vmatprep.subr.mxu0 0.0
    %5011 = vmatpush1.msra.mxu0 0.0
    %5012 = vmatprep.subr.mxu0 0.0
    %5013 = vmatpush1.msra.mxu0 0.0
    %5014 = vmatprep.subr.mxu0 0.0
    %5015 = vmatpush1.msra.mxu0 0.0
    %5016 = vmatprep.subr.mxu0 0.0
    %5017 = vmatpush1.msra.mxu0 0.0
    %5018 = vmatprep.mubr.f32.mxu0 0.0
    %5019 = vmatmul.mubr.f32.gmra.mrb[0].mxu0 %v3397
    %v5020 = vpop.f32.mrb[0].mxu0
    %v5021 = vadd.f32 %v4952, %v5020
    %v5022 = vpop.f32.mrb[0].mxu0
    %5023 = vmatprep.mubr.f32.mxu0 0.0
    %5024 = vmatmul.mubr.f32.gmra.mrb[0].mxu0 %v3400
    %v5025 = vpop.f32.mrb[0].mxu0
    %v5026 = vadd.f32 %v4952, %v5025
    %v5027 = vpop.f32.mrb[0].mxu0
    %5028 = vdwg.mxu0
    %v5030 = vsel %vm550, %v4837, 0
    %v5033 = vsel %vm550, %v4929, 0
    %5035 = vmatprep.subr.mxu0 0.0
    %5036 = vmatpush1.xpose.msra.mxu0 %v5033
    %5037 = vmatprep.subr.mxu0 0.0
    %5038 = vmatpush1.xpose.msra.mxu0 0.0
    %5039 = vmatprep.subr.mxu0 0.0
    %5040 = vmatpush1.xpose.msra.mxu0 0.0
    %5041 = vmatprep.subr.mxu0 0.0
    %5042 = vmatpush1.xpose.msra.mxu0 0.0
    %5043 = vmatprep.subr.mxu0 0.0
    %5044 = vmatpush1.xpose.msra.mxu0 0.0
    %5045 = vmatprep.subr.mxu0 0.0
    %5046 = vmatpush1.xpose.msra.mxu0 0.0
    %5047 = vmatprep.subr.mxu0 0.0
    %5048 = vmatpush1.xpose.msra.mxu0 0.0
    %5049 = vmatprep.subr.mxu0 0.0
    %5050 = vmatpush1.xpose.msra.mxu0 0.0
    %5051 = vmatprep.subr.mxu0 0.0
    %5052 = vmatpush1.xpose.msra.mxu0 0.0
    %5053 = vmatprep.subr.mxu0 0.0
    %5054 = vmatpush1.xpose.msra.mxu0 0.0
    %5055 = vmatprep.subr.mxu0 0.0
    %5056 = vmatpush1.xpose.msra.mxu0 0.0
    %5057 = vmatprep.subr.mxu0 0.0
    %5058 = vmatpush1.xpose.msra.mxu0 0.0
    %5059 = vmatprep.subr.mxu0 0.0
    %5060 = vmatpush1.xpose.msra.mxu0 0.0
    %5061 = vmatprep.subr.mxu0 0.0
    %5062 = vmatpush1.xpose.msra.mxu0 0.0
    %5063 = vmatprep.subr.mxu0 0.0
    %5064 = vmatpush1.xpose.msra.mxu0 0.0
    %5065 = vmatprep.subr.mxu0 0.0
    %5066 = vmatpush1.xpose.msra.mxu0 0.0
    %5067 = vmatprep.subr.mxu0 0.0
    %5068 = vmatpush1.xpose.msra.mxu0 0.0
    %5069 = vmatprep.subr.mxu0 0.0
    %5070 = vmatpush1.xpose.msra.mxu0 0.0
    %5071 = vmatprep.subr.mxu0 0.0
    %5072 = vmatpush1.xpose.msra.mxu0 0.0
    %5073 = vmatprep.subr.mxu0 0.0
    %5074 = vmatpush1.xpose.msra.mxu0 0.0
    %5075 = vmatprep.subr.mxu0 0.0
    %5076 = vmatpush1.xpose.msra.mxu0 0.0
    %5077 = vmatprep.subr.mxu0 0.0
    %5078 = vmatpush1.xpose.msra.mxu0 0.0
    %5079 = vmatprep.subr.mxu0 0.0
    %5080 = vmatpush1.xpose.msra.mxu0 0.0
    %5081 = vmatprep.subr.mxu0 0.0
    %5082 = vmatpush1.xpose.msra.mxu0 0.0
    %5083 = vmatprep.subr.mxu0 0.0
    %5084 = vmatpush1.xpose.msra.mxu0 0.0
    %5085 = vmatprep.subr.mxu0 0.0
    %5086 = vmatpush1.xpose.msra.mxu0 0.0
    %5087 = vmatprep.subr.mxu0 0.0
    %5088 = vmatpush1.xpose.msra.mxu0 0.0
    %5089 = vmatprep.subr.mxu0 0.0
    %5090 = vmatpush1.xpose.msra.mxu0 0.0
    %5091 = vmatprep.subr.mxu0 0.0
    %5092 = vmatpush1.xpose.msra.mxu0 0.0
    %5093 = vmatprep.subr.mxu0 0.0
    %5094 = vmatpush1.xpose.msra.mxu0 0.0
    %5095 = vmatprep.subr.mxu0 0.0
    %5096 = vmatpush1.xpose.msra.mxu0 0.0
    %5097 = vmatprep.subr.mxu0 0.0
    %5098 = vmatpush1.xpose.msra.mxu0 0.0
    %5099 = vmatprep.mubr.f32.mxu0 0.0
    %5100 = vmatmul.mubr.f32.gmra.mrb[0].mxu0 %v5030
    %v5101 = vpop.f32.mrb[0].mxu0
    %v5102 = vadd.f32 0.0, %v5101
    %v5103 = vpop.f32.mrb[0].mxu0
    %5104 = vdwg.mxu0
    %v5106 = vsel %vm550, %v4842, 0
    %v5109 = vsel %vm550, %v4934, 0
    %5111 = vmatprep.subr.mxu0 0.0
    %5112 = vmatpush1.xpose.msra.mxu0 %v5109
    %5113 = vmatprep.subr.mxu0 0.0
    %5114 = vmatpush1.xpose.msra.mxu0 0.0
    %5115 = vmatprep.subr.mxu0 0.0
    %5116 = vmatpush1.xpose.msra.mxu0 0.0
    %5117 = vmatprep.subr.mxu0 0.0
    %5118 = vmatpush1.xpose.msra.mxu0 0.0
    %5119 = vmatprep.subr.mxu0 0.0
    %5120 = vmatpush1.xpose.msra.mxu0 0.0
    %5121 = vmatprep.subr.mxu0 0.0
    %5122 = vmatpush1.xpose.msra.mxu0 0.0
    %5123 = vmatprep.subr.mxu0 0.0
    %5124 = vmatpush1.xpose.msra.mxu0 0.0
    %5125 = vmatprep.subr.mxu0 0.0
    %5126 = vmatpush1.xpose.msra.mxu0 0.0
    %5127 = vmatprep.subr.mxu0 0.0
    %5128 = vmatpush1.xpose.msra.mxu0 0.0
    %5129 = vmatprep.subr.mxu0 0.0
    %5130 = vmatpush1.xpose.msra.mxu0 0.0
    %5131 = vmatprep.subr.mxu0 0.0
    %5132 = vmatpush1.xpose.msra.mxu0 0.0
    %5133 = vmatprep.subr.mxu0 0.0
    %5134 = vmatpush1.xpose.msra.mxu0 0.0
    %5135 = vmatprep.subr.mxu0 0.0
    %5136 = vmatpush1.xpose.msra.mxu0 0.0
    %5137 = vmatprep.subr.mxu0 0.0
    %5138 = vmatpush1.xpose.msra.mxu0 0.0
    %5139 = vmatprep.subr.mxu0 0.0
    %5140 = vmatpush1.xpose.msra.mxu0 0.0
    %5141 = vmatprep.subr.mxu0 0.0
    %5142 = vmatpush1.xpose.msra.mxu0 0.0
    %5143 = vmatprep.subr.mxu0 0.0
    %5144 = vmatpush1.xpose.msra.mxu0 0.0
    %5145 = vmatprep.subr.mxu0 0.0
    %5146 = vmatpush1.xpose.msra.mxu0 0.0
    %5147 = vmatprep.subr.mxu0 0.0
    %5148 = vmatpush1.xpose.msra.mxu0 0.0
    %5149 = vmatprep.subr.mxu0 0.0
    %5150 = vmatpush1.xpose.msra.mxu0 0.0
    %5151 = vmatprep.subr.mxu0 0.0
    %5152 = vmatpush1.xpose.msra.mxu0 0.0
    %5153 = vmatprep.subr.mxu0 0.0
    %5154 = vmatpush1.xpose.msra.mxu0 0.0
    %5155 = vmatprep.subr.mxu0 0.0
    %5156 = vmatpush1.xpose.msra.mxu0 0.0
    %5157 = vmatprep.subr.mxu0 0.0
    %5158 = vmatpush1.xpose.msra.mxu0 0.0
    %5159 = vmatprep.subr.mxu0 0.0
    %5160 = vmatpush1.xpose.msra.mxu0 0.0
    %5161 = vmatprep.subr.mxu0 0.0
    %5162 = vmatpush1.xpose.msra.mxu0 0.0
    %5163 = vmatprep.subr.mxu0 0.0
    %5164 = vmatpush1.xpose.msra.mxu0 0.0
    %5165 = vmatprep.subr.mxu0 0.0
    %5166 = vmatpush1.xpose.msra.mxu0 0.0
    %5167 = vmatprep.subr.mxu0 0.0
    %5168 = vmatpush1.xpose.msra.mxu0 0.0
    %5169 = vmatprep.subr.mxu0 0.0
    %5170 = vmatpush1.xpose.msra.mxu0 0.0
    %5171 = vmatprep.subr.mxu0 0.0
    %5172 = vmatpush1.xpose.msra.mxu0 0.0
    %5173 = vmatprep.subr.mxu0 0.0
    %5174 = vmatpush1.xpose.msra.mxu0 0.0
    %5175 = vmatprep.mubr.f32.mxu0 0.0
    %5176 = vmatmul.mubr.f32.gmra.mrb[0].mxu0 %v5106
    %v5177 = vpop.f32.mrb[0].mxu0
    %v5178 = vadd.f32 0.0, %v5177
    %v5179 = vpop.f32.mrb[0].mxu0
    %5180 = vdwg.mxu0
    %v5181 = vmul.f32 %v5102, 0.25
    %v5182 = vmul.f32 %v5178, 0.25
    %v5183 = vadd.f32 %v5181, %v229
    %v5184 = vadd.f32 %v5182, %v229
    %v5185 = vsel %vm707, %v5183, -inf
    %5186 = vmax.xlane.f32.xlu0 %v5185
    %v5187 = vpop.xlane.xlu0 %5186
    %v5188 = vsel %vm707, %v5184, -inf
    %5189 = vmax.xlane.f32.xlu0 %v5188
    %v5190 = vpop.xlane.xlu0 %5189
    %v5191 = vsub.f32 %v5183, %v5187
    %v5192 = vsub.f32 %v5184, %v5190
    %v5193 = vmul.f32 %v5191, 1.442695
    %v5194 = vpow.pop %v5193
    %v5195 = vmul.f32 %v5192, 1.442695
    %v5196 = vpow.pop %v5195
    %v5197 = vsel %vm707, %v5194, 0.0
    %5198 = vadd.xlane.f32.xlu0 %v5197
    %v5199 = vpop.xlane.xlu0 %5198
    %v5200 = vsel %vm707, %v5196, 0.0
    %5201 = vadd.xlane.f32.xlu0 %v5200
    %v5202 = vpop.xlane.xlu0 %5201
    %v5203 = vrcp.pop %v5199
    %v5204 = vmul.f32 %v5194, %v5203
    %v5205 = vrcp.pop %v5202
    %v5206 = vmul.f32 %v5196, %v5205
    %v5208 = vsel %vm707, %v5204, 0
    %5210 = vmatprep.subr.mxu0 0.0
    %5211 = vmatpush1.msra.mxu0 %v5021
    %5212 = vmatprep.subr.mxu0 0.0
    %5213 = vmatpush1.msra.mxu0 0.0
    %5214 = vmatprep.subr.mxu0 0.0
    %5215 = vmatpush1.msra.mxu0 0.0
    %5216 = vmatprep.subr.mxu0 0.0
    %5217 = vmatpush1.msra.mxu0 0.0
    %5218 = vmatprep.subr.mxu0 0.0
    %5219 = vmatpush1.msra.mxu0 0.0
    %5220 = vmatprep.subr.mxu0 0.0
    %5221 = vmatpush1.msra.mxu0 0.0
    %5222 = vmatprep.subr.mxu0 0.0
    %5223 = vmatpush1.msra.mxu0 0.0
    %5224 = vmatprep.subr.mxu0 0.0
    %5225 = vmatpush1.msra.mxu0 0.0
    %5226 = vmatprep.subr.mxu0 0.0
    %5227 = vmatpush1.msra.mxu0 0.0
    %5228 = vmatprep.subr.mxu0 0.0
    %5229 = vmatpush1.msra.mxu0 0.0
    %5230 = vmatprep.subr.mxu0 0.0
    %5231 = vmatpush1.msra.mxu0 0.0
    %5232 = vmatprep.subr.mxu0 0.0
    %5233 = vmatpush1.msra.mxu0 0.0
    %5234 = vmatprep.subr.mxu0 0.0
    %5235 = vmatpush1.msra.mxu0 0.0
    %5236 = vmatprep.subr.mxu0 0.0
    %5237 = vmatpush1.msra.mxu0 0.0
    %5238 = vmatprep.subr.mxu0 0.0
    %5239 = vmatpush1.msra.mxu0 0.0
    %5240 = vmatprep.subr.mxu0 0.0
    %5241 = vmatpush1.msra.mxu0 0.0
    %5242 = vmatprep.subr.mxu0 0.0
    %5243 = vmatpush1.msra.mxu0 0.0
    %5244 = vmatprep.subr.mxu0 0.0
    %5245 = vmatpush1.msra.mxu0 0.0
    %5246 = vmatprep.subr.mxu0 0.0
    %5247 = vmatpush1.msra.mxu0 0.0
    %5248 = vmatprep.subr.mxu0 0.0
    %5249 = vmatpush1.msra.mxu0 0.0
    %5250 = vmatprep.subr.mxu0 0.0
    %5251 = vmatpush1.msra.mxu0 0.0
    %5252 = vmatprep.subr.mxu0 0.0
    %5253 = vmatpush1.msra.mxu0 0.0
    %5254 = vmatprep.subr.mxu0 0.0
    %5255 = vmatpush1.msra.mxu0 0.0
    %5256 = vmatprep.subr.mxu0 0.0
    %5257 = vmatpush1.msra.mxu0 0.0
    %5258 = vmatprep.subr.mxu0 0.0
    %5259 = vmatpush1.msra.mxu0 0.0
    %5260 = vmatprep.subr.mxu0 0.0
    %5261 = vmatpush1.msra.mxu0 0.0
    %5262 = vmatprep.subr.mxu0 0.0
    %5263 = vmatpush1.msra.mxu0 0.0
    %5264 = vmatprep.subr.mxu0 0.0
    %5265 = vmatpush1.msra.mxu0 0.0
    %5266 = vmatprep.subr.mxu0 0.0
    %5267 = vmatpush1.msra.mxu0 0.0
    %5268 = vmatprep.subr.mxu0 0.0
    %5269 = vmatpush1.msra.mxu0 0.0
    %5270 = vmatprep.subr.mxu0 0.0
    %5271 = vmatpush1.msra.mxu0 0.0
    %5272 = vmatprep.subr.mxu0 0.0
    %5273 = vmatpush1.msra.mxu0 0.0
    %5274 = vmatprep.mubr.f32.mxu0 0.0
    %5275 = vmatmul.mubr.f32.gmra.mrb[0].mxu0 %v5208
    %v5276 = vpop.f32.mrb[0].mxu0
    %v5277 = vadd.f32 0.0, %v5276
    %v5278 = vpop.f32.mrb[0].mxu0
    %5279 = vdwg.mxu0
    %v5281 = vsel %vm707, %v5206, 0
    %5283 = vmatprep.subr.mxu0 0.0
    %5284 = vmatpush1.msra.mxu0 %v5026
    %5285 = vmatprep.subr.mxu0 0.0
    %5286 = vmatpush1.msra.mxu0 0.0
    %5287 = vmatprep.subr.mxu0 0.0
    %5288 = vmatpush1.msra.mxu0 0.0
    %5289 = vmatprep.subr.mxu0 0.0
    %5290 = vmatpush1.msra.mxu0 0.0
    %5291 = vmatprep.subr.mxu0 0.0
    %5292 = vmatpush1.msra.mxu0 0.0
    %5293 = vmatprep.subr.mxu0 0.0
    %5294 = vmatpush1.msra.mxu0 0.0
    %5295 = vmatprep.subr.mxu0 0.0
    %5296 = vmatpush1.msra.mxu0 0.0
    %5297 = vmatprep.subr.mxu0 0.0
    %5298 = vmatpush1.msra.mxu0 0.0
    %5299 = vmatprep.subr.mxu0 0.0
    %5300 = vmatpush1.msra.mxu0 0.0
    %5301 = vmatprep.subr.mxu0 0.0
    %5302 = vmatpush1.msra.mxu0 0.0
    %5303 = vmatprep.subr.mxu0 0.0
    %5304 = vmatpush1.msra.mxu0 0.0
    %5305 = vmatprep.subr.mxu0 0.0
    %5306 = vmatpush1.msra.mxu0 0.0
    %5307 = vmatprep.subr.mxu0 0.0
    %5308 = vmatpush1.msra.mxu0 0.0
    %5309 = vmatprep.subr.mxu0 0.0
    %5310 = vmatpush1.msra.mxu0 0.0
    %5311 = vmatprep.subr.mxu0 0.0
    %5312 = vmatpush1.msra.mxu0 0.0
    %5313 = vmatprep.subr.mxu0 0.0
    %5314 = vmatpush1.msra.mxu0 0.0
    %5315 = vmatprep.subr.mxu0 0.0
    %5316 = vmatpush1.msra.mxu0 0.0
    %5317 = vmatprep.subr.mxu0 0.0
    %5318 = vmatpush1.msra.mxu0 0.0
    %5319 = vmatprep.subr.mxu0 0.0
    %5320 = vmatpush1.msra.mxu0 0.0
    %5321 = vmatprep.subr.mxu0 0.0
    %5322 = vmatpush1.msra.mxu0 0.0
    %5323 = vmatprep.subr.mxu0 0.0
    %5324 = vmatpush1.msra.mxu0 0.0
    %5325 = vmatprep.subr.mxu0 0.0
    %5326 = vmatpush1.msra.mxu0 0.0
    %5327 = vmatprep.subr.mxu0 0.0
    %5328 = vmatpush1.msra.mxu0 0.0
    %5329 = vmatprep.subr.mxu0 0.0
    %5330 = vmatpush1.msra.mxu0 0.0
    %5331 = vmatprep.subr.mxu0 0.0
    %5332 = vmatpush1.msra.mxu0 0.0
    %5333 = vmatprep.subr.mxu0 0.0
    %5334 = vmatpush1.msra.mxu0 0.0
    %5335 = vmatprep.subr.mxu0 0.0
    %5336 = vmatpush1.msra.mxu0 0.0
    %5337 = vmatprep.subr.mxu0 0.0
    %5338 = vmatpush1.msra.mxu0 0.0
    %5339 = vmatprep.subr.mxu0 0.0
    %5340 = vmatpush1.msra.mxu0 0.0
    %5341 = vmatprep.subr.mxu0 0.0
    %5342 = vmatpush1.msra.mxu0 0.0
    %5343 = vmatprep.subr.mxu0 0.0
    %5344 = vmatpush1.msra.mxu0 0.0
    %5345 = vmatprep.subr.mxu0 0.0
    %5346 = vmatpush1.msra.mxu0 0.0
    %5347 = vmatprep.mubr.f32.mxu0 0.0
    %5348 = vmatmul.mubr.f32.gmra.mrb[0].mxu0 %v5281
    %v5349 = vpop.f32.mrb[0].mxu0
    %v5350 = vadd.f32 0.0, %v5349
    %v5351 = vpop.f32.mrb[0].mxu0
    %5352 = vdwg.mxu0
    %s5353 = scalar_lea.vmem %s13, 96
    %v5354 = vld [vmem:[%s5353] sm:$0xff]
    %v5355 = vld [vmem:[%s5353 + $0x8] sm:$0xff]
    %v5357 = vsel %vm550, %v5277, 0
    %v5360 = vsel %vm550, %v5350, 0
    %5362 = vmatprep.subr.mxu0 0.0
    %5363 = vmatpush1.msra.mxu0 %v5354
    %5364 = vmatprep.subr.mxu0 0.0
    %5365 = vmatpush1.msra.mxu0 %v5355
    %5366 = vmatprep.subr.mxu0 0.0
    %5367 = vmatpush1.msra.mxu0 0.0
    %5368 = vmatprep.subr.mxu0 0.0
    %5369 = vmatpush1.msra.mxu0 0.0
    %5370 = vmatprep.subr.mxu0 0.0
    %5371 = vmatpush1.msra.mxu0 0.0
    %5372 = vmatprep.subr.mxu0 0.0
    %5373 = vmatpush1.msra.mxu0 0.0
    %5374 = vmatprep.subr.mxu0 0.0
    %5375 = vmatpush1.msra.mxu0 0.0
    %5376 = vmatprep.subr.mxu0 0.0
    %5377 = vmatpush1.msra.mxu0 0.0
    %5378 = vmatprep.subr.mxu0 0.0
    %5379 = vmatpush1.msra.mxu0 0.0
    %5380 = vmatprep.subr.mxu0 0.0
    %5381 = vmatpush1.msra.mxu0 0.0
    %5382 = vmatprep.subr.mxu0 0.0
    %5383 = vmatpush1.msra.mxu0 0.0
    %5384 = vmatprep.subr.mxu0 0.0
    %5385 = vmatpush1.msra.mxu0 0.0
    %5386 = vmatprep.subr.mxu0 0.0
    %5387 = vmatpush1.msra.mxu0 0.0
    %5388 = vmatprep.subr.mxu0 0.0
    %5389 = vmatpush1.msra.mxu0 0.0
    %5390 = vmatprep.subr.mxu0 0.0
    %5391 = vmatpush1.msra.mxu0 0.0
    %5392 = vmatprep.subr.mxu0 0.0
    %5393 = vmatpush1.msra.mxu0 0.0
    %5394 = vmatprep.subr.mxu0 0.0
    %5395 = vmatpush1.msra.mxu0 0.0
    %5396 = vmatprep.subr.mxu0 0.0
    %5397 = vmatpush1.msra.mxu0 0.0
    %5398 = vmatprep.subr.mxu0 0.0
    %5399 = vmatpush1.msra.mxu0 0.0
    %5400 = vmatprep.subr.mxu0 0.0
    %5401 = vmatpush1.msra.mxu0 0.0
    %5402 = vmatprep.subr.mxu0 0.0
    %5403 = vmatpush1.msra.mxu0 0.0
    %5404 = vmatprep.subr.mxu0 0.0
    %5405 = vmatpush1.msra.mxu0 0.0
    %5406 = vmatprep.subr.mxu0 0.0
    %5407 = vmatpush1.msra.mxu0 0.0
    %5408 = vmatprep.subr.mxu0 0.0
    %5409 = vmatpush1.msra.mxu0 0.0
    %5410 = vmatprep.subr.mxu0 0.0
    %5411 = vmatpush1.msra.mxu0 0.0
    %5412 = vmatprep.subr.mxu0 0.0
    %5413 = vmatpush1.msra.mxu0 0.0
    %5414 = vmatprep.subr.mxu0 0.0
    %5415 = vmatpush1.msra.mxu0 0.0
    %5416 = vmatprep.subr.mxu0 0.0
    %5417 = vmatpush1.msra.mxu0 0.0
    %5418 = vmatprep.subr.mxu0 0.0
    %5419 = vmatpush1.msra.mxu0 0.0
    %5420 = vmatprep.subr.mxu0 0.0
    %5421 = vmatpush1.msra.mxu0 0.0
    %5422 = vmatprep.subr.mxu0 0.0
    %5423 = vmatpush1.msra.mxu0 0.0
    %5424 = vmatprep.subr.mxu0 0.0
    %5425 = vmatpush1.msra.mxu0 0.0
    %5426 = vmatprep.mubr.f32.mxu0 0.0
    %5427 = vmatmul.mubr.f32.gmra.mrb[0].mxu0 %v5357
    %v5428 = vpop.f32.mrb[0].mxu0
    %v5429 = vadd.f32 0.0, %v5428
    %v5430 = vpop.f32.mrb[0].mxu0
    %5431 = vmatprep.mubr.f32.mxu0 0.0
    %5432 = vmatmul.mubr.f32.gmra.mrb[0].mxu0 %v5360
    %v5433 = vpop.f32.mrb[0].mxu0
    %v5434 = vadd.f32 0.0, %v5433
    %v5435 = vpop.f32.mrb[0].mxu0
    %5436 = vdwg.mxu0
    %v5437 = vadd.f32 %v4745, %v5429
    %v5438 = vadd.f32 %v4750, %v5434
    %s5439 = scalar_lea.vmem %s7, 448
    %v5440 = vld [vmem:[%s5439] sm:$0xff]
    %v5441 = vld [vmem:[%s5439 + $0x8] sm:$0xff]
    %v5442 = vld [vmem:[%s5439 + $0x10] sm:$0xff]
    %v5443 = vld [vmem:[%s5439 + $0x18] sm:$0xff]
    %v5444 = vld [vmem:[%s5439 + $0x20] sm:$0xff]
    %v5445 = vld [vmem:[%s5439 + $0x28] sm:$0xff]
    %v5446 = vld [vmem:[%s5439 + $0x30] sm:$0xff]
    %v5447 = vld [vmem:[%s5439 + $0x38] sm:$0xff]
    %s5448 = scalar_lea.vmem %s8, 7
    %v5449 = vld [vmem:[%s5448] sm:$0x1]
    %v5451 = vlaneseq
    %v5452 = vshrl.u32 %v5451, 7
    %v5453 = vsub.s32 0, %v5452
    %v5454 = vrot.slane %v5449, %v5453
    %5456 = vmatprep.subr.mxu0 0.0
    %5457 = vmatpush1.msra.mxu0 %v5440
    %5458 = vmatprep.subr.mxu0 0.0
    %5459 = vmatpush1.msra.mxu0 %v5441
    %5460 = vmatprep.subr.mxu0 0.0
    %5461 = vmatpush1.msra.mxu0 %v5442
    %5462 = vmatprep.subr.mxu0 0.0
    %5463 = vmatpush1.msra.mxu0 %v5443
    %5464 = vmatprep.subr.mxu0 0.0
    %5465 = vmatpush1.msra.mxu0 %v5444
    %5466 = vmatprep.subr.mxu0 0.0
    %5467 = vmatpush1.msra.mxu0 %v5445
    %5468 = vmatprep.subr.mxu0 0.0
    %5469 = vmatpush1.msra.mxu0 %v5446
    %5470 = vmatprep.subr.mxu0 0.0
    %5471 = vmatpush1.msra.mxu0 %v5447
    %5472 = vmatprep.subr.mxu0 0.0
    %5473 = vmatpush1.msra.mxu0 0.0
    %5474 = vmatprep.subr.mxu0 0.0
    %5475 = vmatpush1.msra.mxu0 0.0
    %5476 = vmatprep.subr.mxu0 0.0
    %5477 = vmatpush1.msra.mxu0 0.0
    %5478 = vmatprep.subr.mxu0 0.0
    %5479 = vmatpush1.msra.mxu0 0.0
    %5480 = vmatprep.subr.mxu0 0.0
    %5481 = vmatpush1.msra.mxu0 0.0
    %5482 = vmatprep.subr.mxu0 0.0
    %5483 = vmatpush1.msra.mxu0 0.0
    %5484 = vmatprep.subr.mxu0 0.0
    %5485 = vmatpush1.msra.mxu0 0.0
    %5486 = vmatprep.subr.mxu0 0.0
    %5487 = vmatpush1.msra.mxu0 0.0
    %5488 = vmatprep.subr.mxu0 0.0
    %5489 = vmatpush1.msra.mxu0 0.0
    %5490 = vmatprep.subr.mxu0 0.0
    %5491 = vmatpush1.msra.mxu0 0.0
    %5492 = vmatprep.subr.mxu0 0.0
    %5493 = vmatpush1.msra.mxu0 0.0
    %5494 = vmatprep.subr.mxu0 0.0
    %5495 = vmatpush1.msra.mxu0 0.0
    %5496 = vmatprep.subr.mxu0 0.0
    %5497 = vmatpush1.msra.mxu0 0.0
    %5498 = vmatprep.subr.mxu0 0.0
    %5499 = vmatpush1.msra.mxu0 0.0
    %5500 = vmatprep.subr.mxu0 0.0
    %5501 = vmatpush1.msra.mxu0 0.0
    %5502 = vmatprep.subr.mxu0 0.0
    %5503 = vmatpush1.msra.mxu0 0.0
    %5504 = vmatprep.subr.mxu0 0.0
    %5505 = vmatpush1.msra.mxu0 0.0
    %5506 = vmatprep.subr.mxu0 0.0
    %5507 = vmatpush1.msra.mxu0 0.0
    %5508 = vmatprep.subr.mxu0 0.0
    %5509 = vmatpush1.msra.mxu0 0.0
    %5510 = vmatprep.subr.mxu0 0.0
    %5511 = vmatpush1.msra.mxu0 0.0
    %5512 = vmatprep.subr.mxu0 0.0
    %5513 = vmatpush1.msra.mxu0 0.0
    %5514 = vmatprep.subr.mxu0 0.0
    %5515 = vmatpush1.msra.mxu0 0.0
    %5516 = vmatprep.subr.mxu0 0.0
    %5517 = vmatpush1.msra.mxu0 0.0
    %5518 = vmatprep.subr.mxu0 0.0
    %5519 = vmatpush1.msra.mxu0 0.0
    %5520 = vmatprep.mubr.f32.mxu0 0.0
    %5521 = vmatmul.mubr.f32.gmra.mrb[0].mxu0 %v3397
    %v5522 = vpop.f32.mrb[0].mxu0
    %v5523 = vadd.f32 %v5454, %v5522
    %v5524 = vpop.f32.mrb[0].mxu0
    %5525 = vmatprep.mubr.f32.mxu0 0.0
    %5526 = vmatmul.mubr.f32.gmra.mrb[0].mxu0 %v3400
    %v5527 = vpop.f32.mrb[0].mxu0
    %v5528 = vadd.f32 %v5454, %v5527
    %v5529 = vpop.f32.mrb[0].mxu0
    %5530 = vdwg.mxu0
    %s5531 = scalar_lea.vmem %s9, 448
    %v5532 = vld [vmem:[%s5531] sm:$0xff]
    %v5533 = vld [vmem:[%s5531 + $0x8] sm:$0xff]
    %v5534 = vld [vmem:[%s5531 + $0x10] sm:$0xff]
    %v5535 = vld [vmem:[%s5531 + $0x18] sm:$0xff]
    %v5536 = vld [vmem:[%s5531 + $0x20] sm:$0xff]
    %v5537 = vld [vmem:[%s5531 + $0x28] sm:$0xff]
    %v5538 = vld [vmem:[%s5531 + $0x30] sm:$0xff]
    %v5539 = vld [vmem:[%s5531 + $0x38] sm:$0xff]
    %s5540 = scalar_lea.vmem %s10, 7
    %v5541 = vld [vmem:[%s5540] sm:$0x1]
    %v5543 = vlaneseq
    %v5544 = vshrl.u32 %v5543, 7
    %v5545 = vsub.s32 0, %v5544
    %v5546 = vrot.slane %v5541, %v5545
    %5548 = vmatprep.subr.mxu0 0.0
    %5549 = vmatpush1.msra.mxu0 %v5532
    %5550 = vmatprep.subr.mxu0 0.0
    %5551 = vmatpush1.msra.mxu0 %v5533
    %5552 = vmatprep.subr.mxu0 0.0
    %5553 = vmatpush1.msra.mxu0 %v5534
    %5554 = vmatprep.subr.mxu0 0.0
    %5555 = vmatpush1.msra.mxu0 %v5535
    %5556 = vmatprep.subr.mxu0 0.0
    %5557 = vmatpush1.msra.mxu0 %v5536
    %5558 = vmatprep.subr.mxu0 0.0
    %5559 = vmatpush1.msra.mxu0 %v5537
    %5560 = vmatprep.subr.mxu0 0.0
    %5561 = vmatpush1.msra.mxu0 %v5538
    %5562 = vmatprep.subr.mxu0 0.0
    %5563 = vmatpush1.msra.mxu0 %v5539
    %5564 = vmatprep.subr.mxu0 0.0
    %5565 = vmatpush1.msra.mxu0 0.0
    %5566 = vmatprep.subr.mxu0 0.0
    %5567 = vmatpush1.msra.mxu0 0.0
    %5568 = vmatprep.subr.mxu0 0.0
    %5569 = vmatpush1.msra.mxu0 0.0
    %5570 = vmatprep.subr.mxu0 0.0
    %5571 = vmatpush1.msra.mxu0 0.0
    %5572 = vmatprep.subr.mxu0 0.0
    %5573 = vmatpush1.msra.mxu0 0.0
    %5574 = vmatprep.subr.mxu0 0.0
    %5575 = vmatpush1.msra.mxu0 0.0
    %5576 = vmatprep.subr.mxu0 0.0
    %5577 = vmatpush1.msra.mxu0 0.0
    %5578 = vmatprep.subr.mxu0 0.0
    %5579 = vmatpush1.msra.mxu0 0.0
    %5580 = vmatprep.subr.mxu0 0.0
    %5581 = vmatpush1.msra.mxu0 0.0
    %5582 = vmatprep.subr.mxu0 0.0
    %5583 = vmatpush1.msra.mxu0 0.0
    %5584 = vmatprep.subr.mxu0 0.0
    %5585 = vmatpush1.msra.mxu0 0.0
    %5586 = vmatprep.subr.mxu0 0.0
    %5587 = vmatpush1.msra.mxu0 0.0
    %5588 = vmatprep.subr.mxu0 0.0
    %5589 = vmatpush1.msra.mxu0 0.0
    %5590 = vmatprep.subr.mxu0 0.0
    %5591 = vmatpush1.msra.mxu0 0.0
    %5592 = vmatprep.subr.mxu0 0.0
    %5593 = vmatpush1.msra.mxu0 0.0
    %5594 = vmatprep.subr.mxu0 0.0
    %5595 = vmatpush1.msra.mxu0 0.0
    %5596 = vmatprep.subr.mxu0 0.0
    %5597 = vmatpush1.msra.mxu0 0.0
    %5598 = vmatprep.subr.mxu0 0.0
    %5599 = vmatpush1.msra.mxu0 0.0
    %5600 = vmatprep.subr.mxu0 0.0
    %5601 = vmatpush1.msra.mxu0 0.0
    %5602 = vmatprep.subr.mxu0 0.0
    %5603 = vmatpush1.msra.mxu0 0.0
    %5604 = vmatprep.subr.mxu0 0.0
    %5605 = vmatpush1.msra.mxu0 0.0
    %5606 = vmatprep.subr.mxu0 0.0
    %5607 = vmatpush1.msra.mxu0 0.0
    %5608 = vmatprep.subr.mxu0 0.0
    %5609 = vmatpush1.msra.mxu0 0.0
    %5610 = vmatprep.subr.mxu0 0.0
    %5611 = vmatpush1.msra.mxu0 0.0
    %5612 = vmatprep.mubr.f32.mxu0 0.0
    %5613 = vmatmul.mubr.f32.gmra.mrb[0].mxu0 %v3397
    %v5614 = vpop.f32.mrb[0].mxu0
    %v5615 = vadd.f32 %v5546, %v5614
    %v5616 = vpop.f32.mrb[0].mxu0
    %5617 = vmatprep.mubr.f32.mxu0 0.0
    %5618 = vmatmul.mubr.f32.gmra.mrb[0].mxu0 %v3400
    %v5619 = vpop.f32.mrb[0].mxu0
    %v5620 = vadd.f32 %v5546, %v5619
    %v5621 = vpop.f32.mrb[0].mxu0
    %5622 = vdwg.mxu0
    %s5623 = scalar_lea.vmem %s11, 448
    %v5624 = vld [vmem:[%s5623] sm:$0xff]
    %v5625 = vld [vmem:[%s5623 + $0x8] sm:$0xff]
    %v5626 = vld [vmem:[%s5623 + $0x10] sm:$0xff]
    %v5627 = vld [vmem:[%s5623 + $0x18] sm:$0xff]
    %v5628 = vld [vmem:[%s5623 + $0x20] sm:$0xff]
    %v5629 = vld [vmem:[%s5623 + $0x28] sm:$0xff]
    %v5630 = vld [vmem:[%s5623 + $0x30] sm:$0xff]
    %v5631 = vld [vmem:[%s5623 + $0x38] sm:$0xff]
    %s5632 = scalar_lea.vmem %s12, 7
    %v5633 = vld [vmem:[%s5632] sm:$0x1]
    %v5635 = vlaneseq
    %v5636 = vshrl.u32 %v5635, 7
    %v5637 = vsub.s32 0, %v5636
    %v5638 = vrot.slane %v5633, %v5637
    %5640 = vmatprep.subr.mxu0 0.0
    %5641 = vmatpush1.msra.mxu0 %v5624
    %5642 = vmatprep.subr.mxu0 0.0
    %5643 = vmatpush1.msra.mxu0 %v5625
    %5644 = vmatprep.subr.mxu0 0.0
    %5645 = vmatpush1.msra.mxu0 %v5626
    %5646 = vmatprep.subr.mxu0 0.0
    %5647 = vmatpush1.msra.mxu0 %v5627
    %5648 = vmatprep.subr.mxu0 0.0
    %5649 = vmatpush1.msra.mxu0 %v5628
    %5650 = vmatprep.subr.mxu0 0.0
    %5651 = vmatpush1.msra.mxu0 %v5629
    %5652 = vmatprep.subr.mxu0 0.0
    %5653 = vmatpush1.msra.mxu0 %v5630
    %5654 = vmatprep.subr.mxu0 0.0
    %5655 = vmatpush1.msra.mxu0 %v5631
    %5656 = vmatprep.subr.mxu0 0.0
    %5657 = vmatpush1.msra.mxu0 0.0
    %5658 = vmatprep.subr.mxu0 0.0
    %5659 = vmatpush1.msra.mxu0 0.0
    %5660 = vmatprep.subr.mxu0 0.0
    %5661 = vmatpush1.msra.mxu0 0.0
    %5662 = vmatprep.subr.mxu0 0.0
    %5663 = vmatpush1.msra.mxu0 0.0
    %5664 = vmatprep.subr.mxu0 0.0
    %5665 = vmatpush1.msra.mxu0 0.0
    %5666 = vmatprep.subr.mxu0 0.0
    %5667 = vmatpush1.msra.mxu0 0.0
    %5668 = vmatprep.subr.mxu0 0.0
    %5669 = vmatpush1.msra.mxu0 0.0
    %5670 = vmatprep.subr.mxu0 0.0
    %5671 = vmatpush1.msra.mxu0 0.0
    %5672 = vmatprep.subr.mxu0 0.0
    %5673 = vmatpush1.msra.mxu0 0.0
    %5674 = vmatprep.subr.mxu0 0.0
    %5675 = vmatpush1.msra.mxu0 0.0
    %5676 = vmatprep.subr.mxu0 0.0
    %5677 = vmatpush1.msra.mxu0 0.0
    %5678 = vmatprep.subr.mxu0 0.0
    %5679 = vmatpush1.msra.mxu0 0.0
    %5680 = vmatprep.subr.mxu0 0.0
    %5681 = vmatpush1.msra.mxu0 0.0
    %5682 = vmatprep.subr.mxu0 0.0
    %5683 = vmatpush1.msra.mxu0 0.0
    %5684 = vmatprep.subr.mxu0 0.0
    %5685 = vmatpush1.msra.mxu0 0.0
    %5686 = vmatprep.subr.mxu0 0.0
    %5687 = vmatpush1.msra.mxu0 0.0
    %5688 = vmatprep.subr.mxu0 0.0
    %5689 = vmatpush1.msra.mxu0 0.0
    %5690 = vmatprep.subr.mxu0 0.0
    %5691 = vmatpush1.msra.mxu0 0.0
    %5692 = vmatprep.subr.mxu0 0.0
    %5693 = vmatpush1.msra.mxu0 0.0
    %5694 = vmatprep.subr.mxu0 0.0
    %5695 = vmatpush1.msra.mxu0 0.0
    %5696 = vmatprep.subr.mxu0 0.0
    %5697 = vmatpush1.msra.mxu0 0.0
    %5698 = vmatprep.subr.mxu0 0.0
    %5699 = vmatpush1.msra.mxu0 0.0
    %5700 = vmatprep.subr.mxu0 0.0
    %5701 = vmatpush1.msra.mxu0 0.0
    %5702 = vmatprep.subr.mxu0 0.0
    %5703 = vmatpush1.msra.mxu0 0.0
    %5704 = vmatprep.mubr.f32.mxu0 0.0
    %5705 = vmatmul.mubr.f32.gmra.mrb[0].mxu0 %v3397
    %v5706 = vpop.f32.mrb[0].mxu0
    %v5707 = vadd.f32 %v5638, %v5706
    %v5708 = vpop.f32.mrb[0].mxu0
    %5709 = vmatprep.mubr.f32.mxu0 0.0
    %5710 = vmatmul.mubr.f32.gmra.mrb[0].mxu0 %v3400
    %v5711 = vpop.f32.mrb[0].mxu0
    %v5712 = vadd.f32 %v5638, %v5711
    %v5713 = vpop.f32.mrb[0].mxu0
    %5714 = vdwg.mxu0
    %v5716 = vsel %vm550, %v5523, 0
    %v5719 = vsel %vm550, %v5615, 0
    %5721 = vmatprep.subr.mxu0 0.0
    %5722 = vmatpush1.xpose.msra.mxu0 %v5719
    %5723 = vmatprep.subr.mxu0 0.0
    %5724 = vmatpush1.xpose.msra.mxu0 0.0
    %5725 = vmatprep.subr.mxu0 0.0
    %5726 = vmatpush1.xpose.msra.mxu0 0.0
    %5727 = vmatprep.subr.mxu0 0.0
    %5728 = vmatpush1.xpose.msra.mxu0 0.0
    %5729 = vmatprep.subr.mxu0 0.0
    %5730 = vmatpush1.xpose.msra.mxu0 0.0
    %5731 = vmatprep.subr.mxu0 0.0
    %5732 = vmatpush1.xpose.msra.mxu0 0.0
    %5733 = vmatprep.subr.mxu0 0.0
    %5734 = vmatpush1.xpose.msra.mxu0 0.0
    %5735 = vmatprep.subr.mxu0 0.0
    %5736 = vmatpush1.xpose.msra.mxu0 0.0
    %5737 = vmatprep.subr.mxu0 0.0
    %5738 = vmatpush1.xpose.msra.mxu0 0.0
    %5739 = vmatprep.subr.mxu0 0.0
    %5740 = vmatpush1.xpose.msra.mxu0 0.0
    %5741 = vmatprep.subr.mxu0 0.0
    %5742 = vmatpush1.xpose.msra.mxu0 0.0
    %5743 = vmatprep.subr.mxu0 0.0
    %5744 = vmatpush1.xpose.msra.mxu0 0.0
    %5745 = vmatprep.subr.mxu0 0.0
    %5746 = vmatpush1.xpose.msra.mxu0 0.0
    %5747 = vmatprep.subr.mxu0 0.0
    %5748 = vmatpush1.xpose.msra.mxu0 0.0
    %5749 = vmatprep.subr.mxu0 0.0
    %5750 = vmatpush1.xpose.msra.mxu0 0.0
    %5751 = vmatprep.subr.mxu0 0.0
    %5752 = vmatpush1.xpose.msra.mxu0 0.0
    %5753 = vmatprep.subr.mxu0 0.0
    %5754 = vmatpush1.xpose.msra.mxu0 0.0
    %5755 = vmatprep.subr.mxu0 0.0
    %5756 = vmatpush1.xpose.msra.mxu0 0.0
    %5757 = vmatprep.subr.mxu0 0.0
    %5758 = vmatpush1.xpose.msra.mxu0 0.0
    %5759 = vmatprep.subr.mxu0 0.0
    %5760 = vmatpush1.xpose.msra.mxu0 0.0
    %5761 = vmatprep.subr.mxu0 0.0
    %5762 = vmatpush1.xpose.msra.mxu0 0.0
    %5763 = vmatprep.subr.mxu0 0.0
    %5764 = vmatpush1.xpose.msra.mxu0 0.0
    %5765 = vmatprep.subr.mxu0 0.0
    %5766 = vmatpush1.xpose.msra.mxu0 0.0
    %5767 = vmatprep.subr.mxu0 0.0
    %5768 = vmatpush1.xpose.msra.mxu0 0.0
    %5769 = vmatprep.subr.mxu0 0.0
    %5770 = vmatpush1.xpose.msra.mxu0 0.0
    %5771 = vmatprep.subr.mxu0 0.0
    %5772 = vmatpush1.xpose.msra.mxu0 0.0
    %5773 = vmatprep.subr.mxu0 0.0
    %5774 = vmatpush1.xpose.msra.mxu0 0.0
    %5775 = vmatprep.subr.mxu0 0.0
    %5776 = vmatpush1.xpose.msra.mxu0 0.0
    %5777 = vmatprep.subr.mxu0 0.0
    %5778 = vmatpush1.xpose.msra.mxu0 0.0
    %5779 = vmatprep.subr.mxu0 0.0
    %5780 = vmatpush1.xpose.msra.mxu0 0.0
    %5781 = vmatprep.subr.mxu0 0.0
    %5782 = vmatpush1.xpose.msra.mxu0 0.0
    %5783 = vmatprep.subr.mxu0 0.0
    %5784 = vmatpush1.xpose.msra.mxu0 0.0
    %5785 = vmatprep.mubr.f32.mxu0 0.0
    %5786 = vmatmul.mubr.f32.gmra.mrb[0].mxu0 %v5716
    %v5787 = vpop.f32.mrb[0].mxu0
    %v5788 = vadd.f32 0.0, %v5787
    %v5789 = vpop.f32.mrb[0].mxu0
    %5790 = vdwg.mxu0
    %v5792 = vsel %vm550, %v5528, 0
    %v5795 = vsel %vm550, %v5620, 0
    %5797 = vmatprep.subr.mxu0 0.0
    %5798 = vmatpush1.xpose.msra.mxu0 %v5795
    %5799 = vmatprep.subr.mxu0 0.0
    %5800 = vmatpush1.xpose.msra.mxu0 0.0
    %5801 = vmatprep.subr.mxu0 0.0
    %5802 = vmatpush1.xpose.msra.mxu0 0.0
    %5803 = vmatprep.subr.mxu0 0.0
    %5804 = vmatpush1.xpose.msra.mxu0 0.0
    %5805 = vmatprep.subr.mxu0 0.0
    %5806 = vmatpush1.xpose.msra.mxu0 0.0
    %5807 = vmatprep.subr.mxu0 0.0
    %5808 = vmatpush1.xpose.msra.mxu0 0.0
    %5809 = vmatprep.subr.mxu0 0.0
    %5810 = vmatpush1.xpose.msra.mxu0 0.0
    %5811 = vmatprep.subr.mxu0 0.0
    %5812 = vmatpush1.xpose.msra.mxu0 0.0
    %5813 = vmatprep.subr.mxu0 0.0
    %5814 = vmatpush1.xpose.msra.mxu0 0.0
    %5815 = vmatprep.subr.mxu0 0.0
    %5816 = vmatpush1.xpose.msra.mxu0 0.0
    %5817 = vmatprep.subr.mxu0 0.0
    %5818 = vmatpush1.xpose.msra.mxu0 0.0
    %5819 = vmatprep.subr.mxu0 0.0
    %5820 = vmatpush1.xpose.msra.mxu0 0.0
    %5821 = vmatprep.subr.mxu0 0.0
    %5822 = vmatpush1.xpose.msra.mxu0 0.0
    %5823 = vmatprep.subr.mxu0 0.0
    %5824 = vmatpush1.xpose.msra.mxu0 0.0
    %5825 = vmatprep.subr.mxu0 0.0
    %5826 = vmatpush1.xpose.msra.mxu0 0.0
    %5827 = vmatprep.subr.mxu0 0.0
    %5828 = vmatpush1.xpose.msra.mxu0 0.0
    %5829 = vmatprep.subr.mxu0 0.0
    %5830 = vmatpush1.xpose.msra.mxu0 0.0
    %5831 = vmatprep.subr.mxu0 0.0
    %5832 = vmatpush1.xpose.msra.mxu0 0.0
    %5833 = vmatprep.subr.mxu0 0.0
    %5834 = vmatpush1.xpose.msra.mxu0 0.0
    %5835 = vmatprep.subr.mxu0 0.0
    %5836 = vmatpush1.xpose.msra.mxu0 0.0
    %5837 = vmatprep.subr.mxu0 0.0
    %5838 = vmatpush1.xpose.msra.mxu0 0.0
    %5839 = vmatprep.subr.mxu0 0.0
    %5840 = vmatpush1.xpose.msra.mxu0 0.0
    %5841 = vmatprep.subr.mxu0 0.0
    %5842 = vmatpush1.xpose.msra.mxu0 0.0
    %5843 = vmatprep.subr.mxu0 0.0
    %5844 = vmatpush1.xpose.msra.mxu0 0.0
    %5845 = vmatprep.subr.mxu0 0.0
    %5846 = vmatpush1.xpose.msra.mxu0 0.0
    %5847 = vmatprep.subr.mxu0 0.0
    %5848 = vmatpush1.xpose.msra.mxu0 0.0
    %5849 = vmatprep.subr.mxu0 0.0
    %5850 = vmatpush1.xpose.msra.mxu0 0.0
    %5851 = vmatprep.subr.mxu0 0.0
    %5852 = vmatpush1.xpose.msra.mxu0 0.0
    %5853 = vmatprep.subr.mxu0 0.0
    %5854 = vmatpush1.xpose.msra.mxu0 0.0
    %5855 = vmatprep.subr.mxu0 0.0
    %5856 = vmatpush1.xpose.msra.mxu0 0.0
    %5857 = vmatprep.subr.mxu0 0.0
    %5858 = vmatpush1.xpose.msra.mxu0 0.0
    %5859 = vmatprep.subr.mxu0 0.0
    %5860 = vmatpush1.xpose.msra.mxu0 0.0
    %5861 = vmatprep.mubr.f32.mxu0 0.0
    %5862 = vmatmul.mubr.f32.gmra.mrb[0].mxu0 %v5792
    %v5863 = vpop.f32.mrb[0].mxu0
    %v5864 = vadd.f32 0.0, %v5863
    %v5865 = vpop.f32.mrb[0].mxu0
    %5866 = vdwg.mxu0
    %v5867 = vmul.f32 %v5788, 0.25
    %v5868 = vmul.f32 %v5864, 0.25
    %v5869 = vadd.f32 %v5867, %v229
    %v5870 = vadd.f32 %v5868, %v229
    %v5871 = vsel %vm707, %v5869, -inf
    %5872 = vmax.xlane.f32.xlu0 %v5871
    %v5873 = vpop.xlane.xlu0 %5872
    %v5874 = vsel %vm707, %v5870, -inf
    %5875 = vmax.xlane.f32.xlu0 %v5874
    %v5876 = vpop.xlane.xlu0 %5875
    %v5877 = vsub.f32 %v5869, %v5873
    %v5878 = vsub.f32 %v5870, %v5876
    %v5879 = vmul.f32 %v5877, 1.442695
    %v5880 = vpow.pop %v5879
    %v5881 = vmul.f32 %v5878, 1.442695
    %v5882 = vpow.pop %v5881
    %v5883 = vsel %vm707, %v5880, 0.0
    %5884 = vadd.xlane.f32.xlu0 %v5883
    %v5885 = vpop.xlane.xlu0 %5884
    %v5886 = vsel %vm707, %v5882, 0.0
    %5887 = vadd.xlane.f32.xlu0 %v5886
    %v5888 = vpop.xlane.xlu0 %5887
    %v5889 = vrcp.pop %v5885
    %v5890 = vmul.f32 %v5880, %v5889
    %v5891 = vrcp.pop %v5888
    %v5892 = vmul.f32 %v5882, %v5891
    %v5894 = vsel %vm707, %v5890, 0
    %5896 = vmatprep.subr.mxu0 0.0
    %5897 = vmatpush1.msra.mxu0 %v5707
    %5898 = vmatprep.subr.mxu0 0.0
    %5899 = vmatpush1.msra.mxu0 0.0
    %5900 = vmatprep.subr.mxu0 0.0
    %5901 = vmatpush1.msra.mxu0 0.0
    %5902 = vmatprep.subr.mxu0 0.0
    %5903 = vmatpush1.msra.mxu0 0.0
    %5904 = vmatprep.subr.mxu0 0.0
    %5905 = vmatpush1.msra.mxu0 0.0
    %5906 = vmatprep.subr.mxu0 0.0
    %5907 = vmatpush1.msra.mxu0 0.0
    %5908 = vmatprep.subr.mxu0 0.0
    %5909 = vmatpush1.msra.mxu0 0.0
    %5910 = vmatprep.subr.mxu0 0.0
    %5911 = vmatpush1.msra.mxu0 0.0
    %5912 = vmatprep.subr.mxu0 0.0
    %5913 = vmatpush1.msra.mxu0 0.0
    %5914 = vmatprep.subr.mxu0 0.0
    %5915 = vmatpush1.msra.mxu0 0.0
    %5916 = vmatprep.subr.mxu0 0.0
    %5917 = vmatpush1.msra.mxu0 0.0
    %5918 = vmatprep.subr.mxu0 0.0
    %5919 = vmatpush1.msra.mxu0 0.0
    %5920 = vmatprep.subr.mxu0 0.0
    %5921 = vmatpush1.msra.mxu0 0.0
    %5922 = vmatprep.subr.mxu0 0.0
    %5923 = vmatpush1.msra.mxu0 0.0
    %5924 = vmatprep.subr.mxu0 0.0
    %5925 = vmatpush1.msra.mxu0 0.0
    %5926 = vmatprep.subr.mxu0 0.0
    %5927 = vmatpush1.msra.mxu0 0.0
    %5928 = vmatprep.subr.mxu0 0.0
    %5929 = vmatpush1.msra.mxu0 0.0
    %5930 = vmatprep.subr.mxu0 0.0
    %5931 = vmatpush1.msra.mxu0 0.0
    %5932 = vmatprep.subr.mxu0 0.0
    %5933 = vmatpush1.msra.mxu0 0.0
    %5934 = vmatprep.subr.mxu0 0.0
    %5935 = vmatpush1.msra.mxu0 0.0
    %5936 = vmatprep.subr.mxu0 0.0
    %5937 = vmatpush1.msra.mxu0 0.0
    %5938 = vmatprep.subr.mxu0 0.0
    %5939 = vmatpush1.msra.mxu0 0.0
    %5940 = vmatprep.subr.mxu0 0.0
    %5941 = vmatpush1.msra.mxu0 0.0
    %5942 = vmatprep.subr.mxu0 0.0
    %5943 = vmatpush1.msra.mxu0 0.0
    %5944 = vmatprep.subr.mxu0 0.0
    %5945 = vmatpush1.msra.mxu0 0.0
    %5946 = vmatprep.subr.mxu0 0.0
    %5947 = vmatpush1.msra.mxu0 0.0
    %5948 = vmatprep.subr.mxu0 0.0
    %5949 = vmatpush1.msra.mxu0 0.0
    %5950 = vmatprep.subr.mxu0 0.0
    %5951 = vmatpush1.msra.mxu0 0.0
    %5952 = vmatprep.subr.mxu0 0.0
    %5953 = vmatpush1.msra.mxu0 0.0
    %5954 = vmatprep.subr.mxu0 0.0
    %5955 = vmatpush1.msra.mxu0 0.0
    %5956 = vmatprep.subr.mxu0 0.0
    %5957 = vmatpush1.msra.mxu0 0.0
    %5958 = vmatprep.subr.mxu0 0.0
    %5959 = vmatpush1.msra.mxu0 0.0
    %5960 = vmatprep.mubr.f32.mxu0 0.0
    %5961 = vmatmul.mubr.f32.gmra.mrb[0].mxu0 %v5894
    %v5962 = vpop.f32.mrb[0].mxu0
    %v5963 = vadd.f32 0.0, %v5962
    %v5964 = vpop.f32.mrb[0].mxu0
    %5965 = vdwg.mxu0
    %v5967 = vsel %vm707, %v5892, 0
    %5969 = vmatprep.subr.mxu0 0.0
    %5970 = vmatpush1.msra.mxu0 %v5712
    %5971 = vmatprep.subr.mxu0 0.0
    %5972 = vmatpush1.msra.mxu0 0.0
    %5973 = vmatprep.subr.mxu0 0.0
    %5974 = vmatpush1.msra.mxu0 0.0
    %5975 = vmatprep.subr.mxu0 0.0
    %5976 = vmatpush1.msra.mxu0 0.0
    %5977 = vmatprep.subr.mxu0 0.0
    %5978 = vmatpush1.msra.mxu0 0.0
    %5979 = vmatprep.subr.mxu0 0.0
    %5980 = vmatpush1.msra.mxu0 0.0
    %5981 = vmatprep.subr.mxu0 0.0
    %5982 = vmatpush1.msra.mxu0 0.0
    %5983 = vmatprep.subr.mxu0 0.0
    %5984 = vmatpush1.msra.mxu0 0.0
    %5985 = vmatprep.subr.mxu0 0.0
    %5986 = vmatpush1.msra.mxu0 0.0
    %5987 = vmatprep.subr.mxu0 0.0
    %5988 = vmatpush1.msra.mxu0 0.0
    %5989 = vmatprep.subr.mxu0 0.0
    %5990 = vmatpush1.msra.mxu0 0.0
    %5991 = vmatprep.subr.mxu0 0.0
    %5992 = vmatpush1.msra.mxu0 0.0
    %5993 = vmatprep.subr.mxu0 0.0
    %5994 = vmatpush1.msra.mxu0 0.0
    %5995 = vmatprep.subr.mxu0 0.0
    %5996 = vmatpush1.msra.mxu0 0.0
    %5997 = vmatprep.subr.mxu0 0.0
    %5998 = vmatpush1.msra.mxu0 0.0
    %5999 = vmatprep.subr.mxu0 0.0
    %6000 = vmatpush1.msra.mxu0 0.0
    %6001 = vmatprep.subr.mxu0 0.0
    %6002 = vmatpush1.msra.mxu0 0.0
    %6003 = vmatprep.subr.mxu0 0.0
    %6004 = vmatpush1.msra.mxu0 0.0
    %6005 = vmatprep.subr.mxu0 0.0
    %6006 = vmatpush1.msra.mxu0 0.0
    %6007 = vmatprep.subr.mxu0 0.0
    %6008 = vmatpush1.msra.mxu0 0.0
    %6009 = vmatprep.subr.mxu0 0.0
    %6010 = vmatpush1.msra.mxu0 0.0
    %6011 = vmatprep.subr.mxu0 0.0
    %6012 = vmatpush1.msra.mxu0 0.0
    %6013 = vmatprep.subr.mxu0 0.0
    %6014 = vmatpush1.msra.mxu0 0.0
    %6015 = vmatprep.subr.mxu0 0.0
    %6016 = vmatpush1.msra.mxu0 0.0
    %6017 = vmatprep.subr.mxu0 0.0
    %6018 = vmatpush1.msra.mxu0 0.0
    %6019 = vmatprep.subr.mxu0 0.0
    %6020 = vmatpush1.msra.mxu0 0.0
    %6021 = vmatprep.subr.mxu0 0.0
    %6022 = vmatpush1.msra.mxu0 0.0
    %6023 = vmatprep.subr.mxu0 0.0
    %6024 = vmatpush1.msra.mxu0 0.0
    %6025 = vmatprep.subr.mxu0 0.0
    %6026 = vmatpush1.msra.mxu0 0.0
    %6027 = vmatprep.subr.mxu0 0.0
    %6028 = vmatpush1.msra.mxu0 0.0
    %6029 = vmatprep.subr.mxu0 0.0
    %6030 = vmatpush1.msra.mxu0 0.0
    %6031 = vmatprep.subr.mxu0 0.0
    %6032 = vmatpush1.msra.mxu0 0.0
    %6033 = vmatprep.mubr.f32.mxu0 0.0
    %6034 = vmatmul.mubr.f32.gmra.mrb[0].mxu0 %v5967
    %v6035 = vpop.f32.mrb[0].mxu0
    %v6036 = vadd.f32 0.0, %v6035
    %v6037 = vpop.f32.mrb[0].mxu0
    %6038 = vdwg.mxu0
    %s6039 = scalar_lea.vmem %s13, 112
    %v6040 = vld [vmem:[%s6039] sm:$0xff]
    %v6041 = vld [vmem:[%s6039 + $0x8] sm:$0xff]
    %v6043 = vsel %vm550, %v5963, 0
    %v6046 = vsel %vm550, %v6036, 0
    %6048 = vmatprep.subr.mxu0 0.0
    %6049 = vmatpush1.msra.mxu0 %v6040
    %6050 = vmatprep.subr.mxu0 0.0
    %6051 = vmatpush1.msra.mxu0 %v6041
    %6052 = vmatprep.subr.mxu0 0.0
    %6053 = vmatpush1.msra.mxu0 0.0
    %6054 = vmatprep.subr.mxu0 0.0
    %6055 = vmatpush1.msra.mxu0 0.0
    %6056 = vmatprep.subr.mxu0 0.0
    %6057 = vmatpush1.msra.mxu0 0.0
    %6058 = vmatprep.subr.mxu0 0.0
    %6059 = vmatpush1.msra.mxu0 0.0
    %6060 = vmatprep.subr.mxu0 0.0
    %6061 = vmatpush1.msra.mxu0 0.0
    %6062 = vmatprep.subr.mxu0 0.0
    %6063 = vmatpush1.msra.mxu0 0.0
    %6064 = vmatprep.subr.mxu0 0.0
    %6065 = vmatpush1.msra.mxu0 0.0
    %6066 = vmatprep.subr.mxu0 0.0
    %6067 = vmatpush1.msra.mxu0 0.0
    %6068 = vmatprep.subr.mxu0 0.0
    %6069 = vmatpush1.msra.mxu0 0.0
    %6070 = vmatprep.subr.mxu0 0.0
    %6071 = vmatpush1.msra.mxu0 0.0
    %6072 = vmatprep.subr.mxu0 0.0
    %6073 = vmatpush1.msra.mxu0 0.0
    %6074 = vmatprep.subr.mxu0 0.0
    %6075 = vmatpush1.msra.mxu0 0.0
    %6076 = vmatprep.subr.mxu0 0.0
    %6077 = vmatpush1.msra.mxu0 0.0
    %6078 = vmatprep.subr.mxu0 0.0
    %6079 = vmatpush1.msra.mxu0 0.0
    %6080 = vmatprep.subr.mxu0 0.0
    %6081 = vmatpush1.msra.mxu0 0.0
    %6082 = vmatprep.subr.mxu0 0.0
    %6083 = vmatpush1.msra.mxu0 0.0
    %6084 = vmatprep.subr.mxu0 0.0
    %6085 = vmatpush1.msra.mxu0 0.0
    %6086 = vmatprep.subr.mxu0 0.0
    %6087 = vmatpush1.msra.mxu0 0.0
    %6088 = vmatprep.subr.mxu0 0.0
    %6089 = vmatpush1.msra.mxu0 0.0
    %6090 = vmatprep.subr.mxu0 0.0
    %6091 = vmatpush1.msra.mxu0 0.0
    %6092 = vmatprep.subr.mxu0 0.0
    %6093 = vmatpush1.msra.mxu0 0.0
    %6094 = vmatprep.subr.mxu0 0.0
    %6095 = vmatpush1.msra.mxu0 0.0
    %6096 = vmatprep.subr.mxu0 0.0
    %6097 = vmatpush1.msra.mxu0 0.0
    %6098 = vmatprep.subr.mxu0 0.0
    %6099 = vmatpush1.msra.mxu0 0.0
    %6100 = vmatprep.subr.mxu0 0.0
    %6101 = vmatpush1.msra.mxu0 0.0
    %6102 = vmatprep.subr.mxu0 0.0
    %6103 = vmatpush1.msra.mxu0 0.0
    %6104 = vmatprep.subr.mxu0 0.0
    %6105 = vmatpush1.msra.mxu0 0.0
    %6106 = vmatprep.subr.mxu0 0.0
    %6107 = vmatpush1.msra.mxu0 0.0
    %6108 = vmatprep.subr.mxu0 0.0
    %6109 = vmatpush1.msra.mxu0 0.0
    %6110 = vmatprep.subr.mxu0 0.0
    %6111 = vmatpush1.msra.mxu0 0.0
    %6112 = vmatprep.mubr.f32.mxu0 0.0
    %6113 = vmatmul.mubr.f32.gmra.mrb[0].mxu0 %v6043
    %v6114 = vpop.f32.mrb[0].mxu0
    %v6115 = vadd.f32 0.0, %v6114
    %v6116 = vpop.f32.mrb[0].mxu0
    %6117 = vmatprep.mubr.f32.mxu0 0.0
    %6118 = vmatmul.mubr.f32.gmra.mrb[0].mxu0 %v6046
    %v6119 = vpop.f32.mrb[0].mxu0
    %v6120 = vadd.f32 0.0, %v6119
    %v6121 = vpop.f32.mrb[0].mxu0
    %6122 = vdwg.mxu0
    %v6123 = vadd.f32 %v5437, %v6115
    %v6124 = vadd.f32 %v5438, %v6120
    %v6125 = vadd.f32 %v3331, %v6123
    %v6126 = vadd.f32 %v3332, %v6124
    %s6127 = scalar_lea.vmem %s14, 1
    %v6128 = vld [vmem:[%s6127] sm:$0x1]
    %v6130 = vlaneseq
    %v6131 = vshrl.u32 %v6130, 7
    %v6132 = vsub.s32 0, %v6131
    %v6133 = vrot.slane %v6128, %v6132
    %v6135 = vadd.f32 %v6125, %v6133
    %v6136 = vadd.f32 %v6126, %v6133
    %s6137 = scalar_lea.vmem %s15, 1
    %v6138 = vld [vmem:[%s6137] sm:$0x1]
    %s6139 = scalar_lea.vmem %s16, 1
    %v6140 = vld [vmem:[%s6139] sm:$0x1]
    %v6141 = vsel %vm180, %v6135, 0.0
    %6142 = vadd.xlane.f32.xlu0 %v6141
    %v6143 = vpop.xlane.xlu0 %6142
    %v6144 = vsel %vm180, %v6136, 0.0
    %6145 = vadd.xlane.f32.xlu0 %v6144
    %v6146 = vpop.xlane.xlu0 %6145
    %v6147 = vmul.f32 %v6143, %v187
    %v6148 = vmul.f32 %v6146, %v187
    %v6149 = vsub.f32 %v6135, %v6147
    %v6150 = vsub.f32 %v6136, %v6148
    %v6151 = vmul.f32 %v6149, %v6149
    %v6152 = vmul.f32 %v6150, %v6150
    %v6153 = vsel %vm180, %v6151, 0.0
    %6154 = vadd.xlane.f32.xlu0 %v6153
    %v6155 = vpop.xlane.xlu0 %6154
    %v6156 = vsel %vm180, %v6152, 0.0
    %6157 = vadd.xlane.f32.xlu0 %v6156
    %v6158 = vpop.xlane.xlu0 %6157
    %v6159 = vmul.f32 %v6155, %v187
    %v6160 = vmul.f32 %v6158, %v187
    %v6161 = vadd.f32 %v6159, 1e-05
    %v6162 = vadd.f32 %v6160, 1e-05
    %v6163 = vrsqrt.pop %v6161
    %v6164 = vrsqrt.pop %v6162
    %v6165 = vmul.f32 %v6149, %v6163
    %v6166 = vmul.f32 %v6150, %v6164
    %v6168 = vlaneseq
    %v6169 = vshrl.u32 %v6168, 7
    %v6170 = vsub.s32 0, %v6169
    %v6171 = vrot.slane %v6138, %v6170
    %v6173 = vmul.f32 %v6165, %v6171
    %v6174 = vmul.f32 %v6166, %v6171
    %v6176 = vlaneseq
    %v6177 = vshrl.u32 %v6176, 7
    %v6178 = vsub.s32 0, %v6177
    %v6179 = vrot.slane %v6140, %v6178
    %v6181 = vadd.f32 %v6173, %v6179
    %v6182 = vadd.f32 %v6174, %v6179
    %s6183 = scalar_lea.vmem %s17, 128
    %v6184 = vld [vmem:[%s6183] sm:$0xff]
    %v6185 = vld [vmem:[%s6183 + $0x8] sm:$0xff]
    %v6186 = vld [vmem:[%s6183 + $0x10] sm:$0xff]
    %v6187 = vld [vmem:[%s6183 + $0x18] sm:$0xff]
    %v6188 = vld [vmem:[%s6183 + $0x20] sm:$0xff]
    %v6189 = vld [vmem:[%s6183 + $0x28] sm:$0xff]
    %v6190 = vld [vmem:[%s6183 + $0x30] sm:$0xff]
    %v6191 = vld [vmem:[%s6183 + $0x38] sm:$0xff]
    %v6192 = vld [vmem:[%s6183 + $0x40] sm:$0xff]
    %v6193 = vld [vmem:[%s6183 + $0x48] sm:$0xff]
    %v6194 = vld [vmem:[%s6183 + $0x50] sm:$0xff]
    %v6195 = vld [vmem:[%s6183 + $0x58] sm:$0xff]
    %v6196 = vld [vmem:[%s6183 + $0x60] sm:$0xff]
    %v6197 = vld [vmem:[%s6183 + $0x68] sm:$0xff]
    %v6198 = vld [vmem:[%s6183 + $0x70] sm:$0xff]
    %v6199 = vld [vmem:[%s6183 + $0x78] sm:$0xff]
    %s6200 = scalar_lea.vmem %s18, 2
    %v6201 = vld [vmem:[%s6200] sm:$0x3]
    %v6203 = vlaneseq
    %v6204 = vshrl.u32 %v6203, 7
    %v6205 = vsub.s32 0, %v6204
    %v6206 = vrot.slane %v6201, %v6205
    %v6207 = vlaneseq
    %v6208 = vshrl.u32 %v6207, 7
    %v6209 = vsub.s32 1, %v6208
    %v6210 = vrot.slane %v6201, %v6209
    %v6214 = vsel %vm180, %v6181, 0
    %v6217 = vsel %vm180, %v6182, 0
    %6219 = vmatprep.subr.mxu0 %v6185
    %6220 = vmatpush1.msra.mxu0 %v6184
    %6221 = vmatprep.subr.mxu0 %v6187
    %6222 = vmatpush1.msra.mxu0 %v6186
    %6223 = vmatprep.subr.mxu0 %v6189
    %6224 = vmatpush1.msra.mxu0 %v6188
    %6225 = vmatprep.subr.mxu0 %v6191
    %6226 = vmatpush1.msra.mxu0 %v6190
    %6227 = vmatprep.subr.mxu0 %v6193
    %6228 = vmatpush1.msra.mxu0 %v6192
    %6229 = vmatprep.subr.mxu0 %v6195
    %6230 = vmatpush1.msra.mxu0 %v6194
    %6231 = vmatprep.subr.mxu0 %v6197
    %6232 = vmatpush1.msra.mxu0 %v6196
    %6233 = vmatprep.subr.mxu0 %v6199
    %6234 = vmatpush1.msra.mxu0 %v6198
    %6235 = vmatprep.subr.mxu0 0.0
    %6236 = vmatpush1.msra.mxu0 0.0
    %6237 = vmatprep.subr.mxu0 0.0
    %6238 = vmatpush1.msra.mxu0 0.0
    %6239 = vmatprep.subr.mxu0 0.0
    %6240 = vmatpush1.msra.mxu0 0.0
    %6241 = vmatprep.subr.mxu0 0.0
    %6242 = vmatpush1.msra.mxu0 0.0
    %6243 = vmatprep.subr.mxu0 0.0
    %6244 = vmatpush1.msra.mxu0 0.0
    %6245 = vmatprep.subr.mxu0 0.0
    %6246 = vmatpush1.msra.mxu0 0.0
    %6247 = vmatprep.subr.mxu0 0.0
    %6248 = vmatpush1.msra.mxu0 0.0
    %6249 = vmatprep.subr.mxu0 0.0
    %6250 = vmatpush1.msra.mxu0 0.0
    %6251 = vmatprep.subr.mxu0 0.0
    %6252 = vmatpush1.msra.mxu0 0.0
    %6253 = vmatprep.subr.mxu0 0.0
    %6254 = vmatpush1.msra.mxu0 0.0
    %6255 = vmatprep.subr.mxu0 0.0
    %6256 = vmatpush1.msra.mxu0 0.0
    %6257 = vmatprep.subr.mxu0 0.0
    %6258 = vmatpush1.msra.mxu0 0.0
    %6259 = vmatprep.subr.mxu0 0.0
    %6260 = vmatpush1.msra.mxu0 0.0
    %6261 = vmatprep.subr.mxu0 0.0
    %6262 = vmatpush1.msra.mxu0 0.0
    %6263 = vmatprep.subr.mxu0 0.0
    %6264 = vmatpush1.msra.mxu0 0.0
    %6265 = vmatprep.subr.mxu0 0.0
    %6266 = vmatpush1.msra.mxu0 0.0
    %6267 = vmatprep.subr.mxu0 0.0
    %6268 = vmatpush1.msra.mxu0 0.0
    %6269 = vmatprep.subr.mxu0 0.0
    %6270 = vmatpush1.msra.mxu0 0.0
    %6271 = vmatprep.subr.mxu0 0.0
    %6272 = vmatpush1.msra.mxu0 0.0
    %6273 = vmatprep.subr.mxu0 0.0
    %6274 = vmatpush1.msra.mxu0 0.0
    %6275 = vmatprep.subr.mxu0 0.0
    %6276 = vmatpush1.msra.mxu0 0.0
    %6277 = vmatprep.subr.mxu0 0.0
    %6278 = vmatpush1.msra.mxu0 0.0
    %6279 = vmatprep.subr.mxu0 0.0
    %6280 = vmatpush1.msra.mxu0 0.0
    %6281 = vmatprep.subr.mxu0 0.0
    %6282 = vmatpush1.msra.mxu0 0.0
    %6283 = vmatprep.mubr.f32.mxu0 0.0
    %6284 = vmatmul.mubr.f32.gmra.mrb[0].mxu0 %v6214
    %v6285 = vpop.f32.mrb[0].mxu0
    %v6286 = vadd.f32 %v6206, %v6285
    %v6287 = vpop.f32.mrb[0].mxu0
    %v6288 = vadd.f32 %v6210, %v6287
    %6289 = vmatprep.mubr.f32.mxu0 0.0
    %6290 = vmatmul.mubr.f32.gmra.mrb[0].mxu0 %v6217
    %v6291 = vpop.f32.mrb[0].mxu0
    %v6292 = vadd.f32 %v6206, %v6291
    %v6293 = vpop.f32.mrb[0].mxu0
    %v6294 = vadd.f32 %v6210, %v6293
    %6295 = vdwg.mxu0
    %v6296 = vmul.f32 %v6286, 0.5
    %v6297 = vmul.f32 %v6288, 0.5
    %v6298 = vmul.f32 %v6292, 0.5
    %v6299 = vmul.f32 %v6294, 0.5
    %v6300 = vmul.f32 %v6286, 0.044715
    %v6301 = vmul.f32 %v6288, 0.044715
    %v6302 = vmul.f32 %v6292, 0.044715
    %v6303 = vmul.f32 %v6294, 0.044715
    %v6304 = vmul.f32 %v6300, %v6286
    %v6305 = vmul.f32 %v6301, %v6288
    %v6306 = vmul.f32 %v6302, %v6292
    %v6307 = vmul.f32 %v6303, %v6294
    %v6308 = vmul.f32 %v6304, %v6286
    %v6309 = vmul.f32 %v6305, %v6288
    %v6310 = vmul.f32 %v6306, %v6292
    %v6311 = vmul.f32 %v6307, %v6294
    %v6312 = vadd.f32 %v6286, %v6308
    %v6313 = vadd.f32 %v6288, %v6309
    %v6314 = vadd.f32 %v6292, %v6310
    %v6315 = vadd.f32 %v6294, %v6311
    %v6316 = vmul.f32 %v6312, 0.7978846
    %v6317 = vmul.f32 %v6313, 0.7978846
    %v6318 = vmul.f32 %v6314, 0.7978846
    %v6319 = vmul.f32 %v6315, 0.7978846
    %v6320 = vtanh.pop %v6316
    %v6321 = vtanh.pop %v6317
    %v6322 = vtanh.pop %v6318
    %v6323 = vtanh.pop %v6319
    %v6324 = vadd.f32 %v6320, 1.0
    %v6325 = vadd.f32 %v6321, 1.0
    %v6326 = vadd.f32 %v6322, 1.0
    %v6327 = vadd.f32 %v6323, 1.0
    %v6328 = vmul.f32 %v6296, %v6324
    %v6329 = vmul.f32 %v6297, %v6325
    %v6330 = vmul.f32 %v6298, %v6326
    %v6331 = vmul.f32 %v6299, %v6327
    %s6332 = scalar_lea.vmem %s19, 256
    %v6333 = vld [vmem:[%s6332] sm:$0xff]
    %v6334 = vld [vmem:[%s6332 + $0x8] sm:$0xff]
    %v6335 = vld [vmem:[%s6332 + $0x10] sm:$0xff]
    %v6336 = vld [vmem:[%s6332 + $0x18] sm:$0xff]
    %v6337 = vld [vmem:[%s6332 + $0x20] sm:$0xff]
    %v6338 = vld [vmem:[%s6332 + $0x28] sm:$0xff]
    %v6339 = vld [vmem:[%s6332 + $0x30] sm:$0xff]
    %v6340 = vld [vmem:[%s6332 + $0x38] sm:$0xff]
    %v6341 = vld [vmem:[%s6332 + $0x40] sm:$0xff]
    %v6342 = vld [vmem:[%s6332 + $0x48] sm:$0xff]
    %v6343 = vld [vmem:[%s6332 + $0x50] sm:$0xff]
    %v6344 = vld [vmem:[%s6332 + $0x58] sm:$0xff]
    %v6345 = vld [vmem:[%s6332 + $0x60] sm:$0xff]
    %v6346 = vld [vmem:[%s6332 + $0x68] sm:$0xff]
    %v6347 = vld [vmem:[%s6332 + $0x70] sm:$0xff]
    %v6348 = vld [vmem:[%s6332 + $0x78] sm:$0xff]
    %v6349 = vld [vmem:[%s6332 + $0x80] sm:$0xff]
    %v6350 = vld [vmem:[%s6332 + $0x88] sm:$0xff]
    %v6351 = vld [vmem:[%s6332 + $0x90] sm:$0xff]
    %v6352 = vld [vmem:[%s6332 + $0x98] sm:$0xff]
    %v6353 = vld [vmem:[%s6332 + $0xa0] sm:$0xff]
    %v6354 = vld [vmem:[%s6332 + $0xa8] sm:$0xff]
    %v6355 = vld [vmem:[%s6332 + $0xb0] sm:$0xff]
    %v6356 = vld [vmem:[%s6332 + $0xb8] sm:$0xff]
    %v6357 = vld [vmem:[%s6332 + $0xc0] sm:$0xff]
    %v6358 = vld [vmem:[%s6332 + $0xc8] sm:$0xff]
    %v6359 = vld [vmem:[%s6332 + $0xd0] sm:$0xff]
    %v6360 = vld [vmem:[%s6332 + $0xd8] sm:$0xff]
    %v6361 = vld [vmem:[%s6332 + $0xe0] sm:$0xff]
    %v6362 = vld [vmem:[%s6332 + $0xe8] sm:$0xff]
    %v6363 = vld [vmem:[%s6332 + $0xf0] sm:$0xff]
    %v6364 = vld [vmem:[%s6332 + $0xf8] sm:$0xff]
    %s6365 = scalar_lea.vmem %s20, 1
    %v6366 = vld [vmem:[%s6365] sm:$0x1]
    %v6368 = vlaneseq
    %v6369 = vshrl.u32 %v6368, 7
    %v6370 = vsub.s32 0, %v6369
    %v6371 = vrot.slane %v6366, %v6370
    %6373 = vmatprep.subr.mxu0 0.0
    %6374 = vmatpush1.msra.mxu0 %v6333
    %6375 = vmatprep.subr.mxu0 0.0
    %6376 = vmatpush1.msra.mxu0 %v6334
    %6377 = vmatprep.subr.mxu0 0.0
    %6378 = vmatpush1.msra.mxu0 %v6335
    %6379 = vmatprep.subr.mxu0 0.0
    %6380 = vmatpush1.msra.mxu0 %v6336
    %6381 = vmatprep.subr.mxu0 0.0
    %6382 = vmatpush1.msra.mxu0 %v6337
    %6383 = vmatprep.subr.mxu0 0.0
    %6384 = vmatpush1.msra.mxu0 %v6338
    %6385 = vmatprep.subr.mxu0 0.0
    %6386 = vmatpush1.msra.mxu0 %v6339
    %6387 = vmatprep.subr.mxu0 0.0
    %6388 = vmatpush1.msra.mxu0 %v6340
    %6389 = vmatprep.subr.mxu0 0.0
    %6390 = vmatpush1.msra.mxu0 %v6341
    %6391 = vmatprep.subr.mxu0 0.0
    %6392 = vmatpush1.msra.mxu0 %v6342
    %6393 = vmatprep.subr.mxu0 0.0
    %6394 = vmatpush1.msra.mxu0 %v6343
    %6395 = vmatprep.subr.mxu0 0.0
    %6396 = vmatpush1.msra.mxu0 %v6344
    %6397 = vmatprep.subr.mxu0 0.0
    %6398 = vmatpush1.msra.mxu0 %v6345
    %6399 = vmatprep.subr.mxu0 0.0
    %6400 = vmatpush1.msra.mxu0 %v6346
    %6401 = vmatprep.subr.mxu0 0.0
    %6402 = vmatpush1.msra.mxu0 %v6347
    %6403 = vmatprep.subr.mxu0 0.0
    %6404 = vmatpush1.msra.mxu0 %v6348
    %6405 = vmatprep.subr.mxu0 0.0
    %6406 = vmatpush1.msra.mxu0 %v6349
    %6407 = vmatprep.subr.mxu0 0.0
    %6408 = vmatpush1.msra.mxu0 %v6350
    %6409 = vmatprep.subr.mxu0 0.0
    %6410 = vmatpush1.msra.mxu0 %v6351
    %6411 = vmatprep.subr.mxu0 0.0
    %6412 = vmatpush1.msra.mxu0 %v6352
    %6413 = vmatprep.subr.mxu0 0.0
    %6414 = vmatpush1.msra.mxu0 %v6353
    %6415 = vmatprep.subr.mxu0 0.0
    %6416 = vmatpush1.msra.mxu0 %v6354
    %6417 = vmatprep.subr.mxu0 0.0
    %6418 = vmatpush1.msra.mxu0 %v6355
    %6419 = vmatprep.subr.mxu0 0.0
    %6420 = vmatpush1.msra.mxu0 %v6356
    %6421 = vmatprep.subr.mxu0 0.0
    %6422 = vmatpush1.msra.mxu0 %v6357
    %6423 = vmatprep.subr.mxu0 0.0
    %6424 = vmatpush1.msra.mxu0 %v6358
    %6425 = vmatprep.subr.mxu0 0.0
    %6426 = vmatpush1.msra.mxu0 %v6359
    %6427 = vmatprep.subr.mxu0 0.0
    %6428 = vmatpush1.msra.mxu0 %v6360
    %6429 = vmatprep.subr.mxu0 0.0
    %6430 = vmatpush1.msra.mxu0 %v6361
    %6431 = vmatprep.subr.mxu0 0.0
    %6432 = vmatpush1.msra.mxu0 %v6362
    %6433 = vmatprep.subr.mxu0 0.0
    %6434 = vmatpush1.msra.mxu0 %v6363
    %6435 = vmatprep.subr.mxu0 0.0
    %6436 = vmatpush1.msra.mxu0 %v6364
    %6437 = vmatprep.mubr.f32.mxu0 %v6329
    %6438 = vmatmul.mubr.f32.gmra.mrb[0].mxu0 %v6328
    %v6439 = vpop.f32.mrb[0].mxu0
    %v6440 = vadd.f32 %v6371, %v6439
    %v6441 = vpop.f32.mrb[0].mxu0
    %6442 = vmatprep.mubr.f32.mxu0 %v6331
    %6443 = vmatmul.mubr.f32.gmra.mrb[0].mxu0 %v6330
    %v6444 = vpop.f32.mrb[0].mxu0
    %v6445 = vadd.f32 %v6371, %v6444
    %v6446 = vpop.f32.mrb[0].mxu0
    %6447 = vdwg.mxu0
    %v6448 = vadd.f32 %v6135, %v6440
    %v6449 = vadd.f32 %v6136, %v6445
    %s6450 = scalar_lea.vmem %s5, 2
    %v6451 = vld [vmem:[%s6450] sm:$0x1]
    %s6452 = scalar_lea.vmem %s6, 2
    %v6453 = vld [vmem:[%s6452] sm:$0x1]
    %v6454 = vsel %vm180, %v6448, 0.0
    %6455 = vadd.xlane.f32.xlu0 %v6454
    %v6456 = vpop.xlane.xlu0 %6455
    %v6457 = vsel %vm180, %v6449, 0.0
    %6458 = vadd.xlane.f32.xlu0 %v6457
    %v6459 = vpop.xlane.xlu0 %6458
    %v6460 = vmul.f32 %v6456, %v187
    %v6461 = vmul.f32 %v6459, %v187
    %v6462 = vsub.f32 %v6448, %v6460
    %v6463 = vsub.f32 %v6449, %v6461
    %v6464 = vmul.f32 %v6462, %v6462
    %v6465 = vmul.f32 %v6463, %v6463
    %v6466 = vsel %vm180, %v6464, 0.0
    %6467 = vadd.xlane.f32.xlu0 %v6466
    %v6468 = vpop.xlane.xlu0 %6467
    %v6469 = vsel %vm180, %v6465, 0.0
    %6470 = vadd.xlane.f32.xlu0 %v6469
    %v6471 = vpop.xlane.xlu0 %6470
    %v6472 = vmul.f32 %v6468, %v187
    %v6473 = vmul.f32 %v6471, %v187
    %v6474 = vadd.f32 %v6472, 1e-05
    %v6475 = vadd.f32 %v6473, 1e-05
    %v6476 = vrsqrt.pop %v6474
    %v6477 = vrsqrt.pop %v6475
    %v6478 = vmul.f32 %v6462, %v6476
    %v6479 = vmul.f32 %v6463, %v6477
    %v6481 = vlaneseq
    %v6482 = vshrl.u32 %v6481, 7
    %v6483 = vsub.s32 0, %v6482
    %v6484 = vrot.slane %v6451, %v6483
    %v6486 = vmul.f32 %v6478, %v6484
    %v6487 = vmul.f32 %v6479, %v6484
    %v6489 = vlaneseq
    %v6490 = vshrl.u32 %v6489, 7
    %v6491 = vsub.s32 0, %v6490
    %v6492 = vrot.slane %v6453, %v6491
    %v6494 = vadd.f32 %v6486, %v6492
    %v6495 = vadd.f32 %v6487, %v6492
    %s6496 = scalar_lea.vmem %s7, 512
    %v6497 = vld [vmem:[%s6496] sm:$0xff]
    %v6498 = vld [vmem:[%s6496 + $0x8] sm:$0xff]
    %v6499 = vld [vmem:[%s6496 + $0x10] sm:$0xff]
    %v6500 = vld [vmem:[%s6496 + $0x18] sm:$0xff]
    %v6501 = vld [vmem:[%s6496 + $0x20] sm:$0xff]
    %v6502 = vld [vmem:[%s6496 + $0x28] sm:$0xff]
    %v6503 = vld [vmem:[%s6496 + $0x30] sm:$0xff]
    %v6504 = vld [vmem:[%s6496 + $0x38] sm:$0xff]
    %s6505 = scalar_lea.vmem %s8, 8
    %v6506 = vld [vmem:[%s6505] sm:$0x1]
    %v6508 = vlaneseq
    %v6509 = vshrl.u32 %v6508, 7
    %v6510 = vsub.s32 0, %v6509
    %v6511 = vrot.slane %v6506, %v6510
    %v6514 = vsel %vm180, %v6494, 0
    %v6517 = vsel %vm180, %v6495, 0
    %6519 = vmatprep.subr.mxu0 0.0
    %6520 = vmatpush1.msra.mxu0 %v6497
    %6521 = vmatprep.subr.mxu0 0.0
    %6522 = vmatpush1.msra.mxu0 %v6498
    %6523 = vmatprep.subr.mxu0 0.0
    %6524 = vmatpush1.msra.mxu0 %v6499
    %6525 = vmatprep.subr.mxu0 0.0
    %6526 = vmatpush1.msra.mxu0 %v6500
    %6527 = vmatprep.subr.mxu0 0.0
    %6528 = vmatpush1.msra.mxu0 %v6501
    %6529 = vmatprep.subr.mxu0 0.0
    %6530 = vmatpush1.msra.mxu0 %v6502
    %6531 = vmatprep.subr.mxu0 0.0
    %6532 = vmatpush1.msra.mxu0 %v6503
    %6533 = vmatprep.subr.mxu0 0.0
    %6534 = vmatpush1.msra.mxu0 %v6504
    %6535 = vmatprep.subr.mxu0 0.0
    %6536 = vmatpush1.msra.mxu0 0.0
    %6537 = vmatprep.subr.mxu0 0.0
    %6538 = vmatpush1.msra.mxu0 0.0
    %6539 = vmatprep.subr.mxu0 0.0
    %6540 = vmatpush1.msra.mxu0 0.0
    %6541 = vmatprep.subr.mxu0 0.0
    %6542 = vmatpush1.msra.mxu0 0.0
    %6543 = vmatprep.subr.mxu0 0.0
    %6544 = vmatpush1.msra.mxu0 0.0
    %6545 = vmatprep.subr.mxu0 0.0
    %6546 = vmatpush1.msra.mxu0 0.0
    %6547 = vmatprep.subr.mxu0 0.0
    %6548 = vmatpush1.msra.mxu0 0.0
    %6549 = vmatprep.subr.mxu0 0.0
    %6550 = vmatpush1.msra.mxu0 0.0
    %6551 = vmatprep.subr.mxu0 0.0
    %6552 = vmatpush1.msra.mxu0 0.0
    %6553 = vmatprep.subr.mxu0 0.0
    %6554 = vmatpush1.msra.mxu0 0.0
    %6555 = vmatprep.subr.mxu0 0.0
    %6556 = vmatpush1.msra.mxu0 0.0
    %6557 = vmatprep.subr.mxu0 0.0
    %6558 = vmatpush1.msra.mxu0 0.0
    %6559 = vmatprep.subr.mxu0 0.0
    %6560 = vmatpush1.msra.mxu0 0.0
    %6561 = vmatprep.subr.mxu0 0.0
    %6562 = vmatpush1.msra.mxu0 0.0
    %6563 = vmatprep.subr.mxu0 0.0
    %6564 = vmatpush1.msra.mxu0 0.0
    %6565 = vmatprep.subr.mxu0 0.0
    %6566 = vmatpush1.msra.mxu0 0.0
    %6567 = vmatprep.subr.mxu0 0.0
    %6568 = vmatpush1.msra.mxu0 0.0
    %6569 = vmatprep.subr.mxu0 0.0
    %6570 = vmatpush1.msra.mxu0 0.0
    %6571 = vmatprep.subr.mxu0 0.0
    %6572 = vmatpush1.msra.mxu0 0.0
    %6573 = vmatprep.subr.mxu0 0.0
    %6574 = vmatpush1.msra.mxu0 0.0
    %6575 = vmatprep.subr.mxu0 0.0
    %6576 = vmatpush1.msra.mxu0 0.0
    %6577 = vmatprep.subr.mxu0 0.0
    %6578 = vmatpush1.msra.mxu0 0.0
    %6579 = vmatprep.subr.mxu0 0.0
    %6580 = vmatpush1.msra.mxu0 0.0
    %6581 = vmatprep.subr.mxu0 0.0
    %6582 = vmatpush1.msra.mxu0 0.0
    %6583 = vmatprep.mubr.f32.mxu0 0.0
    %6584 = vmatmul.mubr.f32.gmra.mrb[0].mxu0 %v6514
    %v6585 = vpop.f32.mrb[0].mxu0
    %v6586 = vadd.f32 %v6511, %v6585
    %v6587 = vpop.f32.mrb[0].mxu0
    %6588 = vmatprep.mubr.f32.mxu0 0.0
    %6589 = vmatmul.mubr.f32.gmra.mrb[0].mxu0 %v6517
    %v6590 = vpop.f32.mrb[0].mxu0
    %v6591 = vadd.f32 %v6511, %v6590
    %v6592 = vpop.f32.mrb[0].mxu0
    %6593 = vdwg.mxu0
    %s6594 = scalar_lea.vmem %s9, 512
    %v6595 = vld [vmem:[%s6594] sm:$0xff]
    %v6596 = vld [vmem:[%s6594 + $0x8] sm:$0xff]
    %v6597 = vld [vmem:[%s6594 + $0x10] sm:$0xff]
    %v6598 = vld [vmem:[%s6594 + $0x18] sm:$0xff]
    %v6599 = vld [vmem:[%s6594 + $0x20] sm:$0xff]
    %v6600 = vld [vmem:[%s6594 + $0x28] sm:$0xff]
    %v6601 = vld [vmem:[%s6594 + $0x30] sm:$0xff]
    %v6602 = vld [vmem:[%s6594 + $0x38] sm:$0xff]
    %s6603 = scalar_lea.vmem %s10, 8
    %v6604 = vld [vmem:[%s6603] sm:$0x1]
    %v6606 = vlaneseq
    %v6607 = vshrl.u32 %v6606, 7
    %v6608 = vsub.s32 0, %v6607
    %v6609 = vrot.slane %v6604, %v6608
    %6611 = vmatprep.subr.mxu0 0.0
    %6612 = vmatpush1.msra.mxu0 %v6595
    %6613 = vmatprep.subr.mxu0 0.0
    %6614 = vmatpush1.msra.mxu0 %v6596
    %6615 = vmatprep.subr.mxu0 0.0
    %6616 = vmatpush1.msra.mxu0 %v6597
    %6617 = vmatprep.subr.mxu0 0.0
    %6618 = vmatpush1.msra.mxu0 %v6598
    %6619 = vmatprep.subr.mxu0 0.0
    %6620 = vmatpush1.msra.mxu0 %v6599
    %6621 = vmatprep.subr.mxu0 0.0
    %6622 = vmatpush1.msra.mxu0 %v6600
    %6623 = vmatprep.subr.mxu0 0.0
    %6624 = vmatpush1.msra.mxu0 %v6601
    %6625 = vmatprep.subr.mxu0 0.0
    %6626 = vmatpush1.msra.mxu0 %v6602
    %6627 = vmatprep.subr.mxu0 0.0
    %6628 = vmatpush1.msra.mxu0 0.0
    %6629 = vmatprep.subr.mxu0 0.0
    %6630 = vmatpush1.msra.mxu0 0.0
    %6631 = vmatprep.subr.mxu0 0.0
    %6632 = vmatpush1.msra.mxu0 0.0
    %6633 = vmatprep.subr.mxu0 0.0
    %6634 = vmatpush1.msra.mxu0 0.0
    %6635 = vmatprep.subr.mxu0 0.0
    %6636 = vmatpush1.msra.mxu0 0.0
    %6637 = vmatprep.subr.mxu0 0.0
    %6638 = vmatpush1.msra.mxu0 0.0
    %6639 = vmatprep.subr.mxu0 0.0
    %6640 = vmatpush1.msra.mxu0 0.0
    %6641 = vmatprep.subr.mxu0 0.0
    %6642 = vmatpush1.msra.mxu0 0.0
    %6643 = vmatprep.subr.mxu0 0.0
    %6644 = vmatpush1.msra.mxu0 0.0
    %6645 = vmatprep.subr.mxu0 0.0
    %6646 = vmatpush1.msra.mxu0 0.0
    %6647 = vmatprep.subr.mxu0 0.0
    %6648 = vmatpush1.msra.mxu0 0.0
    %6649 = vmatprep.subr.mxu0 0.0
    %6650 = vmatpush1.msra.mxu0 0.0
    %6651 = vmatprep.subr.mxu0 0.0
    %6652 = vmatpush1.msra.mxu0 0.0
    %6653 = vmatprep.subr.mxu0 0.0
    %6654 = vmatpush1.msra.mxu0 0.0
    %6655 = vmatprep.subr.mxu0 0.0
    %6656 = vmatpush1.msra.mxu0 0.0
    %6657 = vmatprep.subr.mxu0 0.0
    %6658 = vmatpush1.msra.mxu0 0.0
    %6659 = vmatprep.subr.mxu0 0.0
    %6660 = vmatpush1.msra.mxu0 0.0
    %6661 = vmatprep.subr.mxu0 0.0
    %6662 = vmatpush1.msra.mxu0 0.0
    %6663 = vmatprep.subr.mxu0 0.0
    %6664 = vmatpush1.msra.mxu0 0.0
    %6665 = vmatprep.subr.mxu0 0.0
    %6666 = vmatpush1.msra.mxu0 0.0
    %6667 = vmatprep.subr.mxu0 0.0
    %6668 = vmatpush1.msra.mxu0 0.0
    %6669 = vmatprep.subr.mxu0 0.0
    %6670 = vmatpush1.msra.mxu0 0.0
    %6671 = vmatprep.subr.mxu0 0.0
    %6672 = vmatpush1.msra.mxu0 0.0
    %6673 = vmatprep.subr.mxu0 0.0
    %6674 = vmatpush1.msra.mxu0 0.0
    %6675 = vmatprep.mubr.f32.mxu0 0.0
    %6676 = vmatmul.mubr.f32.gmra.mrb[0].mxu0 %v6514
    %v6677 = vpop.f32.mrb[0].mxu0
    %v6678 = vadd.f32 %v6609, %v6677
    %v6679 = vpop.f32.mrb[0].mxu0
    %6680 = vmatprep.mubr.f32.mxu0 0.0
    %6681 = vmatmul.mubr.f32.gmra.mrb[0].mxu0 %v6517
    %v6682 = vpop.f32.mrb[0].mxu0
    %v6683 = vadd.f32 %v6609, %v6682
    %v6684 = vpop.f32.mrb[0].mxu0
    %6685 = vdwg.mxu0
    %s6686 = scalar_lea.vmem %s11, 512
    %v6687 = vld [vmem:[%s6686] sm:$0xff]
    %v6688 = vld [vmem:[%s6686 + $0x8] sm:$0xff]
    %v6689 = vld [vmem:[%s6686 + $0x10] sm:$0xff]
    %v6690 = vld [vmem:[%s6686 + $0x18] sm:$0xff]
    %v6691 = vld [vmem:[%s6686 + $0x20] sm:$0xff]
    %v6692 = vld [vmem:[%s6686 + $0x28] sm:$0xff]
    %v6693 = vld [vmem:[%s6686 + $0x30] sm:$0xff]
    %v6694 = vld [vmem:[%s6686 + $0x38] sm:$0xff]
    %s6695 = scalar_lea.vmem %s12, 8
    %v6696 = vld [vmem:[%s6695] sm:$0x1]
    %v6698 = vlaneseq
    %v6699 = vshrl.u32 %v6698, 7
    %v6700 = vsub.s32 0, %v6699
    %v6701 = vrot.slane %v6696, %v6700
    %6703 = vmatprep.subr.mxu0 0.0
    %6704 = vmatpush1.msra.mxu0 %v6687
    %6705 = vmatprep.subr.mxu0 0.0
    %6706 = vmatpush1.msra.mxu0 %v6688
    %6707 = vmatprep.subr.mxu0 0.0
    %6708 = vmatpush1.msra.mxu0 %v6689
    %6709 = vmatprep.subr.mxu0 0.0
    %6710 = vmatpush1.msra.mxu0 %v6690
    %6711 = vmatprep.subr.mxu0 0.0
    %6712 = vmatpush1.msra.mxu0 %v6691
    %6713 = vmatprep.subr.mxu0 0.0
    %6714 = vmatpush1.msra.mxu0 %v6692
    %6715 = vmatprep.subr.mxu0 0.0
    %6716 = vmatpush1.msra.mxu0 %v6693
    %6717 = vmatprep.subr.mxu0 0.0
    %6718 = vmatpush1.msra.mxu0 %v6694
    %6719 = vmatprep.subr.mxu0 0.0
    %6720 = vmatpush1.msra.mxu0 0.0
    %6721 = vmatprep.subr.mxu0 0.0
    %6722 = vmatpush1.msra.mxu0 0.0
    %6723 = vmatprep.subr.mxu0 0.0
    %6724 = vmatpush1.msra.mxu0 0.0
    %6725 = vmatprep.subr.mxu0 0.0
    %6726 = vmatpush1.msra.mxu0 0.0
    %6727 = vmatprep.subr.mxu0 0.0
    %6728 = vmatpush1.msra.mxu0 0.0
    %6729 = vmatprep.subr.mxu0 0.0
    %6730 = vmatpush1.msra.mxu0 0.0
    %6731 = vmatprep.subr.mxu0 0.0
    %6732 = vmatpush1.msra.mxu0 0.0
    %6733 = vmatprep.subr.mxu0 0.0
    %6734 = vmatpush1.msra.mxu0 0.0
    %6735 = vmatprep.subr.mxu0 0.0
    %6736 = vmatpush1.msra.mxu0 0.0
    %6737 = vmatprep.subr.mxu0 0.0
    %6738 = vmatpush1.msra.mxu0 0.0
    %6739 = vmatprep.subr.mxu0 0.0
    %6740 = vmatpush1.msra.mxu0 0.0
    %6741 = vmatprep.subr.mxu0 0.0
    %6742 = vmatpush1.msra.mxu0 0.0
    %6743 = vmatprep.subr.mxu0 0.0
    %6744 = vmatpush1.msra.mxu0 0.0
    %6745 = vmatprep.subr.mxu0 0.0
    %6746 = vmatpush1.msra.mxu0 0.0
    %6747 = vmatprep.subr.mxu0 0.0
    %6748 = vmatpush1.msra.mxu0 0.0
    %6749 = vmatprep.subr.mxu0 0.0
    %6750 = vmatpush1.msra.mxu0 0.0
    %6751 = vmatprep.subr.mxu0 0.0
    %6752 = vmatpush1.msra.mxu0 0.0
    %6753 = vmatprep.subr.mxu0 0.0
    %6754 = vmatpush1.msra.mxu0 0.0
    %6755 = vmatprep.subr.mxu0 0.0
    %6756 = vmatpush1.msra.mxu0 0.0
    %6757 = vmatprep.subr.mxu0 0.0
    %6758 = vmatpush1.msra.mxu0 0.0
    %6759 = vmatprep.subr.mxu0 0.0
    %6760 = vmatpush1.msra.mxu0 0.0
    %6761 = vmatprep.subr.mxu0 0.0
    %6762 = vmatpush1.msra.mxu0 0.0
    %6763 = vmatprep.subr.mxu0 0.0
    %6764 = vmatpush1.msra.mxu0 0.0
    %6765 = vmatprep.subr.mxu0 0.0
    %6766 = vmatpush1.msra.mxu0 0.0
    %6767 = vmatprep.mubr.f32.mxu0 0.0
    %6768 = vmatmul.mubr.f32.gmra.mrb[0].mxu0 %v6514
    %v6769 = vpop.f32.mrb[0].mxu0
    %v6770 = vadd.f32 %v6701, %v6769
    %v6771 = vpop.f32.mrb[0].mxu0
    %6772 = vmatprep.mubr.f32.mxu0 0.0
    %6773 = vmatmul.mubr.f32.gmra.mrb[0].mxu0 %v6517
    %v6774 = vpop.f32.mrb[0].mxu0
    %v6775 = vadd.f32 %v6701, %v6774
    %v6776 = vpop.f32.mrb[0].mxu0
    %6777 = vdwg.mxu0
    %v6779 = vsel %vm550, %v6586, 0
    %v6782 = vsel %vm550, %v6678, 0
    %6784 = vmatprep.subr.mxu0 0.0
    %6785 = vmatpush1.xpose.msra.mxu0 %v6782
    %6786 = vmatprep.subr.mxu0 0.0
    %6787 = vmatpush1.xpose.msra.mxu0 0.0
    %6788 = vmatprep.subr.mxu0 0.0
    %6789 = vmatpush1.xpose.msra.mxu0 0.0
    %6790 = vmatprep.subr.mxu0 0.0
    %6791 = vmatpush1.xpose.msra.mxu0 0.0
    %6792 = vmatprep.subr.mxu0 0.0
    %6793 = vmatpush1.xpose.msra.mxu0 0.0
    %6794 = vmatprep.subr.mxu0 0.0
    %6795 = vmatpush1.xpose.msra.mxu0 0.0
    %6796 = vmatprep.subr.mxu0 0.0
    %6797 = vmatpush1.xpose.msra.mxu0 0.0
    %6798 = vmatprep.subr.mxu0 0.0
    %6799 = vmatpush1.xpose.msra.mxu0 0.0
    %6800 = vmatprep.subr.mxu0 0.0
    %6801 = vmatpush1.xpose.msra.mxu0 0.0
    %6802 = vmatprep.subr.mxu0 0.0
    %6803 = vmatpush1.xpose.msra.mxu0 0.0
    %6804 = vmatprep.subr.mxu0 0.0
    %6805 = vmatpush1.xpose.msra.mxu0 0.0
    %6806 = vmatprep.subr.mxu0 0.0
    %6807 = vmatpush1.xpose.msra.mxu0 0.0
    %6808 = vmatprep.subr.mxu0 0.0
    %6809 = vmatpush1.xpose.msra.mxu0 0.0
    %6810 = vmatprep.subr.mxu0 0.0
    %6811 = vmatpush1.xpose.msra.mxu0 0.0
    %6812 = vmatprep.subr.mxu0 0.0
    %6813 = vmatpush1.xpose.msra.mxu0 0.0
    %6814 = vmatprep.subr.mxu0 0.0
    %6815 = vmatpush1.xpose.msra.mxu0 0.0
    %6816 = vmatprep.subr.mxu0 0.0
    %6817 = vmatpush1.xpose.msra.mxu0 0.0
    %6818 = vmatprep.subr.mxu0 0.0
    %6819 = vmatpush1.xpose.msra.mxu0 0.0
    %6820 = vmatprep.subr.mxu0 0.0
    %6821 = vmatpush1.xpose.msra.mxu0 0.0
    %6822 = vmatprep.subr.mxu0 0.0
    %6823 = vmatpush1.xpose.msra.mxu0 0.0
    %6824 = vmatprep.subr.mxu0 0.0
    %6825 = vmatpush1.xpose.msra.mxu0 0.0
    %6826 = vmatprep.subr.mxu0 0.0
    %6827 = vmatpush1.xpose.msra.mxu0 0.0
    %6828 = vmatprep.subr.mxu0 0.0
    %6829 = vmatpush1.xpose.msra.mxu0 0.0
    %6830 = vmatprep.subr.mxu0 0.0
    %6831 = vmatpush1.xpose.msra.mxu0 0.0
    %6832 = vmatprep.subr.mxu0 0.0
    %6833 = vmatpush1.xpose.msra.mxu0 0.0
    %6834 = vmatprep.subr.mxu0 0.0
    %6835 = vmatpush1.xpose.msra.mxu0 0.0
    %6836 = vmatprep.subr.mxu0 0.0
    %6837 = vmatpush1.xpose.msra.mxu0 0.0
    %6838 = vmatprep.subr.mxu0 0.0
    %6839 = vmatpush1.xpose.msra.mxu0 0.0
    %6840 = vmatprep.subr.mxu0 0.0
    %6841 = vmatpush1.xpose.msra.mxu0 0.0
    %6842 = vmatprep.subr.mxu0 0.0
    %6843 = vmatpush1.xpose.msra.mxu0 0.0
    %6844 = vmatprep.subr.mxu0 0.0
    %6845 = vmatpush1.xpose.msra.mxu0 0.0
    %6846 = vmatprep.subr.mxu0 0.0
    %6847 = vmatpush1.xpose.msra.mxu0 0.0
    %6848 = vmatprep.mubr.f32.mxu0 0.0
    %6849 = vmatmul.mubr.f32.gmra.mrb[0].mxu0 %v6779
    %v6850 = vpop.f32.mrb[0].mxu0
    %v6851 = vadd.f32 0.0, %v6850
    %v6852 = vpop.f32.mrb[0].mxu0
    %6853 = vdwg.mxu0
    %v6855 = vsel %vm550, %v6591, 0
    %v6858 = vsel %vm550, %v6683, 0
    %6860 = vmatprep.subr.mxu0 0.0
    %6861 = vmatpush1.xpose.msra.mxu0 %v6858
    %6862 = vmatprep.subr.mxu0 0.0
    %6863 = vmatpush1.xpose.msra.mxu0 0.0
    %6864 = vmatprep.subr.mxu0 0.0
    %6865 = vmatpush1.xpose.msra.mxu0 0.0
    %6866 = vmatprep.subr.mxu0 0.0
    %6867 = vmatpush1.xpose.msra.mxu0 0.0
    %6868 = vmatprep.subr.mxu0 0.0
    %6869 = vmatpush1.xpose.msra.mxu0 0.0
    %6870 = vmatprep.subr.mxu0 0.0
    %6871 = vmatpush1.xpose.msra.mxu0 0.0
    %6872 = vmatprep.subr.mxu0 0.0
    %6873 = vmatpush1.xpose.msra.mxu0 0.0
    %6874 = vmatprep.subr.mxu0 0.0
    %6875 = vmatpush1.xpose.msra.mxu0 0.0
    %6876 = vmatprep.subr.mxu0 0.0
    %6877 = vmatpush1.xpose.msra.mxu0 0.0
    %6878 = vmatprep.subr.mxu0 0.0
    %6879 = vmatpush1.xpose.msra.mxu0 0.0
    %6880 = vmatprep.subr.mxu0 0.0
    %6881 = vmatpush1.xpose.msra.mxu0 0.0
    %6882 = vmatprep.subr.mxu0 0.0
    %6883 = vmatpush1.xpose.msra.mxu0 0.0
    %6884 = vmatprep.subr.mxu0 0.0
    %6885 = vmatpush1.xpose.msra.mxu0 0.0
    %6886 = vmatprep.subr.mxu0 0.0
    %6887 = vmatpush1.xpose.msra.mxu0 0.0
    %6888 = vmatprep.subr.mxu0 0.0
    %6889 = vmatpush1.xpose.msra.mxu0 0.0
    %6890 = vmatprep.subr.mxu0 0.0
    %6891 = vmatpush1.xpose.msra.mxu0 0.0
    %6892 = vmatprep.subr.mxu0 0.0
    %6893 = vmatpush1.xpose.msra.mxu0 0.0
    %6894 = vmatprep.subr.mxu0 0.0
    %6895 = vmatpush1.xpose.msra.mxu0 0.0
    %6896 = vmatprep.subr.mxu0 0.0
    %6897 = vmatpush1.xpose.msra.mxu0 0.0
    %6898 = vmatprep.subr.mxu0 0.0
    %6899 = vmatpush1.xpose.msra.mxu0 0.0
    %6900 = vmatprep.subr.mxu0 0.0
    %6901 = vmatpush1.xpose.msra.mxu0 0.0
    %6902 = vmatprep.subr.mxu0 0.0
    %6903 = vmatpush1.xpose.msra.mxu0 0.0
    %6904 = vmatprep.subr.mxu0 0.0
    %6905 = vmatpush1.xpose.msra.mxu0 0.0
    %6906 = vmatprep.subr.mxu0 0.0
    %6907 = vmatpush1.xpose.msra.mxu0 0.0
    %6908 = vmatprep.subr.mxu0 0.0
    %6909 = vmatpush1.xpose.msra.mxu0 0.0
    %6910 = vmatprep.subr.mxu0 0.0
    %6911 = vmatpush1.xpose.msra.mxu0 0.0
    %6912 = vmatprep.subr.mxu0 0.0
    %6913 = vmatpush1.xpose.msra.mxu0 0.0
    %6914 = vmatprep.subr.mxu0 0.0
    %6915 = vmatpush1.xpose.msra.mxu0 0.0
    %6916 = vmatprep.subr.mxu0 0.0
    %6917 = vmatpush1.xpose.msra.mxu0 0.0
    %6918 = vmatprep.subr.mxu0 0.0
    %6919 = vmatpush1.xpose.msra.mxu0 0.0
    %6920 = vmatprep.subr.mxu0 0.0
    %6921 = vmatpush1.xpose.msra.mxu0 0.0
    %6922 = vmatprep.subr.mxu0 0.0
    %6923 = vmatpush1.xpose.msra.mxu0 0.0
    %6924 = vmatprep.mubr.f32.mxu0 0.0
    %6925 = vmatmul.mubr.f32.gmra.mrb[0].mxu0 %v6855
    %v6926 = vpop.f32.mrb[0].mxu0
    %v6927 = vadd.f32 0.0, %v6926
    %v6928 = vpop.f32.mrb[0].mxu0
    %6929 = vdwg.mxu0
    %v6930 = vmul.f32 %v6851, 0.25
    %v6931 = vmul.f32 %v6927, 0.25
    %v6932 = vadd.f32 %v6930, %v229
    %v6933 = vadd.f32 %v6931, %v229
    %v6934 = vsel %vm707, %v6932, -inf
    %6935 = vmax.xlane.f32.xlu0 %v6934
    %v6936 = vpop.xlane.xlu0 %6935
    %v6937 = vsel %vm707, %v6933, -inf
    %6938 = vmax.xlane.f32.xlu0 %v6937
    %v6939 = vpop.xlane.xlu0 %6938
    %v6940 = vsub.f32 %v6932, %v6936
    %v6941 = vsub.f32 %v6933, %v6939
    %v6942 = vmul.f32 %v6940, 1.442695
    %v6943 = vpow.pop %v6942
    %v6944 = vmul.f32 %v6941, 1.442695
    %v6945 = vpow.pop %v6944
    %v6946 = vsel %vm707, %v6943, 0.0
    %6947 = vadd.xlane.f32.xlu0 %v6946
    %v6948 = vpop.xlane.xlu0 %6947
    %v6949 = vsel %vm707, %v6945, 0.0
    %6950 = vadd.xlane.f32.xlu0 %v6949
    %v6951 = vpop.xlane.xlu0 %6950
    %v6952 = vrcp.pop %v6948
    %v6953 = vmul.f32 %v6943, %v6952
    %v6954 = vrcp.pop %v6951
    %v6955 = vmul.f32 %v6945, %v6954
    %v6957 = vsel %vm707, %v6953, 0
    %6959 = vmatprep.subr.mxu0 0.0
    %6960 = vmatpush1.msra.mxu0 %v6770
    %6961 = vmatprep.subr.mxu0 0.0
    %6962 = vmatpush1.msra.mxu0 0.0
    %6963 = vmatprep.subr.mxu0 0.0
    %6964 = vmatpush1.msra.mxu0 0.0
    %6965 = vmatprep.subr.mxu0 0.0
    %6966 = vmatpush1.msra.mxu0 0.0
    %6967 = vmatprep.subr.mxu0 0.0
    %6968 = vmatpush1.msra.mxu0 0.0
    %6969 = vmatprep.subr.mxu0 0.0
    %6970 = vmatpush1.msra.mxu0 0.0
    %6971 = vmatprep.subr.mxu0 0.0
    %6972 = vmatpush1.msra.mxu0 0.0
    %6973 = vmatprep.subr.mxu0 0.0
    %6974 = vmatpush1.msra.mxu0 0.0
    %6975 = vmatprep.subr.mxu0 0.0
    %6976 = vmatpush1.msra.mxu0 0.0
    %6977 = vmatprep.subr.mxu0 0.0
    %6978 = vmatpush1.msra.mxu0 0.0
    %6979 = vmatprep.subr.mxu0 0.0
    %6980 = vmatpush1.msra.mxu0 0.0
    %6981 = vmatprep.subr.mxu0 0.0
    %6982 = vmatpush1.msra.mxu0 0.0
    %6983 = vmatprep.subr.mxu0 0.0
    %6984 = vmatpush1.msra.mxu0 0.0
    %6985 = vmatprep.subr.mxu0 0.0
    %6986 = vmatpush1.msra.mxu0 0.0
    %6987 = vmatprep.subr.mxu0 0.0
    %6988 = vmatpush1.msra.mxu0 0.0
    %6989 = vmatprep.subr.mxu0 0.0
    %6990 = vmatpush1.msra.mxu0 0.0
    %6991 = vmatprep.subr.mxu0 0.0
    %6992 = vmatpush1.msra.mxu0 0.0
    %6993 = vmatprep.subr.mxu0 0.0
    %6994 = vmatpush1.msra.mxu0 0.0
    %6995 = vmatprep.subr.mxu0 0.0
    %6996 = vmatpush1.msra.mxu0 0.0
    %6997 = vmatprep.subr.mxu0 0.0
    %6998 = vmatpush1.msra.mxu0 0.0
    %6999 = vmatprep.subr.mxu0 0.0
    %7000 = vmatpush1.msra.mxu0 0.0
    %7001 = vmatprep.subr.mxu0 0.0
    %7002 = vmatpush1.msra.mxu0 0.0
    %7003 = vmatprep.subr.mxu0 0.0
    %7004 = vmatpush1.msra.mxu0 0.0
    %7005 = vmatprep.subr.mxu0 0.0
    %7006 = vmatpush1.msra.mxu0 0.0
    %7007 = vmatprep.subr.mxu0 0.0
    %7008 = vmatpush1.msra.mxu0 0.0
    %7009 = vmatprep.subr.mxu0 0.0
    %7010 = vmatpush1.msra.mxu0 0.0
    %7011 = vmatprep.subr.mxu0 0.0
    %7012 = vmatpush1.msra.mxu0 0.0
    %7013 = vmatprep.subr.mxu0 0.0
    %7014 = vmatpush1.msra.mxu0 0.0
    %7015 = vmatprep.subr.mxu0 0.0
    %7016 = vmatpush1.msra.mxu0 0.0
    %7017 = vmatprep.subr.mxu0 0.0
    %7018 = vmatpush1.msra.mxu0 0.0
    %7019 = vmatprep.subr.mxu0 0.0
    %7020 = vmatpush1.msra.mxu0 0.0
    %7021 = vmatprep.subr.mxu0 0.0
    %7022 = vmatpush1.msra.mxu0 0.0
    %7023 = vmatprep.mubr.f32.mxu0 0.0
    %7024 = vmatmul.mubr.f32.gmra.mrb[0].mxu0 %v6957
    %v7025 = vpop.f32.mrb[0].mxu0
    %v7026 = vadd.f32 0.0, %v7025
    %v7027 = vpop.f32.mrb[0].mxu0
    %7028 = vdwg.mxu0
    %v7030 = vsel %vm707, %v6955, 0
    %7032 = vmatprep.subr.mxu0 0.0
    %7033 = vmatpush1.msra.mxu0 %v6775
    %7034 = vmatprep.subr.mxu0 0.0
    %7035 = vmatpush1.msra.mxu0 0.0
    %7036 = vmatprep.subr.mxu0 0.0
    %7037 = vmatpush1.msra.mxu0 0.0
    %7038 = vmatprep.subr.mxu0 0.0
    %7039 = vmatpush1.msra.mxu0 0.0
    %7040 = vmatprep.subr.mxu0 0.0
    %7041 = vmatpush1.msra.mxu0 0.0
    %7042 = vmatprep.subr.mxu0 0.0
    %7043 = vmatpush1.msra.mxu0 0.0
    %7044 = vmatprep.subr.mxu0 0.0
    %7045 = vmatpush1.msra.mxu0 0.0
    %7046 = vmatprep.subr.mxu0 0.0
    %7047 = vmatpush1.msra.mxu0 0.0
    %7048 = vmatprep.subr.mxu0 0.0
    %7049 = vmatpush1.msra.mxu0 0.0
    %7050 = vmatprep.subr.mxu0 0.0
    %7051 = vmatpush1.msra.mxu0 0.0
    %7052 = vmatprep.subr.mxu0 0.0
    %7053 = vmatpush1.msra.mxu0 0.0
    %7054 = vmatprep.subr.mxu0 0.0
    %7055 = vmatpush1.msra.mxu0 0.0
    %7056 = vmatprep.subr.mxu0 0.0
    %7057 = vmatpush1.msra.mxu0 0.0
    %7058 = vmatprep.subr.mxu0 0.0
    %7059 = vmatpush1.msra.mxu0 0.0
    %7060 = vmatprep.subr.mxu0 0.0
    %7061 = vmatpush1.msra.mxu0 0.0
    %7062 = vmatprep.subr.mxu0 0.0
    %7063 = vmatpush1.msra.mxu0 0.0
    %7064 = vmatprep.subr.mxu0 0.0
    %7065 = vmatpush1.msra.mxu0 0.0
    %7066 = vmatprep.subr.mxu0 0.0
    %7067 = vmatpush1.msra.mxu0 0.0
    %7068 = vmatprep.subr.mxu0 0.0
    %7069 = vmatpush1.msra.mxu0 0.0
    %7070 = vmatprep.subr.mxu0 0.0
    %7071 = vmatpush1.msra.mxu0 0.0
    %7072 = vmatprep.subr.mxu0 0.0
    %7073 = vmatpush1.msra.mxu0 0.0
    %7074 = vmatprep.subr.mxu0 0.0
    %7075 = vmatpush1.msra.mxu0 0.0
    %7076 = vmatprep.subr.mxu0 0.0
    %7077 = vmatpush1.msra.mxu0 0.0
    %7078 = vmatprep.subr.mxu0 0.0
    %7079 = vmatpush1.msra.mxu0 0.0
    %7080 = vmatprep.subr.mxu0 0.0
    %7081 = vmatpush1.msra.mxu0 0.0
    %7082 = vmatprep.subr.mxu0 0.0
    %7083 = vmatpush1.msra.mxu0 0.0
    %7084 = vmatprep.subr.mxu0 0.0
    %7085 = vmatpush1.msra.mxu0 0.0
    %7086 = vmatprep.subr.mxu0 0.0
    %7087 = vmatpush1.msra.mxu0 0.0
    %7088 = vmatprep.subr.mxu0 0.0
    %7089 = vmatpush1.msra.mxu0 0.0
    %7090 = vmatprep.subr.mxu0 0.0
    %7091 = vmatpush1.msra.mxu0 0.0
    %7092 = vmatprep.subr.mxu0 0.0
    %7093 = vmatpush1.msra.mxu0 0.0
    %7094 = vmatprep.subr.mxu0 0.0
    %7095 = vmatpush1.msra.mxu0 0.0
    %7096 = vmatprep.mubr.f32.mxu0 0.0
    %7097 = vmatmul.mubr.f32.gmra.mrb[0].mxu0 %v7030
    %v7098 = vpop.f32.mrb[0].mxu0
    %v7099 = vadd.f32 0.0, %v7098
    %v7100 = vpop.f32.mrb[0].mxu0
    %7101 = vdwg.mxu0
    %s7102 = scalar_lea.vmem %s13, 128
    %v7103 = vld [vmem:[%s7102] sm:$0xff]
    %v7104 = vld [vmem:[%s7102 + $0x8] sm:$0xff]
    %s7105 = scalar_lea.vmem %s7, 576
    %v7106 = vld [vmem:[%s7105] sm:$0xff]
    %v7107 = vld [vmem:[%s7105 + $0x8] sm:$0xff]
    %v7108 = vld [vmem:[%s7105 + $0x10] sm:$0xff]
    %v7109 = vld [vmem:[%s7105 + $0x18] sm:$0xff]
    %v7110 = vld [vmem:[%s7105 + $0x20] sm:$0xff]
    %v7111 = vld [vmem:[%s7105 + $0x28] sm:$0xff]
    %v7112 = vld [vmem:[%s7105 + $0x30] sm:$0xff]
    %v7113 = vld [vmem:[%s7105 + $0x38] sm:$0xff]
    %s7114 = scalar_lea.vmem %s8, 9
    %v7115 = vld [vmem:[%s7114] sm:$0x1]
    %v7117 = vlaneseq
    %v7118 = vshrl.u32 %v7117, 7
    %v7119 = vsub.s32 0, %v7118
    %v7120 = vrot.slane %v7115, %v7119
    %7122 = vmatprep.subr.mxu0 0.0
    %7123 = vmatpush1.msra.mxu0 %v7106
    %7124 = vmatprep.subr.mxu0 0.0
    %7125 = vmatpush1.msra.mxu0 %v7107
    %7126 = vmatprep.subr.mxu0 0.0
    %7127 = vmatpush1.msra.mxu0 %v7108
    %7128 = vmatprep.subr.mxu0 0.0
    %7129 = vmatpush1.msra.mxu0 %v7109
    %7130 = vmatprep.subr.mxu0 0.0
    %7131 = vmatpush1.msra.mxu0 %v7110
    %7132 = vmatprep.subr.mxu0 0.0
    %7133 = vmatpush1.msra.mxu0 %v7111
    %7134 = vmatprep.subr.mxu0 0.0
    %7135 = vmatpush1.msra.mxu0 %v7112
    %7136 = vmatprep.subr.mxu0 0.0
    %7137 = vmatpush1.msra.mxu0 %v7113
    %7138 = vmatprep.subr.mxu0 0.0
    %7139 = vmatpush1.msra.mxu0 0.0
    %7140 = vmatprep.subr.mxu0 0.0
    %7141 = vmatpush1.msra.mxu0 0.0
    %7142 = vmatprep.subr.mxu0 0.0
    %7143 = vmatpush1.msra.mxu0 0.0
    %7144 = vmatprep.subr.mxu0 0.0
    %7145 = vmatpush1.msra.mxu0 0.0
    %7146 = vmatprep.subr.mxu0 0.0
    %7147 = vmatpush1.msra.mxu0 0.0
    %7148 = vmatprep.subr.mxu0 0.0
    %7149 = vmatpush1.msra.mxu0 0.0
    %7150 = vmatprep.subr.mxu0 0.0
    %7151 = vmatpush1.msra.mxu0 0.0
    %7152 = vmatprep.subr.mxu0 0.0
    %7153 = vmatpush1.msra.mxu0 0.0
    %7154 = vmatprep.subr.mxu0 0.0
    %7155 = vmatpush1.msra.mxu0 0.0
    %7156 = vmatprep.subr.mxu0 0.0
    %7157 = vmatpush1.msra.mxu0 0.0
    %7158 = vmatprep.subr.mxu0 0.0
    %7159 = vmatpush1.msra.mxu0 0.0
    %7160 = vmatprep.subr.mxu0 0.0
    %7161 = vmatpush1.msra.mxu0 0.0
    %7162 = vmatprep.subr.mxu0 0.0
    %7163 = vmatpush1.msra.mxu0 0.0
    %7164 = vmatprep.subr.mxu0 0.0
    %7165 = vmatpush1.msra.mxu0 0.0
    %7166 = vmatprep.subr.mxu0 0.0
    %7167 = vmatpush1.msra.mxu0 0.0
    %7168 = vmatprep.subr.mxu0 0.0
    %7169 = vmatpush1.msra.mxu0 0.0
    %7170 = vmatprep.subr.mxu0 0.0
    %7171 = vmatpush1.msra.mxu0 0.0
    %7172 = vmatprep.subr.mxu0 0.0
    %7173 = vmatpush1.msra.mxu0 0.0
    %7174 = vmatprep.subr.mxu0 0.0
    %7175 = vmatpush1.msra.mxu0 0.0
    %7176 = vmatprep.subr.mxu0 0.0
    %7177 = vmatpush1.msra.mxu0 0.0
    %7178 = vmatprep.subr.mxu0 0.0
    %7179 = vmatpush1.msra.mxu0 0.0
    %7180 = vmatprep.subr.mxu0 0.0
    %7181 = vmatpush1.msra.mxu0 0.0
    %7182 = vmatprep.subr.mxu0 0.0
    %7183 = vmatpush1.msra.mxu0 0.0
    %7184 = vmatprep.subr.mxu0 0.0
    %7185 = vmatpush1.msra.mxu0 0.0
    %7186 = vmatprep.mubr.f32.mxu0 0.0
    %7187 = vmatmul.mubr.f32.gmra.mrb[0].mxu0 %v6514
    %v7188 = vpop.f32.mrb[0].mxu0
    %v7189 = vadd.f32 %v7120, %v7188
    %v7190 = vpop.f32.mrb[0].mxu0
    %7191 = vmatprep.mubr.f32.mxu0 0.0
    %7192 = vmatmul.mubr.f32.gmra.mrb[0].mxu0 %v6517
    %v7193 = vpop.f32.mrb[0].mxu0
    %v7194 = vadd.f32 %v7120, %v7193
    %v7195 = vpop.f32.mrb[0].mxu0
    %7196 = vdwg.mxu0
    %s7197 = scalar_lea.vmem %s9, 576
    %v7198 = vld [vmem:[%s7197] sm:$0xff]
    %v7199 = vld [vmem:[%s7197 + $0x8] sm:$0xff]
    %v7200 = vld [vmem:[%s7197 + $0x10] sm:$0xff]
    %v7201 = vld [vmem:[%s7197 + $0x18] sm:$0xff]
    %v7202 = vld [vmem:[%s7197 + $0x20] sm:$0xff]
    %v7203 = vld [vmem:[%s7197 + $0x28] sm:$0xff]
    %v7204 = vld [vmem:[%s7197 + $0x30] sm:$0xff]
    %v7205 = vld [vmem:[%s7197 + $0x38] sm:$0xff]
    %s7206 = scalar_lea.vmem %s10, 9
    %v7207 = vld [vmem:[%s7206] sm:$0x1]
    %v7209 = vlaneseq
    %v7210 = vshrl.u32 %v7209, 7
    %v7211 = vsub.s32 0, %v7210
    %v7212 = vrot.slane %v7207, %v7211
    %7214 = vmatprep.subr.mxu0 0.0
    %7215 = vmatpush1.msra.mxu0 %v7198
    %7216 = vmatprep.subr.mxu0 0.0
    %7217 = vmatpush1.msra.mxu0 %v7199
    %7218 = vmatprep.subr.mxu0 0.0
    %7219 = vmatpush1.msra.mxu0 %v7200
    %7220 = vmatprep.subr.mxu0 0.0
    %7221 = vmatpush1.msra.mxu0 %v7201
    %7222 = vmatprep.subr.mxu0 0.0
    %7223 = vmatpush1.msra.mxu0 %v7202
    %7224 = vmatprep.subr.mxu0 0.0
    %7225 = vmatpush1.msra.mxu0 %v7203
    %7226 = vmatprep.subr.mxu0 0.0
    %7227 = vmatpush1.msra.mxu0 %v7204
    %7228 = vmatprep.subr.mxu0 0.0
    %7229 = vmatpush1.msra.mxu0 %v7205
    %7230 = vmatprep.subr.mxu0 0.0
    %7231 = vmatpush1.msra.mxu0 0.0
    %7232 = vmatprep.subr.mxu0 0.0
    %7233 = vmatpush1.msra.mxu0 0.0
    %7234 = vmatprep.subr.mxu0 0.0
    %7235 = vmatpush1.msra.mxu0 0.0
    %7236 = vmatprep.subr.mxu0 0.0
    %7237 = vmatpush1.msra.mxu0 0.0
    %7238 = vmatprep.subr.mxu0 0.0
    %7239 = vmatpush1.msra.mxu0 0.0
    %7240 = vmatprep.subr.mxu0 0.0
    %7241 = vmatpush1.msra.mxu0 0.0
    %7242 = vmatprep.subr.mxu0 0.0
    %7243 = vmatpush1.msra.mxu0 0.0
    %7244 = vmatprep.subr.mxu0 0.0
    %7245 = vmatpush1.msra.mxu0 0.0
    %7246 = vmatprep.subr.mxu0 0.0
    %7247 = vmatpush1.msra.mxu0 0.0
    %7248 = vmatprep.subr.mxu0 0.0
    %7249 = vmatpush1.msra.mxu0 0.0
    %7250 = vmatprep.subr.mxu0 0.0
    %7251 = vmatpush1.msra.mxu0 0.0
    %7252 = vmatprep.subr.mxu0 0.0
    %7253 = vmatpush1.msra.mxu0 0.0
    %7254 = vmatprep.subr.mxu0 0.0
    %7255 = vmatpush1.msra.mxu0 0.0
    %7256 = vmatprep.subr.mxu0 0.0
    %7257 = vmatpush1.msra.mxu0 0.0
    %7258 = vmatprep.subr.mxu0 0.0
    %7259 = vmatpush1.msra.mxu0 0.0
    %7260 = vmatprep.subr.mxu0 0.0
    %7261 = vmatpush1.msra.mxu0 0.0
    %7262 = vmatprep.subr.mxu0 0.0
    %7263 = vmatpush1.msra.mxu0 0.0
    %7264 = vmatprep.subr.mxu0 0.0
    %7265 = vmatpush1.msra.mxu0 0.0
    %7266 = vmatprep.subr.mxu0 0.0
    %7267 = vmatpush1.msra.mxu0 0.0
    %7268 = vmatprep.subr.mxu0 0.0
    %7269 = vmatpush1.msra.mxu0 0.0
    %7270 = vmatprep.subr.mxu0 0.0
    %7271 = vmatpush1.msra.mxu0 0.0
    %7272 = vmatprep.subr.mxu0 0.0
    %7273 = vmatpush1.msra.mxu0 0.0
    %7274 = vmatprep.subr.mxu0 0.0
    %7275 = vmatpush1.msra.mxu0 0.0
    %7276 = vmatprep.subr.mxu0 0.0
    %7277 = vmatpush1.msra.mxu0 0.0
    %7278 = vmatprep.mubr.f32.mxu0 0.0
    %7279 = vmatmul.mubr.f32.gmra.mrb[0].mxu0 %v6514
    %v7280 = vpop.f32.mrb[0].mxu0
    %v7281 = vadd.f32 %v7212, %v7280
    %v7282 = vpop.f32.mrb[0].mxu0
    %7283 = vmatprep.mubr.f32.mxu0 0.0
    %7284 = vmatmul.mubr.f32.gmra.mrb[0].mxu0 %v6517
    %v7285 = vpop.f32.mrb[0].mxu0
    %v7286 = vadd.f32 %v7212, %v7285
    %v7287 = vpop.f32.mrb[0].mxu0
    %7288 = vdwg.mxu0
    %s7289 = scalar_lea.vmem %s11, 576
    %v7290 = vld [vmem:[%s7289] sm:$0xff]
    %v7291 = vld [vmem:[%s7289 + $0x8] sm:$0xff]
    %v7292 = vld [vmem:[%s7289 + $0x10] sm:$0xff]
    %v7293 = vld [vmem:[%s7289 + $0x18] sm:$0xff]
    %v7294 = vld [vmem:[%s7289 + $0x20] sm:$0xff]
    %v7295 = vld [vmem:[%s7289 + $0x28] sm:$0xff]
    %v7296 = vld [vmem:[%s7289 + $0x30] sm:$0xff]
    %v7297 = vld [vmem:[%s7289 + $0x38] sm:$0xff]
    %s7298 = scalar_lea.vmem %s12, 9
    %v7299 = vld [vmem:[%s7298] sm:$0x1]
    %v7301 = vlaneseq
    %v7302 = vshrl.u32 %v7301, 7
    %v7303 = vsub.s32 0, %v7302
    %v7304 = vrot.slane %v7299, %v7303
    %7306 = vmatprep.subr.mxu0 0.0
    %7307 = vmatpush1.msra.mxu0 %v7290
    %7308 = vmatprep.subr.mxu0 0.0
    %7309 = vmatpush1.msra.mxu0 %v7291
    %7310 = vmatprep.subr.mxu0 0.0
    %7311 = vmatpush1.msra.mxu0 %v7292
    %7312 = vmatprep.subr.mxu0 0.0
    %7313 = vmatpush1.msra.mxu0 %v7293
    %7314 = vmatprep.subr.mxu0 0.0
    %7315 = vmatpush1.msra.mxu0 %v7294
    %7316 = vmatprep.subr.mxu0 0.0
    %7317 = vmatpush1.msra.mxu0 %v7295
    %7318 = vmatprep.subr.mxu0 0.0
    %7319 = vmatpush1.msra.mxu0 %v7296
    %7320 = vmatprep.subr.mxu0 0.0
    %7321 = vmatpush1.msra.mxu0 %v7297
    %7322 = vmatprep.subr.mxu0 0.0
    %7323 = vmatpush1.msra.mxu0 0.0
    %7324 = vmatprep.subr.mxu0 0.0
    %7325 = vmatpush1.msra.mxu0 0.0
    %7326 = vmatprep.subr.mxu0 0.0
    %7327 = vmatpush1.msra.mxu0 0.0
    %7328 = vmatprep.subr.mxu0 0.0
    %7329 = vmatpush1.msra.mxu0 0.0
    %7330 = vmatprep.subr.mxu0 0.0
    %7331 = vmatpush1.msra.mxu0 0.0
    %7332 = vmatprep.subr.mxu0 0.0
    %7333 = vmatpush1.msra.mxu0 0.0
    %7334 = vmatprep.subr.mxu0 0.0
    %7335 = vmatpush1.msra.mxu0 0.0
    %7336 = vmatprep.subr.mxu0 0.0
    %7337 = vmatpush1.msra.mxu0 0.0
    %7338 = vmatprep.subr.mxu0 0.0
    %7339 = vmatpush1.msra.mxu0 0.0
    %7340 = vmatprep.subr.mxu0 0.0
    %7341 = vmatpush1.msra.mxu0 0.0
    %7342 = vmatprep.subr.mxu0 0.0
    %7343 = vmatpush1.msra.mxu0 0.0
    %7344 = vmatprep.subr.mxu0 0.0
    %7345 = vmatpush1.msra.mxu0 0.0
    %7346 = vmatprep.subr.mxu0 0.0
    %7347 = vmatpush1.msra.mxu0 0.0
    %7348 = vmatprep.subr.mxu0 0.0
    %7349 = vmatpush1.msra.mxu0 0.0
    %7350 = vmatprep.subr.mxu0 0.0
    %7351 = vmatpush1.msra.mxu0 0.0
    %7352 = vmatprep.subr.mxu0 0.0
    %7353 = vmatpush1.msra.mxu0 0.0
    %7354 = vmatprep.subr.mxu0 0.0
    %7355 = vmatpush1.msra.mxu0 0.0
    %7356 = vmatprep.subr.mxu0 0.0
    %7357 = vmatpush1.msra.mxu0 0.0
    %7358 = vmatprep.subr.mxu0 0.0
    %7359 = vmatpush1.msra.mxu0 0.0
    %7360 = vmatprep.subr.mxu0 0.0
    %7361 = vmatpush1.msra.mxu0 0.0
    %7362 = vmatprep.subr.mxu0 0.0
    %7363 = vmatpush1.msra.mxu0 0.0
    %7364 = vmatprep.subr.mxu0 0.0
    %7365 = vmatpush1.msra.mxu0 0.0
    %7366 = vmatprep.subr.mxu0 0.0
    %7367 = vmatpush1.msra.mxu0 0.0
    %7368 = vmatprep.subr.mxu0 0.0
    %7369 = vmatpush1.msra.mxu0 0.0
    %7370 = vmatprep.mubr.f32.mxu0 0.0
    %7371 = vmatmul.mubr.f32.gmra.mrb[0].mxu0 %v6514
    %v7372 = vpop.f32.mrb[0].mxu0
    %v7373 = vadd.f32 %v7304, %v7372
    %v7374 = vpop.f32.mrb[0].mxu0
    %7375 = vmatprep.mubr.f32.mxu0 0.0
    %7376 = vmatmul.mubr.f32.gmra.mrb[0].mxu0 %v6517
    %v7377 = vpop.f32.mrb[0].mxu0
    %v7378 = vadd.f32 %v7304, %v7377
    %v7379 = vpop.f32.mrb[0].mxu0
    %7380 = vdwg.mxu0
    %v7382 = vsel %vm550, %v7189, 0
    %v7385 = vsel %vm550, %v7281, 0
    %7387 = vmatprep.subr.mxu0 0.0
    %7388 = vmatpush1.xpose.msra.mxu0 %v7385
    %7389 = vmatprep.subr.mxu0 0.0
    %7390 = vmatpush1.xpose.msra.mxu0 0.0
    %7391 = vmatprep.subr.mxu0 0.0
    %7392 = vmatpush1.xpose.msra.mxu0 0.0
    %7393 = vmatprep.subr.mxu0 0.0
    %7394 = vmatpush1.xpose.msra.mxu0 0.0
    %7395 = vmatprep.subr.mxu0 0.0
    %7396 = vmatpush1.xpose.msra.mxu0 0.0
    %7397 = vmatprep.subr.mxu0 0.0
    %7398 = vmatpush1.xpose.msra.mxu0 0.0
    %7399 = vmatprep.subr.mxu0 0.0
    %7400 = vmatpush1.xpose.msra.mxu0 0.0
    %7401 = vmatprep.subr.mxu0 0.0
    %7402 = vmatpush1.xpose.msra.mxu0 0.0
    %7403 = vmatprep.subr.mxu0 0.0
    %7404 = vmatpush1.xpose.msra.mxu0 0.0
    %7405 = vmatprep.subr.mxu0 0.0
    %7406 = vmatpush1.xpose.msra.mxu0 0.0
    %7407 = vmatprep.subr.mxu0 0.0
    %7408 = vmatpush1.xpose.msra.mxu0 0.0
    %7409 = vmatprep.subr.mxu0 0.0
    %7410 = vmatpush1.xpose.msra.mxu0 0.0
    %7411 = vmatprep.subr.mxu0 0.0
    %7412 = vmatpush1.xpose.msra.mxu0 0.0
    %7413 = vmatprep.subr.mxu0 0.0
    %7414 = vmatpush1.xpose.msra.mxu0 0.0
    %7415 = vmatprep.subr.mxu0 0.0
    %7416 = vmatpush1.xpose.msra.mxu0 0.0
    %7417 = vmatprep.subr.mxu0 0.0
    %7418 = vmatpush1.xpose.msra.mxu0 0.0
    %7419 = vmatprep.subr.mxu0 0.0
    %7420 = vmatpush1.xpose.msra.mxu0 0.0
    %7421 = vmatprep.subr.mxu0 0.0
    %7422 = vmatpush1.xpose.msra.mxu0 0.0
    %7423 = vmatprep.subr.mxu0 0.0
    %7424 = vmatpush1.xpose.msra.mxu0 0.0
    %7425 = vmatprep.subr.mxu0 0.0
    %7426 = vmatpush1.xpose.msra.mxu0 0.0
    %7427 = vmatprep.subr.mxu0 0.0
    %7428 = vmatpush1.xpose.msra.mxu0 0.0
    %7429 = vmatprep.subr.mxu0 0.0
    %7430 = vmatpush1.xpose.msra.mxu0 0.0
    %7431 = vmatprep.subr.mxu0 0.0
    %7432 = vmatpush1.xpose.msra.mxu0 0.0
    %7433 = vmatprep.subr.mxu0 0.0
    %7434 = vmatpush1.xpose.msra.mxu0 0.0
    %7435 = vmatprep.subr.mxu0 0.0
    %7436 = vmatpush1.xpose.msra.mxu0 0.0
    %7437 = vmatprep.subr.mxu0 0.0
    %7438 = vmatpush1.xpose.msra.mxu0 0.0
    %7439 = vmatprep.subr.mxu0 0.0
    %7440 = vmatpush1.xpose.msra.mxu0 0.0
    %7441 = vmatprep.subr.mxu0 0.0
    %7442 = vmatpush1.xpose.msra.mxu0 0.0
    %7443 = vmatprep.subr.mxu0 0.0
    %7444 = vmatpush1.xpose.msra.mxu0 0.0
    %7445 = vmatprep.subr.mxu0 0.0
    %7446 = vmatpush1.xpose.msra.mxu0 0.0
    %7447 = vmatprep.subr.mxu0 0.0
    %7448 = vmatpush1.xpose.msra.mxu0 0.0
    %7449 = vmatprep.subr.mxu0 0.0
    %7450 = vmatpush1.xpose.msra.mxu0 0.0
    %7451 = vmatprep.mubr.f32.mxu0 0.0
    %7452 = vmatmul.mubr.f32.gmra.mrb[0].mxu0 %v7382
    %v7453 = vpop.f32.mrb[0].mxu0
    %v7454 = vadd.f32 0.0, %v7453
    %v7455 = vpop.f32.mrb[0].mxu0
    %7456 = vdwg.mxu0
    %v7458 = vsel %vm550, %v7194, 0
    %v7461 = vsel %vm550, %v7286, 0
    %7463 = vmatprep.subr.mxu0 0.0
    %7464 = vmatpush1.xpose.msra.mxu0 %v7461
    %7465 = vmatprep.subr.mxu0 0.0
    %7466 = vmatpush1.xpose.msra.mxu0 0.0
    %7467 = vmatprep.subr.mxu0 0.0
    %7468 = vmatpush1.xpose.msra.mxu0 0.0
    %7469 = vmatprep.subr.mxu0 0.0
    %7470 = vmatpush1.xpose.msra.mxu0 0.0
    %7471 = vmatprep.subr.mxu0 0.0
    %7472 = vmatpush1.xpose.msra.mxu0 0.0
    %7473 = vmatprep.subr.mxu0 0.0
    %7474 = vmatpush1.xpose.msra.mxu0 0.0
    %7475 = vmatprep.subr.mxu0 0.0
    %7476 = vmatpush1.xpose.msra.mxu0 0.0
    %7477 = vmatprep.subr.mxu0 0.0
    %7478 = vmatpush1.xpose.msra.mxu0 0.0
    %7479 = vmatprep.subr.mxu0 0.0
    %7480 = vmatpush1.xpose.msra.mxu0 0.0
    %7481 = vmatprep.subr.mxu0 0.0
    %7482 = vmatpush1.xpose.msra.mxu0 0.0
    %7483 = vmatprep.subr.mxu0 0.0
    %7484 = vmatpush1.xpose.msra.mxu0 0.0
    %7485 = vmatprep.subr.mxu0 0.0
    %7486 = vmatpush1.xpose.msra.mxu0 0.0
    %7487 = vmatprep.subr.mxu0 0.0
    %7488 = vmatpush1.xpose.msra.mxu0 0.0
    %7489 = vmatprep.subr.mxu0 0.0
    %7490 = vmatpush1.xpose.msra.mxu0 0.0
    %7491 = vmatprep.subr.mxu0 0.0
    %7492 = vmatpush1.xpose.msra.mxu0 0.0
    %7493 = vmatprep.subr.mxu0 0.0
    %7494 = vmatpush1.xpose.msra.mxu0 0.0
    %7495 = vmatprep.subr.mxu0 0.0
    %7496 = vmatpush1.xpose.msra.mxu0 0.0
    %7497 = vmatprep.subr.mxu0 0.0
    %7498 = vmatpush1.xpose.msra.mxu0 0.0
    %7499 = vmatprep.subr.mxu0 0.0
    %7500 = vmatpush1.xpose.msra.mxu0 0.0
    %7501 = vmatprep.subr.mxu0 0.0
    %7502 = vmatpush1.xpose.msra.mxu0 0.0
    %7503 = vmatprep.subr.mxu0 0.0
    %7504 = vmatpush1.xpose.msra.mxu0 0.0
    %7505 = vmatprep.subr.mxu0 0.0
    %7506 = vmatpush1.xpose.msra.mxu0 0.0
    %7507 = vmatprep.subr.mxu0 0.0
    %7508 = vmatpush1.xpose.msra.mxu0 0.0
    %7509 = vmatprep.subr.mxu0 0.0
    %7510 = vmatpush1.xpose.msra.mxu0 0.0
    %7511 = vmatprep.subr.mxu0 0.0
    %7512 = vmatpush1.xpose.msra.mxu0 0.0
    %7513 = vmatprep.subr.mxu0 0.0
    %7514 = vmatpush1.xpose.msra.mxu0 0.0
    %7515 = vmatprep.subr.mxu0 0.0
    %7516 = vmatpush1.xpose.msra.mxu0 0.0
    %7517 = vmatprep.subr.mxu0 0.0
    %7518 = vmatpush1.xpose.msra.mxu0 0.0
    %7519 = vmatprep.subr.mxu0 0.0
    %7520 = vmatpush1.xpose.msra.mxu0 0.0
    %7521 = vmatprep.subr.mxu0 0.0
    %7522 = vmatpush1.xpose.msra.mxu0 0.0
    %7523 = vmatprep.subr.mxu0 0.0
    %7524 = vmatpush1.xpose.msra.mxu0 0.0
    %7525 = vmatprep.subr.mxu0 0.0
    %7526 = vmatpush1.xpose.msra.mxu0 0.0
    %7527 = vmatprep.mubr.f32.mxu0 0.0
    %7528 = vmatmul.mubr.f32.gmra.mrb[0].mxu0 %v7458
    %v7529 = vpop.f32.mrb[0].mxu0
    %v7530 = vadd.f32 0.0, %v7529
    %v7531 = vpop.f32.mrb[0].mxu0
    %7532 = vdwg.mxu0
    %v7533 = vmul.f32 %v7454, 0.25
    %v7534 = vmul.f32 %v7530, 0.25
    %v7535 = vadd.f32 %v7533, %v229
    %v7536 = vadd.f32 %v7534, %v229
    %v7537 = vsel %vm707, %v7535, -inf
    %7538 = vmax.xlane.f32.xlu0 %v7537
    %v7539 = vpop.xlane.xlu0 %7538
    %v7540 = vsel %vm707, %v7536, -inf
    %7541 = vmax.xlane.f32.xlu0 %v7540
    %v7542 = vpop.xlane.xlu0 %7541
    %v7543 = vsub.f32 %v7535, %v7539
    %v7544 = vsub.f32 %v7536, %v7542
    %v7545 = vmul.f32 %v7543, 1.442695
    %v7546 = vpow.pop %v7545
    %v7547 = vmul.f32 %v7544, 1.442695
    %v7548 = vpow.pop %v7547
    %v7549 = vsel %vm707, %v7546, 0.0
    %7550 = vadd.xlane.f32.xlu0 %v7549
    %v7551 = vpop.xlane.xlu0 %7550
    %v7552 = vsel %vm707, %v7548, 0.0
    %7553 = vadd.xlane.f32.xlu0 %v7552
    %v7554 = vpop.xlane.xlu0 %7553
    %v7555 = vrcp.pop %v7551
    %v7556 = vmul.f32 %v7546, %v7555
    %v7557 = vrcp.pop %v7554
    %v7558 = vmul.f32 %v7548, %v7557
    %v7560 = vsel %vm707, %v7556, 0
    %7562 = vmatprep.subr.mxu0 0.0
    %7563 = vmatpush1.msra.mxu0 %v7373
    %7564 = vmatprep.subr.mxu0 0.0
    %7565 = vmatpush1.msra.mxu0 0.0
    %7566 = vmatprep.subr.mxu0 0.0
    %7567 = vmatpush1.msra.mxu0 0.0
    %7568 = vmatprep.subr.mxu0 0.0
    %7569 = vmatpush1.msra.mxu0 0.0
    %7570 = vmatprep.subr.mxu0 0.0
    %7571 = vmatpush1.msra.mxu0 0.0
    %7572 = vmatprep.subr.mxu0 0.0
    %7573 = vmatpush1.msra.mxu0 0.0
    %7574 = vmatprep.subr.mxu0 0.0
    %7575 = vmatpush1.msra.mxu0 0.0
    %7576 = vmatprep.subr.mxu0 0.0
    %7577 = vmatpush1.msra.mxu0 0.0
    %7578 = vmatprep.subr.mxu0 0.0
    %7579 = vmatpush1.msra.mxu0 0.0
    %7580 = vmatprep.subr.mxu0 0.0
    %7581 = vmatpush1.msra.mxu0 0.0
    %7582 = vmatprep.subr.mxu0 0.0
    %7583 = vmatpush1.msra.mxu0 0.0
    %7584 = vmatprep.subr.mxu0 0.0
    %7585 = vmatpush1.msra.mxu0 0.0
    %7586 = vmatprep.subr.mxu0 0.0
    %7587 = vmatpush1.msra.mxu0 0.0
    %7588 = vmatprep.subr.mxu0 0.0
    %7589 = vmatpush1.msra.mxu0 0.0
    %7590 = vmatprep.subr.mxu0 0.0
    %7591 = vmatpush1.msra.mxu0 0.0
    %7592 = vmatprep.subr.mxu0 0.0
    %7593 = vmatpush1.msra.mxu0 0.0
    %7594 = vmatprep.subr.mxu0 0.0
    %7595 = vmatpush1.msra.mxu0 0.0
    %7596 = vmatprep.subr.mxu0 0.0
    %7597 = vmatpush1.msra.mxu0 0.0
    %7598 = vmatprep.subr.mxu0 0.0
    %7599 = vmatpush1.msra.mxu0 0.0
    %7600 = vmatprep.subr.mxu0 0.0
    %7601 = vmatpush1.msra.mxu0 0.0
    %7602 = vmatprep.subr.mxu0 0.0
    %7603 = vmatpush1.msra.mxu0 0.0
    %7604 = vmatprep.subr.mxu0 0.0
    %7605 = vmatpush1.msra.mxu0 0.0
    %7606 = vmatprep.subr.mxu0 0.0
    %7607 = vmatpush1.msra.mxu0 0.0
    %7608 = vmatprep.subr.mxu0 0.0
    %7609 = vmatpush1.msra.mxu0 0.0
    %7610 = vmatprep.subr.mxu0 0.0
    %7611 = vmatpush1.msra.mxu0 0.0
    %7612 = vmatprep.subr.mxu0 0.0
    %7613 = vmatpush1.msra.mxu0 0.0
    %7614 = vmatprep.subr.mxu0 0.0
    %7615 = vmatpush1.msra.mxu0 0.0
    %7616 = vmatprep.subr.mxu0 0.0
    %7617 = vmatpush1.msra.mxu0 0.0
    %7618 = vmatprep.subr.mxu0 0.0
    %7619 = vmatpush1.msra.mxu0 0.0
    %7620 = vmatprep.subr.mxu0 0.0
    %7621 = vmatpush1.msra.mxu0 0.0
    %7622 = vmatprep.subr.mxu0 0.0
    %7623 = vmatpush1.msra.mxu0 0.0
    %7624 = vmatprep.subr.mxu0 0.0
    %7625 = vmatpush1.msra.mxu0 0.0
    %7626 = vmatprep.mubr.f32.mxu0 0.0
    %7627 = vmatmul.mubr.f32.gmra.mrb[0].mxu0 %v7560
    %v7628 = vpop.f32.mrb[0].mxu0
    %v7629 = vadd.f32 0.0, %v7628
    %v7630 = vpop.f32.mrb[0].mxu0
    %7631 = vdwg.mxu0
    %v7633 = vsel %vm707, %v7558, 0
    %7635 = vmatprep.subr.mxu0 0.0
    %7636 = vmatpush1.msra.mxu0 %v7378
    %7637 = vmatprep.subr.mxu0 0.0
    %7638 = vmatpush1.msra.mxu0 0.0
    %7639 = vmatprep.subr.mxu0 0.0
    %7640 = vmatpush1.msra.mxu0 0.0
    %7641 = vmatprep.subr.mxu0 0.0
    %7642 = vmatpush1.msra.mxu0 0.0
    %7643 = vmatprep.subr.mxu0 0.0
    %7644 = vmatpush1.msra.mxu0 0.0
    %7645 = vmatprep.subr.mxu0 0.0
    %7646 = vmatpush1.msra.mxu0 0.0
    %7647 = vmatprep.subr.mxu0 0.0
    %7648 = vmatpush1.msra.mxu0 0.0
    %7649 = vmatprep.subr.mxu0 0.0
    %7650 = vmatpush1.msra.mxu0 0.0
    %7651 = vmatprep.subr.mxu0 0.0
    %7652 = vmatpush1.msra.mxu0 0.0
    %7653 = vmatprep.subr.mxu0 0.0
    %7654 = vmatpush1.msra.mxu0 0.0
    %7655 = vmatprep.subr.mxu0 0.0
    %7656 = vmatpush1.msra.mxu0 0.0
    %7657 = vmatprep.subr.mxu0 0.0
    %7658 = vmatpush1.msra.mxu0 0.0
    %7659 = vmatprep.subr.mxu0 0.0
    %7660 = vmatpush1.msra.mxu0 0.0
    %7661 = vmatprep.subr.mxu0 0.0
    %7662 = vmatpush1.msra.mxu0 0.0
    %7663 = vmatprep.subr.mxu0 0.0
    %7664 = vmatpush1.msra.mxu0 0.0
    %7665 = vmatprep.subr.mxu0 0.0
    %7666 = vmatpush1.msra.mxu0 0.0
    %7667 = vmatprep.subr.mxu0 0.0
    %7668 = vmatpush1.msra.mxu0 0.0
    %7669 = vmatprep.subr.mxu0 0.0
    %7670 = vmatpush1.msra.mxu0 0.0
    %7671 = vmatprep.subr.mxu0 0.0
    %7672 = vmatpush1.msra.mxu0 0.0
    %7673 = vmatprep.subr.mxu0 0.0
    %7674 = vmatpush1.msra.mxu0 0.0
    %7675 = vmatprep.subr.mxu0 0.0
    %7676 = vmatpush1.msra.mxu0 0.0
    %7677 = vmatprep.subr.mxu0 0.0
    %7678 = vmatpush1.msra.mxu0 0.0
    %7679 = vmatprep.subr.mxu0 0.0
    %7680 = vmatpush1.msra.mxu0 0.0
    %7681 = vmatprep.subr.mxu0 0.0
    %7682 = vmatpush1.msra.mxu0 0.0
    %7683 = vmatprep.subr.mxu0 0.0
    %7684 = vmatpush1.msra.mxu0 0.0
    %7685 = vmatprep.subr.mxu0 0.0
    %7686 = vmatpush1.msra.mxu0 0.0
    %7687 = vmatprep.subr.mxu0 0.0
    %7688 = vmatpush1.msra.mxu0 0.0
    %7689 = vmatprep.subr.mxu0 0.0
    %7690 = vmatpush1.msra.mxu0 0.0
    %7691 = vmatprep.subr.mxu0 0.0
    %7692 = vmatpush1.msra.mxu0 0.0
    %7693 = vmatprep.subr.mxu0 0.0
    %7694 = vmatpush1.msra.mxu0 0.0
    %7695 = vmatprep.subr.mxu0 0.0
    %7696 = vmatpush1.msra.mxu0 0.0
    %7697 = vmatprep.subr.mxu0 0.0
    %7698 = vmatpush1.msra.mxu0 0.0
    %7699 = vmatprep.mubr.f32.mxu0 0.0
    %7700 = vmatmul.mubr.f32.gmra.mrb[0].mxu0 %v7633
    %v7701 = vpop.f32.mrb[0].mxu0
    %v7702 = vadd.f32 0.0, %v7701
    %v7703 = vpop.f32.mrb[0].mxu0
    %7704 = vdwg.mxu0
    %s7705 = scalar_lea.vmem %s13, 144
    %v7706 = vld [vmem:[%s7705] sm:$0xff]
    %v7707 = vld [vmem:[%s7705 + $0x8] sm:$0xff]
    %v7709 = vsel %vm550, %v7629, 0
    %v7712 = vsel %vm550, %v7702, 0
    %7714 = vmatprep.subr.mxu0 0.0
    %7715 = vmatpush1.msra.mxu0 %v7706
    %7716 = vmatprep.subr.mxu0 0.0
    %7717 = vmatpush1.msra.mxu0 %v7707
    %7718 = vmatprep.subr.mxu0 0.0
    %7719 = vmatpush1.msra.mxu0 0.0
    %7720 = vmatprep.subr.mxu0 0.0
    %7721 = vmatpush1.msra.mxu0 0.0
    %7722 = vmatprep.subr.mxu0 0.0
    %7723 = vmatpush1.msra.mxu0 0.0
    %7724 = vmatprep.subr.mxu0 0.0
    %7725 = vmatpush1.msra.mxu0 0.0
    %7726 = vmatprep.subr.mxu0 0.0
    %7727 = vmatpush1.msra.mxu0 0.0
    %7728 = vmatprep.subr.mxu0 0.0
    %7729 = vmatpush1.msra.mxu0 0.0
    %7730 = vmatprep.subr.mxu0 0.0
    %7731 = vmatpush1.msra.mxu0 0.0
    %7732 = vmatprep.subr.mxu0 0.0
    %7733 = vmatpush1.msra.mxu0 0.0
    %7734 = vmatprep.subr.mxu0 0.0
    %7735 = vmatpush1.msra.mxu0 0.0
    %7736 = vmatprep.subr.mxu0 0.0
    %7737 = vmatpush1.msra.mxu0 0.0
    %7738 = vmatprep.subr.mxu0 0.0
    %7739 = vmatpush1.msra.mxu0 0.0
    %7740 = vmatprep.subr.mxu0 0.0
    %7741 = vmatpush1.msra.mxu0 0.0
    %7742 = vmatprep.subr.mxu0 0.0
    %7743 = vmatpush1.msra.mxu0 0.0
    %7744 = vmatprep.subr.mxu0 0.0
    %7745 = vmatpush1.msra.mxu0 0.0
    %7746 = vmatprep.subr.mxu0 0.0
    %7747 = vmatpush1.msra.mxu0 0.0
    %7748 = vmatprep.subr.mxu0 0.0
    %7749 = vmatpush1.msra.mxu0 0.0
    %7750 = vmatprep.subr.mxu0 0.0
    %7751 = vmatpush1.msra.mxu0 0.0
    %7752 = vmatprep.subr.mxu0 0.0
    %7753 = vmatpush1.msra.mxu0 0.0
    %7754 = vmatprep.subr.mxu0 0.0
    %7755 = vmatpush1.msra.mxu0 0.0
    %7756 = vmatprep.subr.mxu0 0.0
    %7757 = vmatpush1.msra.mxu0 0.0
    %7758 = vmatprep.subr.mxu0 0.0
    %7759 = vmatpush1.msra.mxu0 0.0
    %7760 = vmatprep.subr.mxu0 0.0
    %7761 = vmatpush1.msra.mxu0 0.0
    %7762 = vmatprep.subr.mxu0 0.0
    %7763 = vmatpush1.msra.mxu0 0.0
    %7764 = vmatprep.subr.mxu0 0.0
    %7765 = vmatpush1.msra.mxu0 0.0
    %7766 = vmatprep.subr.mxu0 0.0
    %7767 = vmatpush1.msra.mxu0 0.0
    %7768 = vmatprep.subr.mxu0 0.0
    %7769 = vmatpush1.msra.mxu0 0.0
    %7770 = vmatprep.subr.mxu0 0.0
    %7771 = vmatpush1.msra.mxu0 0.0
    %7772 = vmatprep.subr.mxu0 0.0
    %7773 = vmatpush1.msra.mxu0 0.0
    %7774 = vmatprep.subr.mxu0 0.0
    %7775 = vmatpush1.msra.mxu0 0.0
    %7776 = vmatprep.subr.mxu0 0.0
    %7777 = vmatpush1.msra.mxu0 0.0
    %7778 = vmatprep.mubr.f32.mxu0 0.0
    %7779 = vmatmul.mubr.f32.gmra.mrb[0].mxu0 %v7709
    %v7780 = vpop.f32.mrb[0].mxu0
    %v7781 = vadd.f32 0.0, %v7780
    %v7782 = vpop.f32.mrb[0].mxu0
    %7783 = vmatprep.mubr.f32.mxu0 0.0
    %7784 = vmatmul.mubr.f32.gmra.mrb[0].mxu0 %v7712
    %v7785 = vpop.f32.mrb[0].mxu0
    %v7786 = vadd.f32 0.0, %v7785
    %v7787 = vpop.f32.mrb[0].mxu0
    %7788 = vdwg.mxu0
    %v7790 = vsel %vm550, %v7026, 0
    %v7793 = vsel %vm550, %v7099, 0
    %7795 = vmatprep.subr.mxu0 0.0
    %7796 = vmatpush1.msra.mxu0 %v7103
    %7797 = vmatprep.subr.mxu0 0.0
    %7798 = vmatpush1.msra.mxu0 %v7104
    %7799 = vmatprep.subr.mxu0 0.0
    %7800 = vmatpush1.msra.mxu0 0.0
    %7801 = vmatprep.subr.mxu0 0.0
    %7802 = vmatpush1.msra.mxu0 0.0
    %7803 = vmatprep.subr.mxu0 0.0
    %7804 = vmatpush1.msra.mxu0 0.0
    %7805 = vmatprep.subr.mxu0 0.0
    %7806 = vmatpush1.msra.mxu0 0.0
    %7807 = vmatprep.subr.mxu0 0.0
    %7808 = vmatpush1.msra.mxu0 0.0
    %7809 = vmatprep.subr.mxu0 0.0
    %7810 = vmatpush1.msra.mxu0 0.0
    %7811 = vmatprep.subr.mxu0 0.0
    %7812 = vmatpush1.msra.mxu0 0.0
    %7813 = vmatprep.subr.mxu0 0.0
    %7814 = vmatpush1.msra.mxu0 0.0
    %7815 = vmatprep.subr.mxu0 0.0
    %7816 = vmatpush1.msra.mxu0 0.0
    %7817 = vmatprep.subr.mxu0 0.0
    %7818 = vmatpush1.msra.mxu0 0.0
    %7819 = vmatprep.subr.mxu0 0.0
    %7820 = vmatpush1.msra.mxu0 0.0
    %7821 = vmatprep.subr.mxu0 0.0
    %7822 = vmatpush1.msra.mxu0 0.0
    %7823 = vmatprep.subr.mxu0 0.0
    %7824 = vmatpush1.msra.mxu0 0.0
    %7825 = vmatprep.subr.mxu0 0.0
    %7826 = vmatpush1.msra.mxu0 0.0
    %7827 = vmatprep.subr.mxu0 0.0
    %7828 = vmatpush1.msra.mxu0 0.0
    %7829 = vmatprep.subr.mxu0 0.0
    %7830 = vmatpush1.msra.mxu0 0.0
    %7831 = vmatprep.subr.mxu0 0.0
    %7832 = vmatpush1.msra.mxu0 0.0
    %7833 = vmatprep.subr.mxu0 0.0
    %7834 = vmatpush1.msra.mxu0 0.0
    %7835 = vmatprep.subr.mxu0 0.0
    %7836 = vmatpush1.msra.mxu0 0.0
    %7837 = vmatprep.subr.mxu0 0.0
    %7838 = vmatpush1.msra.mxu0 0.0
    %7839 = vmatprep.subr.mxu0 0.0
    %7840 = vmatpush1.msra.mxu0 0.0
    %7841 = vmatprep.subr.mxu0 0.0
    %7842 = vmatpush1.msra.mxu0 0.0
    %7843 = vmatprep.subr.mxu0 0.0
    %7844 = vmatpush1.msra.mxu0 0.0
    %7845 = vmatprep.subr.mxu0 0.0
    %7846 = vmatpush1.msra.mxu0 0.0
    %7847 = vmatprep.subr.mxu0 0.0
    %7848 = vmatpush1.msra.mxu0 0.0
    %7849 = vmatprep.subr.mxu0 0.0
    %7850 = vmatpush1.msra.mxu0 0.0
    %7851 = vmatprep.subr.mxu0 0.0
    %7852 = vmatpush1.msra.mxu0 0.0
    %7853 = vmatprep.subr.mxu0 0.0
    %7854 = vmatpush1.msra.mxu0 0.0
    %7855 = vmatprep.subr.mxu0 0.0
    %7856 = vmatpush1.msra.mxu0 0.0
    %7857 = vmatprep.subr.mxu0 0.0
    %7858 = vmatpush1.msra.mxu0 0.0
    %7859 = vmatprep.mubr.f32.mxu0 0.0
    %7860 = vmatmul.mubr.f32.gmra.mrb[0].mxu0 %v7790
    %v7861 = vpop.f32.mrb[0].mxu0
    %v7862 = vadd.f32 %v7781, %v7861
    %v7863 = vpop.f32.mrb[0].mxu0
    %7864 = vmatprep.mubr.f32.mxu0 0.0
    %7865 = vmatmul.mubr.f32.gmra.mrb[0].mxu0 %v7793
    %v7866 = vpop.f32.mrb[0].mxu0
    %v7867 = vadd.f32 %v7786, %v7866
    %v7868 = vpop.f32.mrb[0].mxu0
    %7869 = vdwg.mxu0
    %s7870 = scalar_lea.vmem %s7, 640
    %v7871 = vld [vmem:[%s7870] sm:$0xff]
    %v7872 = vld [vmem:[%s7870 + $0x8] sm:$0xff]
    %v7873 = vld [vmem:[%s7870 + $0x10] sm:$0xff]
    %v7874 = vld [vmem:[%s7870 + $0x18] sm:$0xff]
    %v7875 = vld [vmem:[%s7870 + $0x20] sm:$0xff]
    %v7876 = vld [vmem:[%s7870 + $0x28] sm:$0xff]
    %v7877 = vld [vmem:[%s7870 + $0x30] sm:$0xff]
    %v7878 = vld [vmem:[%s7870 + $0x38] sm:$0xff]
    %s7879 = scalar_lea.vmem %s8, 10
    %v7880 = vld [vmem:[%s7879] sm:$0x1]
    %v7882 = vlaneseq
    %v7883 = vshrl.u32 %v7882, 7
    %v7884 = vsub.s32 0, %v7883
    %v7885 = vrot.slane %v7880, %v7884
    %7887 = vmatprep.subr.mxu0 0.0
    %7888 = vmatpush1.msra.mxu0 %v7871
    %7889 = vmatprep.subr.mxu0 0.0
    %7890 = vmatpush1.msra.mxu0 %v7872
    %7891 = vmatprep.subr.mxu0 0.0
    %7892 = vmatpush1.msra.mxu0 %v7873
    %7893 = vmatprep.subr.mxu0 0.0
    %7894 = vmatpush1.msra.mxu0 %v7874
    %7895 = vmatprep.subr.mxu0 0.0
    %7896 = vmatpush1.msra.mxu0 %v7875
    %7897 = vmatprep.subr.mxu0 0.0
    %7898 = vmatpush1.msra.mxu0 %v7876
    %7899 = vmatprep.subr.mxu0 0.0
    %7900 = vmatpush1.msra.mxu0 %v7877
    %7901 = vmatprep.subr.mxu0 0.0
    %7902 = vmatpush1.msra.mxu0 %v7878
    %7903 = vmatprep.subr.mxu0 0.0
    %7904 = vmatpush1.msra.mxu0 0.0
    %7905 = vmatprep.subr.mxu0 0.0
    %7906 = vmatpush1.msra.mxu0 0.0
    %7907 = vmatprep.subr.mxu0 0.0
    %7908 = vmatpush1.msra.mxu0 0.0
    %7909 = vmatprep.subr.mxu0 0.0
    %7910 = vmatpush1.msra.mxu0 0.0
    %7911 = vmatprep.subr.mxu0 0.0
    %7912 = vmatpush1.msra.mxu0 0.0
    %7913 = vmatprep.subr.mxu0 0.0
    %7914 = vmatpush1.msra.mxu0 0.0
    %7915 = vmatprep.subr.mxu0 0.0
    %7916 = vmatpush1.msra.mxu0 0.0
    %7917 = vmatprep.subr.mxu0 0.0
    %7918 = vmatpush1.msra.mxu0 0.0
    %7919 = vmatprep.subr.mxu0 0.0
    %7920 = vmatpush1.msra.mxu0 0.0
    %7921 = vmatprep.subr.mxu0 0.0
    %7922 = vmatpush1.msra.mxu0 0.0
    %7923 = vmatprep.subr.mxu0 0.0
    %7924 = vmatpush1.msra.mxu0 0.0
    %7925 = vmatprep.subr.mxu0 0.0
    %7926 = vmatpush1.msra.mxu0 0.0
    %7927 = vmatprep.subr.mxu0 0.0
    %7928 = vmatpush1.msra.mxu0 0.0
    %7929 = vmatprep.subr.mxu0 0.0
    %7930 = vmatpush1.msra.mxu0 0.0
    %7931 = vmatprep.subr.mxu0 0.0
    %7932 = vmatpush1.msra.mxu0 0.0
    %7933 = vmatprep.subr.mxu0 0.0
    %7934 = vmatpush1.msra.mxu0 0.0
    %7935 = vmatprep.subr.mxu0 0.0
    %7936 = vmatpush1.msra.mxu0 0.0
    %7937 = vmatprep.subr.mxu0 0.0
    %7938 = vmatpush1.msra.mxu0 0.0
    %7939 = vmatprep.subr.mxu0 0.0
    %7940 = vmatpush1.msra.mxu0 0.0
    %7941 = vmatprep.subr.mxu0 0.0
    %7942 = vmatpush1.msra.mxu0 0.0
    %7943 = vmatprep.subr.mxu0 0.0
    %7944 = vmatpush1.msra.mxu0 0.0
    %7945 = vmatprep.subr.mxu0 0.0
    %7946 = vmatpush1.msra.mxu0 0.0
    %7947 = vmatprep.subr.mxu0 0.0
    %7948 = vmatpush1.msra.mxu0 0.0
    %7949 = vmatprep.subr.mxu0 0.0
    %7950 = vmatpush1.msra.mxu0 0.0
    %7951 = vmatprep.mubr.f32.mxu0 0.0
    %7952 = vmatmul.mubr.f32.gmra.mrb[0].mxu0 %v6514
    %v7953 = vpop.f32.mrb[0].mxu0
    %v7954 = vadd.f32 %v7885, %v7953
    %v7955 = vpop.f32.mrb[0].mxu0
    %7956 = vmatprep.mubr.f32.mxu0 0.0
    %7957 = vmatmul.mubr.f32.gmra.mrb[0].mxu0 %v6517
    %v7958 = vpop.f32.mrb[0].mxu0
    %v7959 = vadd.f32 %v7885, %v7958
    %v7960 = vpop.f32.mrb[0].mxu0
    %7961 = vdwg.mxu0
    %s7962 = scalar_lea.vmem %s9, 640
    %v7963 = vld [vmem:[%s7962] sm:$0xff]
    %v7964 = vld [vmem:[%s7962 + $0x8] sm:$0xff]
    %v7965 = vld [vmem:[%s7962 + $0x10] sm:$0xff]
    %v7966 = vld [vmem:[%s7962 + $0x18] sm:$0xff]
    %v7967 = vld [vmem:[%s7962 + $0x20] sm:$0xff]
    %v7968 = vld [vmem:[%s7962 + $0x28] sm:$0xff]
    %v7969 = vld [vmem:[%s7962 + $0x30] sm:$0xff]
    %v7970 = vld [vmem:[%s7962 + $0x38] sm:$0xff]
    %s7971 = scalar_lea.vmem %s10, 10
    %v7972 = vld [vmem:[%s7971] sm:$0x1]
    %v7974 = vlaneseq
    %v7975 = vshrl.u32 %v7974, 7
    %v7976 = vsub.s32 0, %v7975
    %v7977 = vrot.slane %v7972, %v7976
    %7979 = vmatprep.subr.mxu0 0.0
    %7980 = vmatpush1.msra.mxu0 %v7963
    %7981 = vmatprep.subr.mxu0 0.0
    %7982 = vmatpush1.msra.mxu0 %v7964
    %7983 = vmatprep.subr.mxu0 0.0
    %7984 = vmatpush1.msra.mxu0 %v7965
    %7985 = vmatprep.subr.mxu0 0.0
    %7986 = vmatpush1.msra.mxu0 %v7966
    %7987 = vmatprep.subr.mxu0 0.0
    %7988 = vmatpush1.msra.mxu0 %v7967
    %7989 = vmatprep.subr.mxu0 0.0
    %7990 = vmatpush1.msra.mxu0 %v7968
    %7991 = vmatprep.subr.mxu0 0.0
    %7992 = vmatpush1.msra.mxu0 %v7969
    %7993 = vmatprep.subr.mxu0 0.0
    %7994 = vmatpush1.msra.mxu0 %v7970
    %7995 = vmatprep.subr.mxu0 0.0
    %7996 = vmatpush1.msra.mxu0 0.0
    %7997 = vmatprep.subr.mxu0 0.0
    %7998 = vmatpush1.msra.mxu0 0.0
    %7999 = vmatprep.subr.mxu0 0.0
    %8000 = vmatpush1.msra.mxu0 0.0
    %8001 = vmatprep.subr.mxu0 0.0
    %8002 = vmatpush1.msra.mxu0 0.0
    %8003 = vmatprep.subr.mxu0 0.0
    %8004 = vmatpush1.msra.mxu0 0.0
    %8005 = vmatprep.subr.mxu0 0.0
    %8006 = vmatpush1.msra.mxu0 0.0
    %8007 = vmatprep.subr.mxu0 0.0
    %8008 = vmatpush1.msra.mxu0 0.0
    %8009 = vmatprep.subr.mxu0 0.0
    %8010 = vmatpush1.msra.mxu0 0.0
    %8011 = vmatprep.subr.mxu0 0.0
    %8012 = vmatpush1.msra.mxu0 0.0
    %8013 = vmatprep.subr.mxu0 0.0
    %8014 = vmatpush1.msra.mxu0 0.0
    %8015 = vmatprep.subr.mxu0 0.0
    %8016 = vmatpush1.msra.mxu0 0.0
    %8017 = vmatprep.subr.mxu0 0.0
    %8018 = vmatpush1.msra.mxu0 0.0
    %8019 = vmatprep.subr.mxu0 0.0
    %8020 = vmatpush1.msra.mxu0 0.0
    %8021 = vmatprep.subr.mxu0 0.0
    %8022 = vmatpush1.msra.mxu0 0.0
    %8023 = vmatprep.subr.mxu0 0.0
    %8024 = vmatpush1.msra.mxu0 0.0
    %8025 = vmatprep.subr.mxu0 0.0
    %8026 = vmatpush1.msra.mxu0 0.0
    %8027 = vmatprep.subr.mxu0 0.0
    %8028 = vmatpush1.msra.mxu0 0.0
    %8029 = vmatprep.subr.mxu0 0.0
    %8030 = vmatpush1.msra.mxu0 0.0
    %8031 = vmatprep.subr.mxu0 0.0
    %8032 = vmatpush1.msra.mxu0 0.0
    %8033 = vmatprep.subr.mxu0 0.0
    %8034 = vmatpush1.msra.mxu0 0.0
    %8035 = vmatprep.subr.mxu0 0.0
    %8036 = vmatpush1.msra.mxu0 0.0
    %8037 = vmatprep.subr.mxu0 0.0
    %8038 = vmatpush1.msra.mxu0 0.0
    %8039 = vmatprep.subr.mxu0 0.0
    %8040 = vmatpush1.msra.mxu0 0.0
    %8041 = vmatprep.subr.mxu0 0.0
    %8042 = vmatpush1.msra.mxu0 0.0
    %8043 = vmatprep.mubr.f32.mxu0 0.0
    %8044 = vmatmul.mubr.f32.gmra.mrb[0].mxu0 %v6514
    %v8045 = vpop.f32.mrb[0].mxu0
    %v8046 = vadd.f32 %v7977, %v8045
    %v8047 = vpop.f32.mrb[0].mxu0
    %8048 = vmatprep.mubr.f32.mxu0 0.0
    %8049 = vmatmul.mubr.f32.gmra.mrb[0].mxu0 %v6517
    %v8050 = vpop.f32.mrb[0].mxu0
    %v8051 = vadd.f32 %v7977, %v8050
    %v8052 = vpop.f32.mrb[0].mxu0
    %8053 = vdwg.mxu0
    %s8054 = scalar_lea.vmem %s11, 640
    %v8055 = vld [vmem:[%s8054] sm:$0xff]
    %v8056 = vld [vmem:[%s8054 + $0x8] sm:$0xff]
    %v8057 = vld [vmem:[%s8054 + $0x10] sm:$0xff]
    %v8058 = vld [vmem:[%s8054 + $0x18] sm:$0xff]
    %v8059 = vld [vmem:[%s8054 + $0x20] sm:$0xff]
    %v8060 = vld [vmem:[%s8054 + $0x28] sm:$0xff]
    %v8061 = vld [vmem:[%s8054 + $0x30] sm:$0xff]
    %v8062 = vld [vmem:[%s8054 + $0x38] sm:$0xff]
    %s8063 = scalar_lea.vmem %s12, 10
    %v8064 = vld [vmem:[%s8063] sm:$0x1]
    %v8066 = vlaneseq
    %v8067 = vshrl.u32 %v8066, 7
    %v8068 = vsub.s32 0, %v8067
    %v8069 = vrot.slane %v8064, %v8068
    %8071 = vmatprep.subr.mxu0 0.0
    %8072 = vmatpush1.msra.mxu0 %v8055
    %8073 = vmatprep.subr.mxu0 0.0
    %8074 = vmatpush1.msra.mxu0 %v8056
    %8075 = vmatprep.subr.mxu0 0.0
    %8076 = vmatpush1.msra.mxu0 %v8057
    %8077 = vmatprep.subr.mxu0 0.0
    %8078 = vmatpush1.msra.mxu0 %v8058
    %8079 = vmatprep.subr.mxu0 0.0
    %8080 = vmatpush1.msra.mxu0 %v8059
    %8081 = vmatprep.subr.mxu0 0.0
    %8082 = vmatpush1.msra.mxu0 %v8060
    %8083 = vmatprep.subr.mxu0 0.0
    %8084 = vmatpush1.msra.mxu0 %v8061
    %8085 = vmatprep.subr.mxu0 0.0
    %8086 = vmatpush1.msra.mxu0 %v8062
    %8087 = vmatprep.subr.mxu0 0.0
    %8088 = vmatpush1.msra.mxu0 0.0
    %8089 = vmatprep.subr.mxu0 0.0
    %8090 = vmatpush1.msra.mxu0 0.0
    %8091 = vmatprep.subr.mxu0 0.0
    %8092 = vmatpush1.msra.mxu0 0.0
    %8093 = vmatprep.subr.mxu0 0.0
    %8094 = vmatpush1.msra.mxu0 0.0
    %8095 = vmatprep.subr.mxu0 0.0
    %8096 = vmatpush1.msra.mxu0 0.0
    %8097 = vmatprep.subr.mxu0 0.0
    %8098 = vmatpush1.msra.mxu0 0.0
    %8099 = vmatprep.subr.mxu0 0.0
    %8100 = vmatpush1.msra.mxu0 0.0
    %8101 = vmatprep.subr.mxu0 0.0
    %8102 = vmatpush1.msra.mxu0 0.0
    %8103 = vmatprep.subr.mxu0 0.0
    %8104 = vmatpush1.msra.mxu0 0.0
    %8105 = vmatprep.subr.mxu0 0.0
    %8106 = vmatpush1.msra.mxu0 0.0
    %8107 = vmatprep.subr.mxu0 0.0
    %8108 = vmatpush1.msra.mxu0 0.0
    %8109 = vmatprep.subr.mxu0 0.0
    %8110 = vmatpush1.msra.mxu0 0.0
    %8111 = vmatprep.subr.mxu0 0.0
    %8112 = vmatpush1.msra.mxu0 0.0
    %8113 = vmatprep.subr.mxu0 0.0
    %8114 = vmatpush1.msra.mxu0 0.0
    %8115 = vmatprep.subr.mxu0 0.0
    %8116 = vmatpush1.msra.mxu0 0.0
    %8117 = vmatprep.subr.mxu0 0.0
    %8118 = vmatpush1.msra.mxu0 0.0
    %8119 = vmatprep.subr.mxu0 0.0
    %8120 = vmatpush1.msra.mxu0 0.0
    %8121 = vmatprep.subr.mxu0 0.0
    %8122 = vmatpush1.msra.mxu0 0.0
    %8123 = vmatprep.subr.mxu0 0.0
    %8124 = vmatpush1.msra.mxu0 0.0
    %8125 = vmatprep.subr.mxu0 0.0
    %8126 = vmatpush1.msra.mxu0 0.0
    %8127 = vmatprep.subr.mxu0 0.0
    %8128 = vmatpush1.msra.mxu0 0.0
    %8129 = vmatprep.subr.mxu0 0.0
    %8130 = vmatpush1.msra.mxu0 0.0
    %8131 = vmatprep.subr.mxu0 0.0
    %8132 = vmatpush1.msra.mxu0 0.0
    %8133 = vmatprep.subr.mxu0 0.0
    %8134 = vmatpush1.msra.mxu0 0.0
    %8135 = vmatprep.mubr.f32.mxu0 0.0
    %8136 = vmatmul.mubr.f32.gmra.mrb[0].mxu0 %v6514
    %v8137 = vpop.f32.mrb[0].mxu0
    %v8138 = vadd.f32 %v8069, %v8137
    %v8139 = vpop.f32.mrb[0].mxu0
    %8140 = vmatprep.mubr.f32.mxu0 0.0
    %8141 = vmatmul.mubr.f32.gmra.mrb[0].mxu0 %v6517
    %v8142 = vpop.f32.mrb[0].mxu0
    %v8143 = vadd.f32 %v8069, %v8142
    %v8144 = vpop.f32.mrb[0].mxu0
    %8145 = vdwg.mxu0
    %v8147 = vsel %vm550, %v7954, 0
    %v8150 = vsel %vm550, %v8046, 0
    %8152 = vmatprep.subr.mxu0 0.0
    %8153 = vmatpush1.xpose.msra.mxu0 %v8150
    %8154 = vmatprep.subr.mxu0 0.0
    %8155 = vmatpush1.xpose.msra.mxu0 0.0
    %8156 = vmatprep.subr.mxu0 0.0
    %8157 = vmatpush1.xpose.msra.mxu0 0.0
    %8158 = vmatprep.subr.mxu0 0.0
    %8159 = vmatpush1.xpose.msra.mxu0 0.0
    %8160 = vmatprep.subr.mxu0 0.0
    %8161 = vmatpush1.xpose.msra.mxu0 0.0
    %8162 = vmatprep.subr.mxu0 0.0
    %8163 = vmatpush1.xpose.msra.mxu0 0.0
    %8164 = vmatprep.subr.mxu0 0.0
    %8165 = vmatpush1.xpose.msra.mxu0 0.0
    %8166 = vmatprep.subr.mxu0 0.0
    %8167 = vmatpush1.xpose.msra.mxu0 0.0
    %8168 = vmatprep.subr.mxu0 0.0
    %8169 = vmatpush1.xpose.msra.mxu0 0.0
    %8170 = vmatprep.subr.mxu0 0.0
    %8171 = vmatpush1.xpose.msra.mxu0 0.0
    %8172 = vmatprep.subr.mxu0 0.0
    %8173 = vmatpush1.xpose.msra.mxu0 0.0
    %8174 = vmatprep.subr.mxu0 0.0
    %8175 = vmatpush1.xpose.msra.mxu0 0.0
    %8176 = vmatprep.subr.mxu0 0.0
    %8177 = vmatpush1.xpose.msra.mxu0 0.0
    %8178 = vmatprep.subr.mxu0 0.0
    %8179 = vmatpush1.xpose.msra.mxu0 0.0
    %8180 = vmatprep.subr.mxu0 0.0
    %8181 = vmatpush1.xpose.msra.mxu0 0.0
    %8182 = vmatprep.subr.mxu0 0.0
    %8183 = vmatpush1.xpose.msra.mxu0 0.0
    %8184 = vmatprep.subr.mxu0 0.0
    %8185 = vmatpush1.xpose.msra.mxu0 0.0
    %8186 = vmatprep.subr.mxu0 0.0
    %8187 = vmatpush1.xpose.msra.mxu0 0.0
    %8188 = vmatprep.subr.mxu0 0.0
    %8189 = vmatpush1.xpose.msra.mxu0 0.0
    %8190 = vmatprep.subr.mxu0 0.0
    %8191 = vmatpush1.xpose.msra.mxu0 0.0
    %8192 = vmatprep.subr.mxu0 0.0
    %8193 = vmatpush1.xpose.msra.mxu0 0.0
    %8194 = vmatprep.subr.mxu0 0.0
    %8195 = vmatpush1.xpose.msra.mxu0 0.0
    %8196 = vmatprep.subr.mxu0 0.0
    %8197 = vmatpush1.xpose.msra.mxu0 0.0
    %8198 = vmatprep.subr.mxu0 0.0
    %8199 = vmatpush1.xpose.msra.mxu0 0.0
    %8200 = vmatprep.subr.mxu0 0.0
    %8201 = vmatpush1.xpose.msra.mxu0 0.0
    %8202 = vmatprep.subr.mxu0 0.0
    %8203 = vmatpush1.xpose.msra.mxu0 0.0
    %8204 = vmatprep.subr.mxu0 0.0
    %8205 = vmatpush1.xpose.msra.mxu0 0.0
    %8206 = vmatprep.subr.mxu0 0.0
    %8207 = vmatpush1.xpose.msra.mxu0 0.0
    %8208 = vmatprep.subr.mxu0 0.0
    %8209 = vmatpush1.xpose.msra.mxu0 0.0
    %8210 = vmatprep.subr.mxu0 0.0
    %8211 = vmatpush1.xpose.msra.mxu0 0.0
    %8212 = vmatprep.subr.mxu0 0.0
    %8213 = vmatpush1.xpose.msra.mxu0 0.0
    %8214 = vmatprep.subr.mxu0 0.0
    %8215 = vmatpush1.xpose.msra.mxu0 0.0
    %8216 = vmatprep.mubr.f32.mxu0 0.0
    %8217 = vmatmul.mubr.f32.gmra.mrb[0].mxu0 %v8147
    %v8218 = vpop.f32.mrb[0].mxu0
    %v8219 = vadd.f32 0.0, %v8218
    %v8220 = vpop.f32.mrb[0].mxu0
    %8221 = vdwg.mxu0
    %v8223 = vsel %vm550, %v7959, 0
    %v8226 = vsel %vm550, %v8051, 0
    %8228 = vmatprep.subr.mxu0 0.0
    %8229 = vmatpush1.xpose.msra.mxu0 %v8226
    %8230 = vmatprep.subr.mxu0 0.0
    %8231 = vmatpush1.xpose.msra.mxu0 0.0
    %8232 = vmatprep.subr.mxu0 0.0
    %8233 = vmatpush1.xpose.msra.mxu0 0.0
    %8234 = vmatprep.subr.mxu0 0.0
    %8235 = vmatpush1.xpose.msra.mxu0 0.0
    %8236 = vmatprep.subr.mxu0 0.0
    %8237 = vmatpush1.xpose.msra.mxu0 0.0
    %8238 = vmatprep.subr.mxu0 0.0
    %8239 = vmatpush1.xpose.msra.mxu0 0.0
    %8240 = vmatprep.subr.mxu0 0.0
    %8241 = vmatpush1.xpose.msra.mxu0 0.0
    %8242 = vmatprep.subr.mxu0 0.0
    %8243 = vmatpush1.xpose.msra.mxu0 0.0
    %8244 = vmatprep.subr.mxu0 0.0
    %8245 = vmatpush1.xpose.msra.mxu0 0.0
    %8246 = vmatprep.subr.mxu0 0.0
    %8247 = vmatpush1.xpose.msra.mxu0 0.0
    %8248 = vmatprep.subr.mxu0 0.0
    %8249 = vmatpush1.xpose.msra.mxu0 0.0
    %8250 = vmatprep.subr.mxu0 0.0
    %8251 = vmatpush1.xpose.msra.mxu0 0.0
    %8252 = vmatprep.subr.mxu0 0.0
    %8253 = vmatpush1.xpose.msra.mxu0 0.0
    %8254 = vmatprep.subr.mxu0 0.0
    %8255 = vmatpush1.xpose.msra.mxu0 0.0
    %8256 = vmatprep.subr.mxu0 0.0
    %8257 = vmatpush1.xpose.msra.mxu0 0.0
    %8258 = vmatprep.subr.mxu0 0.0
    %8259 = vmatpush1.xpose.msra.mxu0 0.0
    %8260 = vmatprep.subr.mxu0 0.0
    %8261 = vmatpush1.xpose.msra.mxu0 0.0
    %8262 = vmatprep.subr.mxu0 0.0
    %8263 = vmatpush1.xpose.msra.mxu0 0.0
    %8264 = vmatprep.subr.mxu0 0.0
    %8265 = vmatpush1.xpose.msra.mxu0 0.0
    %8266 = vmatprep.subr.mxu0 0.0
    %8267 = vmatpush1.xpose.msra.mxu0 0.0
    %8268 = vmatprep.subr.mxu0 0.0
    %8269 = vmatpush1.xpose.msra.mxu0 0.0
    %8270 = vmatprep.subr.mxu0 0.0
    %8271 = vmatpush1.xpose.msra.mxu0 0.0
    %8272 = vmatprep.subr.mxu0 0.0
    %8273 = vmatpush1.xpose.msra.mxu0 0.0
    %8274 = vmatprep.subr.mxu0 0.0
    %8275 = vmatpush1.xpose.msra.mxu0 0.0
    %8276 = vmatprep.subr.mxu0 0.0
    %8277 = vmatpush1.xpose.msra.mxu0 0.0
    %8278 = vmatprep.subr.mxu0 0.0
    %8279 = vmatpush1.xpose.msra.mxu0 0.0
    %8280 = vmatprep.subr.mxu0 0.0
    %8281 = vmatpush1.xpose.msra.mxu0 0.0
    %8282 = vmatprep.subr.mxu0 0.0
    %8283 = vmatpush1.xpose.msra.mxu0 0.0
    %8284 = vmatprep.subr.mxu0 0.0
    %8285 = vmatpush1.xpose.msra.mxu0 0.0
    %8286 = vmatprep.subr.mxu0 0.0
    %8287 = vmatpush1.xpose.msra.mxu0 0.0
    %8288 = vmatprep.subr.mxu0 0.0
    %8289 = vmatpush1.xpose.msra.mxu0 0.0
    %8290 = vmatprep.subr.mxu0 0.0
    %8291 = vmatpush1.xpose.msra.mxu0 0.0
    %8292 = vmatprep.mubr.f32.mxu0 0.0
    %8293 = vmatmul.mubr.f32.gmra.mrb[0].mxu0 %v8223
    %v8294 = vpop.f32.mrb[0].mxu0
    %v8295 = vadd.f32 0.0, %v8294
    %v8296 = vpop.f32.mrb[0].mxu0
    %8297 = vdwg.mxu0
    %v8298 = vmul.f32 %v8219, 0.25
    %v8299 = vmul.f32 %v8295, 0.25
    %v8300 = vadd.f32 %v8298, %v229
    %v8301 = vadd.f32 %v8299, %v229
    %v8302 = vsel %vm707, %v8300, -inf
    %8303 = vmax.xlane.f32.xlu0 %v8302
    %v8304 = vpop.xlane.xlu0 %8303
    %v8305 = vsel %vm707, %v8301, -inf
    %8306 = vmax.xlane.f32.xlu0 %v8305
    %v8307 = vpop.xlane.xlu0 %8306
    %v8308 = vsub.f32 %v8300, %v8304
    %v8309 = vsub.f32 %v8301, %v8307
    %v8310 = vmul.f32 %v8308, 1.442695
    %v8311 = vpow.pop %v8310
    %v8312 = vmul.f32 %v8309, 1.442695
    %v8313 = vpow.pop %v8312
    %v8314 = vsel %vm707, %v8311, 0.0
    %8315 = vadd.xlane.f32.xlu0 %v8314
    %v8316 = vpop.xlane.xlu0 %8315
    %v8317 = vsel %vm707, %v8313, 0.0
    %8318 = vadd.xlane.f32.xlu0 %v8317
    %v8319 = vpop.xlane.xlu0 %8318
    %v8320 = vrcp.pop %v8316
    %v8321 = vmul.f32 %v8311, %v8320
    %v8322 = vrcp.pop %v8319
    %v8323 = vmul.f32 %v8313, %v8322
    %v8325 = vsel %vm707, %v8321, 0
    %8327 = vmatprep.subr.mxu0 0.0
    %8328 = vmatpush1.msra.mxu0 %v8138
    %8329 = vmatprep.subr.mxu0 0.0
    %8330 = vmatpush1.msra.mxu0 0.0
    %8331 = vmatprep.subr.mxu0 0.0
    %8332 = vmatpush1.msra.mxu0 0.0
    %8333 = vmatprep.subr.mxu0 0.0
    %8334 = vmatpush1.msra.mxu0 0.0
    %8335 = vmatprep.subr.mxu0 0.0
    %8336 = vmatpush1.msra.mxu0 0.0
    %8337 = vmatprep.subr.mxu0 0.0
    %8338 = vmatpush1.msra.mxu0 0.0
    %8339 = vmatprep.subr.mxu0 0.0
    %8340 = vmatpush1.msra.mxu0 0.0
    %8341 = vmatprep.subr.mxu0 0.0
    %8342 = vmatpush1.msra.mxu0 0.0
    %8343 = vmatprep.subr.mxu0 0.0
    %8344 = vmatpush1.msra.mxu0 0.0
    %8345 = vmatprep.subr.mxu0 0.0
    %8346 = vmatpush1.msra.mxu0 0.0
    %8347 = vmatprep.subr.mxu0 0.0
    %8348 = vmatpush1.msra.mxu0 0.0
    %8349 = vmatprep.subr.mxu0 0.0
    %8350 = vmatpush1.msra.mxu0 0.0
    %8351 = vmatprep.subr.mxu0 0.0
    %8352 = vmatpush1.msra.mxu0 0.0
    %8353 = vmatprep.subr.mxu0 0.0
    %8354 = vmatpush1.msra.mxu0 0.0
    %8355 = vmatprep.subr.mxu0 0.0
    %8356 = vmatpush1.msra.mxu0 0.0
    %8357 = vmatprep.subr.mxu0 0.0
    %8358 = vmatpush1.msra.mxu0 0.0
    %8359 = vmatprep.subr.mxu0 0.0
    %8360 = vmatpush1.msra.mxu0 0.0
    %8361 = vmatprep.subr.mxu0 0.0
    %8362 = vmatpush1.msra.mxu0 0.0
    %8363 = vmatprep.subr.mxu0 0.0
    %8364 = vmatpush1.msra.mxu0 0.0
    %8365 = vmatprep.subr.mxu0 0.0
    %8366 = vmatpush1.msra.mxu0 0.0
    %8367 = vmatprep.subr.mxu0 0.0
    %8368 = vmatpush1.msra.mxu0 0.0
    %8369 = vmatprep.subr.mxu0 0.0
    %8370 = vmatpush1.msra.mxu0 0.0
    %8371 = vmatprep.subr.mxu0 0.0
    %8372 = vmatpush1.msra.mxu0 0.0
    %8373 = vmatprep.subr.mxu0 0.0
    %8374 = vmatpush1.msra.mxu0 0.0
    %8375 = vmatprep.subr.mxu0 0.0
    %8376 = vmatpush1.msra.mxu0 0.0
    %8377 = vmatprep.subr.mxu0 0.0
    %8378 = vmatpush1.msra.mxu0 0.0
    %8379 = vmatprep.subr.mxu0 0.0
    %8380 = vmatpush1.msra.mxu0 0.0
    %8381 = vmatprep.subr.mxu0 0.0
    %8382 = vmatpush1.msra.mxu0 0.0
    %8383 = vmatprep.subr.mxu0 0.0
    %8384 = vmatpush1.msra.mxu0 0.0
    %8385 = vmatprep.subr.mxu0 0.0
    %8386 = vmatpush1.msra.mxu0 0.0
    %8387 = vmatprep.subr.mxu0 0.0
    %8388 = vmatpush1.msra.mxu0 0.0
    %8389 = vmatprep.subr.mxu0 0.0
    %8390 = vmatpush1.msra.mxu0 0.0
    %8391 = vmatprep.mubr.f32.mxu0 0.0
    %8392 = vmatmul.mubr.f32.gmra.mrb[0].mxu0 %v8325
    %v8393 = vpop.f32.mrb[0].mxu0
    %v8394 = vadd.f32 0.0, %v8393
    %v8395 = vpop.f32.mrb[0].mxu0
    %8396 = vdwg.mxu0
    %v8398 = vsel %vm707, %v8323, 0
    %8400 = vmatprep.subr.mxu0 0.0
    %8401 = vmatpush1.msra.mxu0 %v8143
    %8402 = vmatprep.subr.mxu0 0.0
    %8403 = vmatpush1.msra.mxu0 0.0
    %8404 = vmatprep.subr.mxu0 0.0
    %8405 = vmatpush1.msra.mxu0 0.0
    %8406 = vmatprep.subr.mxu0 0.0
    %8407 = vmatpush1.msra.mxu0 0.0
    %8408 = vmatprep.subr.mxu0 0.0
    %8409 = vmatpush1.msra.mxu0 0.0
    %8410 = vmatprep.subr.mxu0 0.0
    %8411 = vmatpush1.msra.mxu0 0.0
    %8412 = vmatprep.subr.mxu0 0.0
    %8413 = vmatpush1.msra.mxu0 0.0
    %8414 = vmatprep.subr.mxu0 0.0
    %8415 = vmatpush1.msra.mxu0 0.0
    %8416 = vmatprep.subr.mxu0 0.0
    %8417 = vmatpush1.msra.mxu0 0.0
    %8418 = vmatprep.subr.mxu0 0.0
    %8419 = vmatpush1.msra.mxu0 0.0
    %8420 = vmatprep.subr.mxu0 0.0
    %8421 = vmatpush1.msra.mxu0 0.0
    %8422 = vmatprep.subr.mxu0 0.0
    %8423 = vmatpush1.msra.mxu0 0.0
    %8424 = vmatprep.subr.mxu0 0.0
    %8425 = vmatpush1.msra.mxu0 0.0
    %8426 = vmatprep.subr.mxu0 0.0
    %8427 = vmatpush1.msra.mxu0 0.0
    %8428 = vmatprep.subr.mxu0 0.0
    %8429 = vmatpush1.msra.mxu0 0.0
    %8430 = vmatprep.subr.mxu0 0.0
    %8431 = vmatpush1.msra.mxu0 0.0
    %8432 = vmatprep.subr.mxu0 0.0
    %8433 = vmatpush1.msra.mxu0 0.0
    %8434 = vmatprep.subr.mxu0 0.0
    %8435 = vmatpush1.msra.mxu0 0.0
    %8436 = vmatprep.subr.mxu0 0.0
    %8437 = vmatpush1.msra.mxu0 0.0
    %8438 = vmatprep.subr.mxu0 0.0
    %8439 = vmatpush1.msra.mxu0 0.0
    %8440 = vmatprep.subr.mxu0 0.0
    %8441 = vmatpush1.msra.mxu0 0.0
    %8442 = vmatprep.subr.mxu0 0.0
    %8443 = vmatpush1.msra.mxu0 0.0
    %8444 = vmatprep.subr.mxu0 0.0
    %8445 = vmatpush1.msra.mxu0 0.0
    %8446 = vmatprep.subr.mxu0 0.0
    %8447 = vmatpush1.msra.mxu0 0.0
    %8448 = vmatprep.subr.mxu0 0.0
    %8449 = vmatpush1.msra.mxu0 0.0
    %8450 = vmatprep.subr.mxu0 0.0
    %8451 = vmatpush1.msra.mxu0 0.0
    %8452 = vmatprep.subr.mxu0 0.0
    %8453 = vmatpush1.msra.mxu0 0.0
    %8454 = vmatprep.subr.mxu0 0.0
    %8455 = vmatpush1.msra.mxu0 0.0
    %8456 = vmatprep.subr.mxu0 0.0
    %8457 = vmatpush1.msra.mxu0 0.0
    %8458 = vmatprep.subr.mxu0 0.0
    %8459 = vmatpush1.msra.mxu0 0.0
    %8460 = vmatprep.subr.mxu0 0.0
    %8461 = vmatpush1.msra.mxu0 0.0
    %8462 = vmatprep.subr.mxu0 0.0
    %8463 = vmatpush1.msra.mxu0 0.0
    %8464 = vmatprep.mubr.f32.mxu0 0.0
    %8465 = vmatmul.mubr.f32.gmra.mrb[0].mxu0 %v8398
    %v8466 = vpop.f32.mrb[0].mxu0
    %v8467 = vadd.f32 0.0, %v8466
    %v8468 = vpop.f32.mrb[0].mxu0
    %8469 = vdwg.mxu0
    %s8470 = scalar_lea.vmem %s13, 160
    %v8471 = vld [vmem:[%s8470] sm:$0xff]
    %v8472 = vld [vmem:[%s8470 + $0x8] sm:$0xff]
    %v8474 = vsel %vm550, %v8394, 0
    %v8477 = vsel %vm550, %v8467, 0
    %8479 = vmatprep.subr.mxu0 0.0
    %8480 = vmatpush1.msra.mxu0 %v8471
    %8481 = vmatprep.subr.mxu0 0.0
    %8482 = vmatpush1.msra.mxu0 %v8472
    %8483 = vmatprep.subr.mxu0 0.0
    %8484 = vmatpush1.msra.mxu0 0.0
    %8485 = vmatprep.subr.mxu0 0.0
    %8486 = vmatpush1.msra.mxu0 0.0
    %8487 = vmatprep.subr.mxu0 0.0
    %8488 = vmatpush1.msra.mxu0 0.0
    %8489 = vmatprep.subr.mxu0 0.0
    %8490 = vmatpush1.msra.mxu0 0.0
    %8491 = vmatprep.subr.mxu0 0.0
    %8492 = vmatpush1.msra.mxu0 0.0
    %8493 = vmatprep.subr.mxu0 0.0
    %8494 = vmatpush1.msra.mxu0 0.0
    %8495 = vmatprep.subr.mxu0 0.0
    %8496 = vmatpush1.msra.mxu0 0.0
    %8497 = vmatprep.subr.mxu0 0.0
    %8498 = vmatpush1.msra.mxu0 0.0
    %8499 = vmatprep.subr.mxu0 0.0
    %8500 = vmatpush1.msra.mxu0 0.0
    %8501 = vmatprep.subr.mxu0 0.0
    %8502 = vmatpush1.msra.mxu0 0.0
    %8503 = vmatprep.subr.mxu0 0.0
    %8504 = vmatpush1.msra.mxu0 0.0
    %8505 = vmatprep.subr.mxu0 0.0
    %8506 = vmatpush1.msra.mxu0 0.0
    %8507 = vmatprep.subr.mxu0 0.0
    %8508 = vmatpush1.msra.mxu0 0.0
    %8509 = vmatprep.subr.mxu0 0.0
    %8510 = vmatpush1.msra.mxu0 0.0
    %8511 = vmatprep.subr.mxu0 0.0
    %8512 = vmatpush1.msra.mxu0 0.0
    %8513 = vmatprep.subr.mxu0 0.0
    %8514 = vmatpush1.msra.mxu0 0.0
    %8515 = vmatprep.subr.mxu0 0.0
    %8516 = vmatpush1.msra.mxu0 0.0
    %8517 = vmatprep.subr.mxu0 0.0
    %8518 = vmatpush1.msra.mxu0 0.0
    %8519 = vmatprep.subr.mxu0 0.0
    %8520 = vmatpush1.msra.mxu0 0.0
    %8521 = vmatprep.subr.mxu0 0.0
    %8522 = vmatpush1.msra.mxu0 0.0
    %8523 = vmatprep.subr.mxu0 0.0
    %8524 = vmatpush1.msra.mxu0 0.0
    %8525 = vmatprep.subr.mxu0 0.0
    %8526 = vmatpush1.msra.mxu0 0.0
    %8527 = vmatprep.subr.mxu0 0.0
    %8528 = vmatpush1.msra.mxu0 0.0
    %8529 = vmatprep.subr.mxu0 0.0
    %8530 = vmatpush1.msra.mxu0 0.0
    %8531 = vmatprep.subr.mxu0 0.0
    %8532 = vmatpush1.msra.mxu0 0.0
    %8533 = vmatprep.subr.mxu0 0.0
    %8534 = vmatpush1.msra.mxu0 0.0
    %8535 = vmatprep.subr.mxu0 0.0
    %8536 = vmatpush1.msra.mxu0 0.0
    %8537 = vmatprep.subr.mxu0 0.0
    %8538 = vmatpush1.msra.mxu0 0.0
    %8539 = vmatprep.subr.mxu0 0.0
    %8540 = vmatpush1.msra.mxu0 0.0
    %8541 = vmatprep.subr.mxu0 0.0
    %8542 = vmatpush1.msra.mxu0 0.0
    %8543 = vmatprep.mubr.f32.mxu0 0.0
    %8544 = vmatmul.mubr.f32.gmra.mrb[0].mxu0 %v8474
    %v8545 = vpop.f32.mrb[0].mxu0
    %v8546 = vadd.f32 0.0, %v8545
    %v8547 = vpop.f32.mrb[0].mxu0
    %8548 = vmatprep.mubr.f32.mxu0 0.0
    %8549 = vmatmul.mubr.f32.gmra.mrb[0].mxu0 %v8477
    %v8550 = vpop.f32.mrb[0].mxu0
    %v8551 = vadd.f32 0.0, %v8550
    %v8552 = vpop.f32.mrb[0].mxu0
    %8553 = vdwg.mxu0
    %v8554 = vadd.f32 %v7862, %v8546
    %v8555 = vadd.f32 %v7867, %v8551
    %s8556 = scalar_lea.vmem %s7, 704
    %v8557 = vld [vmem:[%s8556] sm:$0xff]
    %v8558 = vld [vmem:[%s8556 + $0x8] sm:$0xff]
    %v8559 = vld [vmem:[%s8556 + $0x10] sm:$0xff]
    %v8560 = vld [vmem:[%s8556 + $0x18] sm:$0xff]
    %v8561 = vld [vmem:[%s8556 + $0x20] sm:$0xff]
    %v8562 = vld [vmem:[%s8556 + $0x28] sm:$0xff]
    %v8563 = vld [vmem:[%s8556 + $0x30] sm:$0xff]
    %v8564 = vld [vmem:[%s8556 + $0x38] sm:$0xff]
    %s8565 = scalar_lea.vmem %s8, 11
    %v8566 = vld [vmem:[%s8565] sm:$0x1]
    %v8568 = vlaneseq
    %v8569 = vshrl.u32 %v8568, 7
    %v8570 = vsub.s32 0, %v8569
    %v8571 = vrot.slane %v8566, %v8570
    %8573 = vmatprep.subr.mxu0 0.0
    %8574 = vmatpush1.msra.mxu0 %v8557
    %8575 = vmatprep.subr.mxu0 0.0
    %8576 = vmatpush1.msra.mxu0 %v8558
    %8577 = vmatprep.subr.mxu0 0.0
    %8578 = vmatpush1.msra.mxu0 %v8559
    %8579 = vmatprep.subr.mxu0 0.0
    %8580 = vmatpush1.msra.mxu0 %v8560
    %8581 = vmatprep.subr.mxu0 0.0
    %8582 = vmatpush1.msra.mxu0 %v8561
    %8583 = vmatprep.subr.mxu0 0.0
    %8584 = vmatpush1.msra.mxu0 %v8562
    %8585 = vmatprep.subr.mxu0 0.0
    %8586 = vmatpush1.msra.mxu0 %v8563
    %8587 = vmatprep.subr.mxu0 0.0
    %8588 = vmatpush1.msra.mxu0 %v8564
    %8589 = vmatprep.subr.mxu0 0.0
    %8590 = vmatpush1.msra.mxu0 0.0
    %8591 = vmatprep.subr.mxu0 0.0
    %8592 = vmatpush1.msra.mxu0 0.0
    %8593 = vmatprep.subr.mxu0 0.0
    %8594 = vmatpush1.msra.mxu0 0.0
    %8595 = vmatprep.subr.mxu0 0.0
    %8596 = vmatpush1.msra.mxu0 0.0
    %8597 = vmatprep.subr.mxu0 0.0
    %8598 = vmatpush1.msra.mxu0 0.0
    %8599 = vmatprep.subr.mxu0 0.0
    %8600 = vmatpush1.msra.mxu0 0.0
    %8601 = vmatprep.subr.mxu0 0.0
    %8602 = vmatpush1.msra.mxu0 0.0
    %8603 = vmatprep.subr.mxu0 0.0
    %8604 = vmatpush1.msra.mxu0 0.0
    %8605 = vmatprep.subr.mxu0 0.0
    %8606 = vmatpush1.msra.mxu0 0.0
    %8607 = vmatprep.subr.mxu0 0.0
    %8608 = vmatpush1.msra.mxu0 0.0
    %8609 = vmatprep.subr.mxu0 0.0
    %8610 = vmatpush1.msra.mxu0 0.0
    %8611 = vmatprep.subr.mxu0 0.0
    %8612 = vmatpush1.msra.mxu0 0.0
    %8613 = vmatprep.subr.mxu0 0.0
    %8614 = vmatpush1.msra.mxu0 0.0
    %8615 = vmatprep.subr.mxu0 0.0
    %8616 = vmatpush1.msra.mxu0 0.0
    %8617 = vmatprep.subr.mxu0 0.0
    %8618 = vmatpush1.msra.mxu0 0.0
    %8619 = vmatprep.subr.mxu0 0.0
    %8620 = vmatpush1.msra.mxu0 0.0
    %8621 = vmatprep.subr.mxu0 0.0
    %8622 = vmatpush1.msra.mxu0 0.0
    %8623 = vmatprep.subr.mxu0 0.0
    %8624 = vmatpush1.msra.mxu0 0.0
    %8625 = vmatprep.subr.mxu0 0.0
    %8626 = vmatpush1.msra.mxu0 0.0
    %8627 = vmatprep.subr.mxu0 0.0
    %8628 = vmatpush1.msra.mxu0 0.0
    %8629 = vmatprep.subr.mxu0 0.0
    %8630 = vmatpush1.msra.mxu0 0.0
    %8631 = vmatprep.subr.mxu0 0.0
    %8632 = vmatpush1.msra.mxu0 0.0
    %8633 = vmatprep.subr.mxu0 0.0
    %8634 = vmatpush1.msra.mxu0 0.0
    %8635 = vmatprep.subr.mxu0 0.0
    %8636 = vmatpush1.msra.mxu0 0.0
    %8637 = vmatprep.mubr.f32.mxu0 0.0
    %8638 = vmatmul.mubr.f32.gmra.mrb[0].mxu0 %v6514
    %v8639 = vpop.f32.mrb[0].mxu0
    %v8640 = vadd.f32 %v8571, %v8639
    %v8641 = vpop.f32.mrb[0].mxu0
    %8642 = vmatprep.mubr.f32.mxu0 0.0
    %8643 = vmatmul.mubr.f32.gmra.mrb[0].mxu0 %v6517
    %v8644 = vpop.f32.mrb[0].mxu0
    %v8645 = vadd.f32 %v8571, %v8644
    %v8646 = vpop.f32.mrb[0].mxu0
    %8647 = vdwg.mxu0
    %s8648 = scalar_lea.vmem %s9, 704
    %v8649 = vld [vmem:[%s8648] sm:$0xff]
    %v8650 = vld [vmem:[%s8648 + $0x8] sm:$0xff]
    %v8651 = vld [vmem:[%s8648 + $0x10] sm:$0xff]
    %v8652 = vld [vmem:[%s8648 + $0x18] sm:$0xff]
    %v8653 = vld [vmem:[%s8648 + $0x20] sm:$0xff]
    %v8654 = vld [vmem:[%s8648 + $0x28] sm:$0xff]
    %v8655 = vld [vmem:[%s8648 + $0x30] sm:$0xff]
    %v8656 = vld [vmem:[%s8648 + $0x38] sm:$0xff]
    %s8657 = scalar_lea.vmem %s10, 11
    %v8658 = vld [vmem:[%s8657] sm:$0x1]
    %v8660 = vlaneseq
    %v8661 = vshrl.u32 %v8660, 7
    %v8662 = vsub.s32 0, %v8661
    %v8663 = vrot.slane %v8658, %v8662
    %8665 = vmatprep.subr.mxu0 0.0
    %8666 = vmatpush1.msra.mxu0 %v8649
    %8667 = vmatprep.subr.mxu0 0.0
    %8668 = vmatpush1.msra.mxu0 %v8650
    %8669 = vmatprep.subr.mxu0 0.0
    %8670 = vmatpush1.msra.mxu0 %v8651
    %8671 = vmatprep.subr.mxu0 0.0
    %8672 = vmatpush1.msra.mxu0 %v8652
    %8673 = vmatprep.subr.mxu0 0.0
    %8674 = vmatpush1.msra.mxu0 %v8653
    %8675 = vmatprep.subr.mxu0 0.0
    %8676 = vmatpush1.msra.mxu0 %v8654
    %8677 = vmatprep.subr.mxu0 0.0
    %8678 = vmatpush1.msra.mxu0 %v8655
    %8679 = vmatprep.subr.mxu0 0.0
    %8680 = vmatpush1.msra.mxu0 %v8656
    %8681 = vmatprep.subr.mxu0 0.0
    %8682 = vmatpush1.msra.mxu0 0.0
    %8683 = vmatprep.subr.mxu0 0.0
    %8684 = vmatpush1.msra.mxu0 0.0
    %8685 = vmatprep.subr.mxu0 0.0
    %8686 = vmatpush1.msra.mxu0 0.0
    %8687 = vmatprep.subr.mxu0 0.0
    %8688 = vmatpush1.msra.mxu0 0.0
    %8689 = vmatprep.subr.mxu0 0.0
    %8690 = vmatpush1.msra.mxu0 0.0
    %8691 = vmatprep.subr.mxu0 0.0
    %8692 = vmatpush1.msra.mxu0 0.0
    %8693 = vmatprep.subr.mxu0 0.0
    %8694 = vmatpush1.msra.mxu0 0.0
    %8695 = vmatprep.subr.mxu0 0.0
    %8696 = vmatpush1.msra.mxu0 0.0
    %8697 = vmatprep.subr.mxu0 0.0
    %8698 = vmatpush1.msra.mxu0 0.0
    %8699 = vmatprep.subr.mxu0 0.0
    %8700 = vmatpush1.msra.mxu0 0.0
    %8701 = vmatprep.subr.mxu0 0.0
    %8702 = vmatpush1.msra.mxu0 0.0
    %8703 = vmatprep.subr.mxu0 0.0
    %8704 = vmatpush1.msra.mxu0 0.0
    %8705 = vmatprep.subr.mxu0 0.0
    %8706 = vmatpush1.msra.mxu0 0.0
    %8707 = vmatprep.subr.mxu0 0.0
    %8708 = vmatpush1.msra.mxu0 0.0
    %8709 = vmatprep.subr.mxu0 0.0
    %8710 = vmatpush1.msra.mxu0 0.0
    %8711 = vmatprep.subr.mxu0 0.0
    %8712 = vmatpush1.msra.mxu0 0.0
    %8713 = vmatprep.subr.mxu0 0.0
    %8714 = vmatpush1.msra.mxu0 0.0
    %8715 = vmatprep.subr.mxu0 0.0
    %8716 = vmatpush1.msra.mxu0 0.0
    %8717 = vmatprep.subr.mxu0 0.0
    %8718 = vmatpush1.msra.mxu0 0.0
    %8719 = vmatprep.subr.mxu0 0.0
    %8720 = vmatpush1.msra.mxu0 0.0
    %8721 = vmatprep.subr.mxu0 0.0
    %8722 = vmatpush1.msra.mxu0 0.0
    %8723 = vmatprep.subr.mxu0 0.0
    %8724 = vmatpush1.msra.mxu0 0.0
    %8725 = vmatprep.subr.mxu0 0.0
    %8726 = vmatpush1.msra.mxu0 0.0
    %8727 = vmatprep.subr.mxu0 0.0
    %8728 = vmatpush1.msra.mxu0 0.0
    %8729 = vmatprep.mubr.f32.mxu0 0.0
    %8730 = vmatmul.mubr.f32.gmra.mrb[0].mxu0 %v6514
    %v8731 = vpop.f32.mrb[0].mxu0
    %v8732 = vadd.f32 %v8663, %v8731
    %v8733 = vpop.f32.mrb[0].mxu0
    %8734 = vmatprep.mubr.f32.mxu0 0.0
    %8735 = vmatmul.mubr.f32.gmra.mrb[0].mxu0 %v6517
    %v8736 = vpop.f32.mrb[0].mxu0
    %v8737 = vadd.f32 %v8663, %v8736
    %v8738 = vpop.f32.mrb[0].mxu0
    %8739 = vdwg.mxu0
    %s8740 = scalar_lea.vmem %s11, 704
    %v8741 = vld [vmem:[%s8740] sm:$0xff]
    %v8742 = vld [vmem:[%s8740 + $0x8] sm:$0xff]
    %v8743 = vld [vmem:[%s8740 + $0x10] sm:$0xff]
    %v8744 = vld [vmem:[%s8740 + $0x18] sm:$0xff]
    %v8745 = vld [vmem:[%s8740 + $0x20] sm:$0xff]
    %v8746 = vld [vmem:[%s8740 + $0x28] sm:$0xff]
    %v8747 = vld [vmem:[%s8740 + $0x30] sm:$0xff]
    %v8748 = vld [vmem:[%s8740 + $0x38] sm:$0xff]
    %s8749 = scalar_lea.vmem %s12, 11
    %v8750 = vld [vmem:[%s8749] sm:$0x1]
    %v8752 = vlaneseq
    %v8753 = vshrl.u32 %v8752, 7
    %v8754 = vsub.s32 0, %v8753
    %v8755 = vrot.slane %v8750, %v8754
    %8757 = vmatprep.subr.mxu0 0.0
    %8758 = vmatpush1.msra.mxu0 %v8741
    %8759 = vmatprep.subr.mxu0 0.0
    %8760 = vmatpush1.msra.mxu0 %v8742
    %8761 = vmatprep.subr.mxu0 0.0
    %8762 = vmatpush1.msra.mxu0 %v8743
    %8763 = vmatprep.subr.mxu0 0.0
    %8764 = vmatpush1.msra.mxu0 %v8744
    %8765 = vmatprep.subr.mxu0 0.0
    %8766 = vmatpush1.msra.mxu0 %v8745
    %8767 = vmatprep.subr.mxu0 0.0
    %8768 = vmatpush1.msra.mxu0 %v8746
    %8769 = vmatprep.subr.mxu0 0.0
    %8770 = vmatpush1.msra.mxu0 %v8747
    %8771 = vmatprep.subr.mxu0 0.0
    %8772 = vmatpush1.msra.mxu0 %v8748
    %8773 = vmatprep.subr.mxu0 0.0
    %8774 = vmatpush1.msra.mxu0 0.0
    %8775 = vmatprep.subr.mxu0 0.0
    %8776 = vmatpush1.msra.mxu0 0.0
    %8777 = vmatprep.subr.mxu0 0.0
    %8778 = vmatpush1.msra.mxu0 0.0
    %8779 = vmatprep.subr.mxu0 0.0
    %8780 = vmatpush1.msra.mxu0 0.0
    %8781 = vmatprep.subr.mxu0 0.0
    %8782 = vmatpush1.msra.mxu0 0.0
    %8783 = vmatprep.subr.mxu0 0.0
    %8784 = vmatpush1.msra.mxu0 0.0
    %8785 = vmatprep.subr.mxu0 0.0
    %8786 = vmatpush1.msra.mxu0 0.0
    %8787 = vmatprep.subr.mxu0 0.0
    %8788 = vmatpush1.msra.mxu0 0.0
    %8789 = vmatprep.subr.mxu0 0.0
    %8790 = vmatpush1.msra.mxu0 0.0
    %8791 = vmatprep.subr.mxu0 0.0
    %8792 = vmatpush1.msra.mxu0 0.0
    %8793 = vmatprep.subr.mxu0 0.0
    %8794 = vmatpush1.msra.mxu0 0.0
    %8795 = vmatprep.subr.mxu0 0.0
    %8796 = vmatpush1.msra.mxu0 0.0
    %8797 = vmatprep.subr.mxu0 0.0
    %8798 = vmatpush1.msra.mxu0 0.0
    %8799 = vmatprep.subr.mxu0 0.0
    %8800 = vmatpush1.msra.mxu0 0.0
    %8801 = vmatprep.subr.mxu0 0.0
    %8802 = vmatpush1.msra.mxu0 0.0
    %8803 = vmatprep.subr.mxu0 0.0
    %8804 = vmatpush1.msra.mxu0 0.0
    %8805 = vmatprep.subr.mxu0 0.0
    %8806 = vmatpush1.msra.mxu0 0.0
    %8807 = vmatprep.subr.mxu0 0.0
    %8808 = vmatpush1.msra.mxu0 0.0
    %8809 = vmatprep.subr.mxu0 0.0
    %8810 = vmatpush1.msra.mxu0 0.0
    %8811 = vmatprep.subr.mxu0 0.0
    %8812 = vmatpush1.msra.mxu0 0.0
    %8813 = vmatprep.subr.mxu0 0.0
    %8814 = vmatpush1.msra.mxu0 0.0
    %8815 = vmatprep.subr.mxu0 0.0
    %8816 = vmatpush1.msra.mxu0 0.0
    %8817 = vmatprep.subr.mxu0 0.0
    %8818 = vmatpush1.msra.mxu0 0.0
    %8819 = vmatprep.subr.mxu0 0.0
    %8820 = vmatpush1.msra.mxu0 0.0
    %8821 = vmatprep.mubr.f32.mxu0 0.0
    %8822 = vmatmul.mubr.f32.gmra.mrb[0].mxu0 %v6514
    %v8823 = vpop.f32.mrb[0].mxu0
    %v8824 = vadd.f32 %v8755, %v8823
    %v8825 = vpop.f32.mrb[0].mxu0
    %8826 = vmatprep.mubr.f32.mxu0 0.0
    %8827 = vmatmul.mubr.f32.gmra.mrb[0].mxu0 %v6517
    %v8828 = vpop.f32.mrb[0].mxu0
    %v8829 = vadd.f32 %v8755, %v8828
    %v8830 = vpop.f32.mrb[0].mxu0
    %8831 = vdwg.mxu0
    %v8833 = vsel %vm550, %v8640, 0
    %v8836 = vsel %vm550, %v8732, 0
    %8838 = vmatprep.subr.mxu0 0.0
    %8839 = vmatpush1.xpose.msra.mxu0 %v8836
    %8840 = vmatprep.subr.mxu0 0.0
    %8841 = vmatpush1.xpose.msra.mxu0 0.0
    %8842 = vmatprep.subr.mxu0 0.0
    %8843 = vmatpush1.xpose.msra.mxu0 0.0
    %8844 = vmatprep.subr.mxu0 0.0
    %8845 = vmatpush1.xpose.msra.mxu0 0.0
    %8846 = vmatprep.subr.mxu0 0.0
    %8847 = vmatpush1.xpose.msra.mxu0 0.0
    %8848 = vmatprep.subr.mxu0 0.0
    %8849 = vmatpush1.xpose.msra.mxu0 0.0
    %8850 = vmatprep.subr.mxu0 0.0
    %8851 = vmatpush1.xpose.msra.mxu0 0.0
    %8852 = vmatprep.subr.mxu0 0.0
    %8853 = vmatpush1.xpose.msra.mxu0 0.0
    %8854 = vmatprep.subr.mxu0 0.0
    %8855 = vmatpush1.xpose.msra.mxu0 0.0
    %8856 = vmatprep.subr.mxu0 0.0
    %8857 = vmatpush1.xpose.msra.mxu0 0.0
    %8858 = vmatprep.subr.mxu0 0.0
    %8859 = vmatpush1.xpose.msra.mxu0 0.0
    %8860 = vmatprep.subr.mxu0 0.0
    %8861 = vmatpush1.xpose.msra.mxu0 0.0
    %8862 = vmatprep.subr.mxu0 0.0
    %8863 = vmatpush1.xpose.msra.mxu0 0.0
    %8864 = vmatprep.subr.mxu0 0.0
    %8865 = vmatpush1.xpose.msra.mxu0 0.0
    %8866 = vmatprep.subr.mxu0 0.0
    %8867 = vmatpush1.xpose.msra.mxu0 0.0
    %8868 = vmatprep.subr.mxu0 0.0
    %8869 = vmatpush1.xpose.msra.mxu0 0.0
    %8870 = vmatprep.subr.mxu0 0.0
    %8871 = vmatpush1.xpose.msra.mxu0 0.0
    %8872 = vmatprep.subr.mxu0 0.0
    %8873 = vmatpush1.xpose.msra.mxu0 0.0
    %8874 = vmatprep.subr.mxu0 0.0
    %8875 = vmatpush1.xpose.msra.mxu0 0.0
    %8876 = vmatprep.subr.mxu0 0.0
    %8877 = vmatpush1.xpose.msra.mxu0 0.0
    %8878 = vmatprep.subr.mxu0 0.0
    %8879 = vmatpush1.xpose.msra.mxu0 0.0
    %8880 = vmatprep.subr.mxu0 0.0
    %8881 = vmatpush1.xpose.msra.mxu0 0.0
    %8882 = vmatprep.subr.mxu0 0.0
    %8883 = vmatpush1.xpose.msra.mxu0 0.0
    %8884 = vmatprep.subr.mxu0 0.0
    %8885 = vmatpush1.xpose.msra.mxu0 0.0
    %8886 = vmatprep.subr.mxu0 0.0
    %8887 = vmatpush1.xpose.msra.mxu0 0.0
    %8888 = vmatprep.subr.mxu0 0.0
    %8889 = vmatpush1.xpose.msra.mxu0 0.0
    %8890 = vmatprep.subr.mxu0 0.0
    %8891 = vmatpush1.xpose.msra.mxu0 0.0
    %8892 = vmatprep.subr.mxu0 0.0
    %8893 = vmatpush1.xpose.msra.mxu0 0.0
    %8894 = vmatprep.subr.mxu0 0.0
    %8895 = vmatpush1.xpose.msra.mxu0 0.0
    %8896 = vmatprep.subr.mxu0 0.0
    %8897 = vmatpush1.xpose.msra.mxu0 0.0
    %8898 = vmatprep.subr.mxu0 0.0
    %8899 = vmatpush1.xpose.msra.mxu0 0.0
    %8900 = vmatprep.subr.mxu0 0.0
    %8901 = vmatpush1.xpose.msra.mxu0 0.0
    %8902 = vmatprep.mubr.f32.mxu0 0.0
    %8903 = vmatmul.mubr.f32.gmra.mrb[0].mxu0 %v8833
    %v8904 = vpop.f32.mrb[0].mxu0
    %v8905 = vadd.f32 0.0, %v8904
    %v8906 = vpop.f32.mrb[0].mxu0
    %8907 = vdwg.mxu0
    %v8909 = vsel %vm550, %v8645, 0
    %v8912 = vsel %vm550, %v8737, 0
    %8914 = vmatprep.subr.mxu0 0.0
    %8915 = vmatpush1.xpose.msra.mxu0 %v8912
    %8916 = vmatprep.subr.mxu0 0.0
    %8917 = vmatpush1.xpose.msra.mxu0 0.0
    %8918 = vmatprep.subr.mxu0 0.0
    %8919 = vmatpush1.xpose.msra.mxu0 0.0
    %8920 = vmatprep.subr.mxu0 0.0
    %8921 = vmatpush1.xpose.msra.mxu0 0.0
    %8922 = vmatprep.subr.mxu0 0.0
    %8923 = vmatpush1.xpose.msra.mxu0 0.0
    %8924 = vmatprep.subr.mxu0 0.0
    %8925 = vmatpush1.xpose.msra.mxu0 0.0
    %8926 = vmatprep.subr.mxu0 0.0
    %8927 = vmatpush1.xpose.msra.mxu0 0.0
    %8928 = vmatprep.subr.mxu0 0.0
    %8929 = vmatpush1.xpose.msra.mxu0 0.0
    %8930 = vmatprep.subr.mxu0 0.0
    %8931 = vmatpush1.xpose.msra.mxu0 0.0
    %8932 = vmatprep.subr.mxu0 0.0
    %8933 = vmatpush1.xpose.msra.mxu0 0.0
    %8934 = vmatprep.subr.mxu0 0.0
    %8935 = vmatpush1.xpose.msra.mxu0 0.0
    %8936 = vmatprep.subr.mxu0 0.0
    %8937 = vmatpush1.xpose.msra.mxu0 0.0
    %8938 = vmatprep.subr.mxu0 0.0
    %8939 = vmatpush1.xpose.msra.mxu0 0.0
    %8940 = vmatprep.subr.mxu0 0.0
    %8941 = vmatpush1.xpose.msra.mxu0 0.0
    %8942 = vmatprep.subr.mxu0 0.0
    %8943 = vmatpush1.xpose.msra.mxu0 0.0
    %8944 = vmatprep.subr.mxu0 0.0
    %8945 = vmatpush1.xpose.msra.mxu0 0.0
    %8946 = vmatprep.subr.mxu0 0.0
    %8947 = vmatpush1.xpose.msra.mxu0 0.0
    %8948 = vmatprep.subr.mxu0 0.0
    %8949 = vmatpush1.xpose.msra.mxu0 0.0
    %8950 = vmatprep.subr.mxu0 0.0
    %8951 = vmatpush1.xpose.msra.mxu0 0.0
    %8952 = vmatprep.subr.mxu0 0.0
    %8953 = vmatpush1.xpose.msra.mxu0 0.0
    %8954 = vmatprep.subr.mxu0 0.0
    %8955 = vmatpush1.xpose.msra.mxu0 0.0
    %8956 = vmatprep.subr.mxu0 0.0
    %8957 = vmatpush1.xpose.msra.mxu0 0.0
    %8958 = vmatprep.subr.mxu0 0.0
    %8959 = vmatpush1.xpose.msra.mxu0 0.0
    %8960 = vmatprep.subr.mxu0 0.0
    %8961 = vmatpush1.xpose.msra.mxu0 0.0
    %8962 = vmatprep.subr.mxu0 0.0
    %8963 = vmatpush1.xpose.msra.mxu0 0.0
    %8964 = vmatprep.subr.mxu0 0.0
    %8965 = vmatpush1.xpose.msra.mxu0 0.0
    %8966 = vmatprep.subr.mxu0 0.0
    %8967 = vmatpush1.xpose.msra.mxu0 0.0
    %8968 = vmatprep.subr.mxu0 0.0
    %8969 = vmatpush1.xpose.msra.mxu0 0.0
    %8970 = vmatprep.subr.mxu0 0.0
    %8971 = vmatpush1.xpose.msra.mxu0 0.0
    %8972 = vmatprep.subr.mxu0 0.0
    %8973 = vmatpush1.xpose.msra.mxu0 0.0
    %8974 = vmatprep.subr.mxu0 0.0
    %8975 = vmatpush1.xpose.msra.mxu0 0.0
    %8976 = vmatprep.subr.mxu0 0.0
    %8977 = vmatpush1.xpose.msra.mxu0 0.0
    %8978 = vmatprep.mubr.f32.mxu0 0.0
    %8979 = vmatmul.mubr.f32.gmra.mrb[0].mxu0 %v8909
    %v8980 = vpop.f32.mrb[0].mxu0
    %v8981 = vadd.f32 0.0, %v8980
    %v8982 = vpop.f32.mrb[0].mxu0
    %8983 = vdwg.mxu0
    %v8984 = vmul.f32 %v8905, 0.25
    %v8985 = vmul.f32 %v8981, 0.25
    %v8986 = vadd.f32 %v8984, %v229
    %v8987 = vadd.f32 %v8985, %v229
    %v8988 = vsel %vm707, %v8986, -inf
    %8989 = vmax.xlane.f32.xlu0 %v8988
    %v8990 = vpop.xlane.xlu0 %8989
    %v8991 = vsel %vm707, %v8987, -inf
    %8992 = vmax.xlane.f32.xlu0 %v8991
    %v8993 = vpop.xlane.xlu0 %8992
    %v8994 = vsub.f32 %v8986, %v8990
    %v8995 = vsub.f32 %v8987, %v8993
    %v8996 = vmul.f32 %v8994, 1.442695
    %v8997 = vpow.pop %v8996
    %v8998 = vmul.f32 %v8995, 1.442695
    %v8999 = vpow.pop %v8998
    %v9000 = vsel %vm707, %v8997, 0.0
    %9001 = vadd.xlane.f32.xlu0 %v9000
    %v9002 = vpop.xlane.xlu0 %9001
    %v9003 = vsel %vm707, %v8999, 0.0
    %9004 = vadd.xlane.f32.xlu0 %v9003
    %v9005 = vpop.xlane.xlu0 %9004
    %v9006 = vrcp.pop %v9002
    %v9007 = vmul.f32 %v8997, %v9006
    %v9008 = vrcp.pop %v9005
    %v9009 = vmul.f32 %v8999, %v9008
    %v9011 = vsel %vm707, %v9007, 0
    %9013 = vmatprep.subr.mxu0 0.0
    %9014 = vmatpush1.msra.mxu0 %v8824
    %9015 = vmatprep.subr.mxu0 0.0
    %9016 = vmatpush1.msra.mxu0 0.0
    %9017 = vmatprep.subr.mxu0 0.0
    %9018 = vmatpush1.msra.mxu0 0.0
    %9019 = vmatprep.subr.mxu0 0.0
    %9020 = vmatpush1.msra.mxu0 0.0
    %9021 = vmatprep.subr.mxu0 0.0
    %9022 = vmatpush1.msra.mxu0 0.0
    %9023 = vmatprep.subr.mxu0 0.0
    %9024 = vmatpush1.msra.mxu0 0.0
    %9025 = vmatprep.subr.mxu0 0.0
    %9026 = vmatpush1.msra.mxu0 0.0
    %9027 = vmatprep.subr.mxu0 0.0
    %9028 = vmatpush1.msra.mxu0 0.0
    %9029 = vmatprep.subr.mxu0 0.0
    %9030 = vmatpush1.msra.mxu0 0.0
    %9031 = vmatprep.subr.mxu0 0.0
    %9032 = vmatpush1.msra.mxu0 0.0
    %9033 = vmatprep.subr.mxu0 0.0
    %9034 = vmatpush1.msra.mxu0 0.0
    %9035 = vmatprep.subr.mxu0 0.0
    %9036 = vmatpush1.msra.mxu0 0.0
    %9037 = vmatprep.subr.mxu0 0.0
    %9038 = vmatpush1.msra.mxu0 0.0
    %9039 = vmatprep.subr.mxu0 0.0
    %9040 = vmatpush1.msra.mxu0 0.0
    %9041 = vmatprep.subr.mxu0 0.0
    %9042 = vmatpush1.msra.mxu0 0.0
    %9043 = vmatprep.subr.mxu0 0.0
    %9044 = vmatpush1.msra.mxu0 0.0
    %9045 = vmatprep.subr.mxu0 0.0
    %9046 = vmatpush1.msra.mxu0 0.0
    %9047 = vmatprep.subr.mxu0 0.0
    %9048 = vmatpush1.msra.mxu0 0.0
    %9049 = vmatprep.subr.mxu0 0.0
    %9050 = vmatpush1.msra.mxu0 0.0
    %9051 = vmatprep.subr.mxu0 0.0
    %9052 = vmatpush1.msra.mxu0 0.0
    %9053 = vmatprep.subr.mxu0 0.0
    %9054 = vmatpush1.msra.mxu0 0.0
    %9055 = vmatprep.subr.mxu0 0.0
    %9056 = vmatpush1.msra.mxu0 0.0
    %9057 = vmatprep.subr.mxu0 0.0
    %9058 = vmatpush1.msra.mxu0 0.0
    %9059 = vmatprep.subr.mxu0 0.0
    %9060 = vmatpush1.msra.mxu0 0.0
    %9061 = vmatprep.subr.mxu0 0.0
    %9062 = vmatpush1.msra.mxu0 0.0
    %9063 = vmatprep.subr.mxu0 0.0
    %9064 = vmatpush1.msra.mxu0 0.0
    %9065 = vmatprep.subr.mxu0 0.0
    %9066 = vmatpush1.msra.mxu0 0.0
    %9067 = vmatprep.subr.mxu0 0.0
    %9068 = vmatpush1.msra.mxu0 0.0
    %9069 = vmatprep.subr.mxu0 0.0
    %9070 = vmatpush1.msra.mxu0 0.0
    %9071 = vmatprep.subr.mxu0 0.0
    %9072 = vmatpush1.msra.mxu0 0.0
    %9073 = vmatprep.subr.mxu0 0.0
    %9074 = vmatpush1.msra.mxu0 0.0
    %9075 = vmatprep.subr.mxu0 0.0
    %9076 = vmatpush1.msra.mxu0 0.0
    %9077 = vmatprep.mubr.f32.mxu0 0.0
    %9078 = vmatmul.mubr.f32.gmra.mrb[0].mxu0 %v9011
    %v9079 = vpop.f32.mrb[0].mxu0
    %v9080 = vadd.f32 0.0, %v9079
    %v9081 = vpop.f32.mrb[0].mxu0
    %9082 = vdwg.mxu0
    %v9084 = vsel %vm707, %v9009, 0
    %9086 = vmatprep.subr.mxu0 0.0
    %9087 = vmatpush1.msra.mxu0 %v8829
    %9088 = vmatprep.subr.mxu0 0.0
    %9089 = vmatpush1.msra.mxu0 0.0
    %9090 = vmatprep.subr.mxu0 0.0
    %9091 = vmatpush1.msra.mxu0 0.0
    %9092 = vmatprep.subr.mxu0 0.0
    %9093 = vmatpush1.msra.mxu0 0.0
    %9094 = vmatprep.subr.mxu0 0.0
    %9095 = vmatpush1.msra.mxu0 0.0
    %9096 = vmatprep.subr.mxu0 0.0
    %9097 = vmatpush1.msra.mxu0 0.0
    %9098 = vmatprep.subr.mxu0 0.0
    %9099 = vmatpush1.msra.mxu0 0.0
    %9100 = vmatprep.subr.mxu0 0.0
    %9101 = vmatpush1.msra.mxu0 0.0
    %9102 = vmatprep.subr.mxu0 0.0
    %9103 = vmatpush1.msra.mxu0 0.0
    %9104 = vmatprep.subr.mxu0 0.0
    %9105 = vmatpush1.msra.mxu0 0.0
    %9106 = vmatprep.subr.mxu0 0.0
    %9107 = vmatpush1.msra.mxu0 0.0
    %9108 = vmatprep.subr.mxu0 0.0
    %9109 = vmatpush1.msra.mxu0 0.0
    %9110 = vmatprep.subr.mxu0 0.0
    %9111 = vmatpush1.msra.mxu0 0.0
    %9112 = vmatprep.subr.mxu0 0.0
    %9113 = vmatpush1.msra.mxu0 0.0
    %9114 = vmatprep.subr.mxu0 0.0
    %9115 = vmatpush1.msra.mxu0 0.0
    %9116 = vmatprep.subr.mxu0 0.0
    %9117 = vmatpush1.msra.mxu0 0.0
    %9118 = vmatprep.subr.mxu0 0.0
    %9119 = vmatpush1.msra.mxu0 0.0
    %9120 = vmatprep.subr.mxu0 0.0
    %9121 = vmatpush1.msra.mxu0 0.0
    %9122 = vmatprep.subr.mxu0 0.0
    %9123 = vmatpush1.msra.mxu0 0.0
    %9124 = vmatprep.subr.mxu0 0.0
    %9125 = vmatpush1.msra.mxu0 0.0
    %9126 = vmatprep.subr.mxu0 0.0
    %9127 = vmatpush1.msra.mxu0 0.0
    %9128 = vmatprep.subr.mxu0 0.0
    %9129 = vmatpush1.msra.mxu0 0.0
    %9130 = vmatprep.subr.mxu0 0.0
    %9131 = vmatpush1.msra.mxu0 0.0
    %9132 = vmatprep.subr.mxu0 0.0
    %9133 = vmatpush1.msra.mxu0 0.0
    %9134 = vmatprep.subr.mxu0 0.0
    %9135 = vmatpush1.msra.mxu0 0.0
    %9136 = vmatprep.subr.mxu0 0.0
    %9137 = vmatpush1.msra.mxu0 0.0
    %9138 = vmatprep.subr.mxu0 0.0
    %9139 = vmatpush1.msra.mxu0 0.0
    %9140 = vmatprep.subr.mxu0 0.0
    %9141 = vmatpush1.msra.mxu0 0.0
    %9142 = vmatprep.subr.mxu0 0.0
    %9143 = vmatpush1.msra.mxu0 0.0
    %9144 = vmatprep.subr.mxu0 0.0
    %9145 = vmatpush1.msra.mxu0 0.0
    %9146 = vmatprep.subr.mxu0 0.0
    %9147 = vmatpush1.msra.mxu0 0.0
    %9148 = vmatprep.subr.mxu0 0.0
    %9149 = vmatpush1.msra.mxu0 0.0
    %9150 = vmatprep.mubr.f32.mxu0 0.0
    %9151 = vmatmul.mubr.f32.gmra.mrb[0].mxu0 %v9084
    %v9152 = vpop.f32.mrb[0].mxu0
    %v9153 = vadd.f32 0.0, %v9152
    %v9154 = vpop.f32.mrb[0].mxu0
    %9155 = vdwg.mxu0
    %s9156 = scalar_lea.vmem %s13, 176
    %v9157 = vld [vmem:[%s9156] sm:$0xff]
    %v9158 = vld [vmem:[%s9156 + $0x8] sm:$0xff]
    %v9160 = vsel %vm550, %v9080, 0
    %v9163 = vsel %vm550, %v9153, 0
    %9165 = vmatprep.subr.mxu0 0.0
    %9166 = vmatpush1.msra.mxu0 %v9157
    %9167 = vmatprep.subr.mxu0 0.0
    %9168 = vmatpush1.msra.mxu0 %v9158
    %9169 = vmatprep.subr.mxu0 0.0
    %9170 = vmatpush1.msra.mxu0 0.0
    %9171 = vmatprep.subr.mxu0 0.0
    %9172 = vmatpush1.msra.mxu0 0.0
    %9173 = vmatprep.subr.mxu0 0.0
    %9174 = vmatpush1.msra.mxu0 0.0
    %9175 = vmatprep.subr.mxu0 0.0
    %9176 = vmatpush1.msra.mxu0 0.0
    %9177 = vmatprep.subr.mxu0 0.0
    %9178 = vmatpush1.msra.mxu0 0.0
    %9179 = vmatprep.subr.mxu0 0.0
    %9180 = vmatpush1.msra.mxu0 0.0
    %9181 = vmatprep.subr.mxu0 0.0
    %9182 = vmatpush1.msra.mxu0 0.0
    %9183 = vmatprep.subr.mxu0 0.0
    %9184 = vmatpush1.msra.mxu0 0.0
    %9185 = vmatprep.subr.mxu0 0.0
    %9186 = vmatpush1.msra.mxu0 0.0
    %9187 = vmatprep.subr.mxu0 0.0
    %9188 = vmatpush1.msra.mxu0 0.0
    %9189 = vmatprep.subr.mxu0 0.0
    %9190 = vmatpush1.msra.mxu0 0.0
    %9191 = vmatprep.subr.mxu0 0.0
    %9192 = vmatpush1.msra.mxu0 0.0
    %9193 = vmatprep.subr.mxu0 0.0
    %9194 = vmatpush1.msra.mxu0 0.0
    %9195 = vmatprep.subr.mxu0 0.0
    %9196 = vmatpush1.msra.mxu0 0.0
    %9197 = vmatprep.subr.mxu0 0.0
    %9198 = vmatpush1.msra.mxu0 0.0
    %9199 = vmatprep.subr.mxu0 0.0
    %9200 = vmatpush1.msra.mxu0 0.0
    %9201 = vmatprep.subr.mxu0 0.0
    %9202 = vmatpush1.msra.mxu0 0.0
    %9203 = vmatprep.subr.mxu0 0.0
    %9204 = vmatpush1.msra.mxu0 0.0
    %9205 = vmatprep.subr.mxu0 0.0
    %9206 = vmatpush1.msra.mxu0 0.0
    %9207 = vmatprep.subr.mxu0 0.0
    %9208 = vmatpush1.msra.mxu0 0.0
    %9209 = vmatprep.subr.mxu0 0.0
    %9210 = vmatpush1.msra.mxu0 0.0
    %9211 = vmatprep.subr.mxu0 0.0
    %9212 = vmatpush1.msra.mxu0 0.0
    %9213 = vmatprep.subr.mxu0 0.0
    %9214 = vmatpush1.msra.mxu0 0.0
    %9215 = vmatprep.subr.mxu0 0.0
    %9216 = vmatpush1.msra.mxu0 0.0
    %9217 = vmatprep.subr.mxu0 0.0
    %9218 = vmatpush1.msra.mxu0 0.0
    %9219 = vmatprep.subr.mxu0 0.0
    %9220 = vmatpush1.msra.mxu0 0.0
    %9221 = vmatprep.subr.mxu0 0.0
    %9222 = vmatpush1.msra.mxu0 0.0
    %9223 = vmatprep.subr.mxu0 0.0
    %9224 = vmatpush1.msra.mxu0 0.0
    %9225 = vmatprep.subr.mxu0 0.0
    %9226 = vmatpush1.msra.mxu0 0.0
    %9227 = vmatprep.subr.mxu0 0.0
    %9228 = vmatpush1.msra.mxu0 0.0
    %9229 = vmatprep.mubr.f32.mxu0 0.0
    %9230 = vmatmul.mubr.f32.gmra.mrb[0].mxu0 %v9160
    %v9231 = vpop.f32.mrb[0].mxu0
    %v9232 = vadd.f32 0.0, %v9231
    %v9233 = vpop.f32.mrb[0].mxu0
    %9234 = vmatprep.mubr.f32.mxu0 0.0
    %9235 = vmatmul.mubr.f32.gmra.mrb[0].mxu0 %v9163
    %v9236 = vpop.f32.mrb[0].mxu0
    %v9237 = vadd.f32 0.0, %v9236
    %v9238 = vpop.f32.mrb[0].mxu0
    %9239 = vdwg.mxu0
    %v9240 = vadd.f32 %v8554, %v9232
    %v9241 = vadd.f32 %v8555, %v9237
    %v9242 = vadd.f32 %v6448, %v9240
    %v9243 = vadd.f32 %v6449, %v9241
    %s9244 = scalar_lea.vmem %s14, 2
    %v9245 = vld [vmem:[%s9244] sm:$0x1]
    %v9247 = vlaneseq
    %v9248 = vshrl.u32 %v9247, 7
    %v9249 = vsub.s32 0, %v9248
    %v9250 = vrot.slane %v9245, %v9249
    %v9252 = vadd.f32 %v9242, %v9250
    %v9253 = vadd.f32 %v9243, %v9250
    %s9254 = scalar_lea.vmem %s15, 2
    %v9255 = vld [vmem:[%s9254] sm:$0x1]
    %s9256 = scalar_lea.vmem %s16, 2
    %v9257 = vld [vmem:[%s9256] sm:$0x1]
    %v9258 = vsel %vm180, %v9252, 0.0
    %9259 = vadd.xlane.f32.xlu0 %v9258
    %v9260 = vpop.xlane.xlu0 %9259
    %v9261 = vsel %vm180, %v9253, 0.0
    %9262 = vadd.xlane.f32.xlu0 %v9261
    %v9263 = vpop.xlane.xlu0 %9262
    %v9264 = vmul.f32 %v9260, %v187
    %v9265 = vmul.f32 %v9263, %v187
    %v9266 = vsub.f32 %v9252, %v9264
    %v9267 = vsub.f32 %v9253, %v9265
    %v9268 = vmul.f32 %v9266, %v9266
    %v9269 = vmul.f32 %v9267, %v9267
    %v9270 = vsel %vm180, %v9268, 0.0
    %9271 = vadd.xlane.f32.xlu0 %v9270
    %v9272 = vpop.xlane.xlu0 %9271
    %v9273 = vsel %vm180, %v9269, 0.0
    %9274 = vadd.xlane.f32.xlu0 %v9273
    %v9275 = vpop.xlane.xlu0 %9274
    %v9276 = vmul.f32 %v9272, %v187
    %v9277 = vmul.f32 %v9275, %v187
    %v9278 = vadd.f32 %v9276, 1e-05
    %v9279 = vadd.f32 %v9277, 1e-05
    %v9280 = vrsqrt.pop %v9278
    %v9281 = vrsqrt.pop %v9279
    %v9282 = vmul.f32 %v9266, %v9280
    %v9283 = vmul.f32 %v9267, %v9281
    %v9285 = vlaneseq
    %v9286 = vshrl.u32 %v9285, 7
    %v9287 = vsub.s32 0, %v9286
    %v9288 = vrot.slane %v9255, %v9287
    %v9290 = vmul.f32 %v9282, %v9288
    %v9291 = vmul.f32 %v9283, %v9288
    %v9293 = vlaneseq
    %v9294 = vshrl.u32 %v9293, 7
    %v9295 = vsub.s32 0, %v9294
    %v9296 = vrot.slane %v9257, %v9295
    %v9298 = vadd.f32 %v9290, %v9296
    %v9299 = vadd.f32 %v9291, %v9296
    %s9300 = scalar_lea.vmem %s17, 256
    %v9301 = vld [vmem:[%s9300] sm:$0xff]
    %v9302 = vld [vmem:[%s9300 + $0x8] sm:$0xff]
    %v9303 = vld [vmem:[%s9300 + $0x10] sm:$0xff]
    %v9304 = vld [vmem:[%s9300 + $0x18] sm:$0xff]
    %v9305 = vld [vmem:[%s9300 + $0x20] sm:$0xff]
    %v9306 = vld [vmem:[%s9300 + $0x28] sm:$0xff]
    %v9307 = vld [vmem:[%s9300 + $0x30] sm:$0xff]
    %v9308 = vld [vmem:[%s9300 + $0x38] sm:$0xff]
    %v9309 = vld [vmem:[%s9300 + $0x40] sm:$0xff]
    %v9310 = vld [vmem:[%s9300 + $0x48] sm:$0xff]
    %v9311 = vld [vmem:[%s9300 + $0x50] sm:$0xff]
    %v9312 = vld [vmem:[%s9300 + $0x58] sm:$0xff]
    %v9313 = vld [vmem:[%s9300 + $0x60] sm:$0xff]
    %v9314 = vld [vmem:[%s9300 + $0x68] sm:$0xff]
    %v9315 = vld [vmem:[%s9300 + $0x70] sm:$0xff]
    %v9316 = vld [vmem:[%s9300 + $0x78] sm:$0xff]
    %s9317 = scalar_lea.vmem %s18, 4
    %v9318 = vld [vmem:[%s9317] sm:$0x3]
    %v9320 = vlaneseq
    %v9321 = vshrl.u32 %v9320, 7
    %v9322 = vsub.s32 0, %v9321
    %v9323 = vrot.slane %v9318, %v9322
    %v9324 = vlaneseq
    %v9325 = vshrl.u32 %v9324, 7
    %v9326 = vsub.s32 1, %v9325
    %v9327 = vrot.slane %v9318, %v9326
    %v9331 = vsel %vm180, %v9298, 0
    %v9334 = vsel %vm180, %v9299, 0
    %9336 = vmatprep.subr.mxu0 %v9302
    %9337 = vmatpush1.msra.mxu0 %v9301
    %9338 = vmatprep.subr.mxu0 %v9304
    %9339 = vmatpush1.msra.mxu0 %v9303
    %9340 = vmatprep.subr.mxu0 %v9306
    %9341 = vmatpush1.msra.mxu0 %v9305
    %9342 = vmatprep.subr.mxu0 %v9308
    %9343 = vmatpush1.msra.mxu0 %v9307
    %9344 = vmatprep.subr.mxu0 %v9310
    %9345 = vmatpush1.msra.mxu0 %v9309
    %9346 = vmatprep.subr.mxu0 %v9312
    %9347 = vmatpush1.msra.mxu0 %v9311
    %9348 = vmatprep.subr.mxu0 %v9314
    %9349 = vmatpush1.msra.mxu0 %v9313
    %9350 = vmatprep.subr.mxu0 %v9316
    %9351 = vmatpush1.msra.mxu0 %v9315
    %9352 = vmatprep.subr.mxu0 0.0
    %9353 = vmatpush1.msra.mxu0 0.0
    %9354 = vmatprep.subr.mxu0 0.0
    %9355 = vmatpush1.msra.mxu0 0.0
    %9356 = vmatprep.subr.mxu0 0.0
    %9357 = vmatpush1.msra.mxu0 0.0
    %9358 = vmatprep.subr.mxu0 0.0
    %9359 = vmatpush1.msra.mxu0 0.0
    %9360 = vmatprep.subr.mxu0 0.0
    %9361 = vmatpush1.msra.mxu0 0.0
    %9362 = vmatprep.subr.mxu0 0.0
    %9363 = vmatpush1.msra.mxu0 0.0
    %9364 = vmatprep.subr.mxu0 0.0
    %9365 = vmatpush1.msra.mxu0 0.0
    %9366 = vmatprep.subr.mxu0 0.0
    %9367 = vmatpush1.msra.mxu0 0.0
    %9368 = vmatprep.subr.mxu0 0.0
    %9369 = vmatpush1.msra.mxu0 0.0
    %9370 = vmatprep.subr.mxu0 0.0
    %9371 = vmatpush1.msra.mxu0 0.0
    %9372 = vmatprep.subr.mxu0 0.0
    %9373 = vmatpush1.msra.mxu0 0.0
    %9374 = vmatprep.subr.mxu0 0.0
    %9375 = vmatpush1.msra.mxu0 0.0
    %9376 = vmatprep.subr.mxu0 0.0
    %9377 = vmatpush1.msra.mxu0 0.0
    %9378 = vmatprep.subr.mxu0 0.0
    %9379 = vmatpush1.msra.mxu0 0.0
    %9380 = vmatprep.subr.mxu0 0.0
    %9381 = vmatpush1.msra.mxu0 0.0
    %9382 = vmatprep.subr.mxu0 0.0
    %9383 = vmatpush1.msra.mxu0 0.0
    %9384 = vmatprep.subr.mxu0 0.0
    %9385 = vmatpush1.msra.mxu0 0.0
    %9386 = vmatprep.subr.mxu0 0.0
    %9387 = vmatpush1.msra.mxu0 0.0
    %9388 = vmatprep.subr.mxu0 0.0
    %9389 = vmatpush1.msra.mxu0 0.0
    %9390 = vmatprep.subr.mxu0 0.0
    %9391 = vmatpush1.msra.mxu0 0.0
    %9392 = vmatprep.subr.mxu0 0.0
    %9393 = vmatpush1.msra.mxu0 0.0
    %9394 = vmatprep.subr.mxu0 0.0
    %9395 = vmatpush1.msra.mxu0 0.0
    %9396 = vmatprep.subr.mxu0 0.0
    %9397 = vmatpush1.msra.mxu0 0.0
    %9398 = vmatprep.subr.mxu0 0.0
    %9399 = vmatpush1.msra.mxu0 0.0
    %9400 = vmatprep.mubr.f32.mxu0 0.0
    %9401 = vmatmul.mubr.f32.gmra.mrb[0].mxu0 %v9331
    %v9402 = vpop.f32.mrb[0].mxu0
    %v9403 = vadd.f32 %v9323, %v9402
    %v9404 = vpop.f32.mrb[0].mxu0
    %v9405 = vadd.f32 %v9327, %v9404
    %9406 = vmatprep.mubr.f32.mxu0 0.0
    %9407 = vmatmul.mubr.f32.gmra.mrb[0].mxu0 %v9334
    %v9408 = vpop.f32.mrb[0].mxu0
    %v9409 = vadd.f32 %v9323, %v9408
    %v9410 = vpop.f32.mrb[0].mxu0
    %v9411 = vadd.f32 %v9327, %v9410
    %9412 = vdwg.mxu0
    %v9413 = vmul.f32 %v9403, 0.5
    %v9414 = vmul.f32 %v9405, 0.5
    %v9415 = vmul.f32 %v9409, 0.5
    %v9416 = vmul.f32 %v9411, 0.5
    %v9417 = vmul.f32 %v9403, 0.044715
    %v9418 = vmul.f32 %v9405, 0.044715
    %v9419 = vmul.f32 %v9409, 0.044715
    %v9420 = vmul.f32 %v9411, 0.044715
    %v9421 = vmul.f32 %v9417, %v9403
    %v9422 = vmul.f32 %v9418, %v9405
    %v9423 = vmul.f32 %v9419, %v9409
    %v9424 = vmul.f32 %v9420, %v9411
    %v9425 = vmul.f32 %v9421, %v9403
    %v9426 = vmul.f32 %v9422, %v9405
    %v9427 = vmul.f32 %v9423, %v9409
    %v9428 = vmul.f32 %v9424, %v9411
    %v9429 = vadd.f32 %v9403, %v9425
    %v9430 = vadd.f32 %v9405, %v9426
    %v9431 = vadd.f32 %v9409, %v9427
    %v9432 = vadd.f32 %v9411, %v9428
    %v9433 = vmul.f32 %v9429, 0.7978846
    %v9434 = vmul.f32 %v9430, 0.7978846
    %v9435 = vmul.f32 %v9431, 0.7978846
    %v9436 = vmul.f32 %v9432, 0.7978846
    %v9437 = vtanh.pop %v9433
    %v9438 = vtanh.pop %v9434
    %v9439 = vtanh.pop %v9435
    %v9440 = vtanh.pop %v9436
    %v9441 = vadd.f32 %v9437, 1.0
    %v9442 = vadd.f32 %v9438, 1.0
    %v9443 = vadd.f32 %v9439, 1.0
    %v9444 = vadd.f32 %v9440, 1.0
    %v9445 = vmul.f32 %v9413, %v9441
    %v9446 = vmul.f32 %v9414, %v9442
    %v9447 = vmul.f32 %v9415, %v9443
    %v9448 = vmul.f32 %v9416, %v9444
    %s9449 = scalar_lea.vmem %s19, 512
    %v9450 = vld [vmem:[%s9449] sm:$0xff]
    %v9451 = vld [vmem:[%s9449 + $0x8] sm:$0xff]
    %v9452 = vld [vmem:[%s9449 + $0x10] sm:$0xff]
    %v9453 = vld [vmem:[%s9449 + $0x18] sm:$0xff]
    %v9454 = vld [vmem:[%s9449 + $0x20] sm:$0xff]
    %v9455 = vld [vmem:[%s9449 + $0x28] sm:$0xff]
    %v9456 = vld [vmem:[%s9449 + $0x30] sm:$0xff]
    %v9457 = vld [vmem:[%s9449 + $0x38] sm:$0xff]
    %v9458 = vld [vmem:[%s9449 + $0x40] sm:$0xff]
    %v9459 = vld [vmem:[%s9449 + $0x48] sm:$0xff]
    %v9460 = vld [vmem:[%s9449 + $0x50] sm:$0xff]
    %v9461 = vld [vmem:[%s9449 + $0x58] sm:$0xff]
    %v9462 = vld [vmem:[%s9449 + $0x60] sm:$0xff]
    %v9463 = vld [vmem:[%s9449 + $0x68] sm:$0xff]
    %v9464 = vld [vmem:[%s9449 + $0x70] sm:$0xff]
    %v9465 = vld [vmem:[%s9449 + $0x78] sm:$0xff]
    %v9466 = vld [vmem:[%s9449 + $0x80] sm:$0xff]
    %v9467 = vld [vmem:[%s9449 + $0x88] sm:$0xff]
    %v9468 = vld [vmem:[%s9449 + $0x90] sm:$0xff]
    %v9469 = vld [vmem:[%s9449 + $0x98] sm:$0xff]
    %v9470 = vld [vmem:[%s9449 + $0xa0] sm:$0xff]
    %v9471 = vld [vmem:[%s9449 + $0xa8] sm:$0xff]
    %v9472 = vld [vmem:[%s9449 + $0xb0] sm:$0xff]
    %v9473 = vld [vmem:[%s9449 + $0xb8] sm:$0xff]
    %v9474 = vld [vmem:[%s9449 + $0xc0] sm:$0xff]
    %v9475 = vld [vmem:[%s9449 + $0xc8] sm:$0xff]
    %v9476 = vld [vmem:[%s9449 + $0xd0] sm:$0xff]
    %v9477 = vld [vmem:[%s9449 + $0xd8] sm:$0xff]
    %v9478 = vld [vmem:[%s9449 + $0xe0] sm:$0xff]
    %v9479 = vld [vmem:[%s9449 + $0xe8] sm:$0xff]
    %v9480 = vld [vmem:[%s9449 + $0xf0] sm:$0xff]
    %v9481 = vld [vmem:[%s9449 + $0xf8] sm:$0xff]
    %s9482 = scalar_lea.vmem %s20, 2
    %v9483 = vld [vmem:[%s9482] sm:$0x1]
    %v9485 = vlaneseq
    %v9486 = vshrl.u32 %v9485, 7
    %v9487 = vsub.s32 0, %v9486
    %v9488 = vrot.slane %v9483, %v9487
    %9490 = vmatprep.subr.mxu0 0.0
    %9491 = vmatpush1.msra.mxu0 %v9450
    %9492 = vmatprep.subr.mxu0 0.0
    %9493 = vmatpush1.msra.mxu0 %v9451
    %9494 = vmatprep.subr.mxu0 0.0
    %9495 = vmatpush1.msra.mxu0 %v9452
    %9496 = vmatprep.subr.mxu0 0.0
    %9497 = vmatpush1.msra.mxu0 %v9453
    %9498 = vmatprep.subr.mxu0 0.0
    %9499 = vmatpush1.msra.mxu0 %v9454
    %9500 = vmatprep.subr.mxu0 0.0
    %9501 = vmatpush1.msra.mxu0 %v9455
    %9502 = vmatprep.subr.mxu0 0.0
    %9503 = vmatpush1.msra.mxu0 %v9456
    %9504 = vmatprep.subr.mxu0 0.0
    %9505 = vmatpush1.msra.mxu0 %v9457
    %9506 = vmatprep.subr.mxu0 0.0
    %9507 = vmatpush1.msra.mxu0 %v9458
    %9508 = vmatprep.subr.mxu0 0.0
    %9509 = vmatpush1.msra.mxu0 %v9459
    %9510 = vmatprep.subr.mxu0 0.0
    %9511 = vmatpush1.msra.mxu0 %v9460
    %9512 = vmatprep.subr.mxu0 0.0
    %9513 = vmatpush1.msra.mxu0 %v9461
    %9514 = vmatprep.subr.mxu0 0.0
    %9515 = vmatpush1.msra.mxu0 %v9462
    %9516 = vmatprep.subr.mxu0 0.0
    %9517 = vmatpush1.msra.mxu0 %v9463
    %9518 = vmatprep.subr.mxu0 0.0
    %9519 = vmatpush1.msra.mxu0 %v9464
    %9520 = vmatprep.subr.mxu0 0.0
    %9521 = vmatpush1.msra.mxu0 %v9465
    %9522 = vmatprep.subr.mxu0 0.0
    %9523 = vmatpush1.msra.mxu0 %v9466
    %9524 = vmatprep.subr.mxu0 0.0
    %9525 = vmatpush1.msra.mxu0 %v9467
    %9526 = vmatprep.subr.mxu0 0.0
    %9527 = vmatpush1.msra.mxu0 %v9468
    %9528 = vmatprep.subr.mxu0 0.0
    %9529 = vmatpush1.msra.mxu0 %v9469
    %9530 = vmatprep.subr.mxu0 0.0
    %9531 = vmatpush1.msra.mxu0 %v9470
    %9532 = vmatprep.subr.mxu0 0.0
    %9533 = vmatpush1.msra.mxu0 %v9471
    %9534 = vmatprep.subr.mxu0 0.0
    %9535 = vmatpush1.msra.mxu0 %v9472
    %9536 = vmatprep.subr.mxu0 0.0
    %9537 = vmatpush1.msra.mxu0 %v9473
    %9538 = vmatprep.subr.mxu0 0.0
    %9539 = vmatpush1.msra.mxu0 %v9474
    %9540 = vmatprep.subr.mxu0 0.0
    %9541 = vmatpush1.msra.mxu0 %v9475
    %9542 = vmatprep.subr.mxu0 0.0
    %9543 = vmatpush1.msra.mxu0 %v9476
    %9544 = vmatprep.subr.mxu0 0.0
    %9545 = vmatpush1.msra.mxu0 %v9477
    %9546 = vmatprep.subr.mxu0 0.0
    %9547 = vmatpush1.msra.mxu0 %v9478
    %9548 = vmatprep.subr.mxu0 0.0
    %9549 = vmatpush1.msra.mxu0 %v9479
    %9550 = vmatprep.subr.mxu0 0.0
    %9551 = vmatpush1.msra.mxu0 %v9480
    %9552 = vmatprep.subr.mxu0 0.0
    %9553 = vmatpush1.msra.mxu0 %v9481
    %9554 = vmatprep.mubr.f32.mxu0 %v9446
    %9555 = vmatmul.mubr.f32.gmra.mrb[0].mxu0 %v9445
    %v9556 = vpop.f32.mrb[0].mxu0
    %v9557 = vadd.f32 %v9488, %v9556
    %v9558 = vpop.f32.mrb[0].mxu0
    %9559 = vmatprep.mubr.f32.mxu0 %v9448
    %9560 = vmatmul.mubr.f32.gmra.mrb[0].mxu0 %v9447
    %v9561 = vpop.f32.mrb[0].mxu0
    %v9562 = vadd.f32 %v9488, %v9561
    %v9563 = vpop.f32.mrb[0].mxu0
    %9564 = vdwg.mxu0
    %v9565 = vadd.f32 %v9252, %v9557
    %v9566 = vadd.f32 %v9253, %v9562
    %v9567 = vld [vmem:[%s21] sm:$0x1]
    %v9568 = vld [vmem:[%s22] sm:$0x1]
    %v9571 = vrot.slane %v9566, 7
    %vm9574 = vcmask 523271
    %v9575 = vsel %vm9574, %v9565, 0.0
    %9576 = vadd.xlane.f32.xlu0 %v9575
    %v9577 = vpop.xlane.xlu0 %9576
    %vm9578 = vcmask 516096
    %v9579 = vsel %vm9578, %v9571, 0.0
    %9580 = vadd.xlane.f32.xlu0 %v9579
    %v9581 = vpop.xlane.xlu0 %9580
    %v9582 = vmul.f32 %v9577, %v187
    %v9583 = vmul.f32 %v9581, %v187
    %v9586 = vrot.slane %v9583, 1
    %v9589 = vsub.f32 %v9565, %v9582
    %v9590 = vsub.f32 %v9566, %v9586
    %v9591 = vmul.f32 %v9589, %v9589
    %v9592 = vmul.f32 %v9590, %v9590
    %v9595 = vrot.slane %v9592, 7
    %v9598 = vsel %vm9574, %v9591, 0.0
    %9599 = vadd.xlane.f32.xlu0 %v9598
    %v9600 = vpop.xlane.xlu0 %9599
    %v9601 = vsel %vm9578, %v9595, 0.0
    %9602 = vadd.xlane.f32.xlu0 %v9601
    %v9603 = vpop.xlane.xlu0 %9602
    %v9604 = vmul.f32 %v9600, %v187
    %v9605 = vmul.f32 %v9603, %v187
    %v9606 = vadd.f32 %v9604, 1e-05
    %v9607 = vadd.f32 %v9605, 1e-05
    %v9608 = vrsqrt.pop %v9606
    %v9609 = vrsqrt.pop %v9607
    %v9612 = vrot.slane %v9609, 1
    %v9615 = vmul.f32 %v9589, %v9608
    %v9616 = vmul.f32 %v9590, %v9612
    %v9618 = vlaneseq
    %v9619 = vshrl.u32 %v9618, 7
    %v9620 = vsub.s32 0, %v9619
    %v9621 = vrot.slane %v9567, %v9620
    %v9623 = vmul.f32 %v9615, %v9621
    %v9624 = vmul.f32 %v9616, %v9621
    %v9626 = vlaneseq
    %v9627 = vshrl.u32 %v9626, 7
    %v9628 = vsub.s32 0, %v9627
    %v9629 = vrot.slane %v9568, %v9628
    %v9631 = vadd.f32 %v9623, %v9629
    %v9632 = vadd.f32 %v9624, %v9629
    %v9633 = vld [vmem:[%s23] sm:$0xff]
    %v9634 = vld [vmem:[%s23 + $0x8] sm:$0xff]
    %v9635 = vld [vmem:[%s23 + $0x10] sm:$0xff]
    %v9636 = vld [vmem:[%s23 + $0x18] sm:$0xff]
    %v9637 = vld [vmem:[%s23 + $0x20] sm:$0xff]
    %v9638 = vld [vmem:[%s23 + $0x28] sm:$0xff]
    %v9639 = vld [vmem:[%s23 + $0x30] sm:$0xff]
    %v9640 = vld [vmem:[%s23 + $0x38] sm:$0xff]
    %v9641 = vld [vmem:[%s24] sm:$0x1]
    %v9643 = vlaneseq
    %v9644 = vshrl.u32 %v9643, 7
    %v9645 = vsub.s32 0, %v9644
    %v9646 = vrot.slane %v9641, %v9645
    %v9650 = vrot.slane %v9631, 7
    %v9651 = vrot.slane %v9632, 6
    %vm9652 = vcmask 1041409
    %v9653 = vsel %vm9652, %v9651, %v9650
    %v9654 = vsel %vm180, %v9653, 0
    %9656 = vmatprep.subr.mxu0 0.0
    %9657 = vmatpush1.msra.mxu0 %v9633
    %9658 = vmatprep.subr.mxu0 0.0
    %9659 = vmatpush1.msra.mxu0 %v9634
    %9660 = vmatprep.subr.mxu0 0.0
    %9661 = vmatpush1.msra.mxu0 %v9635
    %9662 = vmatprep.subr.mxu0 0.0
    %9663 = vmatpush1.msra.mxu0 %v9636
    %9664 = vmatprep.subr.mxu0 0.0
    %9665 = vmatpush1.msra.mxu0 %v9637
    %9666 = vmatprep.subr.mxu0 0.0
    %9667 = vmatpush1.msra.mxu0 %v9638
    %9668 = vmatprep.subr.mxu0 0.0
    %9669 = vmatpush1.msra.mxu0 %v9639
    %9670 = vmatprep.subr.mxu0 0.0
    %9671 = vmatpush1.msra.mxu0 %v9640
    %9672 = vmatprep.subr.mxu0 0.0
    %9673 = vmatpush1.msra.mxu0 0.0
    %9674 = vmatprep.subr.mxu0 0.0
    %9675 = vmatpush1.msra.mxu0 0.0
    %9676 = vmatprep.subr.mxu0 0.0
    %9677 = vmatpush1.msra.mxu0 0.0
    %9678 = vmatprep.subr.mxu0 0.0
    %9679 = vmatpush1.msra.mxu0 0.0
    %9680 = vmatprep.subr.mxu0 0.0
    %9681 = vmatpush1.msra.mxu0 0.0
    %9682 = vmatprep.subr.mxu0 0.0
    %9683 = vmatpush1.msra.mxu0 0.0
    %9684 = vmatprep.subr.mxu0 0.0
    %9685 = vmatpush1.msra.mxu0 0.0
    %9686 = vmatprep.subr.mxu0 0.0
    %9687 = vmatpush1.msra.mxu0 0.0
    %9688 = vmatprep.subr.mxu0 0.0
    %9689 = vmatpush1.msra.mxu0 0.0
    %9690 = vmatprep.subr.mxu0 0.0
    %9691 = vmatpush1.msra.mxu0 0.0
    %9692 = vmatprep.subr.mxu0 0.0
    %9693 = vmatpush1.msra.mxu0 0.0
    %9694 = vmatprep.subr.mxu0 0.0
    %9695 = vmatpush1.msra.mxu0 0.0
    %9696 = vmatprep.subr.mxu0 0.0
    %9697 = vmatpush1.msra.mxu0 0.0
    %9698 = vmatprep.subr.mxu0 0.0
    %9699 = vmatpush1.msra.mxu0 0.0
    %9700 = vmatprep.subr.mxu0 0.0
    %9701 = vmatpush1.msra.mxu0 0.0
    %9702 = vmatprep.subr.mxu0 0.0
    %9703 = vmatpush1.msra.mxu0 0.0
    %9704 = vmatprep.subr.mxu0 0.0
    %9705 = vmatpush1.msra.mxu0 0.0
    %9706 = vmatprep.subr.mxu0 0.0
    %9707 = vmatpush1.msra.mxu0 0.0
    %9708 = vmatprep.subr.mxu0 0.0
    %9709 = vmatpush1.msra.mxu0 0.0
    %9710 = vmatprep.subr.mxu0 0.0
    %9711 = vmatpush1.msra.mxu0 0.0
    %9712 = vmatprep.subr.mxu0 0.0
    %9713 = vmatpush1.msra.mxu0 0.0
    %9714 = vmatprep.subr.mxu0 0.0
    %9715 = vmatpush1.msra.mxu0 0.0
    %9716 = vmatprep.subr.mxu0 0.0
    %9717 = vmatpush1.msra.mxu0 0.0
    %9718 = vmatprep.subr.mxu0 0.0
    %9719 = vmatpush1.msra.mxu0 0.0
    %9720 = vmatprep.mubr.f32.mxu0 0.0
    %9721 = vmatmul.mubr.f32.gmra.mrb[0].mxu0 %v9654
    %v9722 = vpop.f32.mrb[0].mxu0
    %v9723 = vadd.f32 %v9646, %v9722
    %v9724 = vpop.f32.mrb[0].mxu0
    %9725 = vdwg.mxu0
    %vm9726 = vcmask 9216
    %9727 = vst.msk [vmem:[#allocation2] sm:$0x3] %vm9726, %v9723
    // Predicated region
    $region102: #{timeseries_decoder_forward.1} parent=1 // pred_check
      _
    $region103: #{timeseries_decoder_forward.1} parent=1 // pred_check_branch
      %9729 = sbr.rel (0) target = $region105
    $region104: #{timeseries_decoder_forward.1} parent=1 // pred_region
      %s9731 = ssub.s32 32, 32
      %9732 = vsyncadd [#allocation3], %s9731
      %s9734 = sshll.u32 [#allocation2], 4
      %s9735 = int_to_ptr.vmem [resolvable:$true] %s9734
      %9737 = dma.vmem_to_hbm [thread:$0]  %s9735, 32, %s25, [#allocation3]
    $region105: #{timeseries_decoder_forward.1} parent=1 // pred_fallthru
      _
    // Predicated region
    $region106: #{timeseries_decoder_forward.1} parent=1 // pred_check
      _
    $region107: #{timeseries_decoder_forward.1} parent=1 // pred_check_branch
      %9739 = sbr.rel (0) target = $region109
    $region108: #{timeseries_decoder_forward.1} parent=1 // pred_region
      %9740 = dma.done [#allocation3], 32
    $region109: #{timeseries_decoder_forward.1} parent=1 // pred_fallthru
      _
    %9741 = vsyncpa [#allocation3], 1

</llo_original>
